<compile_context>
chip_gen: v5e
topology: v5e:2x2
jax: 0.10.0
libtpu: 0.0.40
codegen_flags: <defaults>
</compile_context>

<pallas_src>
import math

import jax
import jax.numpy as jnp
from jax.experimental import pallas as pl
from jax.experimental.pallas import tpu as pltpu

# ----------------------------- configuration --------------------------------
B, N, T = 2, 16, 12          # batch, num_nodes, length (tem_size)
C_IN, C_HID = 1, 32          # in_dim, dilation_channels
OUT_DIM = 12                 # conv1 output channels
K, KT = 3, 3                 # Chebyshev order, temporal kernel size
POI_DIM, ATT_DIM = 8, 16     # POI feature dim, cross-attention dim
EPS = 1e-5                   # BatchNorm eps

_N_BLOCK_PARAMS = 6          # fused params per ST block passed to the kernel


# ----------------------- in-kernel ST_BLOCK_4 helper -------------------------
def _st_block(x2, lb, wrx_ref, brx_ref, wfg_ref, bfg_ref, wt_ref, bt_ref):
    """One ST_BLOCK_4 on the VMEM-resident activation.

    x2: (T*B*N, C_in) value with rows ordered (t, b, n).  Returns (T*B*N, C).
    """
    rows, c_in = x2.shape
    c = bt_ref.shape[1]                           # C_HID
    g = lb.shape[0]                               # T * B row-groups
    n_nodes = lb.shape[2]
    k_hops = lb.shape[1] // n_nodes

    # 1) fused 1x1 residual + projection: [res | x1] in one channel matmul.
    if c_in == 1:
        rx = x2 * wrx_ref[...] + brx_ref[...]                      # (rows, 2C)
    else:
        rx = jnp.dot(x2, wrx_ref[...],
                     preferred_element_type=jnp.float32) + brx_ref[...]
    res = rx[:, :c]
    x1 = rx[:, c:]

    # 2) all K Chebyshev hops in one batched contraction against the
    #    host-stacked (G, K*N, N) hop operator (no in-kernel broadcast of L).
    zs = jnp.einsum("gkm,gmc->gkc", lb, x1.reshape(g, n_nodes, c),
                    preferred_element_type=jnp.float32)            # (G, K*N, C)

    # 3) fused GLU channel mix: hop activations stacked on lanes -> 1 matmul.
    zcat = jnp.concatenate(
        [zs[:, k * n_nodes:(k + 1) * n_nodes, :] for k in range(k_hops)],
        axis=-1).reshape(rows, k_hops * c)                         # (rows, K*C)
    fg = jnp.dot(zcat, wfg_ref[...],
                 preferred_element_type=jnp.float32) + bfg_ref[...]
    h = (fg[:, :c] + res) * jax.nn.sigmoid(fg[:, c:])              # GLU

    # 4) (1, Kt) temporal conv: one stacked matmul, then shifted adds along t
    #    (rows are (t, b, n): a shift of +-1 in t is a shift of +-B row-groups).
    kt = wt_ref.shape[1] // c
    pad = (kt - 1) // 2
    p3 = jnp.dot(h, wt_ref[...],
                 preferred_element_type=jnp.float32).reshape(g, n_nodes, kt * c)
    out = p3[:, :, pad * c:(pad + 1) * c] + bt_ref[...]            # centre tap
    for k in range(kt):
        off = k - pad
        if off == 0:
            continue
        grp = p3[:, :, k * c:(k + 1) * c]                          # (G, N, C)
        if off < 0:        # out[t] += P_k[t + off], zero at the t=0 boundary
            shifted = jnp.concatenate(
                [jnp.zeros((-off * B, n_nodes, c), jnp.float32),
                 grp[:g + off * B]], axis=0)
        else:              # zero at the t=T-1 boundary
            shifted = jnp.concatenate(
                [grp[off * B:],
                 jnp.zeros((off * B, n_nodes, c), jnp.float32)], axis=0)
        out = out + shifted
    return out.reshape(rows, c)


# ----------------------------- fused forward kernel --------------------------
def pstgcn_kernel(*args):
    """Whole PSTGCN forward (all batches folded into the row dimension)."""
    x_ref, lb_ref = args[0], args[1]
    blocks = [args[2 + i * _N_BLOCK_PARAMS: 2 + (i + 1) * _N_BLOCK_PARAMS]
              for i in range(3)]
    wq_ref, wk_ref, poi_ref, pvec_ref, wc_ref, bc_ref = args[20:26]
    y_ref, dist_ref, pout_ref = args[26:29]

    lb = lb_ref[...]                               # (T*B, K*N, N)
    h = x_ref[...]                                 # (T*B*N, C_IN), BN in wrapper
    for i in range(3):
        h = _st_block(h, lb, *blocks[i])           # (T*B*N, C_HID)

    rows, c = h.shape
    bn = rows // T                                 # B * N
    h3 = h.reshape(T, bn, c)                       # (T, B*N, C)

    # --- Cross_P: cross attention of time-pooled features vs. POI vectors ---
    xm = jnp.mean(h3, axis=0)                                          # (B*N, C)
    q = jnp.dot(xm, wq_ref[...], preferred_element_type=jnp.float32)
    kk = jnp.dot(pvec_ref[...], wk_ref[...], preferred_element_type=jnp.float32)
    s = jax.lax.dot_general(q, kk, (((1,), (1,)), ((), ())),
                            preferred_element_type=jnp.float32)        # (B*N, N)
    s = s * (1.0 / math.sqrt(wq_ref.shape[1]))
    s = s - jnp.max(s, axis=-1, keepdims=True)
    e = jnp.exp(s)
    dist = e / jnp.sum(e, axis=-1, keepdims=True)                      # exact
    pout = jnp.tanh(jnp.dot(dist, poi_ref[...],
                            preferred_element_type=jnp.float32))       # (B*N, 1)

    dist_ref[...] = dist.astype(dist_ref.dtype)
    pout_ref[...] = pout.astype(pout_ref.dtype)

    # --- x * (poi + 1) and conv1 head as one deep (T*C) contraction ----------
    gated = h3 * (pout[None] + 1.0)                                    # (T, B*N, C)
    gcat = jnp.concatenate([gated[t] for t in range(T)], axis=-1)      # (B*N, T*C)
    y = jnp.dot(gcat, wc_ref[...],
                preferred_element_type=jnp.float32) + bc_ref[...]      # (B*N, 12)
    y_ref[...] = y.astype(y_ref.dtype)


# ----------------------------- glue / parameters -----------------------------
def chebyshev(adj, k_order):
    n = adj.shape[0]
    l0 = jnp.eye(n, dtype=adj.dtype)
    ls = [l0, adj]
    l1 = adj
    for _ in range(2, k_order):
        l2 = 2.0 * adj @ l1 - l0
        l0, l1 = l1, l2
        ls.append(l2)
    return jnp.stack(ls[:k_order], axis=0)                             # (K, N, N)


def init_params(key):
    keys = iter(jax.random.split(key, 64))

    def nrm(shape, fan_in):
        return jax.random.normal(next(keys), shape, jnp.float32) / math.sqrt(fan_in)

    params = {}
    c_in = C_IN
    for name in ("block1", "block2", "block3"):
        params[name] = {
            "wres": nrm((c_in, C_HID), max(c_in, 1)),
            "bres": jnp.zeros((1, C_HID), jnp.float32),
            "w1": nrm((c_in, C_HID), max(c_in, 1)),
            "b1": jnp.zeros((1, C_HID), jnp.float32),
            "wgf": nrm((K, C_HID, C_HID), K * C_HID),
            "bgf": jnp.zeros((1, C_HID), jnp.float32),
            "wgg": nrm((K, C_HID, C_HID), K * C_HID),
            "bgg": jnp.zeros((1, C_HID), jnp.float32),
            "wt": nrm((KT, C_HID, C_HID), KT * C_HID),
            "bt": jnp.zeros((1, C_HID), jnp.float32),
        }
        c_in = C_HID
    params["wq"] = nrm((C_HID, ATT_DIM), C_HID)
    params["wk"] = nrm((POI_DIM, ATT_DIM), POI_DIM)
    params["wc"] = nrm((T, C_HID, OUT_DIM), T * C_HID)                 # conv1
    params["bc"] = jnp.zeros((1, OUT_DIM), jnp.float32)
    return params


def _prep_block(p):
    """Host-side weight fusion / stacking for one ST block (free XLA ops)."""
    wrx = jnp.concatenate([p["wres"], p["w1"]], axis=1)                # (C_in, 2C)
    brx = jnp.concatenate([p["bres"], p["b1"]], axis=1)                # (1, 2C)
    wfg = jnp.concatenate(
        [jnp.concatenate([p["wgf"][k], p["wgg"][k]], axis=1) for k in range(K)],
        axis=0)                                                        # (K*C, 2C)
    bfg = jnp.concatenate([p["bgf"], p["bgg"]], axis=1)                # (1, 2C)
    wt = jnp.concatenate([p["wt"][k] for k in range(KT)], axis=1)      # (C, Kt*C)
    return [wrx, brx, wfg, bfg, wt, p["bt"]]


def _full_spec(a):
    nd = a.ndim
    return pl.BlockSpec(a.shape, lambda i: (0,) * nd)


def _full_out_spec(shape):
    nd = len(shape)
    return pl.BlockSpec(shape, lambda i: (0,) * nd)


def pstgcn_forward(x_nchw, adj, poi, poi_vec, params):
    x = x_nchw.astype(jnp.float32)
    b, c_in, n, t = x.shape

    # BatchNorm2d(affine=False), training-mode batch stats -- computed once on
    # the wrapper side so the kernel neither receives x twice nor re-reduces it.
    mean = jnp.mean(x, axis=(0, 2, 3), keepdims=True)
    var = jnp.mean((x - mean) ** 2, axis=(0, 2, 3), keepdims=True)
    xn = (x - mean) * jax.lax.rsqrt(var + EPS)

    # kernel layout: rows ordered (t, b, n), channels on the lane axis
    x_rows = jnp.transpose(xn, (3, 0, 2, 1)).reshape(t * b * n, c_in)

    # host-side layout prep: stacked Chebyshev hop operator, pre-broadcast over
    # the (t, b) row-groups, and the flattened conv1 head weight.
    lstack = chebyshev(adj, K).reshape(K * n, n)
    lb = jnp.broadcast_to(lstack[None], (t * b, K * n, n))
    wc_flat = params["wc"].reshape(t * C_HID, OUT_DIM)

    weight_args = []
    for name in ("block1", "block2", "block3"):
        weight_args += _prep_block(params[name])
    weight_args += [params["wq"], params["wk"], poi, poi_vec, wc_flat,
                    params["bc"]]

    args = [x_rows, lb] + weight_args
    bn_rows = b * n
    out_shape = (
        jax.ShapeDtypeStruct((bn_rows, OUT_DIM), jnp.float32),
        jax.ShapeDtypeStruct((bn_rows, n), jnp.float32),
        jax.ShapeDtypeStruct((bn_rows, 1), jnp.float32),
    )

    y, dist, pout = pl.pallas_call(
        pstgcn_kernel,
        grid=(1,),
        in_specs=[_full_spec(a) for a in args],
        out_specs=tuple(_full_out_spec(s.shape) for s in out_shape),
        out_shape=out_shape,
        compiler_params=pltpu.CompilerParams(
            dimension_semantics=("arbitrary",)),
    )(*args)

    y = jnp.transpose(y.reshape(b, n, OUT_DIM), (0, 2, 1))[..., None]  # (B,12,N,1)
    dist = dist.reshape(b, n, n)                                       # (B, N, N)
    pout = pout.reshape(b, n, 1)                                       # (B, N, 1)
    return y, dist, pout


if __name__ == "__main__":
    key = jax.random.PRNGKey(0)
    k_x, k_adj, k_poi, k_pvec, k_par = jax.random.split(key, 5)

    x = jax.random.normal(k_x, (B, C_IN, N, T), jnp.float32)           # torch NCHW
    a = jax.random.uniform(k_adj, (N, N), jnp.float32)
    a = 0.5 * (a + a.T)
    adj = a / jnp.sum(a, axis=-1, keepdims=True)                       # supports[0]
    poi = jax.random.uniform(k_poi, (N, 1), jnp.float32)               # masks[1]
    poi_vec = jax.random.uniform(k_pvec, (N, POI_DIM), jnp.float32)    # masks[2]
    params = init_params(k_par)

    fwd = jax.jit(pstgcn_forward)
    y, dist, poi_gate = fwd(x, adj, poi, poi_vec, params)
    jax.block_until_ready((y, dist, poi_gate))

    assert y.shape == (B, OUT_DIM, N, 1)
    assert dist.shape == (B, N, N)
    assert poi_gate.shape == (B, N, 1)
    print("KERNEL_OK")
</pallas_src>

<mosaic_0001>
module attributes {stable_mosaic.version = 11 : i64} {
  func.func @pstgcn_kernel(%arg0: i32, %arg1: memref<384x1xf32, #tpu.memory_space<vmem>>, %arg2: memref<24x48x16xf32, #tpu.memory_space<vmem>>, %arg3: memref<1x64xf32, #tpu.memory_space<vmem>>, %arg4: memref<1x64xf32, #tpu.memory_space<vmem>>, %arg5: memref<96x64xf32, #tpu.memory_space<vmem>>, %arg6: memref<1x64xf32, #tpu.memory_space<vmem>>, %arg7: memref<32x96xf32, #tpu.memory_space<vmem>>, %arg8: memref<1x32xf32, #tpu.memory_space<vmem>>, %arg9: memref<32x64xf32, #tpu.memory_space<vmem>>, %arg10: memref<1x64xf32, #tpu.memory_space<vmem>>, %arg11: memref<96x64xf32, #tpu.memory_space<vmem>>, %arg12: memref<1x64xf32, #tpu.memory_space<vmem>>, %arg13: memref<32x96xf32, #tpu.memory_space<vmem>>, %arg14: memref<1x32xf32, #tpu.memory_space<vmem>>, %arg15: memref<32x64xf32, #tpu.memory_space<vmem>>, %arg16: memref<1x64xf32, #tpu.memory_space<vmem>>, %arg17: memref<96x64xf32, #tpu.memory_space<vmem>>, %arg18: memref<1x64xf32, #tpu.memory_space<vmem>>, %arg19: memref<32x96xf32, #tpu.memory_space<vmem>>, %arg20: memref<1x32xf32, #tpu.memory_space<vmem>>, %arg21: memref<32x16xf32, #tpu.memory_space<vmem>>, %arg22: memref<8x16xf32, #tpu.memory_space<vmem>>, %arg23: memref<16x1xf32, #tpu.memory_space<vmem>>, %arg24: memref<16x8xf32, #tpu.memory_space<vmem>>, %arg25: memref<384x12xf32, #tpu.memory_space<vmem>>, %arg26: memref<1x12xf32, #tpu.memory_space<vmem>>, %arg27: memref<32x12xf32, #tpu.memory_space<vmem>>, %arg28: memref<32x16xf32, #tpu.memory_space<vmem>>, %arg29: memref<32x1xf32, #tpu.memory_space<vmem>>) attributes {dimension_semantics = [#tpu.dimension_semantics<arbitrary>], iteration_bounds = array<i64: 1>, scalar_prefetch = 0 : i64, scratch_operands = 0 : i64, tpu.core_type = #tpu.core_type<tc>, window_params = [{pipeline_mode = #tpu.pipeline_mode<synchronous>, transform_indices = @transform_0, window_bounds = array<i64: 384, 1>}, {pipeline_mode = #tpu.pipeline_mode<synchronous>, transform_indices = @transform_1, window_bounds = array<i64: 24, 48, 16>}, {pipeline_mode = #tpu.pipeline_mode<synchronous>, transform_indices = @transform_2, window_bounds = array<i64: 1, 64>}, {pipeline_mode = #tpu.pipeline_mode<synchronous>, transform_indices = @transform_3, window_bounds = array<i64: 1, 64>}, {pipeline_mode = #tpu.pipeline_mode<synchronous>, transform_indices = @transform_4, window_bounds = array<i64: 96, 64>}, {pipeline_mode = #tpu.pipeline_mode<synchronous>, transform_indices = @transform_5, window_bounds = array<i64: 1, 64>}, {pipeline_mode = #tpu.pipeline_mode<synchronous>, transform_indices = @transform_6, window_bounds = array<i64: 32, 96>}, {pipeline_mode = #tpu.pipeline_mode<synchronous>, transform_indices = @transform_7, window_bounds = array<i64: 1, 32>}, {pipeline_mode = #tpu.pipeline_mode<synchronous>, transform_indices = @transform_8, window_bounds = array<i64: 32, 64>}, {pipeline_mode = #tpu.pipeline_mode<synchronous>, transform_indices = @transform_9, window_bounds = array<i64: 1, 64>}, {pipeline_mode = #tpu.pipeline_mode<synchronous>, transform_indices = @transform_10, window_bounds = array<i64: 96, 64>}, {pipeline_mode = #tpu.pipeline_mode<synchronous>, transform_indices = @transform_11, window_bounds = array<i64: 1, 64>}, {pipeline_mode = #tpu.pipeline_mode<synchronous>, transform_indices = @transform_12, window_bounds = array<i64: 32, 96>}, {pipeline_mode = #tpu.pipeline_mode<synchronous>, transform_indices = @transform_13, window_bounds = array<i64: 1, 32>}, {pipeline_mode = #tpu.pipeline_mode<synchronous>, transform_indices = @transform_14, window_bounds = array<i64: 32, 64>}, {pipeline_mode = #tpu.pipeline_mode<synchronous>, transform_indices = @transform_15, window_bounds = array<i64: 1, 64>}, {pipeline_mode = #tpu.pipeline_mode<synchronous>, transform_indices = @transform_16, window_bounds = array<i64: 96, 64>}, {pipeline_mode = #tpu.pipeline_mode<synchronous>, transform_indices = @transform_17, window_bounds = array<i64: 1, 64>}, {pipeline_mode = #tpu.pipeline_mode<synchronous>, transform_indices = @transform_18, window_bounds = array<i64: 32, 96>}, {pipeline_mode = #tpu.pipeline_mode<synchronous>, transform_indices = @transform_19, window_bounds = array<i64: 1, 32>}, {pipeline_mode = #tpu.pipeline_mode<synchronous>, transform_indices = @transform_20, window_bounds = array<i64: 32, 16>}, {pipeline_mode = #tpu.pipeline_mode<synchronous>, transform_indices = @transform_21, window_bounds = array<i64: 8, 16>}, {pipeline_mode = #tpu.pipeline_mode<synchronous>, transform_indices = @transform_22, window_bounds = array<i64: 16, 1>}, {pipeline_mode = #tpu.pipeline_mode<synchronous>, transform_indices = @transform_23, window_bounds = array<i64: 16, 8>}, {pipeline_mode = #tpu.pipeline_mode<synchronous>, transform_indices = @transform_24, window_bounds = array<i64: 384, 12>}, {pipeline_mode = #tpu.pipeline_mode<synchronous>, transform_indices = @transform_25, window_bounds = array<i64: 1, 12>}, {pipeline_mode = #tpu.pipeline_mode<synchronous>, transform_indices = @transform_26, window_bounds = array<i64: 32, 12>}, {pipeline_mode = #tpu.pipeline_mode<synchronous>, transform_indices = @transform_27, window_bounds = array<i64: 32, 16>}, {pipeline_mode = #tpu.pipeline_mode<synchronous>, transform_indices = @transform_28, window_bounds = array<i64: 32, 1>}]} {
    %c0 = arith.constant 0 : index
    %c0_0 = arith.constant 0 : index
    %c0_1 = arith.constant 0 : index
    %0 = vector.load %arg2[%c0, %c0_0, %c0_1] : memref<24x48x16xf32, #tpu.memory_space<vmem>>, vector<24x48x16xf32>
    %c0_2 = arith.constant 0 : index
    %c0_3 = arith.constant 0 : index
    %1 = vector.load %arg1[%c0_2, %c0_3] : memref<384x1xf32, #tpu.memory_space<vmem>>, vector<384x1xf32>
    %c0_4 = arith.constant 0 : index
    %c0_5 = arith.constant 0 : index
    %2 = vector.load %arg3[%c0_4, %c0_5] : memref<1x64xf32, #tpu.memory_space<vmem>>, vector<1x64xf32>
    %3 = vector.broadcast %1 : vector<384x1xf32> to vector<384x64xf32>
    %4 = vector.broadcast %2 : vector<1x64xf32> to vector<384x64xf32>
    %5 = arith.mulf %3, %4 : vector<384x64xf32>
    %c0_6 = arith.constant 0 : index
    %c0_7 = arith.constant 0 : index
    %6 = vector.load %arg4[%c0_6, %c0_7] : memref<1x64xf32, #tpu.memory_space<vmem>>, vector<1x64xf32>
    %7 = vector.broadcast %6 : vector<1x64xf32> to vector<384x64xf32>
    %8 = arith.addf %5, %7 : vector<384x64xf32>
    %9 = vector.extract_strided_slice %8 {offsets = [0, 0], sizes = [384, 32], strides = [1, 1]} : vector<384x64xf32> to vector<384x32xf32>
    %10 = vector.extract_strided_slice %8 {offsets = [0, 32], sizes = [384, 32], strides = [1, 1]} : vector<384x64xf32> to vector<384x32xf32>
    %11 = vector.shape_cast %10 : vector<384x32xf32> to vector<24x16x32xf32>
    "tpu.trace_start"() <{level = 10 : i32, message = "gkm,gmc->gkc"}> : () -> ()
    %cst = arith.constant dense<0.000000e+00> : vector<24x48x32xf32>
    %12 = tpu.matmul %0, %11, %cst {dimension_numbers = #tpu.dot_dimension_numbers<[2], [1], [1], [2], [0, 0, 0, 1, 1, 2], [0], [0]>} : vector<24x48x16xf32>, vector<24x16x32xf32>, vector<24x48x32xf32> -> vector<24x48x32xf32>
    "tpu.trace_stop"() : () -> ()
    %13 = vector.extract_strided_slice %12 {offsets = [0, 0, 0], sizes = [24, 16, 32], strides = [1, 1, 1]} : vector<24x48x32xf32> to vector<24x16x32xf32>
    %14 = vector.extract_strided_slice %12 {offsets = [0, 16, 0], sizes = [24, 16, 32], strides = [1, 1, 1]} : vector<24x48x32xf32> to vector<24x16x32xf32>
    %15 = vector.extract_strided_slice %12 {offsets = [0, 32, 0], sizes = [24, 16, 32], strides = [1, 1, 1]} : vector<24x48x32xf32> to vector<24x16x32xf32>
    %16 = tpu.concatenate %13, %14, %15 in 2 : vector<24x16x32xf32>, vector<24x16x32xf32>, vector<24x16x32xf32> -> vector<24x16x96xf32>
    %17 = vector.shape_cast %16 : vector<24x16x96xf32> to vector<384x96xf32>
    %c0_8 = arith.constant 0 : index
    %c0_9 = arith.constant 0 : index
    %18 = vector.load %arg5[%c0_8, %c0_9] : memref<96x64xf32, #tpu.memory_space<vmem>>, vector<96x64xf32>
    %cst_10 = arith.constant dense<0.000000e+00> : vector<384x64xf32>
    %19 = tpu.matmul %17, %18, %cst_10 {dimension_numbers = #tpu.dot_dimension_numbers<[1], [0], [0], [1], [0, 0, 1, 1], [], []>} : vector<384x96xf32>, vector<96x64xf32>, vector<384x64xf32> -> vector<384x64xf32>
    %c0_11 = arith.constant 0 : index
    %c0_12 = arith.constant 0 : index
    %20 = vector.load %arg6[%c0_11, %c0_12] : memref<1x64xf32, #tpu.memory_space<vmem>>, vector<1x64xf32>
    %21 = vector.broadcast %20 : vector<1x64xf32> to vector<384x64xf32>
    %22 = arith.addf %19, %21 : vector<384x64xf32>
    %23 = vector.extract_strided_slice %22 {offsets = [0, 0], sizes = [384, 32], strides = [1, 1]} : vector<384x64xf32> to vector<384x32xf32>
    %24 = arith.addf %23, %9 : vector<384x32xf32>
    %25 = vector.extract_strided_slice %22 {offsets = [0, 32], sizes = [384, 32], strides = [1, 1]} : vector<384x64xf32> to vector<384x32xf32>
    %26 = arith.negf %25 : vector<384x32xf32>
    %27 = math.exp %26 : vector<384x32xf32>
    %cst_13 = arith.constant 1.000000e+00 : f32
    %28 = vector.broadcast %cst_13 : f32 to vector<384x32xf32>
    %29 = arith.addf %28, %27 : vector<384x32xf32>
    %30 = arith.divf %28, %29 : vector<384x32xf32>
    %31 = arith.mulf %24, %30 : vector<384x32xf32>
    %c0_14 = arith.constant 0 : index
    %c0_15 = arith.constant 0 : index
    %32 = vector.load %arg7[%c0_14, %c0_15] : memref<32x96xf32, #tpu.memory_space<vmem>>, vector<32x96xf32>
    %cst_16 = arith.constant dense<0.000000e+00> : vector<384x96xf32>
    %33 = tpu.matmul %31, %32, %cst_16 {dimension_numbers = #tpu.dot_dimension_numbers<[1], [0], [0], [1], [0, 0, 1, 1], [], []>} : vector<384x32xf32>, vector<32x96xf32>, vector<384x96xf32> -> vector<384x96xf32>
    %34 = vector.shape_cast %33 : vector<384x96xf32> to vector<24x16x96xf32>
    %35 = vector.extract_strided_slice %34 {offsets = [0, 0, 32], sizes = [24, 16, 32], strides = [1, 1, 1]} : vector<24x16x96xf32> to vector<24x16x32xf32>
    %c0_17 = arith.constant 0 : index
    %c0_18 = arith.constant 0 : index
    %36 = vector.load %arg8[%c0_17, %c0_18] : memref<1x32xf32, #tpu.memory_space<vmem>>, vector<1x32xf32>
    %37 = vector.shape_cast %36 : vector<1x32xf32> to vector<1x1x32xf32>
    %38 = vector.broadcast %37 : vector<1x1x32xf32> to vector<24x16x32xf32>
    %39 = arith.addf %35, %38 : vector<24x16x32xf32>
    %40 = vector.extract_strided_slice %34 {offsets = [0, 0, 0], sizes = [24, 16, 32], strides = [1, 1, 1]} : vector<24x16x96xf32> to vector<24x16x32xf32>
    %cst_19 = arith.constant 0.000000e+00 : f32
    %41 = vector.broadcast %cst_19 : f32 to vector<2x16x32xf32>
    %42 = vector.extract_strided_slice %40 {offsets = [0, 0, 0], sizes = [22, 16, 32], strides = [1, 1, 1]} : vector<24x16x32xf32> to vector<22x16x32xf32>
    %43 = tpu.concatenate %41, %42 in 0 : vector<2x16x32xf32>, vector<22x16x32xf32> -> vector<24x16x32xf32>
    %44 = arith.addf %39, %43 : vector<24x16x32xf32>
    %45 = vector.extract_strided_slice %34 {offsets = [0, 0, 64], sizes = [24, 16, 32], strides = [1, 1, 1]} : vector<24x16x96xf32> to vector<24x16x32xf32>
    %46 = vector.extract_strided_slice %45 {offsets = [2, 0, 0], sizes = [22, 16, 32], strides = [1, 1, 1]} : vector<24x16x32xf32> to vector<22x16x32xf32>
    %cst_20 = arith.constant 0.000000e+00 : f32
    %47 = vector.broadcast %cst_20 : f32 to vector<2x16x32xf32>
    %48 = tpu.concatenate %46, %47 in 0 : vector<22x16x32xf32>, vector<2x16x32xf32> -> vector<24x16x32xf32>
    %49 = arith.addf %44, %48 : vector<24x16x32xf32>
    %50 = vector.shape_cast %49 : vector<24x16x32xf32> to vector<384x32xf32>
    %c0_21 = arith.constant 0 : index
    %c0_22 = arith.constant 0 : index
    %51 = vector.load %arg9[%c0_21, %c0_22] : memref<32x64xf32, #tpu.memory_space<vmem>>, vector<32x64xf32>
    %cst_23 = arith.constant dense<0.000000e+00> : vector<384x64xf32>
    %52 = tpu.matmul %50, %51, %cst_23 {dimension_numbers = #tpu.dot_dimension_numbers<[1], [0], [0], [1], [0, 0, 1, 1], [], []>} : vector<384x32xf32>, vector<32x64xf32>, vector<384x64xf32> -> vector<384x64xf32>
    %c0_24 = arith.constant 0 : index
    %c0_25 = arith.constant 0 : index
    %53 = vector.load %arg10[%c0_24, %c0_25] : memref<1x64xf32, #tpu.memory_space<vmem>>, vector<1x64xf32>
    %54 = vector.broadcast %53 : vector<1x64xf32> to vector<384x64xf32>
    %55 = arith.addf %52, %54 : vector<384x64xf32>
    %56 = vector.extract_strided_slice %55 {offsets = [0, 0], sizes = [384, 32], strides = [1, 1]} : vector<384x64xf32> to vector<384x32xf32>
    %57 = vector.extract_strided_slice %55 {offsets = [0, 32], sizes = [384, 32], strides = [1, 1]} : vector<384x64xf32> to vector<384x32xf32>
    %58 = vector.shape_cast %57 : vector<384x32xf32> to vector<24x16x32xf32>
    "tpu.trace_start"() <{level = 10 : i32, message = "gkm,gmc->gkc"}> : () -> ()
    %cst_26 = arith.constant dense<0.000000e+00> : vector<24x48x32xf32>
    %59 = tpu.matmul %0, %58, %cst_26 {dimension_numbers = #tpu.dot_dimension_numbers<[2], [1], [1], [2], [0, 0, 0, 1, 1, 2], [0], [0]>} : vector<24x48x16xf32>, vector<24x16x32xf32>, vector<24x48x32xf32> -> vector<24x48x32xf32>
    "tpu.trace_stop"() : () -> ()
    %60 = vector.extract_strided_slice %59 {offsets = [0, 0, 0], sizes = [24, 16, 32], strides = [1, 1, 1]} : vector<24x48x32xf32> to vector<24x16x32xf32>
    %61 = vector.extract_strided_slice %59 {offsets = [0, 16, 0], sizes = [24, 16, 32], strides = [1, 1, 1]} : vector<24x48x32xf32> to vector<24x16x32xf32>
    %62 = vector.extract_strided_slice %59 {offsets = [0, 32, 0], sizes = [24, 16, 32], strides = [1, 1, 1]} : vector<24x48x32xf32> to vector<24x16x32xf32>
    %63 = tpu.concatenate %60, %61, %62 in 2 : vector<24x16x32xf32>, vector<24x16x32xf32>, vector<24x16x32xf32> -> vector<24x16x96xf32>
    %64 = vector.shape_cast %63 : vector<24x16x96xf32> to vector<384x96xf32>
    %c0_27 = arith.constant 0 : index
    %c0_28 = arith.constant 0 : index
    %65 = vector.load %arg11[%c0_27, %c0_28] : memref<96x64xf32, #tpu.memory_space<vmem>>, vector<96x64xf32>
    %cst_29 = arith.constant dense<0.000000e+00> : vector<384x64xf32>
    %66 = tpu.matmul %64, %65, %cst_29 {dimension_numbers = #tpu.dot_dimension_numbers<[1], [0], [0], [1], [0, 0, 1, 1], [], []>} : vector<384x96xf32>, vector<96x64xf32>, vector<384x64xf32> -> vector<384x64xf32>
    %c0_30 = arith.constant 0 : index
    %c0_31 = arith.constant 0 : index
    %67 = vector.load %arg12[%c0_30, %c0_31] : memref<1x64xf32, #tpu.memory_space<vmem>>, vector<1x64xf32>
    %68 = vector.broadcast %67 : vector<1x64xf32> to vector<384x64xf32>
    %69 = arith.addf %66, %68 : vector<384x64xf32>
    %70 = vector.extract_strided_slice %69 {offsets = [0, 0], sizes = [384, 32], strides = [1, 1]} : vector<384x64xf32> to vector<384x32xf32>
    %71 = arith.addf %70, %56 : vector<384x32xf32>
    %72 = vector.extract_strided_slice %69 {offsets = [0, 32], sizes = [384, 32], strides = [1, 1]} : vector<384x64xf32> to vector<384x32xf32>
    %73 = arith.negf %72 : vector<384x32xf32>
    %74 = math.exp %73 : vector<384x32xf32>
    %cst_32 = arith.constant 1.000000e+00 : f32
    %75 = vector.broadcast %cst_32 : f32 to vector<384x32xf32>
    %76 = arith.addf %75, %74 : vector<384x32xf32>
    %77 = arith.divf %75, %76 : vector<384x32xf32>
    %78 = arith.mulf %71, %77 : vector<384x32xf32>
    %c0_33 = arith.constant 0 : index
    %c0_34 = arith.constant 0 : index
    %79 = vector.load %arg13[%c0_33, %c0_34] : memref<32x96xf32, #tpu.memory_space<vmem>>, vector<32x96xf32>
    %cst_35 = arith.constant dense<0.000000e+00> : vector<384x96xf32>
    %80 = tpu.matmul %78, %79, %cst_35 {dimension_numbers = #tpu.dot_dimension_numbers<[1], [0], [0], [1], [0, 0, 1, 1], [], []>} : vector<384x32xf32>, vector<32x96xf32>, vector<384x96xf32> -> vector<384x96xf32>
    %81 = vector.shape_cast %80 : vector<384x96xf32> to vector<24x16x96xf32>
    %82 = vector.extract_strided_slice %81 {offsets = [0, 0, 32], sizes = [24, 16, 32], strides = [1, 1, 1]} : vector<24x16x96xf32> to vector<24x16x32xf32>
    %c0_36 = arith.constant 0 : index
    %c0_37 = arith.constant 0 : index
    %83 = vector.load %arg14[%c0_36, %c0_37] : memref<1x32xf32, #tpu.memory_space<vmem>>, vector<1x32xf32>
    %84 = vector.shape_cast %83 : vector<1x32xf32> to vector<1x1x32xf32>
    %85 = vector.broadcast %84 : vector<1x1x32xf32> to vector<24x16x32xf32>
    %86 = arith.addf %82, %85 : vector<24x16x32xf32>
    %87 = vector.extract_strided_slice %81 {offsets = [0, 0, 0], sizes = [24, 16, 32], strides = [1, 1, 1]} : vector<24x16x96xf32> to vector<24x16x32xf32>
    %cst_38 = arith.constant 0.000000e+00 : f32
    %88 = vector.broadcast %cst_38 : f32 to vector<2x16x32xf32>
    %89 = vector.extract_strided_slice %87 {offsets = [0, 0, 0], sizes = [22, 16, 32], strides = [1, 1, 1]} : vector<24x16x32xf32> to vector<22x16x32xf32>
    %90 = tpu.concatenate %88, %89 in 0 : vector<2x16x32xf32>, vector<22x16x32xf32> -> vector<24x16x32xf32>
    %91 = arith.addf %86, %90 : vector<24x16x32xf32>
    %92 = vector.extract_strided_slice %81 {offsets = [0, 0, 64], sizes = [24, 16, 32], strides = [1, 1, 1]} : vector<24x16x96xf32> to vector<24x16x32xf32>
    %93 = vector.extract_strided_slice %92 {offsets = [2, 0, 0], sizes = [22, 16, 32], strides = [1, 1, 1]} : vector<24x16x32xf32> to vector<22x16x32xf32>
    %cst_39 = arith.constant 0.000000e+00 : f32
    %94 = vector.broadcast %cst_39 : f32 to vector<2x16x32xf32>
    %95 = tpu.concatenate %93, %94 in 0 : vector<22x16x32xf32>, vector<2x16x32xf32> -> vector<24x16x32xf32>
    %96 = arith.addf %91, %95 : vector<24x16x32xf32>
    %97 = vector.shape_cast %96 : vector<24x16x32xf32> to vector<384x32xf32>
    %c0_40 = arith.constant 0 : index
    %c0_41 = arith.constant 0 : index
    %98 = vector.load %arg15[%c0_40, %c0_41] : memref<32x64xf32, #tpu.memory_space<vmem>>, vector<32x64xf32>
    %cst_42 = arith.constant dense<0.000000e+00> : vector<384x64xf32>
    %99 = tpu.matmul %97, %98, %cst_42 {dimension_numbers = #tpu.dot_dimension_numbers<[1], [0], [0], [1], [0, 0, 1, 1], [], []>} : vector<384x32xf32>, vector<32x64xf32>, vector<384x64xf32> -> vector<384x64xf32>
    %c0_43 = arith.constant 0 : index
    %c0_44 = arith.constant 0 : index
    %100 = vector.load %arg16[%c0_43, %c0_44] : memref<1x64xf32, #tpu.memory_space<vmem>>, vector<1x64xf32>
    %101 = vector.broadcast %100 : vector<1x64xf32> to vector<384x64xf32>
    %102 = arith.addf %99, %101 : vector<384x64xf32>
    %103 = vector.extract_strided_slice %102 {offsets = [0, 0], sizes = [384, 32], strides = [1, 1]} : vector<384x64xf32> to vector<384x32xf32>
    %104 = vector.extract_strided_slice %102 {offsets = [0, 32], sizes = [384, 32], strides = [1, 1]} : vector<384x64xf32> to vector<384x32xf32>
    %105 = vector.shape_cast %104 : vector<384x32xf32> to vector<24x16x32xf32>
    "tpu.trace_start"() <{level = 10 : i32, message = "gkm,gmc->gkc"}> : () -> ()
    %cst_45 = arith.constant dense<0.000000e+00> : vector<24x48x32xf32>
    %106 = tpu.matmul %0, %105, %cst_45 {dimension_numbers = #tpu.dot_dimension_numbers<[2], [1], [1], [2], [0, 0, 0, 1, 1, 2], [0], [0]>} : vector<24x48x16xf32>, vector<24x16x32xf32>, vector<24x48x32xf32> -> vector<24x48x32xf32>
    "tpu.trace_stop"() : () -> ()
    %107 = vector.extract_strided_slice %106 {offsets = [0, 0, 0], sizes = [24, 16, 32], strides = [1, 1, 1]} : vector<24x48x32xf32> to vector<24x16x32xf32>
    %108 = vector.extract_strided_slice %106 {offsets = [0, 16, 0], sizes = [24, 16, 32], strides = [1, 1, 1]} : vector<24x48x32xf32> to vector<24x16x32xf32>
    %109 = vector.extract_strided_slice %106 {offsets = [0, 32, 0], sizes = [24, 16, 32], strides = [1, 1, 1]} : vector<24x48x32xf32> to vector<24x16x32xf32>
    %110 = tpu.concatenate %107, %108, %109 in 2 : vector<24x16x32xf32>, vector<24x16x32xf32>, vector<24x16x32xf32> -> vector<24x16x96xf32>
    %111 = vector.shape_cast %110 : vector<24x16x96xf32> to vector<384x96xf32>
    %c0_46 = arith.constant 0 : index
    %c0_47 = arith.constant 0 : index
    %112 = vector.load %arg17[%c0_46, %c0_47] : memref<96x64xf32, #tpu.memory_space<vmem>>, vector<96x64xf32>
    %cst_48 = arith.constant dense<0.000000e+00> : vector<384x64xf32>
    %113 = tpu.matmul %111, %112, %cst_48 {dimension_numbers = #tpu.dot_dimension_numbers<[1], [0], [0], [1], [0, 0, 1, 1], [], []>} : vector<384x96xf32>, vector<96x64xf32>, vector<384x64xf32> -> vector<384x64xf32>
    %c0_49 = arith.constant 0 : index
    %c0_50 = arith.constant 0 : index
    %114 = vector.load %arg18[%c0_49, %c0_50] : memref<1x64xf32, #tpu.memory_space<vmem>>, vector<1x64xf32>
    %115 = vector.broadcast %114 : vector<1x64xf32> to vector<384x64xf32>
    %116 = arith.addf %113, %115 : vector<384x64xf32>
    %117 = vector.extract_strided_slice %116 {offsets = [0, 0], sizes = [384, 32], strides = [1, 1]} : vector<384x64xf32> to vector<384x32xf32>
    %118 = arith.addf %117, %103 : vector<384x32xf32>
    %119 = vector.extract_strided_slice %116 {offsets = [0, 32], sizes = [384, 32], strides = [1, 1]} : vector<384x64xf32> to vector<384x32xf32>
    %120 = arith.negf %119 : vector<384x32xf32>
    %121 = math.exp %120 : vector<384x32xf32>
    %cst_51 = arith.constant 1.000000e+00 : f32
    %122 = vector.broadcast %cst_51 : f32 to vector<384x32xf32>
    %123 = arith.addf %122, %121 : vector<384x32xf32>
    %124 = arith.divf %122, %123 : vector<384x32xf32>
    %125 = arith.mulf %118, %124 : vector<384x32xf32>
    %c0_52 = arith.constant 0 : index
    %c0_53 = arith.constant 0 : index
    %126 = vector.load %arg19[%c0_52, %c0_53] : memref<32x96xf32, #tpu.memory_space<vmem>>, vector<32x96xf32>
    %cst_54 = arith.constant dense<0.000000e+00> : vector<384x96xf32>
    %127 = tpu.matmul %125, %126, %cst_54 {dimension_numbers = #tpu.dot_dimension_numbers<[1], [0], [0], [1], [0, 0, 1, 1], [], []>} : vector<384x32xf32>, vector<32x96xf32>, vector<384x96xf32> -> vector<384x96xf32>
    %128 = vector.shape_cast %127 : vector<384x96xf32> to vector<24x16x96xf32>
    %129 = vector.extract_strided_slice %128 {offsets = [0, 0, 32], sizes = [24, 16, 32], strides = [1, 1, 1]} : vector<24x16x96xf32> to vector<24x16x32xf32>
    %c0_55 = arith.constant 0 : index
    %c0_56 = arith.constant 0 : index
    %130 = vector.load %arg20[%c0_55, %c0_56] : memref<1x32xf32, #tpu.memory_space<vmem>>, vector<1x32xf32>
    %131 = vector.shape_cast %130 : vector<1x32xf32> to vector<1x1x32xf32>
    %132 = vector.broadcast %131 : vector<1x1x32xf32> to vector<24x16x32xf32>
    %133 = arith.addf %129, %132 : vector<24x16x32xf32>
    %134 = vector.extract_strided_slice %128 {offsets = [0, 0, 0], sizes = [24, 16, 32], strides = [1, 1, 1]} : vector<24x16x96xf32> to vector<24x16x32xf32>
    %cst_57 = arith.constant 0.000000e+00 : f32
    %135 = vector.broadcast %cst_57 : f32 to vector<2x16x32xf32>
    %136 = vector.extract_strided_slice %134 {offsets = [0, 0, 0], sizes = [22, 16, 32], strides = [1, 1, 1]} : vector<24x16x32xf32> to vector<22x16x32xf32>
    %137 = tpu.concatenate %135, %136 in 0 : vector<2x16x32xf32>, vector<22x16x32xf32> -> vector<24x16x32xf32>
    %138 = arith.addf %133, %137 : vector<24x16x32xf32>
    %139 = vector.extract_strided_slice %128 {offsets = [0, 0, 64], sizes = [24, 16, 32], strides = [1, 1, 1]} : vector<24x16x96xf32> to vector<24x16x32xf32>
    %140 = vector.extract_strided_slice %139 {offsets = [2, 0, 0], sizes = [22, 16, 32], strides = [1, 1, 1]} : vector<24x16x32xf32> to vector<22x16x32xf32>
    %cst_58 = arith.constant 0.000000e+00 : f32
    %141 = vector.broadcast %cst_58 : f32 to vector<2x16x32xf32>
    %142 = tpu.concatenate %140, %141 in 0 : vector<22x16x32xf32>, vector<2x16x32xf32> -> vector<24x16x32xf32>
    %143 = arith.addf %138, %142 : vector<24x16x32xf32>
    %144 = vector.shape_cast %143 : vector<24x16x32xf32> to vector<384x32xf32>
    %145 = vector.shape_cast %144 : vector<384x32xf32> to vector<12x32x32xf32>
    %cst_59 = arith.constant dense<0.000000e+00> : vector<32x32xf32>
    %146 = vector.multi_reduction <add>, %145, %cst_59 [0] : vector<12x32x32xf32> to vector<32x32xf32>
    %cst_60 = arith.constant 1.200000e+01 : f32
    %147 = vector.broadcast %cst_60 : f32 to vector<32x32xf32>
    %148 = arith.divf %146, %147 : vector<32x32xf32>
    %c0_61 = arith.constant 0 : index
    %c0_62 = arith.constant 0 : index
    %149 = vector.load %arg21[%c0_61, %c0_62] : memref<32x16xf32, #tpu.memory_space<vmem>>, vector<32x16xf32>
    %cst_63 = arith.constant dense<0.000000e+00> : vector<32x16xf32>
    %150 = tpu.matmul %148, %149, %cst_63 {dimension_numbers = #tpu.dot_dimension_numbers<[1], [0], [0], [1], [0, 0, 1, 1], [], []>} : vector<32x32xf32>, vector<32x16xf32>, vector<32x16xf32> -> vector<32x16xf32>
    %c0_64 = arith.constant 0 : index
    %c0_65 = arith.constant 0 : index
    %151 = vector.load %arg24[%c0_64, %c0_65] : memref<16x8xf32, #tpu.memory_space<vmem>>, vector<16x8xf32>
    %c0_66 = arith.constant 0 : index
    %c0_67 = arith.constant 0 : index
    %152 = vector.load %arg22[%c0_66, %c0_67] : memref<8x16xf32, #tpu.memory_space<vmem>>, vector<8x16xf32>
    %cst_68 = arith.constant dense<0.000000e+00> : vector<16x16xf32>
    %153 = tpu.matmul %151, %152, %cst_68 {dimension_numbers = #tpu.dot_dimension_numbers<[1], [0], [0], [1], [0, 0, 1, 1], [], []>} : vector<16x8xf32>, vector<8x16xf32>, vector<16x16xf32> -> vector<16x16xf32>
    %cst_69 = arith.constant dense<0.000000e+00> : vector<32x16xf32>
    %154 = tpu.matmul %150, %153, %cst_69 {dimension_numbers = #tpu.dot_dimension_numbers<[1], [1], [0], [0], [0, 0, 1, 0], [], []>} : vector<32x16xf32>, vector<16x16xf32>, vector<32x16xf32> -> vector<32x16xf32>
    %cst_70 = arith.constant 2.500000e-01 : f32
    %155 = vector.broadcast %cst_70 : f32 to vector<32x16xf32>
    %156 = arith.mulf %154, %155 : vector<32x16xf32>
    %cst_71 = arith.constant dense<0xFF800000> : vector<32xf32>
    %157 = vector.multi_reduction <maximumf>, %156, %cst_71 [1] : vector<32x16xf32> to vector<32xf32>
    %158 = vector.shape_cast %157 : vector<32xf32> to vector<32x1xf32>
    %159 = vector.broadcast %158 : vector<32x1xf32> to vector<32x16xf32>
    %160 = arith.subf %156, %159 : vector<32x16xf32>
    %161 = math.exp %160 : vector<32x16xf32>
    %cst_72 = arith.constant dense<0.000000e+00> : vector<32xf32>
    %162 = vector.multi_reduction <add>, %161, %cst_72 [1] : vector<32x16xf32> to vector<32xf32>
    %163 = vector.shape_cast %162 : vector<32xf32> to vector<32x1xf32>
    %164 = vector.broadcast %163 : vector<32x1xf32> to vector<32x16xf32>
    %165 = arith.divf %161, %164 : vector<32x16xf32>
    %c0_73 = arith.constant 0 : index
    %c0_74 = arith.constant 0 : index
    %166 = vector.load %arg23[%c0_73, %c0_74] : memref<16x1xf32, #tpu.memory_space<vmem>>, vector<16x1xf32>
    %cst_75 = arith.constant dense<0.000000e+00> : vector<32x1xf32>
    %167 = tpu.matmul %165, %166, %cst_75 {dimension_numbers = #tpu.dot_dimension_numbers<[1], [0], [0], [1], [0, 0, 1, 1], [], []>} : vector<32x16xf32>, vector<16x1xf32>, vector<32x1xf32> -> vector<32x1xf32>
    %168 = math.tanh %167 : vector<32x1xf32>
    %c0_76 = arith.constant 0 : index
    %c0_77 = arith.constant 0 : index
    %169 = vector.load %arg28[%c0_76, %c0_77] : memref<32x16xf32, #tpu.memory_space<vmem>>, vector<32x16xf32>
    tpu.vector_store %arg28[%c0_76, %c0_77], %165 {strides = array<i32>} : memref<32x16xf32, #tpu.memory_space<vmem>>, vector<32x16xf32>,
    %c0_78 = arith.constant 0 : index
    %c0_79 = arith.constant 0 : index
    %170 = vector.load %arg29[%c0_78, %c0_79] : memref<32x1xf32, #tpu.memory_space<vmem>>, vector<32x1xf32>
    tpu.vector_store %arg29[%c0_78, %c0_79], %168 {strides = array<i32>} : memref<32x1xf32, #tpu.memory_space<vmem>>, vector<32x1xf32>,
    %171 = vector.shape_cast %168 : vector<32x1xf32> to vector<1x32x1xf32>
    %cst_80 = arith.constant 1.000000e+00 : f32
    %172 = vector.broadcast %cst_80 : f32 to vector<1x32x1xf32>
    %173 = arith.addf %171, %172 : vector<1x32x1xf32>
    %174 = vector.broadcast %173 : vector<1x32x1xf32> to vector<12x32x32xf32>
    %175 = arith.mulf %145, %174 : vector<12x32x32xf32>
    %176 = vector.extract_strided_slice %175 {offsets = [0, 0, 0], sizes = [1, 32, 32], strides = [1, 1, 1]} : vector<12x32x32xf32> to vector<1x32x32xf32>
    %177 = vector.shape_cast %176 : vector<1x32x32xf32> to vector<32x32xf32>
    %178 = vector.extract_strided_slice %175 {offsets = [1, 0, 0], sizes = [1, 32, 32], strides = [1, 1, 1]} : vector<12x32x32xf32> to vector<1x32x32xf32>
    %179 = vector.shape_cast %178 : vector<1x32x32xf32> to vector<32x32xf32>
    %180 = vector.extract_strided_slice %175 {offsets = [2, 0, 0], sizes = [1, 32, 32], strides = [1, 1, 1]} : vector<12x32x32xf32> to vector<1x32x32xf32>
    %181 = vector.shape_cast %180 : vector<1x32x32xf32> to vector<32x32xf32>
    %182 = vector.extract_strided_slice %175 {offsets = [3, 0, 0], sizes = [1, 32, 32], strides = [1, 1, 1]} : vector<12x32x32xf32> to vector<1x32x32xf32>
    %183 = vector.shape_cast %182 : vector<1x32x32xf32> to vector<32x32xf32>
    %184 = vector.extract_strided_slice %175 {offsets = [4, 0, 0], sizes = [1, 32, 32], strides = [1, 1, 1]} : vector<12x32x32xf32> to vector<1x32x32xf32>
    %185 = vector.shape_cast %184 : vector<1x32x32xf32> to vector<32x32xf32>
    %186 = vector.extract_strided_slice %175 {offsets = [5, 0, 0], sizes = [1, 32, 32], strides = [1, 1, 1]} : vector<12x32x32xf32> to vector<1x32x32xf32>
    %187 = vector.shape_cast %186 : vector<1x32x32xf32> to vector<32x32xf32>
    %188 = vector.extract_strided_slice %175 {offsets = [6, 0, 0], sizes = [1, 32, 32], strides = [1, 1, 1]} : vector<12x32x32xf32> to vector<1x32x32xf32>
    %189 = vector.shape_cast %188 : vector<1x32x32xf32> to vector<32x32xf32>
    %190 = vector.extract_strided_slice %175 {offsets = [7, 0, 0], sizes = [1, 32, 32], strides = [1, 1, 1]} : vector<12x32x32xf32> to vector<1x32x32xf32>
    %191 = vector.shape_cast %190 : vector<1x32x32xf32> to vector<32x32xf32>
    %192 = vector.extract_strided_slice %175 {offsets = [8, 0, 0], sizes = [1, 32, 32], strides = [1, 1, 1]} : vector<12x32x32xf32> to vector<1x32x32xf32>
    %193 = vector.shape_cast %192 : vector<1x32x32xf32> to vector<32x32xf32>
    %194 = vector.extract_strided_slice %175 {offsets = [9, 0, 0], sizes = [1, 32, 32], strides = [1, 1, 1]} : vector<12x32x32xf32> to vector<1x32x32xf32>
    %195 = vector.shape_cast %194 : vector<1x32x32xf32> to vector<32x32xf32>
    %196 = vector.extract_strided_slice %175 {offsets = [10, 0, 0], sizes = [1, 32, 32], strides = [1, 1, 1]} : vector<12x32x32xf32> to vector<1x32x32xf32>
    %197 = vector.shape_cast %196 : vector<1x32x32xf32> to vector<32x32xf32>
    %198 = vector.extract_strided_slice %175 {offsets = [11, 0, 0], sizes = [1, 32, 32], strides = [1, 1, 1]} : vector<12x32x32xf32> to vector<1x32x32xf32>
    %199 = vector.shape_cast %198 : vector<1x32x32xf32> to vector<32x32xf32>
    %200 = tpu.concatenate %177, %179, %181, %183, %185, %187, %189, %191, %193, %195, %197, %199 in 1 : vector<32x32xf32>, vector<32x32xf32>, vector<32x32xf32>, vector<32x32xf32>, vector<32x32xf32>, vector<32x32xf32>, vector<32x32xf32>, vector<32x32xf32>, vector<32x32xf32>, vector<32x32xf32>, vector<32x32xf32>, vector<32x32xf32> -> vector<32x384xf32>
    %c0_81 = arith.constant 0 : index
    %c0_82 = arith.constant 0 : index
    %201 = vector.load %arg25[%c0_81, %c0_82] : memref<384x12xf32, #tpu.memory_space<vmem>>, vector<384x12xf32>
    %cst_83 = arith.constant dense<0.000000e+00> : vector<32x12xf32>
    %202 = tpu.matmul %200, %201, %cst_83 {dimension_numbers = #tpu.dot_dimension_numbers<[1], [0], [0], [1], [0, 0, 1, 1], [], []>} : vector<32x384xf32>, vector<384x12xf32>, vector<32x12xf32> -> vector<32x12xf32>
    %c0_84 = arith.constant 0 : index
    %c0_85 = arith.constant 0 : index
    %203 = vector.load %arg26[%c0_84, %c0_85] : memref<1x12xf32, #tpu.memory_space<vmem>>, vector<1x12xf32>
    %204 = vector.broadcast %203 : vector<1x12xf32> to vector<32x12xf32>
    %205 = arith.addf %202, %204 : vector<32x12xf32>
    %c0_86 = arith.constant 0 : index
    %c0_87 = arith.constant 0 : index
    %206 = vector.load %arg27[%c0_86, %c0_87] : memref<32x12xf32, #tpu.memory_space<vmem>>, vector<32x12xf32>
    tpu.vector_store %arg27[%c0_86, %c0_87], %205 {strides = array<i32>} : memref<32x12xf32, #tpu.memory_space<vmem>>, vector<32x12xf32>,
    return
  }
  func.func @transform_0(%arg0: i32) -> (i32, i32) {
    %c0_i32 = arith.constant 0 : i32
    %c0_i32_0 = arith.constant 0 : i32
    %c0_i32_1 = arith.constant 0 : i32
    return %c0_i32, %c0_i32_0 : i32, i32
  }
  func.func @transform_1(%arg0: i32) -> (i32, i32, i32) {
    %c0_i32 = arith.constant 0 : i32
    %c0_i32_0 = arith.constant 0 : i32
    %c0_i32_1 = arith.constant 0 : i32
    %c0_i32_2 = arith.constant 0 : i32
    return %c0_i32, %c0_i32_0, %c0_i32_1 : i32, i32, i32
  }
  func.func @transform_2(%arg0: i32) -> (i32, i32) {
    %c0_i32 = arith.constant 0 : i32
    %c0_i32_0 = arith.constant 0 : i32
    %c0_i32_1 = arith.constant 0 : i32
    return %c0_i32, %c0_i32_0 : i32, i32
  }
  func.func @transform_3(%arg0: i32) -> (i32, i32) {
    %c0_i32 = arith.constant 0 : i32
    %c0_i32_0 = arith.constant 0 : i32
    %c0_i32_1 = arith.constant 0 : i32
    return %c0_i32, %c0_i32_0 : i32, i32
  }
  func.func @transform_4(%arg0: i32) -> (i32, i32) {
    %c0_i32 = arith.constant 0 : i32
    %c0_i32_0 = arith.constant 0 : i32
    %c0_i32_1 = arith.constant 0 : i32
    return %c0_i32, %c0_i32_0 : i32, i32
  }
  func.func @transform_5(%arg0: i32) -> (i32, i32) {
    %c0_i32 = arith.constant 0 : i32
    %c0_i32_0 = arith.constant 0 : i32
    %c0_i32_1 = arith.constant 0 : i32
    return %c0_i32, %c0_i32_0 : i32, i32
  }
  func.func @transform_6(%arg0: i32) -> (i32, i32) {
    %c0_i32 = arith.constant 0 : i32
    %c0_i32_0 = arith.constant 0 : i32
    %c0_i32_1 = arith.constant 0 : i32
    return %c0_i32, %c0_i32_0 : i32, i32
  }
  func.func @transform_7(%arg0: i32) -> (i32, i32) {
    %c0_i32 = arith.constant 0 : i32
    %c0_i32_0 = arith.constant 0 : i32
    %c0_i32_1 = arith.constant 0 : i32
    return %c0_i32, %c0_i32_0 : i32, i32
  }
  func.func @transform_8(%arg0: i32) -> (i32, i32) {
    %c0_i32 = arith.constant 0 : i32
    %c0_i32_0 = arith.constant 0 : i32
    %c0_i32_1 = arith.constant 0 : i32
    return %c0_i32, %c0_i32_0 : i32, i32
  }
  func.func @transform_9(%arg0: i32) -> (i32, i32) {
    %c0_i32 = arith.constant 0 : i32
    %c0_i32_0 = arith.constant 0 : i32
    %c0_i32_1 = arith.constant 0 : i32
    return %c0_i32, %c0_i32_0 : i32, i32
  }
  func.func @transform_10(%arg0: i32) -> (i32, i32) {
    %c0_i32 = arith.constant 0 : i32
    %c0_i32_0 = arith.constant 0 : i32
    %c0_i32_1 = arith.constant 0 : i32
    return %c0_i32, %c0_i32_0 : i32, i32
  }
  func.func @transform_11(%arg0: i32) -> (i32, i32) {
    %c0_i32 = arith.constant 0 : i32
    %c0_i32_0 = arith.constant 0 : i32
    %c0_i32_1 = arith.constant 0 : i32
    return %c0_i32, %c0_i32_0 : i32, i32
  }
  func.func @transform_12(%arg0: i32) -> (i32, i32) {
    %c0_i32 = arith.constant 0 : i32
    %c0_i32_0 = arith.constant 0 : i32
    %c0_i32_1 = arith.constant 0 : i32
    return %c0_i32, %c0_i32_0 : i32, i32
  }
  func.func @transform_13(%arg0: i32) -> (i32, i32) {
    %c0_i32 = arith.constant 0 : i32
    %c0_i32_0 = arith.constant 0 : i32
    %c0_i32_1 = arith.constant 0 : i32
    return %c0_i32, %c0_i32_0 : i32, i32
  }
  func.func @transform_14(%arg0: i32) -> (i32, i32) {
    %c0_i32 = arith.constant 0 : i32
    %c0_i32_0 = arith.constant 0 : i32
    %c0_i32_1 = arith.constant 0 : i32
    return %c0_i32, %c0_i32_0 : i32, i32
  }
  func.func @transform_15(%arg0: i32) -> (i32, i32) {
    %c0_i32 = arith.constant 0 : i32
    %c0_i32_0 = arith.constant 0 : i32
    %c0_i32_1 = arith.constant 0 : i32
    return %c0_i32, %c0_i32_0 : i32, i32
  }
  func.func @transform_16(%arg0: i32) -> (i32, i32) {
    %c0_i32 = arith.constant 0 : i32
    %c0_i32_0 = arith.constant 0 : i32
    %c0_i32_1 = arith.constant 0 : i32
    return %c0_i32, %c0_i32_0 : i32, i32
  }
  func.func @transform_17(%arg0: i32) -> (i32, i32) {
    %c0_i32 = arith.constant 0 : i32
    %c0_i32_0 = arith.constant 0 : i32
    %c0_i32_1 = arith.constant 0 : i32
    return %c0_i32, %c0_i32_0 : i32, i32
  }
  func.func @transform_18(%arg0: i32) -> (i32, i32) {
    %c0_i32 = arith.constant 0 : i32
    %c0_i32_0 = arith.constant 0 : i32
    %c0_i32_1 = arith.constant 0 : i32
    return %c0_i32, %c0_i32_0 : i32, i32
  }
  func.func @transform_19(%arg0: i32) -> (i32, i32) {
    %c0_i32 = arith.constant 0 : i32
    %c0_i32_0 = arith.constant 0 : i32
    %c0_i32_1 = arith.constant 0 : i32
    return %c0_i32, %c0_i32_0 : i32, i32
  }
  func.func @transform_20(%arg0: i32) -> (i32, i32) {
    %c0_i32 = arith.constant 0 : i32
    %c0_i32_0 = arith.constant 0 : i32
    %c0_i32_1 = arith.constant 0 : i32
    return %c0_i32, %c0_i32_0 : i32, i32
  }
  func.func @transform_21(%arg0: i32) -> (i32, i32) {
    %c0_i32 = arith.constant 0 : i32
    %c0_i32_0 = arith.constant 0 : i32
    %c0_i32_1 = arith.constant 0 : i32
    return %c0_i32, %c0_i32_0 : i32, i32
  }
  func.func @transform_22(%arg0: i32) -> (i32, i32) {
    %c0_i32 = arith.constant 0 : i32
    %c0_i32_0 = arith.constant 0 : i32
    %c0_i32_1 = arith.constant 0 : i32
    return %c0_i32, %c0_i32_0 : i32, i32
  }
  func.func @transform_23(%arg0: i32) -> (i32, i32) {
    %c0_i32 = arith.constant 0 : i32
    %c0_i32_0 = arith.constant 0 : i32
    %c0_i32_1 = arith.constant 0 : i32
    return %c0_i32, %c0_i32_0 : i32, i32
  }
  func.func @transform_24(%arg0: i32) -> (i32, i32) {
    %c0_i32 = arith.constant 0 : i32
    %c0_i32_0 = arith.constant 0 : i32
    %c0_i32_1 = arith.constant 0 : i32
    return %c0_i32, %c0_i32_0 : i32, i32
  }
  func.func @transform_25(%arg0: i32) -> (i32, i32) {
    %c0_i32 = arith.constant 0 : i32
    %c0_i32_0 = arith.constant 0 : i32
    %c0_i32_1 = arith.constant 0 : i32
    return %c0_i32, %c0_i32_0 : i32, i32
  }
  func.func @transform_26(%arg0: i32) -> (i32, i32) {
    %c0_i32 = arith.constant 0 : i32
    %c0_i32_0 = arith.constant 0 : i32
    %c0_i32_1 = arith.constant 0 : i32
    return %c0_i32, %c0_i32_0 : i32, i32
  }
  func.func @transform_27(%arg0: i32) -> (i32, i32) {
    %c0_i32 = arith.constant 0 : i32
    %c0_i32_0 = arith.constant 0 : i32
    %c0_i32_1 = arith.constant 0 : i32
    return %c0_i32, %c0_i32_0 : i32, i32
  }
  func.func @transform_28(%arg0: i32) -> (i32, i32) {
    %c0_i32 = arith.constant 0 : i32
    %c0_i32_0 = arith.constant 0 : i32
    %c0_i32_1 = arith.constant 0 : i32
    return %c0_i32, %c0_i32_0 : i32, i32
  }
}

</mosaic_0001>

<llo_original>
// kernel: pstgcn_forward.1
$region0: #{pstgcn_forward.1}
  #allocation0 [shape = 'u32[]', space=smem, size = 0x4, offset = 0x4, fixed_abs, tag = 'smem constant byte address 0x4 - core index']
  #allocation1 [shape = 'u32[72,128]{1,0:T(1,128)}', space=vmem, size = 0x9000, scoped, tag = 'internal scratch']
  %s0 = inlined_call_operand.vmem [shape: f32[384,1], index: 0, kind: input, shape index: {}]
  %s1 = inlined_call_operand.vmem [shape: f32[24,48,16], index: 1, kind: input, shape index: {}]
  %s2 = inlined_call_operand.vmem [shape: f32[1,64], index: 2, kind: input, shape index: {}]
  %s3 = inlined_call_operand.vmem [shape: f32[1,64], index: 3, kind: input, shape index: {}]
  %s4 = inlined_call_operand.vmem [shape: f32[96,64], index: 4, kind: input, shape index: {}]
  %s5 = inlined_call_operand.vmem [shape: f32[1,64], index: 5, kind: input, shape index: {}]
  %s6 = inlined_call_operand.vmem [shape: f32[32,96], index: 6, kind: input, shape index: {}]
  %s7 = inlined_call_operand.vmem [shape: f32[1,32], index: 7, kind: input, shape index: {}]
  %s8 = inlined_call_operand.vmem [shape: f32[32,64], index: 8, kind: input, shape index: {}]
  %s9 = inlined_call_operand.vmem [shape: f32[1,64], index: 9, kind: input, shape index: {}]
  %s10 = inlined_call_operand.vmem [shape: f32[96,64], index: 10, kind: input, shape index: {}]
  %s11 = inlined_call_operand.vmem [shape: f32[1,64], index: 11, kind: input, shape index: {}]
  %s12 = inlined_call_operand.vmem [shape: f32[32,96], index: 12, kind: input, shape index: {}]
  %s13 = inlined_call_operand.vmem [shape: f32[1,32], index: 13, kind: input, shape index: {}]
  %s14 = inlined_call_operand.vmem [shape: f32[32,64], index: 14, kind: input, shape index: {}]
  %s15 = inlined_call_operand.vmem [shape: f32[1,64], index: 15, kind: input, shape index: {}]
  %s16 = inlined_call_operand.vmem [shape: f32[96,64], index: 16, kind: input, shape index: {}]
  %s17 = inlined_call_operand.vmem [shape: f32[1,64], index: 17, kind: input, shape index: {}]
  %s18 = inlined_call_operand.vmem [shape: f32[32,96], index: 18, kind: input, shape index: {}]
  %s19 = inlined_call_operand.vmem [shape: f32[1,32], index: 19, kind: input, shape index: {}]
  %s20 = inlined_call_operand.vmem [shape: f32[32,16], index: 20, kind: input, shape index: {}]
  %s21 = inlined_call_operand.vmem [shape: f32[8,16], index: 21, kind: input, shape index: {}]
  %s22 = inlined_call_operand.vmem [shape: f32[16,1], index: 22, kind: input, shape index: {}]
  %s23 = inlined_call_operand.vmem [shape: f32[16,8], index: 23, kind: input, shape index: {}]
  %s24 = inlined_call_operand.vmem [shape: f32[384,12], index: 24, kind: input, shape index: {}]
  %s25 = inlined_call_operand.vmem [shape: f32[1,12], index: 25, kind: input, shape index: {}]
  %s26 = inlined_call_operand.vmem [shape: f32[32,12], index: 26, kind: output, shape index: {0}]
  %s27 = inlined_call_operand.hbm [shape: f32[32,16], index: 27, kind: output, shape index: {1}]
  %s28 = inlined_call_operand.vmem [shape: f32[32,1], index: 28, kind: output, shape index: {2}]
  %29 = xla_tuple %s26, %s27, %s28
  %s30 = sld [smem:[#allocation0]]
  $region130: #{pstgcn_forward.1} parent=0
    _
  %s32 = ssub.s32 1, %s30
  %s33 = scalar_select 0, %s32, %s30
  $region1: #{pstgcn_forward.1} parent=0
    #allocation2 [shape = 'u8[16384]{0}', space=vmem, size = 0x4000, scoped, tag = 'output window, operand 1, single buffered']
    #allocation3 [shape = 's32[1]{0}', space=sflag, size = 0x4, scoped, tag = 'scoped memory for pstgcn_forward.1']
    %34 = vsyncpa [#allocation3], 0
    // Predicated region
    $region2: #{pstgcn_forward.1} parent=1 // pred_check
      _
    $region3: #{pstgcn_forward.1} parent=1 // pred_check_branch
      %36 = sbr.rel (0) target = $region5
    $region4: #{pstgcn_forward.1} parent=1 // pred_region
      _
    $region5: #{pstgcn_forward.1} parent=1 // pred_fallthru
      _
    // Predicated region
    $region6: #{pstgcn_forward.1} parent=1 // pred_check
      _
    $region7: #{pstgcn_forward.1} parent=1 // pred_check_branch
      %38 = sbr.rel (0) target = $region9
    $region8: #{pstgcn_forward.1} parent=1 // pred_region
      _
    $region9: #{pstgcn_forward.1} parent=1 // pred_fallthru
      _
    // Predicated region
    $region10: #{pstgcn_forward.1} parent=1 // pred_check
      _
    $region11: #{pstgcn_forward.1} parent=1 // pred_check_branch
      %40 = sbr.rel (0) target = $region13
    $region12: #{pstgcn_forward.1} parent=1 // pred_region
      _
    $region13: #{pstgcn_forward.1} parent=1 // pred_fallthru
      _
    // Predicated region
    $region14: #{pstgcn_forward.1} parent=1 // pred_check
      _
    $region15: #{pstgcn_forward.1} parent=1 // pred_check_branch
      %42 = sbr.rel (0) target = $region17
    $region16: #{pstgcn_forward.1} parent=1 // pred_region
      _
    $region17: #{pstgcn_forward.1} parent=1 // pred_fallthru
      _
    // Predicated region
    $region18: #{pstgcn_forward.1} parent=1 // pred_check
      _
    $region19: #{pstgcn_forward.1} parent=1 // pred_check_branch
      %44 = sbr.rel (0) target = $region21
    $region20: #{pstgcn_forward.1} parent=1 // pred_region
      _
    $region21: #{pstgcn_forward.1} parent=1 // pred_fallthru
      _
    // Predicated region
    $region22: #{pstgcn_forward.1} parent=1 // pred_check
      _
    $region23: #{pstgcn_forward.1} parent=1 // pred_check_branch
      %46 = sbr.rel (0) target = $region25
    $region24: #{pstgcn_forward.1} parent=1 // pred_region
      _
    $region25: #{pstgcn_forward.1} parent=1 // pred_fallthru
      _
    // Predicated region
    $region26: #{pstgcn_forward.1} parent=1 // pred_check
      _
    $region27: #{pstgcn_forward.1} parent=1 // pred_check_branch
      %48 = sbr.rel (0) target = $region29
    $region28: #{pstgcn_forward.1} parent=1 // pred_region
      _
    $region29: #{pstgcn_forward.1} parent=1 // pred_fallthru
      _
    // Predicated region
    $region30: #{pstgcn_forward.1} parent=1 // pred_check
      _
    $region31: #{pstgcn_forward.1} parent=1 // pred_check_branch
      %50 = sbr.rel (0) target = $region33
    $region32: #{pstgcn_forward.1} parent=1 // pred_region
      _
    $region33: #{pstgcn_forward.1} parent=1 // pred_fallthru
      _
    // Predicated region
    $region34: #{pstgcn_forward.1} parent=1 // pred_check
      _
    $region35: #{pstgcn_forward.1} parent=1 // pred_check_branch
      %52 = sbr.rel (0) target = $region37
    $region36: #{pstgcn_forward.1} parent=1 // pred_region
      _
    $region37: #{pstgcn_forward.1} parent=1 // pred_fallthru
      _
    // Predicated region
    $region38: #{pstgcn_forward.1} parent=1 // pred_check
      _
    $region39: #{pstgcn_forward.1} parent=1 // pred_check_branch
      %54 = sbr.rel (0) target = $region41
    $region40: #{pstgcn_forward.1} parent=1 // pred_region
      _
    $region41: #{pstgcn_forward.1} parent=1 // pred_fallthru
      _
    // Predicated region
    $region42: #{pstgcn_forward.1} parent=1 // pred_check
      _
    $region43: #{pstgcn_forward.1} parent=1 // pred_check_branch
      %56 = sbr.rel (0) target = $region45
    $region44: #{pstgcn_forward.1} parent=1 // pred_region
      _
    $region45: #{pstgcn_forward.1} parent=1 // pred_fallthru
      _
    // Predicated region
    $region46: #{pstgcn_forward.1} parent=1 // pred_check
      _
    $region47: #{pstgcn_forward.1} parent=1 // pred_check_branch
      %58 = sbr.rel (0) target = $region49
    $region48: #{pstgcn_forward.1} parent=1 // pred_region
      _
    $region49: #{pstgcn_forward.1} parent=1 // pred_fallthru
      _
    // Predicated region
    $region50: #{pstgcn_forward.1} parent=1 // pred_check
      _
    $region51: #{pstgcn_forward.1} parent=1 // pred_check_branch
      %60 = sbr.rel (0) target = $region53
    $region52: #{pstgcn_forward.1} parent=1 // pred_region
      _
    $region53: #{pstgcn_forward.1} parent=1 // pred_fallthru
      _
    // Predicated region
    $region54: #{pstgcn_forward.1} parent=1 // pred_check
      _
    $region55: #{pstgcn_forward.1} parent=1 // pred_check_branch
      %62 = sbr.rel (0) target = $region57
    $region56: #{pstgcn_forward.1} parent=1 // pred_region
      _
    $region57: #{pstgcn_forward.1} parent=1 // pred_fallthru
      _
    // Predicated region
    $region58: #{pstgcn_forward.1} parent=1 // pred_check
      _
    $region59: #{pstgcn_forward.1} parent=1 // pred_check_branch
      %64 = sbr.rel (0) target = $region61
    $region60: #{pstgcn_forward.1} parent=1 // pred_region
      _
    $region61: #{pstgcn_forward.1} parent=1 // pred_fallthru
      _
    // Predicated region
    $region62: #{pstgcn_forward.1} parent=1 // pred_check
      _
    $region63: #{pstgcn_forward.1} parent=1 // pred_check_branch
      %66 = sbr.rel (0) target = $region65
    $region64: #{pstgcn_forward.1} parent=1 // pred_region
      _
    $region65: #{pstgcn_forward.1} parent=1 // pred_fallthru
      _
    // Predicated region
    $region66: #{pstgcn_forward.1} parent=1 // pred_check
      _
    $region67: #{pstgcn_forward.1} parent=1 // pred_check_branch
      %68 = sbr.rel (0) target = $region69
    $region68: #{pstgcn_forward.1} parent=1 // pred_region
      _
    $region69: #{pstgcn_forward.1} parent=1 // pred_fallthru
      _
    // Predicated region
    $region70: #{pstgcn_forward.1} parent=1 // pred_check
      _
    $region71: #{pstgcn_forward.1} parent=1 // pred_check_branch
      %70 = sbr.rel (0) target = $region73
    $region72: #{pstgcn_forward.1} parent=1 // pred_region
      _
    $region73: #{pstgcn_forward.1} parent=1 // pred_fallthru
      _
    // Predicated region
    $region74: #{pstgcn_forward.1} parent=1 // pred_check
      _
    $region75: #{pstgcn_forward.1} parent=1 // pred_check_branch
      %72 = sbr.rel (0) target = $region77
    $region76: #{pstgcn_forward.1} parent=1 // pred_region
      _
    $region77: #{pstgcn_forward.1} parent=1 // pred_fallthru
      _
    // Predicated region
    $region78: #{pstgcn_forward.1} parent=1 // pred_check
      _
    $region79: #{pstgcn_forward.1} parent=1 // pred_check_branch
      %74 = sbr.rel (0) target = $region81
    $region80: #{pstgcn_forward.1} parent=1 // pred_region
      _
    $region81: #{pstgcn_forward.1} parent=1 // pred_fallthru
      _
    // Predicated region
    $region82: #{pstgcn_forward.1} parent=1 // pred_check
      _
    $region83: #{pstgcn_forward.1} parent=1 // pred_check_branch
      %76 = sbr.rel (0) target = $region85
    $region84: #{pstgcn_forward.1} parent=1 // pred_region
      _
    $region85: #{pstgcn_forward.1} parent=1 // pred_fallthru
      _
    // Predicated region
    $region86: #{pstgcn_forward.1} parent=1 // pred_check
      _
    $region87: #{pstgcn_forward.1} parent=1 // pred_check_branch
      %78 = sbr.rel (0) target = $region89
    $region88: #{pstgcn_forward.1} parent=1 // pred_region
      _
    $region89: #{pstgcn_forward.1} parent=1 // pred_fallthru
      _
    // Predicated region
    $region90: #{pstgcn_forward.1} parent=1 // pred_check
      _
    $region91: #{pstgcn_forward.1} parent=1 // pred_check_branch
      %80 = sbr.rel (0) target = $region93
    $region92: #{pstgcn_forward.1} parent=1 // pred_region
      _
    $region93: #{pstgcn_forward.1} parent=1 // pred_fallthru
      _
    // Predicated region
    $region94: #{pstgcn_forward.1} parent=1 // pred_check
      _
    $region95: #{pstgcn_forward.1} parent=1 // pred_check_branch
      %82 = sbr.rel (0) target = $region97
    $region96: #{pstgcn_forward.1} parent=1 // pred_region
      _
    $region97: #{pstgcn_forward.1} parent=1 // pred_fallthru
      _
    // Predicated region
    $region98: #{pstgcn_forward.1} parent=1 // pred_check
      _
    $region99: #{pstgcn_forward.1} parent=1 // pred_check_branch
      %84 = sbr.rel (0) target = $region101
    $region100: #{pstgcn_forward.1} parent=1 // pred_region
      _
    $region101: #{pstgcn_forward.1} parent=1 // pred_fallthru
      _
    // Predicated region
    $region102: #{pstgcn_forward.1} parent=1 // pred_check
      _
    $region103: #{pstgcn_forward.1} parent=1 // pred_check_branch
      %86 = sbr.rel (0) target = $region105
    $region104: #{pstgcn_forward.1} parent=1 // pred_region
      _
    $region105: #{pstgcn_forward.1} parent=1 // pred_fallthru
      _
    %v87 = vld [vmem:[%s1] sm:$0xff]
    %v88 = vld [vmem:[%s1 + $0x8] sm:$0xff]
    %v89 = vld [vmem:[%s1 + $0x10] sm:$0xff]
    %v90 = vld [vmem:[%s1 + $0x18] sm:$0xff]
    %v91 = vld [vmem:[%s1 + $0x20] sm:$0xff]
    %v92 = vld [vmem:[%s1 + $0x28] sm:$0xff]
    %v93 = vld [vmem:[%s1 + $0x30] sm:$0xff]
    %v94 = vld [vmem:[%s1 + $0x38] sm:$0xff]
    %v95 = vld [vmem:[%s1 + $0x40] sm:$0xff]
    %v96 = vld [vmem:[%s1 + $0x48] sm:$0xff]
    %v97 = vld [vmem:[%s1 + $0x50] sm:$0xff]
    %v98 = vld [vmem:[%s1 + $0x58] sm:$0xff]
    %v99 = vld [vmem:[%s1 + $0x60] sm:$0xff]
    %v100 = vld [vmem:[%s1 + $0x68] sm:$0xff]
    %v101 = vld [vmem:[%s1 + $0x70] sm:$0xff]
    %v102 = vld [vmem:[%s1 + $0x78] sm:$0xff]
    %v103 = vld [vmem:[%s1 + $0x80] sm:$0xff]
    %v104 = vld [vmem:[%s1 + $0x88] sm:$0xff]
    %v105 = vld [vmem:[%s1 + $0x90] sm:$0xff]
    %v106 = vld [vmem:[%s1 + $0x98] sm:$0xff]
    %v107 = vld [vmem:[%s1 + $0xa0] sm:$0xff]
    %v108 = vld [vmem:[%s1 + $0xa8] sm:$0xff]
    %v109 = vld [vmem:[%s1 + $0xb0] sm:$0xff]
    %v110 = vld [vmem:[%s1 + $0xb8] sm:$0xff]
    %v111 = vld [vmem:[%s1 + $0xc0] sm:$0xff]
    %v112 = vld [vmem:[%s1 + $0xc8] sm:$0xff]
    %v113 = vld [vmem:[%s1 + $0xd0] sm:$0xff]
    %v114 = vld [vmem:[%s1 + $0xd8] sm:$0xff]
    %v115 = vld [vmem:[%s1 + $0xe0] sm:$0xff]
    %v116 = vld [vmem:[%s1 + $0xe8] sm:$0xff]
    %v117 = vld [vmem:[%s1 + $0xf0] sm:$0xff]
    %v118 = vld [vmem:[%s1 + $0xf8] sm:$0xff]
    %v119 = vld [vmem:[%s1 + $0x100] sm:$0xff]
    %v120 = vld [vmem:[%s1 + $0x108] sm:$0xff]
    %v121 = vld [vmem:[%s1 + $0x110] sm:$0xff]
    %v122 = vld [vmem:[%s1 + $0x118] sm:$0xff]
    %v123 = vld [vmem:[%s1 + $0x120] sm:$0xff]
    %v124 = vld [vmem:[%s1 + $0x128] sm:$0xff]
    %v125 = vld [vmem:[%s1 + $0x130] sm:$0xff]
    %v126 = vld [vmem:[%s1 + $0x138] sm:$0xff]
    %v127 = vld [vmem:[%s1 + $0x140] sm:$0xff]
    %v128 = vld [vmem:[%s1 + $0x148] sm:$0xff]
    %v129 = vld [vmem:[%s1 + $0x150] sm:$0xff]
    %v130 = vld [vmem:[%s1 + $0x158] sm:$0xff]
    %v131 = vld [vmem:[%s1 + $0x160] sm:$0xff]
    %v132 = vld [vmem:[%s1 + $0x168] sm:$0xff]
    %v133 = vld [vmem:[%s1 + $0x170] sm:$0xff]
    %v134 = vld [vmem:[%s1 + $0x178] sm:$0xff]
    %v135 = vld [vmem:[%s1 + $0x180] sm:$0xff]
    %v136 = vld [vmem:[%s1 + $0x188] sm:$0xff]
    %v137 = vld [vmem:[%s1 + $0x190] sm:$0xff]
    %v138 = vld [vmem:[%s1 + $0x198] sm:$0xff]
    %v139 = vld [vmem:[%s1 + $0x1a0] sm:$0xff]
    %v140 = vld [vmem:[%s1 + $0x1a8] sm:$0xff]
    %v141 = vld [vmem:[%s1 + $0x1b0] sm:$0xff]
    %v142 = vld [vmem:[%s1 + $0x1b8] sm:$0xff]
    %v143 = vld [vmem:[%s1 + $0x1c0] sm:$0xff]
    %v144 = vld [vmem:[%s1 + $0x1c8] sm:$0xff]
    %v145 = vld [vmem:[%s1 + $0x1d0] sm:$0xff]
    %v146 = vld [vmem:[%s1 + $0x1d8] sm:$0xff]
    %v147 = vld [vmem:[%s1 + $0x1e0] sm:$0xff]
    %v148 = vld [vmem:[%s1 + $0x1e8] sm:$0xff]
    %v149 = vld [vmem:[%s1 + $0x1f0] sm:$0xff]
    %v150 = vld [vmem:[%s1 + $0x1f8] sm:$0xff]
    %v151 = vld [vmem:[%s1 + $0x200] sm:$0xff]
    %v152 = vld [vmem:[%s1 + $0x208] sm:$0xff]
    %v153 = vld [vmem:[%s1 + $0x210] sm:$0xff]
    %v154 = vld [vmem:[%s1 + $0x218] sm:$0xff]
    %v155 = vld [vmem:[%s1 + $0x220] sm:$0xff]
    %v156 = vld [vmem:[%s1 + $0x228] sm:$0xff]
    %v157 = vld [vmem:[%s1 + $0x230] sm:$0xff]
    %v158 = vld [vmem:[%s1 + $0x238] sm:$0xff]
    %v159 = vld [vmem:[%s1 + $0x240] sm:$0xff]
    %v160 = vld [vmem:[%s1 + $0x248] sm:$0xff]
    %v161 = vld [vmem:[%s1 + $0x250] sm:$0xff]
    %v162 = vld [vmem:[%s1 + $0x258] sm:$0xff]
    %v163 = vld [vmem:[%s1 + $0x260] sm:$0xff]
    %v164 = vld [vmem:[%s1 + $0x268] sm:$0xff]
    %v165 = vld [vmem:[%s1 + $0x270] sm:$0xff]
    %v166 = vld [vmem:[%s1 + $0x278] sm:$0xff]
    %v167 = vld [vmem:[%s1 + $0x280] sm:$0xff]
    %v168 = vld [vmem:[%s1 + $0x288] sm:$0xff]
    %v169 = vld [vmem:[%s1 + $0x290] sm:$0xff]
    %v170 = vld [vmem:[%s1 + $0x298] sm:$0xff]
    %v171 = vld [vmem:[%s1 + $0x2a0] sm:$0xff]
    %v172 = vld [vmem:[%s1 + $0x2a8] sm:$0xff]
    %v173 = vld [vmem:[%s1 + $0x2b0] sm:$0xff]
    %v174 = vld [vmem:[%s1 + $0x2b8] sm:$0xff]
    %v175 = vld [vmem:[%s1 + $0x2c0] sm:$0xff]
    %v176 = vld [vmem:[%s1 + $0x2c8] sm:$0xff]
    %v177 = vld [vmem:[%s1 + $0x2d0] sm:$0xff]
    %v178 = vld [vmem:[%s1 + $0x2d8] sm:$0xff]
    %v179 = vld [vmem:[%s1 + $0x2e0] sm:$0xff]
    %v180 = vld [vmem:[%s1 + $0x2e8] sm:$0xff]
    %v181 = vld [vmem:[%s1 + $0x2f0] sm:$0xff]
    %v182 = vld [vmem:[%s1 + $0x2f8] sm:$0xff]
    %v183 = vld [vmem:[%s1 + $0x300] sm:$0xff]
    %v184 = vld [vmem:[%s1 + $0x308] sm:$0xff]
    %v185 = vld [vmem:[%s1 + $0x310] sm:$0xff]
    %v186 = vld [vmem:[%s1 + $0x318] sm:$0xff]
    %v187 = vld [vmem:[%s1 + $0x320] sm:$0xff]
    %v188 = vld [vmem:[%s1 + $0x328] sm:$0xff]
    %v189 = vld [vmem:[%s1 + $0x330] sm:$0xff]
    %v190 = vld [vmem:[%s1 + $0x338] sm:$0xff]
    %v191 = vld [vmem:[%s1 + $0x340] sm:$0xff]
    %v192 = vld [vmem:[%s1 + $0x348] sm:$0xff]
    %v193 = vld [vmem:[%s1 + $0x350] sm:$0xff]
    %v194 = vld [vmem:[%s1 + $0x358] sm:$0xff]
    %v195 = vld [vmem:[%s1 + $0x360] sm:$0xff]
    %v196 = vld [vmem:[%s1 + $0x368] sm:$0xff]
    %v197 = vld [vmem:[%s1 + $0x370] sm:$0xff]
    %v198 = vld [vmem:[%s1 + $0x378] sm:$0xff]
    %v199 = vld [vmem:[%s1 + $0x380] sm:$0xff]
    %v200 = vld [vmem:[%s1 + $0x388] sm:$0xff]
    %v201 = vld [vmem:[%s1 + $0x390] sm:$0xff]
    %v202 = vld [vmem:[%s1 + $0x398] sm:$0xff]
    %v203 = vld [vmem:[%s1 + $0x3a0] sm:$0xff]
    %v204 = vld [vmem:[%s1 + $0x3a8] sm:$0xff]
    %v205 = vld [vmem:[%s1 + $0x3b0] sm:$0xff]
    %v206 = vld [vmem:[%s1 + $0x3b8] sm:$0xff]
    %v207 = vld [vmem:[%s1 + $0x3c0] sm:$0xff]
    %v208 = vld [vmem:[%s1 + $0x3c8] sm:$0xff]
    %v209 = vld [vmem:[%s1 + $0x3d0] sm:$0xff]
    %v210 = vld [vmem:[%s1 + $0x3d8] sm:$0xff]
    %v211 = vld [vmem:[%s1 + $0x3e0] sm:$0xff]
    %v212 = vld [vmem:[%s1 + $0x3e8] sm:$0xff]
    %v213 = vld [vmem:[%s1 + $0x3f0] sm:$0xff]
    %v214 = vld [vmem:[%s1 + $0x3f8] sm:$0xff]
    %v215 = vld [vmem:[%s1 + $0x400] sm:$0xff]
    %v216 = vld [vmem:[%s1 + $0x408] sm:$0xff]
    %v217 = vld [vmem:[%s1 + $0x410] sm:$0xff]
    %v218 = vld [vmem:[%s1 + $0x418] sm:$0xff]
    %v219 = vld [vmem:[%s1 + $0x420] sm:$0xff]
    %v220 = vld [vmem:[%s1 + $0x428] sm:$0xff]
    %v221 = vld [vmem:[%s1 + $0x430] sm:$0xff]
    %v222 = vld [vmem:[%s1 + $0x438] sm:$0xff]
    %v223 = vld [vmem:[%s1 + $0x440] sm:$0xff]
    %v224 = vld [vmem:[%s1 + $0x448] sm:$0xff]
    %v225 = vld [vmem:[%s1 + $0x450] sm:$0xff]
    %v226 = vld [vmem:[%s1 + $0x458] sm:$0xff]
    %v227 = vld [vmem:[%s1 + $0x460] sm:$0xff]
    %v228 = vld [vmem:[%s1 + $0x468] sm:$0xff]
    %v229 = vld [vmem:[%s1 + $0x470] sm:$0xff]
    %v230 = vld [vmem:[%s1 + $0x478] sm:$0xff]
    %v231 = vld [vmem:[%s0] sm:$0xff]
    %v232 = vld [vmem:[%s0 + $0x8] sm:$0xff]
    %v233 = vld [vmem:[%s0 + $0x10] sm:$0xff]
    %v234 = vld [vmem:[%s0 + $0x18] sm:$0xff]
    %v235 = vld [vmem:[%s0 + $0x20] sm:$0xff]
    %v236 = vld [vmem:[%s0 + $0x28] sm:$0xff]
    %v237 = vld [vmem:[%s0 + $0x30] sm:$0xff]
    %v238 = vld [vmem:[%s0 + $0x38] sm:$0xff]
    %v239 = vld [vmem:[%s0 + $0x40] sm:$0xff]
    %v240 = vld [vmem:[%s0 + $0x48] sm:$0xff]
    %v241 = vld [vmem:[%s0 + $0x50] sm:$0xff]
    %v242 = vld [vmem:[%s0 + $0x58] sm:$0xff]
    %v243 = vld [vmem:[%s0 + $0x60] sm:$0xff]
    %v244 = vld [vmem:[%s0 + $0x68] sm:$0xff]
    %v245 = vld [vmem:[%s0 + $0x70] sm:$0xff]
    %v246 = vld [vmem:[%s0 + $0x78] sm:$0xff]
    %v247 = vld [vmem:[%s0 + $0x80] sm:$0xff]
    %v248 = vld [vmem:[%s0 + $0x88] sm:$0xff]
    %v249 = vld [vmem:[%s0 + $0x90] sm:$0xff]
    %v250 = vld [vmem:[%s0 + $0x98] sm:$0xff]
    %v251 = vld [vmem:[%s0 + $0xa0] sm:$0xff]
    %v252 = vld [vmem:[%s0 + $0xa8] sm:$0xff]
    %v253 = vld [vmem:[%s0 + $0xb0] sm:$0xff]
    %v254 = vld [vmem:[%s0 + $0xb8] sm:$0xff]
    %v255 = vld [vmem:[%s0 + $0xc0] sm:$0xff]
    %v256 = vld [vmem:[%s0 + $0xc8] sm:$0xff]
    %v257 = vld [vmem:[%s0 + $0xd0] sm:$0xff]
    %v258 = vld [vmem:[%s0 + $0xd8] sm:$0xff]
    %v259 = vld [vmem:[%s0 + $0xe0] sm:$0xff]
    %v260 = vld [vmem:[%s0 + $0xe8] sm:$0xff]
    %v261 = vld [vmem:[%s0 + $0xf0] sm:$0xff]
    %v262 = vld [vmem:[%s0 + $0xf8] sm:$0xff]
    %v263 = vld [vmem:[%s0 + $0x100] sm:$0xff]
    %v264 = vld [vmem:[%s0 + $0x108] sm:$0xff]
    %v265 = vld [vmem:[%s0 + $0x110] sm:$0xff]
    %v266 = vld [vmem:[%s0 + $0x118] sm:$0xff]
    %v267 = vld [vmem:[%s0 + $0x120] sm:$0xff]
    %v268 = vld [vmem:[%s0 + $0x128] sm:$0xff]
    %v269 = vld [vmem:[%s0 + $0x130] sm:$0xff]
    %v270 = vld [vmem:[%s0 + $0x138] sm:$0xff]
    %v271 = vld [vmem:[%s0 + $0x140] sm:$0xff]
    %v272 = vld [vmem:[%s0 + $0x148] sm:$0xff]
    %v273 = vld [vmem:[%s0 + $0x150] sm:$0xff]
    %v274 = vld [vmem:[%s0 + $0x158] sm:$0xff]
    %v275 = vld [vmem:[%s0 + $0x160] sm:$0xff]
    %v276 = vld [vmem:[%s0 + $0x168] sm:$0xff]
    %v277 = vld [vmem:[%s0 + $0x170] sm:$0xff]
    %v278 = vld [vmem:[%s0 + $0x178] sm:$0xff]
    %v279 = vld [vmem:[%s2] sm:$0x1]
    %281 = vset.pattern.permute.xlu0 0
    %282 = vperm.xlu0 %281, %v231
    %v283 = vpop.permute.xlu0 %282
    %286 = vset.pattern.permute.xlu0 0
    %287 = vperm.xlu0 %286, %v232
    %v288 = vpop.permute.xlu0 %287
    %291 = vset.pattern.permute.xlu0 0
    %292 = vperm.xlu0 %291, %v233
    %v293 = vpop.permute.xlu0 %292
    %296 = vset.pattern.permute.xlu0 0
    %297 = vperm.xlu0 %296, %v234
    %v298 = vpop.permute.xlu0 %297
    %301 = vset.pattern.permute.xlu0 0
    %302 = vperm.xlu0 %301, %v235
    %v303 = vpop.permute.xlu0 %302
    %306 = vset.pattern.permute.xlu0 0
    %307 = vperm.xlu0 %306, %v236
    %v308 = vpop.permute.xlu0 %307
    %311 = vset.pattern.permute.xlu0 0
    %312 = vperm.xlu0 %311, %v237
    %v313 = vpop.permute.xlu0 %312
    %316 = vset.pattern.permute.xlu0 0
    %317 = vperm.xlu0 %316, %v238
    %v318 = vpop.permute.xlu0 %317
    %321 = vset.pattern.permute.xlu0 0
    %322 = vperm.xlu0 %321, %v239
    %v323 = vpop.permute.xlu0 %322
    %326 = vset.pattern.permute.xlu0 0
    %327 = vperm.xlu0 %326, %v240
    %v328 = vpop.permute.xlu0 %327
    %331 = vset.pattern.permute.xlu0 0
    %332 = vperm.xlu0 %331, %v241
    %v333 = vpop.permute.xlu0 %332
    %336 = vset.pattern.permute.xlu0 0
    %337 = vperm.xlu0 %336, %v242
    %v338 = vpop.permute.xlu0 %337
    %341 = vset.pattern.permute.xlu0 0
    %342 = vperm.xlu0 %341, %v243
    %v343 = vpop.permute.xlu0 %342
    %346 = vset.pattern.permute.xlu0 0
    %347 = vperm.xlu0 %346, %v244
    %v348 = vpop.permute.xlu0 %347
    %351 = vset.pattern.permute.xlu0 0
    %352 = vperm.xlu0 %351, %v245
    %v353 = vpop.permute.xlu0 %352
    %356 = vset.pattern.permute.xlu0 0
    %357 = vperm.xlu0 %356, %v246
    %v358 = vpop.permute.xlu0 %357
    %361 = vset.pattern.permute.xlu0 0
    %362 = vperm.xlu0 %361, %v247
    %v363 = vpop.permute.xlu0 %362
    %366 = vset.pattern.permute.xlu0 0
    %367 = vperm.xlu0 %366, %v248
    %v368 = vpop.permute.xlu0 %367
    %371 = vset.pattern.permute.xlu0 0
    %372 = vperm.xlu0 %371, %v249
    %v373 = vpop.permute.xlu0 %372
    %376 = vset.pattern.permute.xlu0 0
    %377 = vperm.xlu0 %376, %v250
    %v378 = vpop.permute.xlu0 %377
    %381 = vset.pattern.permute.xlu0 0
    %382 = vperm.xlu0 %381, %v251
    %v383 = vpop.permute.xlu0 %382
    %386 = vset.pattern.permute.xlu0 0
    %387 = vperm.xlu0 %386, %v252
    %v388 = vpop.permute.xlu0 %387
    %391 = vset.pattern.permute.xlu0 0
    %392 = vperm.xlu0 %391, %v253
    %v393 = vpop.permute.xlu0 %392
    %396 = vset.pattern.permute.xlu0 0
    %397 = vperm.xlu0 %396, %v254
    %v398 = vpop.permute.xlu0 %397
    %401 = vset.pattern.permute.xlu0 0
    %402 = vperm.xlu0 %401, %v255
    %v403 = vpop.permute.xlu0 %402
    %406 = vset.pattern.permute.xlu0 0
    %407 = vperm.xlu0 %406, %v256
    %v408 = vpop.permute.xlu0 %407
    %411 = vset.pattern.permute.xlu0 0
    %412 = vperm.xlu0 %411, %v257
    %v413 = vpop.permute.xlu0 %412
    %416 = vset.pattern.permute.xlu0 0
    %417 = vperm.xlu0 %416, %v258
    %v418 = vpop.permute.xlu0 %417
    %421 = vset.pattern.permute.xlu0 0
    %422 = vperm.xlu0 %421, %v259
    %v423 = vpop.permute.xlu0 %422
    %426 = vset.pattern.permute.xlu0 0
    %427 = vperm.xlu0 %426, %v260
    %v428 = vpop.permute.xlu0 %427
    %431 = vset.pattern.permute.xlu0 0
    %432 = vperm.xlu0 %431, %v261
    %v433 = vpop.permute.xlu0 %432
    %436 = vset.pattern.permute.xlu0 0
    %437 = vperm.xlu0 %436, %v262
    %v438 = vpop.permute.xlu0 %437
    %441 = vset.pattern.permute.xlu0 0
    %442 = vperm.xlu0 %441, %v263
    %v443 = vpop.permute.xlu0 %442
    %446 = vset.pattern.permute.xlu0 0
    %447 = vperm.xlu0 %446, %v264
    %v448 = vpop.permute.xlu0 %447
    %451 = vset.pattern.permute.xlu0 0
    %452 = vperm.xlu0 %451, %v265
    %v453 = vpop.permute.xlu0 %452
    %456 = vset.pattern.permute.xlu0 0
    %457 = vperm.xlu0 %456, %v266
    %v458 = vpop.permute.xlu0 %457
    %461 = vset.pattern.permute.xlu0 0
    %462 = vperm.xlu0 %461, %v267
    %v463 = vpop.permute.xlu0 %462
    %466 = vset.pattern.permute.xlu0 0
    %467 = vperm.xlu0 %466, %v268
    %v468 = vpop.permute.xlu0 %467
    %471 = vset.pattern.permute.xlu0 0
    %472 = vperm.xlu0 %471, %v269
    %v473 = vpop.permute.xlu0 %472
    %476 = vset.pattern.permute.xlu0 0
    %477 = vperm.xlu0 %476, %v270
    %v478 = vpop.permute.xlu0 %477
    %481 = vset.pattern.permute.xlu0 0
    %482 = vperm.xlu0 %481, %v271
    %v483 = vpop.permute.xlu0 %482
    %486 = vset.pattern.permute.xlu0 0
    %487 = vperm.xlu0 %486, %v272
    %v488 = vpop.permute.xlu0 %487
    %491 = vset.pattern.permute.xlu0 0
    %492 = vperm.xlu0 %491, %v273
    %v493 = vpop.permute.xlu0 %492
    %496 = vset.pattern.permute.xlu0 0
    %497 = vperm.xlu0 %496, %v274
    %v498 = vpop.permute.xlu0 %497
    %501 = vset.pattern.permute.xlu0 0
    %502 = vperm.xlu0 %501, %v275
    %v503 = vpop.permute.xlu0 %502
    %506 = vset.pattern.permute.xlu0 0
    %507 = vperm.xlu0 %506, %v276
    %v508 = vpop.permute.xlu0 %507
    %511 = vset.pattern.permute.xlu0 0
    %512 = vperm.xlu0 %511, %v277
    %v513 = vpop.permute.xlu0 %512
    %516 = vset.pattern.permute.xlu0 0
    %517 = vperm.xlu0 %516, %v278
    %v518 = vpop.permute.xlu0 %517
    %v521 = vperm.slane %v279, 0
    %v523 = vmul.f32 %v283, %v521
    %v524 = vmul.f32 %v288, %v521
    %v525 = vmul.f32 %v293, %v521
    %v526 = vmul.f32 %v298, %v521
    %v527 = vmul.f32 %v303, %v521
    %v528 = vmul.f32 %v308, %v521
    %v529 = vmul.f32 %v313, %v521
    %v530 = vmul.f32 %v318, %v521
    %v531 = vmul.f32 %v323, %v521
    %v532 = vmul.f32 %v328, %v521
    %v533 = vmul.f32 %v333, %v521
    %v534 = vmul.f32 %v338, %v521
    %v535 = vmul.f32 %v343, %v521
    %v536 = vmul.f32 %v348, %v521
    %v537 = vmul.f32 %v353, %v521
    %v538 = vmul.f32 %v358, %v521
    %v539 = vmul.f32 %v363, %v521
    %v540 = vmul.f32 %v368, %v521
    %v541 = vmul.f32 %v373, %v521
    %v542 = vmul.f32 %v378, %v521
    %v543 = vmul.f32 %v383, %v521
    %v544 = vmul.f32 %v388, %v521
    %v545 = vmul.f32 %v393, %v521
    %v546 = vmul.f32 %v398, %v521
    %v547 = vmul.f32 %v403, %v521
    %v548 = vmul.f32 %v408, %v521
    %v549 = vmul.f32 %v413, %v521
    %v550 = vmul.f32 %v418, %v521
    %v551 = vmul.f32 %v423, %v521
    %v552 = vmul.f32 %v428, %v521
    %v553 = vmul.f32 %v433, %v521
    %v554 = vmul.f32 %v438, %v521
    %v555 = vmul.f32 %v443, %v521
    %v556 = vmul.f32 %v448, %v521
    %v557 = vmul.f32 %v453, %v521
    %v558 = vmul.f32 %v458, %v521
    %v559 = vmul.f32 %v463, %v521
    %v560 = vmul.f32 %v468, %v521
    %v561 = vmul.f32 %v473, %v521
    %v562 = vmul.f32 %v478, %v521
    %v563 = vmul.f32 %v483, %v521
    %v564 = vmul.f32 %v488, %v521
    %v565 = vmul.f32 %v493, %v521
    %v566 = vmul.f32 %v498, %v521
    %v567 = vmul.f32 %v503, %v521
    %v568 = vmul.f32 %v508, %v521
    %v569 = vmul.f32 %v513, %v521
    %v570 = vmul.f32 %v518, %v521
    %v571 = vld [vmem:[%s3] sm:$0x1]
    %v573 = vperm.slane %v571, 0
    %v575 = vadd.f32 %v523, %v573
    %v576 = vadd.f32 %v524, %v573
    %v577 = vadd.f32 %v525, %v573
    %v578 = vadd.f32 %v526, %v573
    %v579 = vadd.f32 %v527, %v573
    %v580 = vadd.f32 %v528, %v573
    %v581 = vadd.f32 %v529, %v573
    %v582 = vadd.f32 %v530, %v573
    %v583 = vadd.f32 %v531, %v573
    %v584 = vadd.f32 %v532, %v573
    %v585 = vadd.f32 %v533, %v573
    %v586 = vadd.f32 %v534, %v573
    %v587 = vadd.f32 %v535, %v573
    %v588 = vadd.f32 %v536, %v573
    %v589 = vadd.f32 %v537, %v573
    %v590 = vadd.f32 %v538, %v573
    %v591 = vadd.f32 %v539, %v573
    %v592 = vadd.f32 %v540, %v573
    %v593 = vadd.f32 %v541, %v573
    %v594 = vadd.f32 %v542, %v573
    %v595 = vadd.f32 %v543, %v573
    %v596 = vadd.f32 %v544, %v573
    %v597 = vadd.f32 %v545, %v573
    %v598 = vadd.f32 %v546, %v573
    %v599 = vadd.f32 %v547, %v573
    %v600 = vadd.f32 %v548, %v573
    %v601 = vadd.f32 %v549, %v573
    %v602 = vadd.f32 %v550, %v573
    %v603 = vadd.f32 %v551, %v573
    %v604 = vadd.f32 %v552, %v573
    %v605 = vadd.f32 %v553, %v573
    %v606 = vadd.f32 %v554, %v573
    %v607 = vadd.f32 %v555, %v573
    %v608 = vadd.f32 %v556, %v573
    %v609 = vadd.f32 %v557, %v573
    %v610 = vadd.f32 %v558, %v573
    %v611 = vadd.f32 %v559, %v573
    %v612 = vadd.f32 %v560, %v573
    %v613 = vadd.f32 %v561, %v573
    %v614 = vadd.f32 %v562, %v573
    %v615 = vadd.f32 %v563, %v573
    %v616 = vadd.f32 %v564, %v573
    %v617 = vadd.f32 %v565, %v573
    %v618 = vadd.f32 %v566, %v573
    %v619 = vadd.f32 %v567, %v573
    %v620 = vadd.f32 %v568, %v573
    %v621 = vadd.f32 %v569, %v573
    %v622 = vadd.f32 %v570, %v573
    %625 = vrot.lane.b32.xlu0 %v575, 96
    %v626 = vpop.permute.xlu0 %625
    %627 = vrot.lane.b32.xlu0 %v576, 96
    %v628 = vpop.permute.xlu0 %627
    %vm631 = vcmask 130048
    %v633 = vsel %vm631, %v87, 0
    %v636 = vsel %vm631, %v88, 0
    %v639 = vsel %vm631, %v89, 0
    %v642 = vsel %vm631, %v90, 0
    %v645 = vsel %vm631, %v91, 0
    %v648 = vsel %vm631, %v92, 0
    %650 = vmatpush.msra.mxu0 0.0
    %651 = vmatpush.msra.mxu0 0.0
    %652 = vmatpush.msra.mxu0 0.0
    %653 = vmatpush.msra.mxu0 0.0
    %654 = vmatpush.msra.mxu0 0.0
    %655 = vmatpush.msra.mxu0 0.0
    %656 = vmatpush.msra.mxu0 0.0
    %657 = vmatpush.msra.mxu0 0.0
    %658 = vmatpush.msra.mxu0 0.0
    %659 = vmatpush.msra.mxu0 0.0
    %660 = vmatpush.msra.mxu0 0.0
    %661 = vmatpush.msra.mxu0 0.0
    %662 = vmatpush.msra.mxu0 0.0
    %663 = vmatpush.msra.mxu0 0.0
    %664 = vmatpush.msra.mxu0 %v628
    %665 = vmatpush.msra.mxu0 %v626
    %666 = vmatmul.f32.gmra.mxu0 %v633
    %v667 = vpop.f32.mrf.mxu0
    %v668 = vadd.f32 0.0, %v667
    %669 = vmatmul.f32.gmra.mxu0 %v636
    %v670 = vpop.f32.mrf.mxu0
    %v671 = vadd.f32 0.0, %v670
    %672 = vmatmul.f32.gmra.mxu0 %v639
    %v673 = vpop.f32.mrf.mxu0
    %v674 = vadd.f32 0.0, %v673
    %675 = vmatmul.f32.gmra.mxu0 %v642
    %v676 = vpop.f32.mrf.mxu0
    %v677 = vadd.f32 0.0, %v676
    %678 = vmatmul.f32.gmra.mxu0 %v645
    %v679 = vpop.f32.mrf.mxu0
    %v680 = vadd.f32 0.0, %v679
    %681 = vmatmul.f32.gmra.mxu0 %v648
    %v682 = vpop.f32.mrf.mxu0
    %v683 = vadd.f32 0.0, %v682
    %684 = vdwg.mxu0
    %687 = vrot.lane.b32.xlu0 %v577, 96
    %v688 = vpop.permute.xlu0 %687
    %689 = vrot.lane.b32.xlu0 %v578, 96
    %v690 = vpop.permute.xlu0 %689
    %v694 = vsel %vm631, %v93, 0
    %v697 = vsel %vm631, %v94, 0
    %v700 = vsel %vm631, %v95, 0
    %v703 = vsel %vm631, %v96, 0
    %v706 = vsel %vm631, %v97, 0
    %v709 = vsel %vm631, %v98, 0
    %711 = vmatpush.msra.mxu0 0.0
    %712 = vmatpush.msra.mxu0 0.0
    %713 = vmatpush.msra.mxu0 0.0
    %714 = vmatpush.msra.mxu0 0.0
    %715 = vmatpush.msra.mxu0 0.0
    %716 = vmatpush.msra.mxu0 0.0
    %717 = vmatpush.msra.mxu0 0.0
    %718 = vmatpush.msra.mxu0 0.0
    %719 = vmatpush.msra.mxu0 0.0
    %720 = vmatpush.msra.mxu0 0.0
    %721 = vmatpush.msra.mxu0 0.0
    %722 = vmatpush.msra.mxu0 0.0
    %723 = vmatpush.msra.mxu0 0.0
    %724 = vmatpush.msra.mxu0 0.0
    %725 = vmatpush.msra.mxu0 %v690
    %726 = vmatpush.msra.mxu0 %v688
    %727 = vmatmul.f32.gmra.mxu0 %v694
    %v728 = vpop.f32.mrf.mxu0
    %v729 = vadd.f32 0.0, %v728
    %730 = vmatmul.f32.gmra.mxu0 %v697
    %v731 = vpop.f32.mrf.mxu0
    %v732 = vadd.f32 0.0, %v731
    %733 = vmatmul.f32.gmra.mxu0 %v700
    %v734 = vpop.f32.mrf.mxu0
    %v735 = vadd.f32 0.0, %v734
    %736 = vmatmul.f32.gmra.mxu0 %v703
    %v737 = vpop.f32.mrf.mxu0
    %v738 = vadd.f32 0.0, %v737
    %739 = vmatmul.f32.gmra.mxu0 %v706
    %v740 = vpop.f32.mrf.mxu0
    %v741 = vadd.f32 0.0, %v740
    %742 = vmatmul.f32.gmra.mxu0 %v709
    %v743 = vpop.f32.mrf.mxu0
    %v744 = vadd.f32 0.0, %v743
    %745 = vdwg.mxu0
    %748 = vrot.lane.b32.xlu0 %v579, 96
    %v749 = vpop.permute.xlu0 %748
    %750 = vrot.lane.b32.xlu0 %v580, 96
    %v751 = vpop.permute.xlu0 %750
    %v755 = vsel %vm631, %v99, 0
    %v758 = vsel %vm631, %v100, 0
    %v761 = vsel %vm631, %v101, 0
    %v764 = vsel %vm631, %v102, 0
    %v767 = vsel %vm631, %v103, 0
    %v770 = vsel %vm631, %v104, 0
    %772 = vmatpush.msra.mxu0 0.0
    %773 = vmatpush.msra.mxu0 0.0
    %774 = vmatpush.msra.mxu0 0.0
    %775 = vmatpush.msra.mxu0 0.0
    %776 = vmatpush.msra.mxu0 0.0
    %777 = vmatpush.msra.mxu0 0.0
    %778 = vmatpush.msra.mxu0 0.0
    %779 = vmatpush.msra.mxu0 0.0
    %780 = vmatpush.msra.mxu0 0.0
    %781 = vmatpush.msra.mxu0 0.0
    %782 = vmatpush.msra.mxu0 0.0
    %783 = vmatpush.msra.mxu0 0.0
    %784 = vmatpush.msra.mxu0 0.0
    %785 = vmatpush.msra.mxu0 0.0
    %786 = vmatpush.msra.mxu0 %v751
    %787 = vmatpush.msra.mxu0 %v749
    %788 = vmatmul.f32.gmra.mxu0 %v755
    %v789 = vpop.f32.mrf.mxu0
    %v790 = vadd.f32 0.0, %v789
    %791 = vmatmul.f32.gmra.mxu0 %v758
    %v792 = vpop.f32.mrf.mxu0
    %v793 = vadd.f32 0.0, %v792
    %794 = vmatmul.f32.gmra.mxu0 %v761
    %v795 = vpop.f32.mrf.mxu0
    %v796 = vadd.f32 0.0, %v795
    %797 = vmatmul.f32.gmra.mxu0 %v764
    %v798 = vpop.f32.mrf.mxu0
    %v799 = vadd.f32 0.0, %v798
    %800 = vmatmul.f32.gmra.mxu0 %v767
    %v801 = vpop.f32.mrf.mxu0
    %v802 = vadd.f32 0.0, %v801
    %803 = vmatmul.f32.gmra.mxu0 %v770
    %v804 = vpop.f32.mrf.mxu0
    %v805 = vadd.f32 0.0, %v804
    %806 = vdwg.mxu0
    %809 = vrot.lane.b32.xlu0 %v581, 96
    %v810 = vpop.permute.xlu0 %809
    %811 = vrot.lane.b32.xlu0 %v582, 96
    %v812 = vpop.permute.xlu0 %811
    %v816 = vsel %vm631, %v105, 0
    %v819 = vsel %vm631, %v106, 0
    %v822 = vsel %vm631, %v107, 0
    %v825 = vsel %vm631, %v108, 0
    %v828 = vsel %vm631, %v109, 0
    %v831 = vsel %vm631, %v110, 0
    %833 = vmatpush.msra.mxu0 0.0
    %834 = vmatpush.msra.mxu0 0.0
    %835 = vmatpush.msra.mxu0 0.0
    %836 = vmatpush.msra.mxu0 0.0
    %837 = vmatpush.msra.mxu0 0.0
    %838 = vmatpush.msra.mxu0 0.0
    %839 = vmatpush.msra.mxu0 0.0
    %840 = vmatpush.msra.mxu0 0.0
    %841 = vmatpush.msra.mxu0 0.0
    %842 = vmatpush.msra.mxu0 0.0
    %843 = vmatpush.msra.mxu0 0.0
    %844 = vmatpush.msra.mxu0 0.0
    %845 = vmatpush.msra.mxu0 0.0
    %846 = vmatpush.msra.mxu0 0.0
    %847 = vmatpush.msra.mxu0 %v812
    %848 = vmatpush.msra.mxu0 %v810
    %849 = vmatmul.f32.gmra.mxu0 %v816
    %v850 = vpop.f32.mrf.mxu0
    %v851 = vadd.f32 0.0, %v850
    %852 = vmatmul.f32.gmra.mxu0 %v819
    %v853 = vpop.f32.mrf.mxu0
    %v854 = vadd.f32 0.0, %v853
    %855 = vmatmul.f32.gmra.mxu0 %v822
    %v856 = vpop.f32.mrf.mxu0
    %v857 = vadd.f32 0.0, %v856
    %858 = vmatmul.f32.gmra.mxu0 %v825
    %v859 = vpop.f32.mrf.mxu0
    %v860 = vadd.f32 0.0, %v859
    %861 = vmatmul.f32.gmra.mxu0 %v828
    %v862 = vpop.f32.mrf.mxu0
    %v863 = vadd.f32 0.0, %v862
    %864 = vmatmul.f32.gmra.mxu0 %v831
    %v865 = vpop.f32.mrf.mxu0
    %v866 = vadd.f32 0.0, %v865
    %867 = vdwg.mxu0
    %870 = vrot.lane.b32.xlu0 %v583, 96
    %v871 = vpop.permute.xlu0 %870
    %872 = vrot.lane.b32.xlu0 %v584, 96
    %v873 = vpop.permute.xlu0 %872
    %v877 = vsel %vm631, %v111, 0
    %v880 = vsel %vm631, %v112, 0
    %v883 = vsel %vm631, %v113, 0
    %v886 = vsel %vm631, %v114, 0
    %v889 = vsel %vm631, %v115, 0
    %v892 = vsel %vm631, %v116, 0
    %894 = vmatpush.msra.mxu0 0.0
    %895 = vmatpush.msra.mxu0 0.0
    %896 = vmatpush.msra.mxu0 0.0
    %897 = vmatpush.msra.mxu0 0.0
    %898 = vmatpush.msra.mxu0 0.0
    %899 = vmatpush.msra.mxu0 0.0
    %900 = vmatpush.msra.mxu0 0.0
    %901 = vmatpush.msra.mxu0 0.0
    %902 = vmatpush.msra.mxu0 0.0
    %903 = vmatpush.msra.mxu0 0.0
    %904 = vmatpush.msra.mxu0 0.0
    %905 = vmatpush.msra.mxu0 0.0
    %906 = vmatpush.msra.mxu0 0.0
    %907 = vmatpush.msra.mxu0 0.0
    %908 = vmatpush.msra.mxu0 %v873
    %909 = vmatpush.msra.mxu0 %v871
    %910 = vmatmul.f32.gmra.mxu0 %v877
    %v911 = vpop.f32.mrf.mxu0
    %v912 = vadd.f32 0.0, %v911
    %913 = vmatmul.f32.gmra.mxu0 %v880
    %v914 = vpop.f32.mrf.mxu0
    %v915 = vadd.f32 0.0, %v914
    %916 = vmatmul.f32.gmra.mxu0 %v883
    %v917 = vpop.f32.mrf.mxu0
    %v918 = vadd.f32 0.0, %v917
    %919 = vmatmul.f32.gmra.mxu0 %v886
    %v920 = vpop.f32.mrf.mxu0
    %v921 = vadd.f32 0.0, %v920
    %922 = vmatmul.f32.gmra.mxu0 %v889
    %v923 = vpop.f32.mrf.mxu0
    %v924 = vadd.f32 0.0, %v923
    %925 = vmatmul.f32.gmra.mxu0 %v892
    %v926 = vpop.f32.mrf.mxu0
    %v927 = vadd.f32 0.0, %v926
    %928 = vdwg.mxu0
    %931 = vrot.lane.b32.xlu0 %v585, 96
    %v932 = vpop.permute.xlu0 %931
    %933 = vrot.lane.b32.xlu0 %v586, 96
    %v934 = vpop.permute.xlu0 %933
    %v938 = vsel %vm631, %v117, 0
    %v941 = vsel %vm631, %v118, 0
    %v944 = vsel %vm631, %v119, 0
    %v947 = vsel %vm631, %v120, 0
    %v950 = vsel %vm631, %v121, 0
    %v953 = vsel %vm631, %v122, 0
    %955 = vmatpush.msra.mxu0 0.0
    %956 = vmatpush.msra.mxu0 0.0
    %957 = vmatpush.msra.mxu0 0.0
    %958 = vmatpush.msra.mxu0 0.0
    %959 = vmatpush.msra.mxu0 0.0
    %960 = vmatpush.msra.mxu0 0.0
    %961 = vmatpush.msra.mxu0 0.0
    %962 = vmatpush.msra.mxu0 0.0
    %963 = vmatpush.msra.mxu0 0.0
    %964 = vmatpush.msra.mxu0 0.0
    %965 = vmatpush.msra.mxu0 0.0
    %966 = vmatpush.msra.mxu0 0.0
    %967 = vmatpush.msra.mxu0 0.0
    %968 = vmatpush.msra.mxu0 0.0
    %969 = vmatpush.msra.mxu0 %v934
    %970 = vmatpush.msra.mxu0 %v932
    %971 = vmatmul.f32.gmra.mxu0 %v938
    %v972 = vpop.f32.mrf.mxu0
    %v973 = vadd.f32 0.0, %v972
    %974 = vmatmul.f32.gmra.mxu0 %v941
    %v975 = vpop.f32.mrf.mxu0
    %v976 = vadd.f32 0.0, %v975
    %977 = vmatmul.f32.gmra.mxu0 %v944
    %v978 = vpop.f32.mrf.mxu0
    %v979 = vadd.f32 0.0, %v978
    %980 = vmatmul.f32.gmra.mxu0 %v947
    %v981 = vpop.f32.mrf.mxu0
    %v982 = vadd.f32 0.0, %v981
    %983 = vmatmul.f32.gmra.mxu0 %v950
    %v984 = vpop.f32.mrf.mxu0
    %v985 = vadd.f32 0.0, %v984
    %986 = vmatmul.f32.gmra.mxu0 %v953
    %v987 = vpop.f32.mrf.mxu0
    %v988 = vadd.f32 0.0, %v987
    %989 = vdwg.mxu0
    %992 = vrot.lane.b32.xlu0 %v587, 96
    %v993 = vpop.permute.xlu0 %992
    %994 = vrot.lane.b32.xlu0 %v588, 96
    %v995 = vpop.permute.xlu0 %994
    %v999 = vsel %vm631, %v123, 0
    %v1002 = vsel %vm631, %v124, 0
    %v1005 = vsel %vm631, %v125, 0
    %v1008 = vsel %vm631, %v126, 0
    %v1011 = vsel %vm631, %v127, 0
    %v1014 = vsel %vm631, %v128, 0
    %1016 = vmatpush.msra.mxu0 0.0
    %1017 = vmatpush.msra.mxu0 0.0
    %1018 = vmatpush.msra.mxu0 0.0
    %1019 = vmatpush.msra.mxu0 0.0
    %1020 = vmatpush.msra.mxu0 0.0
    %1021 = vmatpush.msra.mxu0 0.0
    %1022 = vmatpush.msra.mxu0 0.0
    %1023 = vmatpush.msra.mxu0 0.0
    %1024 = vmatpush.msra.mxu0 0.0
    %1025 = vmatpush.msra.mxu0 0.0
    %1026 = vmatpush.msra.mxu0 0.0
    %1027 = vmatpush.msra.mxu0 0.0
    %1028 = vmatpush.msra.mxu0 0.0
    %1029 = vmatpush.msra.mxu0 0.0
    %1030 = vmatpush.msra.mxu0 %v995
    %1031 = vmatpush.msra.mxu0 %v993
    %1032 = vmatmul.f32.gmra.mxu0 %v999
    %v1033 = vpop.f32.mrf.mxu0
    %v1034 = vadd.f32 0.0, %v1033
    %1035 = vmatmul.f32.gmra.mxu0 %v1002
    %v1036 = vpop.f32.mrf.mxu0
    %v1037 = vadd.f32 0.0, %v1036
    %1038 = vmatmul.f32.gmra.mxu0 %v1005
    %v1039 = vpop.f32.mrf.mxu0
    %v1040 = vadd.f32 0.0, %v1039
    %1041 = vmatmul.f32.gmra.mxu0 %v1008
    %v1042 = vpop.f32.mrf.mxu0
    %v1043 = vadd.f32 0.0, %v1042
    %1044 = vmatmul.f32.gmra.mxu0 %v1011
    %v1045 = vpop.f32.mrf.mxu0
    %v1046 = vadd.f32 0.0, %v1045
    %1047 = vmatmul.f32.gmra.mxu0 %v1014
    %v1048 = vpop.f32.mrf.mxu0
    %v1049 = vadd.f32 0.0, %v1048
    %1050 = vdwg.mxu0
    %1053 = vrot.lane.b32.xlu0 %v589, 96
    %v1054 = vpop.permute.xlu0 %1053
    %1055 = vrot.lane.b32.xlu0 %v590, 96
    %v1056 = vpop.permute.xlu0 %1055
    %v1060 = vsel %vm631, %v129, 0
    %v1063 = vsel %vm631, %v130, 0
    %v1066 = vsel %vm631, %v131, 0
    %v1069 = vsel %vm631, %v132, 0
    %v1072 = vsel %vm631, %v133, 0
    %v1075 = vsel %vm631, %v134, 0
    %1077 = vmatpush.msra.mxu0 0.0
    %1078 = vmatpush.msra.mxu0 0.0
    %1079 = vmatpush.msra.mxu0 0.0
    %1080 = vmatpush.msra.mxu0 0.0
    %1081 = vmatpush.msra.mxu0 0.0
    %1082 = vmatpush.msra.mxu0 0.0
    %1083 = vmatpush.msra.mxu0 0.0
    %1084 = vmatpush.msra.mxu0 0.0
    %1085 = vmatpush.msra.mxu0 0.0
    %1086 = vmatpush.msra.mxu0 0.0
    %1087 = vmatpush.msra.mxu0 0.0
    %1088 = vmatpush.msra.mxu0 0.0
    %1089 = vmatpush.msra.mxu0 0.0
    %1090 = vmatpush.msra.mxu0 0.0
    %1091 = vmatpush.msra.mxu0 %v1056
    %1092 = vmatpush.msra.mxu0 %v1054
    %1093 = vmatmul.f32.gmra.mxu0 %v1060
    %v1094 = vpop.f32.mrf.mxu0
    %v1095 = vadd.f32 0.0, %v1094
    %1096 = vmatmul.f32.gmra.mxu0 %v1063
    %v1097 = vpop.f32.mrf.mxu0
    %v1098 = vadd.f32 0.0, %v1097
    %1099 = vmatmul.f32.gmra.mxu0 %v1066
    %v1100 = vpop.f32.mrf.mxu0
    %v1101 = vadd.f32 0.0, %v1100
    %1102 = vmatmul.f32.gmra.mxu0 %v1069
    %v1103 = vpop.f32.mrf.mxu0
    %v1104 = vadd.f32 0.0, %v1103
    %1105 = vmatmul.f32.gmra.mxu0 %v1072
    %v1106 = vpop.f32.mrf.mxu0
    %v1107 = vadd.f32 0.0, %v1106
    %1108 = vmatmul.f32.gmra.mxu0 %v1075
    %v1109 = vpop.f32.mrf.mxu0
    %v1110 = vadd.f32 0.0, %v1109
    %1111 = vdwg.mxu0
    %1114 = vrot.lane.b32.xlu0 %v591, 96
    %v1115 = vpop.permute.xlu0 %1114
    %1116 = vrot.lane.b32.xlu0 %v592, 96
    %v1117 = vpop.permute.xlu0 %1116
    %v1121 = vsel %vm631, %v135, 0
    %v1124 = vsel %vm631, %v136, 0
    %v1127 = vsel %vm631, %v137, 0
    %v1130 = vsel %vm631, %v138, 0
    %v1133 = vsel %vm631, %v139, 0
    %v1136 = vsel %vm631, %v140, 0
    %1138 = vmatpush.msra.mxu0 0.0
    %1139 = vmatpush.msra.mxu0 0.0
    %1140 = vmatpush.msra.mxu0 0.0
    %1141 = vmatpush.msra.mxu0 0.0
    %1142 = vmatpush.msra.mxu0 0.0
    %1143 = vmatpush.msra.mxu0 0.0
    %1144 = vmatpush.msra.mxu0 0.0
    %1145 = vmatpush.msra.mxu0 0.0
    %1146 = vmatpush.msra.mxu0 0.0
    %1147 = vmatpush.msra.mxu0 0.0
    %1148 = vmatpush.msra.mxu0 0.0
    %1149 = vmatpush.msra.mxu0 0.0
    %1150 = vmatpush.msra.mxu0 0.0
    %1151 = vmatpush.msra.mxu0 0.0
    %1152 = vmatpush.msra.mxu0 %v1117
    %1153 = vmatpush.msra.mxu0 %v1115
    %1154 = vmatmul.f32.gmra.mxu0 %v1121
    %v1155 = vpop.f32.mrf.mxu0
    %v1156 = vadd.f32 0.0, %v1155
    %1157 = vmatmul.f32.gmra.mxu0 %v1124
    %v1158 = vpop.f32.mrf.mxu0
    %v1159 = vadd.f32 0.0, %v1158
    %1160 = vmatmul.f32.gmra.mxu0 %v1127
    %v1161 = vpop.f32.mrf.mxu0
    %v1162 = vadd.f32 0.0, %v1161
    %1163 = vmatmul.f32.gmra.mxu0 %v1130
    %v1164 = vpop.f32.mrf.mxu0
    %v1165 = vadd.f32 0.0, %v1164
    %1166 = vmatmul.f32.gmra.mxu0 %v1133
    %v1167 = vpop.f32.mrf.mxu0
    %v1168 = vadd.f32 0.0, %v1167
    %1169 = vmatmul.f32.gmra.mxu0 %v1136
    %v1170 = vpop.f32.mrf.mxu0
    %v1171 = vadd.f32 0.0, %v1170
    %1172 = vdwg.mxu0
    %1175 = vrot.lane.b32.xlu0 %v593, 96
    %v1176 = vpop.permute.xlu0 %1175
    %1177 = vrot.lane.b32.xlu0 %v594, 96
    %v1178 = vpop.permute.xlu0 %1177
    %v1182 = vsel %vm631, %v141, 0
    %v1185 = vsel %vm631, %v142, 0
    %v1188 = vsel %vm631, %v143, 0
    %v1191 = vsel %vm631, %v144, 0
    %v1194 = vsel %vm631, %v145, 0
    %v1197 = vsel %vm631, %v146, 0
    %1199 = vmatpush.msra.mxu0 0.0
    %1200 = vmatpush.msra.mxu0 0.0
    %1201 = vmatpush.msra.mxu0 0.0
    %1202 = vmatpush.msra.mxu0 0.0
    %1203 = vmatpush.msra.mxu0 0.0
    %1204 = vmatpush.msra.mxu0 0.0
    %1205 = vmatpush.msra.mxu0 0.0
    %1206 = vmatpush.msra.mxu0 0.0
    %1207 = vmatpush.msra.mxu0 0.0
    %1208 = vmatpush.msra.mxu0 0.0
    %1209 = vmatpush.msra.mxu0 0.0
    %1210 = vmatpush.msra.mxu0 0.0
    %1211 = vmatpush.msra.mxu0 0.0
    %1212 = vmatpush.msra.mxu0 0.0
    %1213 = vmatpush.msra.mxu0 %v1178
    %1214 = vmatpush.msra.mxu0 %v1176
    %1215 = vmatmul.f32.gmra.mxu0 %v1182
    %v1216 = vpop.f32.mrf.mxu0
    %v1217 = vadd.f32 0.0, %v1216
    %1218 = vmatmul.f32.gmra.mxu0 %v1185
    %v1219 = vpop.f32.mrf.mxu0
    %v1220 = vadd.f32 0.0, %v1219
    %1221 = vmatmul.f32.gmra.mxu0 %v1188
    %v1222 = vpop.f32.mrf.mxu0
    %v1223 = vadd.f32 0.0, %v1222
    %1224 = vmatmul.f32.gmra.mxu0 %v1191
    %v1225 = vpop.f32.mrf.mxu0
    %v1226 = vadd.f32 0.0, %v1225
    %1227 = vmatmul.f32.gmra.mxu0 %v1194
    %v1228 = vpop.f32.mrf.mxu0
    %v1229 = vadd.f32 0.0, %v1228
    %1230 = vmatmul.f32.gmra.mxu0 %v1197
    %v1231 = vpop.f32.mrf.mxu0
    %v1232 = vadd.f32 0.0, %v1231
    %1233 = vdwg.mxu0
    %1236 = vrot.lane.b32.xlu0 %v595, 96
    %v1237 = vpop.permute.xlu0 %1236
    %1238 = vrot.lane.b32.xlu0 %v596, 96
    %v1239 = vpop.permute.xlu0 %1238
    %v1243 = vsel %vm631, %v147, 0
    %v1246 = vsel %vm631, %v148, 0
    %v1249 = vsel %vm631, %v149, 0
    %v1252 = vsel %vm631, %v150, 0
    %v1255 = vsel %vm631, %v151, 0
    %v1258 = vsel %vm631, %v152, 0
    %1260 = vmatpush.msra.mxu0 0.0
    %1261 = vmatpush.msra.mxu0 0.0
    %1262 = vmatpush.msra.mxu0 0.0
    %1263 = vmatpush.msra.mxu0 0.0
    %1264 = vmatpush.msra.mxu0 0.0
    %1265 = vmatpush.msra.mxu0 0.0
    %1266 = vmatpush.msra.mxu0 0.0
    %1267 = vmatpush.msra.mxu0 0.0
    %1268 = vmatpush.msra.mxu0 0.0
    %1269 = vmatpush.msra.mxu0 0.0
    %1270 = vmatpush.msra.mxu0 0.0
    %1271 = vmatpush.msra.mxu0 0.0
    %1272 = vmatpush.msra.mxu0 0.0
    %1273 = vmatpush.msra.mxu0 0.0
    %1274 = vmatpush.msra.mxu0 %v1239
    %1275 = vmatpush.msra.mxu0 %v1237
    %1276 = vmatmul.f32.gmra.mxu0 %v1243
    %v1277 = vpop.f32.mrf.mxu0
    %v1278 = vadd.f32 0.0, %v1277
    %1279 = vmatmul.f32.gmra.mxu0 %v1246
    %v1280 = vpop.f32.mrf.mxu0
    %v1281 = vadd.f32 0.0, %v1280
    %1282 = vmatmul.f32.gmra.mxu0 %v1249
    %v1283 = vpop.f32.mrf.mxu0
    %v1284 = vadd.f32 0.0, %v1283
    %1285 = vmatmul.f32.gmra.mxu0 %v1252
    %v1286 = vpop.f32.mrf.mxu0
    %v1287 = vadd.f32 0.0, %v1286
    %1288 = vmatmul.f32.gmra.mxu0 %v1255
    %v1289 = vpop.f32.mrf.mxu0
    %v1290 = vadd.f32 0.0, %v1289
    %1291 = vmatmul.f32.gmra.mxu0 %v1258
    %v1292 = vpop.f32.mrf.mxu0
    %v1293 = vadd.f32 0.0, %v1292
    %1294 = vdwg.mxu0
    %1297 = vrot.lane.b32.xlu0 %v597, 96
    %v1298 = vpop.permute.xlu0 %1297
    %1299 = vrot.lane.b32.xlu0 %v598, 96
    %v1300 = vpop.permute.xlu0 %1299
    %v1304 = vsel %vm631, %v153, 0
    %v1307 = vsel %vm631, %v154, 0
    %v1310 = vsel %vm631, %v155, 0
    %v1313 = vsel %vm631, %v156, 0
    %v1316 = vsel %vm631, %v157, 0
    %v1319 = vsel %vm631, %v158, 0
    %1321 = vmatpush.msra.mxu0 0.0
    %1322 = vmatpush.msra.mxu0 0.0
    %1323 = vmatpush.msra.mxu0 0.0
    %1324 = vmatpush.msra.mxu0 0.0
    %1325 = vmatpush.msra.mxu0 0.0
    %1326 = vmatpush.msra.mxu0 0.0
    %1327 = vmatpush.msra.mxu0 0.0
    %1328 = vmatpush.msra.mxu0 0.0
    %1329 = vmatpush.msra.mxu0 0.0
    %1330 = vmatpush.msra.mxu0 0.0
    %1331 = vmatpush.msra.mxu0 0.0
    %1332 = vmatpush.msra.mxu0 0.0
    %1333 = vmatpush.msra.mxu0 0.0
    %1334 = vmatpush.msra.mxu0 0.0
    %1335 = vmatpush.msra.mxu0 %v1300
    %1336 = vmatpush.msra.mxu0 %v1298
    %1337 = vmatmul.f32.gmra.mxu0 %v1304
    %v1338 = vpop.f32.mrf.mxu0
    %v1339 = vadd.f32 0.0, %v1338
    %1340 = vmatmul.f32.gmra.mxu0 %v1307
    %v1341 = vpop.f32.mrf.mxu0
    %v1342 = vadd.f32 0.0, %v1341
    %1343 = vmatmul.f32.gmra.mxu0 %v1310
    %v1344 = vpop.f32.mrf.mxu0
    %v1345 = vadd.f32 0.0, %v1344
    %1346 = vmatmul.f32.gmra.mxu0 %v1313
    %v1347 = vpop.f32.mrf.mxu0
    %v1348 = vadd.f32 0.0, %v1347
    %1349 = vmatmul.f32.gmra.mxu0 %v1316
    %v1350 = vpop.f32.mrf.mxu0
    %v1351 = vadd.f32 0.0, %v1350
    %1352 = vmatmul.f32.gmra.mxu0 %v1319
    %v1353 = vpop.f32.mrf.mxu0
    %v1354 = vadd.f32 0.0, %v1353
    %1355 = vdwg.mxu0
    %1358 = vrot.lane.b32.xlu0 %v599, 96
    %v1359 = vpop.permute.xlu0 %1358
    %1360 = vrot.lane.b32.xlu0 %v600, 96
    %v1361 = vpop.permute.xlu0 %1360
    %v1365 = vsel %vm631, %v159, 0
    %v1368 = vsel %vm631, %v160, 0
    %v1371 = vsel %vm631, %v161, 0
    %v1374 = vsel %vm631, %v162, 0
    %v1377 = vsel %vm631, %v163, 0
    %v1380 = vsel %vm631, %v164, 0
    %1382 = vmatpush.msra.mxu0 0.0
    %1383 = vmatpush.msra.mxu0 0.0
    %1384 = vmatpush.msra.mxu0 0.0
    %1385 = vmatpush.msra.mxu0 0.0
    %1386 = vmatpush.msra.mxu0 0.0
    %1387 = vmatpush.msra.mxu0 0.0
    %1388 = vmatpush.msra.mxu0 0.0
    %1389 = vmatpush.msra.mxu0 0.0
    %1390 = vmatpush.msra.mxu0 0.0
    %1391 = vmatpush.msra.mxu0 0.0
    %1392 = vmatpush.msra.mxu0 0.0
    %1393 = vmatpush.msra.mxu0 0.0
    %1394 = vmatpush.msra.mxu0 0.0
    %1395 = vmatpush.msra.mxu0 0.0
    %1396 = vmatpush.msra.mxu0 %v1361
    %1397 = vmatpush.msra.mxu0 %v1359
    %1398 = vmatmul.f32.gmra.mxu0 %v1365
    %v1399 = vpop.f32.mrf.mxu0
    %v1400 = vadd.f32 0.0, %v1399
    %1401 = vmatmul.f32.gmra.mxu0 %v1368
    %v1402 = vpop.f32.mrf.mxu0
    %v1403 = vadd.f32 0.0, %v1402
    %1404 = vmatmul.f32.gmra.mxu0 %v1371
    %v1405 = vpop.f32.mrf.mxu0
    %v1406 = vadd.f32 0.0, %v1405
    %1407 = vmatmul.f32.gmra.mxu0 %v1374
    %v1408 = vpop.f32.mrf.mxu0
    %v1409 = vadd.f32 0.0, %v1408
    %1410 = vmatmul.f32.gmra.mxu0 %v1377
    %v1411 = vpop.f32.mrf.mxu0
    %v1412 = vadd.f32 0.0, %v1411
    %1413 = vmatmul.f32.gmra.mxu0 %v1380
    %v1414 = vpop.f32.mrf.mxu0
    %v1415 = vadd.f32 0.0, %v1414
    %1416 = vdwg.mxu0
    %1419 = vrot.lane.b32.xlu0 %v601, 96
    %v1420 = vpop.permute.xlu0 %1419
    %1421 = vrot.lane.b32.xlu0 %v602, 96
    %v1422 = vpop.permute.xlu0 %1421
    %v1426 = vsel %vm631, %v165, 0
    %v1429 = vsel %vm631, %v166, 0
    %v1432 = vsel %vm631, %v167, 0
    %v1435 = vsel %vm631, %v168, 0
    %v1438 = vsel %vm631, %v169, 0
    %v1441 = vsel %vm631, %v170, 0
    %1443 = vmatpush.msra.mxu0 0.0
    %1444 = vmatpush.msra.mxu0 0.0
    %1445 = vmatpush.msra.mxu0 0.0
    %1446 = vmatpush.msra.mxu0 0.0
    %1447 = vmatpush.msra.mxu0 0.0
    %1448 = vmatpush.msra.mxu0 0.0
    %1449 = vmatpush.msra.mxu0 0.0
    %1450 = vmatpush.msra.mxu0 0.0
    %1451 = vmatpush.msra.mxu0 0.0
    %1452 = vmatpush.msra.mxu0 0.0
    %1453 = vmatpush.msra.mxu0 0.0
    %1454 = vmatpush.msra.mxu0 0.0
    %1455 = vmatpush.msra.mxu0 0.0
    %1456 = vmatpush.msra.mxu0 0.0
    %1457 = vmatpush.msra.mxu0 %v1422
    %1458 = vmatpush.msra.mxu0 %v1420
    %1459 = vmatmul.f32.gmra.mxu0 %v1426
    %v1460 = vpop.f32.mrf.mxu0
    %v1461 = vadd.f32 0.0, %v1460
    %1462 = vmatmul.f32.gmra.mxu0 %v1429
    %v1463 = vpop.f32.mrf.mxu0
    %v1464 = vadd.f32 0.0, %v1463
    %1465 = vmatmul.f32.gmra.mxu0 %v1432
    %v1466 = vpop.f32.mrf.mxu0
    %v1467 = vadd.f32 0.0, %v1466
    %1468 = vmatmul.f32.gmra.mxu0 %v1435
    %v1469 = vpop.f32.mrf.mxu0
    %v1470 = vadd.f32 0.0, %v1469
    %1471 = vmatmul.f32.gmra.mxu0 %v1438
    %v1472 = vpop.f32.mrf.mxu0
    %v1473 = vadd.f32 0.0, %v1472
    %1474 = vmatmul.f32.gmra.mxu0 %v1441
    %v1475 = vpop.f32.mrf.mxu0
    %v1476 = vadd.f32 0.0, %v1475
    %1477 = vdwg.mxu0
    %1480 = vrot.lane.b32.xlu0 %v603, 96
    %v1481 = vpop.permute.xlu0 %1480
    %1482 = vrot.lane.b32.xlu0 %v604, 96
    %v1483 = vpop.permute.xlu0 %1482
    %v1487 = vsel %vm631, %v171, 0
    %v1490 = vsel %vm631, %v172, 0
    %v1493 = vsel %vm631, %v173, 0
    %v1496 = vsel %vm631, %v174, 0
    %v1499 = vsel %vm631, %v175, 0
    %v1502 = vsel %vm631, %v176, 0
    %1504 = vmatpush.msra.mxu0 0.0
    %1505 = vmatpush.msra.mxu0 0.0
    %1506 = vmatpush.msra.mxu0 0.0
    %1507 = vmatpush.msra.mxu0 0.0
    %1508 = vmatpush.msra.mxu0 0.0
    %1509 = vmatpush.msra.mxu0 0.0
    %1510 = vmatpush.msra.mxu0 0.0
    %1511 = vmatpush.msra.mxu0 0.0
    %1512 = vmatpush.msra.mxu0 0.0
    %1513 = vmatpush.msra.mxu0 0.0
    %1514 = vmatpush.msra.mxu0 0.0
    %1515 = vmatpush.msra.mxu0 0.0
    %1516 = vmatpush.msra.mxu0 0.0
    %1517 = vmatpush.msra.mxu0 0.0
    %1518 = vmatpush.msra.mxu0 %v1483
    %1519 = vmatpush.msra.mxu0 %v1481
    %1520 = vmatmul.f32.gmra.mxu0 %v1487
    %v1521 = vpop.f32.mrf.mxu0
    %v1522 = vadd.f32 0.0, %v1521
    %1523 = vmatmul.f32.gmra.mxu0 %v1490
    %v1524 = vpop.f32.mrf.mxu0
    %v1525 = vadd.f32 0.0, %v1524
    %1526 = vmatmul.f32.gmra.mxu0 %v1493
    %v1527 = vpop.f32.mrf.mxu0
    %v1528 = vadd.f32 0.0, %v1527
    %1529 = vmatmul.f32.gmra.mxu0 %v1496
    %v1530 = vpop.f32.mrf.mxu0
    %v1531 = vadd.f32 0.0, %v1530
    %1532 = vmatmul.f32.gmra.mxu0 %v1499
    %v1533 = vpop.f32.mrf.mxu0
    %v1534 = vadd.f32 0.0, %v1533
    %1535 = vmatmul.f32.gmra.mxu0 %v1502
    %v1536 = vpop.f32.mrf.mxu0
    %v1537 = vadd.f32 0.0, %v1536
    %1538 = vdwg.mxu0
    %1541 = vrot.lane.b32.xlu0 %v605, 96
    %v1542 = vpop.permute.xlu0 %1541
    %1543 = vrot.lane.b32.xlu0 %v606, 96
    %v1544 = vpop.permute.xlu0 %1543
    %v1548 = vsel %vm631, %v177, 0
    %v1551 = vsel %vm631, %v178, 0
    %v1554 = vsel %vm631, %v179, 0
    %v1557 = vsel %vm631, %v180, 0
    %v1560 = vsel %vm631, %v181, 0
    %v1563 = vsel %vm631, %v182, 0
    %1565 = vmatpush.msra.mxu0 0.0
    %1566 = vmatpush.msra.mxu0 0.0
    %1567 = vmatpush.msra.mxu0 0.0
    %1568 = vmatpush.msra.mxu0 0.0
    %1569 = vmatpush.msra.mxu0 0.0
    %1570 = vmatpush.msra.mxu0 0.0
    %1571 = vmatpush.msra.mxu0 0.0
    %1572 = vmatpush.msra.mxu0 0.0
    %1573 = vmatpush.msra.mxu0 0.0
    %1574 = vmatpush.msra.mxu0 0.0
    %1575 = vmatpush.msra.mxu0 0.0
    %1576 = vmatpush.msra.mxu0 0.0
    %1577 = vmatpush.msra.mxu0 0.0
    %1578 = vmatpush.msra.mxu0 0.0
    %1579 = vmatpush.msra.mxu0 %v1544
    %1580 = vmatpush.msra.mxu0 %v1542
    %1581 = vmatmul.f32.gmra.mxu0 %v1548
    %v1582 = vpop.f32.mrf.mxu0
    %v1583 = vadd.f32 0.0, %v1582
    %1584 = vmatmul.f32.gmra.mxu0 %v1551
    %v1585 = vpop.f32.mrf.mxu0
    %v1586 = vadd.f32 0.0, %v1585
    %1587 = vmatmul.f32.gmra.mxu0 %v1554
    %v1588 = vpop.f32.mrf.mxu0
    %v1589 = vadd.f32 0.0, %v1588
    %1590 = vmatmul.f32.gmra.mxu0 %v1557
    %v1591 = vpop.f32.mrf.mxu0
    %v1592 = vadd.f32 0.0, %v1591
    %1593 = vmatmul.f32.gmra.mxu0 %v1560
    %v1594 = vpop.f32.mrf.mxu0
    %v1595 = vadd.f32 0.0, %v1594
    %1596 = vmatmul.f32.gmra.mxu0 %v1563
    %v1597 = vpop.f32.mrf.mxu0
    %v1598 = vadd.f32 0.0, %v1597
    %1599 = vdwg.mxu0
    %1602 = vrot.lane.b32.xlu0 %v607, 96
    %v1603 = vpop.permute.xlu0 %1602
    %1604 = vrot.lane.b32.xlu0 %v608, 96
    %v1605 = vpop.permute.xlu0 %1604
    %v1609 = vsel %vm631, %v183, 0
    %v1612 = vsel %vm631, %v184, 0
    %v1615 = vsel %vm631, %v185, 0
    %v1618 = vsel %vm631, %v186, 0
    %v1621 = vsel %vm631, %v187, 0
    %v1624 = vsel %vm631, %v188, 0
    %1626 = vmatpush.msra.mxu0 0.0
    %1627 = vmatpush.msra.mxu0 0.0
    %1628 = vmatpush.msra.mxu0 0.0
    %1629 = vmatpush.msra.mxu0 0.0
    %1630 = vmatpush.msra.mxu0 0.0
    %1631 = vmatpush.msra.mxu0 0.0
    %1632 = vmatpush.msra.mxu0 0.0
    %1633 = vmatpush.msra.mxu0 0.0
    %1634 = vmatpush.msra.mxu0 0.0
    %1635 = vmatpush.msra.mxu0 0.0
    %1636 = vmatpush.msra.mxu0 0.0
    %1637 = vmatpush.msra.mxu0 0.0
    %1638 = vmatpush.msra.mxu0 0.0
    %1639 = vmatpush.msra.mxu0 0.0
    %1640 = vmatpush.msra.mxu0 %v1605
    %1641 = vmatpush.msra.mxu0 %v1603
    %1642 = vmatmul.f32.gmra.mxu0 %v1609
    %v1643 = vpop.f32.mrf.mxu0
    %v1644 = vadd.f32 0.0, %v1643
    %1645 = vmatmul.f32.gmra.mxu0 %v1612
    %v1646 = vpop.f32.mrf.mxu0
    %v1647 = vadd.f32 0.0, %v1646
    %1648 = vmatmul.f32.gmra.mxu0 %v1615
    %v1649 = vpop.f32.mrf.mxu0
    %v1650 = vadd.f32 0.0, %v1649
    %1651 = vmatmul.f32.gmra.mxu0 %v1618
    %v1652 = vpop.f32.mrf.mxu0
    %v1653 = vadd.f32 0.0, %v1652
    %1654 = vmatmul.f32.gmra.mxu0 %v1621
    %v1655 = vpop.f32.mrf.mxu0
    %v1656 = vadd.f32 0.0, %v1655
    %1657 = vmatmul.f32.gmra.mxu0 %v1624
    %v1658 = vpop.f32.mrf.mxu0
    %v1659 = vadd.f32 0.0, %v1658
    %1660 = vdwg.mxu0
    %1663 = vrot.lane.b32.xlu0 %v609, 96
    %v1664 = vpop.permute.xlu0 %1663
    %1665 = vrot.lane.b32.xlu0 %v610, 96
    %v1666 = vpop.permute.xlu0 %1665
    %v1670 = vsel %vm631, %v189, 0
    %v1673 = vsel %vm631, %v190, 0
    %v1676 = vsel %vm631, %v191, 0
    %v1679 = vsel %vm631, %v192, 0
    %v1682 = vsel %vm631, %v193, 0
    %v1685 = vsel %vm631, %v194, 0
    %1687 = vmatpush.msra.mxu0 0.0
    %1688 = vmatpush.msra.mxu0 0.0
    %1689 = vmatpush.msra.mxu0 0.0
    %1690 = vmatpush.msra.mxu0 0.0
    %1691 = vmatpush.msra.mxu0 0.0
    %1692 = vmatpush.msra.mxu0 0.0
    %1693 = vmatpush.msra.mxu0 0.0
    %1694 = vmatpush.msra.mxu0 0.0
    %1695 = vmatpush.msra.mxu0 0.0
    %1696 = vmatpush.msra.mxu0 0.0
    %1697 = vmatpush.msra.mxu0 0.0
    %1698 = vmatpush.msra.mxu0 0.0
    %1699 = vmatpush.msra.mxu0 0.0
    %1700 = vmatpush.msra.mxu0 0.0
    %1701 = vmatpush.msra.mxu0 %v1666
    %1702 = vmatpush.msra.mxu0 %v1664
    %1703 = vmatmul.f32.gmra.mxu0 %v1670
    %v1704 = vpop.f32.mrf.mxu0
    %v1705 = vadd.f32 0.0, %v1704
    %1706 = vmatmul.f32.gmra.mxu0 %v1673
    %v1707 = vpop.f32.mrf.mxu0
    %v1708 = vadd.f32 0.0, %v1707
    %1709 = vmatmul.f32.gmra.mxu0 %v1676
    %v1710 = vpop.f32.mrf.mxu0
    %v1711 = vadd.f32 0.0, %v1710
    %1712 = vmatmul.f32.gmra.mxu0 %v1679
    %v1713 = vpop.f32.mrf.mxu0
    %v1714 = vadd.f32 0.0, %v1713
    %1715 = vmatmul.f32.gmra.mxu0 %v1682
    %v1716 = vpop.f32.mrf.mxu0
    %v1717 = vadd.f32 0.0, %v1716
    %1718 = vmatmul.f32.gmra.mxu0 %v1685
    %v1719 = vpop.f32.mrf.mxu0
    %v1720 = vadd.f32 0.0, %v1719
    %1721 = vdwg.mxu0
    %1724 = vrot.lane.b32.xlu0 %v611, 96
    %v1725 = vpop.permute.xlu0 %1724
    %1726 = vrot.lane.b32.xlu0 %v612, 96
    %v1727 = vpop.permute.xlu0 %1726
    %v1731 = vsel %vm631, %v195, 0
    %v1734 = vsel %vm631, %v196, 0
    %v1737 = vsel %vm631, %v197, 0
    %v1740 = vsel %vm631, %v198, 0
    %v1743 = vsel %vm631, %v199, 0
    %v1746 = vsel %vm631, %v200, 0
    %1748 = vmatpush.msra.mxu0 0.0
    %1749 = vmatpush.msra.mxu0 0.0
    %1750 = vmatpush.msra.mxu0 0.0
    %1751 = vmatpush.msra.mxu0 0.0
    %1752 = vmatpush.msra.mxu0 0.0
    %1753 = vmatpush.msra.mxu0 0.0
    %1754 = vmatpush.msra.mxu0 0.0
    %1755 = vmatpush.msra.mxu0 0.0
    %1756 = vmatpush.msra.mxu0 0.0
    %1757 = vmatpush.msra.mxu0 0.0
    %1758 = vmatpush.msra.mxu0 0.0
    %1759 = vmatpush.msra.mxu0 0.0
    %1760 = vmatpush.msra.mxu0 0.0
    %1761 = vmatpush.msra.mxu0 0.0
    %1762 = vmatpush.msra.mxu0 %v1727
    %1763 = vmatpush.msra.mxu0 %v1725
    %1764 = vmatmul.f32.gmra.mxu0 %v1731
    %v1765 = vpop.f32.mrf.mxu0
    %v1766 = vadd.f32 0.0, %v1765
    %1767 = vmatmul.f32.gmra.mxu0 %v1734
    %v1768 = vpop.f32.mrf.mxu0
    %v1769 = vadd.f32 0.0, %v1768
    %1770 = vmatmul.f32.gmra.mxu0 %v1737
    %v1771 = vpop.f32.mrf.mxu0
    %v1772 = vadd.f32 0.0, %v1771
    %1773 = vmatmul.f32.gmra.mxu0 %v1740
    %v1774 = vpop.f32.mrf.mxu0
    %v1775 = vadd.f32 0.0, %v1774
    %1776 = vmatmul.f32.gmra.mxu0 %v1743
    %v1777 = vpop.f32.mrf.mxu0
    %v1778 = vadd.f32 0.0, %v1777
    %1779 = vmatmul.f32.gmra.mxu0 %v1746
    %v1780 = vpop.f32.mrf.mxu0
    %v1781 = vadd.f32 0.0, %v1780
    %1782 = vdwg.mxu0
    %1785 = vrot.lane.b32.xlu0 %v613, 96
    %v1786 = vpop.permute.xlu0 %1785
    %1787 = vrot.lane.b32.xlu0 %v614, 96
    %v1788 = vpop.permute.xlu0 %1787
    %v1792 = vsel %vm631, %v201, 0
    %v1795 = vsel %vm631, %v202, 0
    %v1798 = vsel %vm631, %v203, 0
    %v1801 = vsel %vm631, %v204, 0
    %v1804 = vsel %vm631, %v205, 0
    %v1807 = vsel %vm631, %v206, 0
    %1809 = vmatpush.msra.mxu0 0.0
    %1810 = vmatpush.msra.mxu0 0.0
    %1811 = vmatpush.msra.mxu0 0.0
    %1812 = vmatpush.msra.mxu0 0.0
    %1813 = vmatpush.msra.mxu0 0.0
    %1814 = vmatpush.msra.mxu0 0.0
    %1815 = vmatpush.msra.mxu0 0.0
    %1816 = vmatpush.msra.mxu0 0.0
    %1817 = vmatpush.msra.mxu0 0.0
    %1818 = vmatpush.msra.mxu0 0.0
    %1819 = vmatpush.msra.mxu0 0.0
    %1820 = vmatpush.msra.mxu0 0.0
    %1821 = vmatpush.msra.mxu0 0.0
    %1822 = vmatpush.msra.mxu0 0.0
    %1823 = vmatpush.msra.mxu0 %v1788
    %1824 = vmatpush.msra.mxu0 %v1786
    %1825 = vmatmul.f32.gmra.mxu0 %v1792
    %v1826 = vpop.f32.mrf.mxu0
    %v1827 = vadd.f32 0.0, %v1826
    %1828 = vmatmul.f32.gmra.mxu0 %v1795
    %v1829 = vpop.f32.mrf.mxu0
    %v1830 = vadd.f32 0.0, %v1829
    %1831 = vmatmul.f32.gmra.mxu0 %v1798
    %v1832 = vpop.f32.mrf.mxu0
    %v1833 = vadd.f32 0.0, %v1832
    %1834 = vmatmul.f32.gmra.mxu0 %v1801
    %v1835 = vpop.f32.mrf.mxu0
    %v1836 = vadd.f32 0.0, %v1835
    %1837 = vmatmul.f32.gmra.mxu0 %v1804
    %v1838 = vpop.f32.mrf.mxu0
    %v1839 = vadd.f32 0.0, %v1838
    %1840 = vmatmul.f32.gmra.mxu0 %v1807
    %v1841 = vpop.f32.mrf.mxu0
    %v1842 = vadd.f32 0.0, %v1841
    %1843 = vdwg.mxu0
    %1846 = vrot.lane.b32.xlu0 %v615, 96
    %v1847 = vpop.permute.xlu0 %1846
    %1848 = vrot.lane.b32.xlu0 %v616, 96
    %v1849 = vpop.permute.xlu0 %1848
    %v1853 = vsel %vm631, %v207, 0
    %v1856 = vsel %vm631, %v208, 0
    %v1859 = vsel %vm631, %v209, 0
    %v1862 = vsel %vm631, %v210, 0
    %v1865 = vsel %vm631, %v211, 0
    %v1868 = vsel %vm631, %v212, 0
    %1870 = vmatpush.msra.mxu0 0.0
    %1871 = vmatpush.msra.mxu0 0.0
    %1872 = vmatpush.msra.mxu0 0.0
    %1873 = vmatpush.msra.mxu0 0.0
    %1874 = vmatpush.msra.mxu0 0.0
    %1875 = vmatpush.msra.mxu0 0.0
    %1876 = vmatpush.msra.mxu0 0.0
    %1877 = vmatpush.msra.mxu0 0.0
    %1878 = vmatpush.msra.mxu0 0.0
    %1879 = vmatpush.msra.mxu0 0.0
    %1880 = vmatpush.msra.mxu0 0.0
    %1881 = vmatpush.msra.mxu0 0.0
    %1882 = vmatpush.msra.mxu0 0.0
    %1883 = vmatpush.msra.mxu0 0.0
    %1884 = vmatpush.msra.mxu0 %v1849
    %1885 = vmatpush.msra.mxu0 %v1847
    %1886 = vmatmul.f32.gmra.mxu0 %v1853
    %v1887 = vpop.f32.mrf.mxu0
    %v1888 = vadd.f32 0.0, %v1887
    %1889 = vmatmul.f32.gmra.mxu0 %v1856
    %v1890 = vpop.f32.mrf.mxu0
    %v1891 = vadd.f32 0.0, %v1890
    %1892 = vmatmul.f32.gmra.mxu0 %v1859
    %v1893 = vpop.f32.mrf.mxu0
    %v1894 = vadd.f32 0.0, %v1893
    %1895 = vmatmul.f32.gmra.mxu0 %v1862
    %v1896 = vpop.f32.mrf.mxu0
    %v1897 = vadd.f32 0.0, %v1896
    %1898 = vmatmul.f32.gmra.mxu0 %v1865
    %v1899 = vpop.f32.mrf.mxu0
    %v1900 = vadd.f32 0.0, %v1899
    %1901 = vmatmul.f32.gmra.mxu0 %v1868
    %v1902 = vpop.f32.mrf.mxu0
    %v1903 = vadd.f32 0.0, %v1902
    %1904 = vdwg.mxu0
    %1907 = vrot.lane.b32.xlu0 %v617, 96
    %v1908 = vpop.permute.xlu0 %1907
    %1909 = vrot.lane.b32.xlu0 %v618, 96
    %v1910 = vpop.permute.xlu0 %1909
    %v1914 = vsel %vm631, %v213, 0
    %v1917 = vsel %vm631, %v214, 0
    %v1920 = vsel %vm631, %v215, 0
    %v1923 = vsel %vm631, %v216, 0
    %v1926 = vsel %vm631, %v217, 0
    %v1929 = vsel %vm631, %v218, 0
    %1931 = vmatpush.msra.mxu0 0.0
    %1932 = vmatpush.msra.mxu0 0.0
    %1933 = vmatpush.msra.mxu0 0.0
    %1934 = vmatpush.msra.mxu0 0.0
    %1935 = vmatpush.msra.mxu0 0.0
    %1936 = vmatpush.msra.mxu0 0.0
    %1937 = vmatpush.msra.mxu0 0.0
    %1938 = vmatpush.msra.mxu0 0.0
    %1939 = vmatpush.msra.mxu0 0.0
    %1940 = vmatpush.msra.mxu0 0.0
    %1941 = vmatpush.msra.mxu0 0.0
    %1942 = vmatpush.msra.mxu0 0.0
    %1943 = vmatpush.msra.mxu0 0.0
    %1944 = vmatpush.msra.mxu0 0.0
    %1945 = vmatpush.msra.mxu0 %v1910
    %1946 = vmatpush.msra.mxu0 %v1908
    %1947 = vmatmul.f32.gmra.mxu0 %v1914
    %v1948 = vpop.f32.mrf.mxu0
    %v1949 = vadd.f32 0.0, %v1948
    %1950 = vmatmul.f32.gmra.mxu0 %v1917
    %v1951 = vpop.f32.mrf.mxu0
    %v1952 = vadd.f32 0.0, %v1951
    %1953 = vmatmul.f32.gmra.mxu0 %v1920
    %v1954 = vpop.f32.mrf.mxu0
    %v1955 = vadd.f32 0.0, %v1954
    %1956 = vmatmul.f32.gmra.mxu0 %v1923
    %v1957 = vpop.f32.mrf.mxu0
    %v1958 = vadd.f32 0.0, %v1957
    %1959 = vmatmul.f32.gmra.mxu0 %v1926
    %v1960 = vpop.f32.mrf.mxu0
    %v1961 = vadd.f32 0.0, %v1960
    %1962 = vmatmul.f32.gmra.mxu0 %v1929
    %v1963 = vpop.f32.mrf.mxu0
    %v1964 = vadd.f32 0.0, %v1963
    %1965 = vdwg.mxu0
    %1968 = vrot.lane.b32.xlu0 %v619, 96
    %v1969 = vpop.permute.xlu0 %1968
    %1970 = vrot.lane.b32.xlu0 %v620, 96
    %v1971 = vpop.permute.xlu0 %1970
    %v1975 = vsel %vm631, %v219, 0
    %v1978 = vsel %vm631, %v220, 0
    %v1981 = vsel %vm631, %v221, 0
    %v1984 = vsel %vm631, %v222, 0
    %v1987 = vsel %vm631, %v223, 0
    %v1990 = vsel %vm631, %v224, 0
    %1992 = vmatpush.msra.mxu0 0.0
    %1993 = vmatpush.msra.mxu0 0.0
    %1994 = vmatpush.msra.mxu0 0.0
    %1995 = vmatpush.msra.mxu0 0.0
    %1996 = vmatpush.msra.mxu0 0.0
    %1997 = vmatpush.msra.mxu0 0.0
    %1998 = vmatpush.msra.mxu0 0.0
    %1999 = vmatpush.msra.mxu0 0.0
    %2000 = vmatpush.msra.mxu0 0.0
    %2001 = vmatpush.msra.mxu0 0.0
    %2002 = vmatpush.msra.mxu0 0.0
    %2003 = vmatpush.msra.mxu0 0.0
    %2004 = vmatpush.msra.mxu0 0.0
    %2005 = vmatpush.msra.mxu0 0.0
    %2006 = vmatpush.msra.mxu0 %v1971
    %2007 = vmatpush.msra.mxu0 %v1969
    %2008 = vmatmul.f32.gmra.mxu0 %v1975
    %v2009 = vpop.f32.mrf.mxu0
    %v2010 = vadd.f32 0.0, %v2009
    %2011 = vmatmul.f32.gmra.mxu0 %v1978
    %v2012 = vpop.f32.mrf.mxu0
    %v2013 = vadd.f32 0.0, %v2012
    %2014 = vmatmul.f32.gmra.mxu0 %v1981
    %v2015 = vpop.f32.mrf.mxu0
    %v2016 = vadd.f32 0.0, %v2015
    %2017 = vmatmul.f32.gmra.mxu0 %v1984
    %v2018 = vpop.f32.mrf.mxu0
    %v2019 = vadd.f32 0.0, %v2018
    %2020 = vmatmul.f32.gmra.mxu0 %v1987
    %v2021 = vpop.f32.mrf.mxu0
    %v2022 = vadd.f32 0.0, %v2021
    %2023 = vmatmul.f32.gmra.mxu0 %v1990
    %v2024 = vpop.f32.mrf.mxu0
    %v2025 = vadd.f32 0.0, %v2024
    %2026 = vdwg.mxu0
    %2029 = vrot.lane.b32.xlu0 %v621, 96
    %v2030 = vpop.permute.xlu0 %2029
    %2031 = vrot.lane.b32.xlu0 %v622, 96
    %v2032 = vpop.permute.xlu0 %2031
    %v2036 = vsel %vm631, %v225, 0
    %v2039 = vsel %vm631, %v226, 0
    %v2042 = vsel %vm631, %v227, 0
    %v2045 = vsel %vm631, %v228, 0
    %v2048 = vsel %vm631, %v229, 0
    %v2051 = vsel %vm631, %v230, 0
    %2053 = vmatpush.msra.mxu0 0.0
    %2054 = vmatpush.msra.mxu0 0.0
    %2055 = vmatpush.msra.mxu0 0.0
    %2056 = vmatpush.msra.mxu0 0.0
    %2057 = vmatpush.msra.mxu0 0.0
    %2058 = vmatpush.msra.mxu0 0.0
    %2059 = vmatpush.msra.mxu0 0.0
    %2060 = vmatpush.msra.mxu0 0.0
    %2061 = vmatpush.msra.mxu0 0.0
    %2062 = vmatpush.msra.mxu0 0.0
    %2063 = vmatpush.msra.mxu0 0.0
    %2064 = vmatpush.msra.mxu0 0.0
    %2065 = vmatpush.msra.mxu0 0.0
    %2066 = vmatpush.msra.mxu0 0.0
    %2067 = vmatpush.msra.mxu0 %v2032
    %2068 = vmatpush.msra.mxu0 %v2030
    %2069 = vmatmul.f32.gmra.mxu0 %v2036
    %v2070 = vpop.f32.mrf.mxu0
    %v2071 = vadd.f32 0.0, %v2070
    %2072 = vmatmul.f32.gmra.mxu0 %v2039
    %v2073 = vpop.f32.mrf.mxu0
    %v2074 = vadd.f32 0.0, %v2073
    %2075 = vmatmul.f32.gmra.mxu0 %v2042
    %v2076 = vpop.f32.mrf.mxu0
    %v2077 = vadd.f32 0.0, %v2076
    %2078 = vmatmul.f32.gmra.mxu0 %v2045
    %v2079 = vpop.f32.mrf.mxu0
    %v2080 = vadd.f32 0.0, %v2079
    %2081 = vmatmul.f32.gmra.mxu0 %v2048
    %v2082 = vpop.f32.mrf.mxu0
    %v2083 = vadd.f32 0.0, %v2082
    %2084 = vmatmul.f32.gmra.mxu0 %v2051
    %v2085 = vpop.f32.mrf.mxu0
    %v2086 = vadd.f32 0.0, %v2085
    %2087 = vdwg.mxu0
    %2136 = vrot.lane.b32.xlu0 %v674, 32
    %v2137 = vpop.permute.xlu0 %2136
    %2138 = vrot.lane.b32.xlu0 %v677, 32
    %v2139 = vpop.permute.xlu0 %2138
    %2140 = vrot.lane.b32.xlu0 %v735, 32
    %v2141 = vpop.permute.xlu0 %2140
    %2142 = vrot.lane.b32.xlu0 %v738, 32
    %v2143 = vpop.permute.xlu0 %2142
    %2144 = vrot.lane.b32.xlu0 %v796, 32
    %v2145 = vpop.permute.xlu0 %2144
    %2146 = vrot.lane.b32.xlu0 %v799, 32
    %v2147 = vpop.permute.xlu0 %2146
    %2148 = vrot.lane.b32.xlu0 %v857, 32
    %v2149 = vpop.permute.xlu0 %2148
    %2150 = vrot.lane.b32.xlu0 %v860, 32
    %v2151 = vpop.permute.xlu0 %2150
    %2152 = vrot.lane.b32.xlu0 %v918, 32
    %v2153 = vpop.permute.xlu0 %2152
    %2154 = vrot.lane.b32.xlu0 %v921, 32
    %v2155 = vpop.permute.xlu0 %2154
    %2156 = vrot.lane.b32.xlu0 %v979, 32
    %v2157 = vpop.permute.xlu0 %2156
    %2158 = vrot.lane.b32.xlu0 %v982, 32
    %v2159 = vpop.permute.xlu0 %2158
    %2160 = vrot.lane.b32.xlu0 %v1040, 32
    %v2161 = vpop.permute.xlu0 %2160
    %2162 = vrot.lane.b32.xlu0 %v1043, 32
    %v2163 = vpop.permute.xlu0 %2162
    %2164 = vrot.lane.b32.xlu0 %v1101, 32
    %v2165 = vpop.permute.xlu0 %2164
    %2166 = vrot.lane.b32.xlu0 %v1104, 32
    %v2167 = vpop.permute.xlu0 %2166
    %2168 = vrot.lane.b32.xlu0 %v1162, 32
    %v2169 = vpop.permute.xlu0 %2168
    %2170 = vrot.lane.b32.xlu0 %v1165, 32
    %v2171 = vpop.permute.xlu0 %2170
    %2172 = vrot.lane.b32.xlu0 %v1223, 32
    %v2173 = vpop.permute.xlu0 %2172
    %2174 = vrot.lane.b32.xlu0 %v1226, 32
    %v2175 = vpop.permute.xlu0 %2174
    %2176 = vrot.lane.b32.xlu0 %v1284, 32
    %v2177 = vpop.permute.xlu0 %2176
    %2178 = vrot.lane.b32.xlu0 %v1287, 32
    %v2179 = vpop.permute.xlu0 %2178
    %2180 = vrot.lane.b32.xlu0 %v1345, 32
    %v2181 = vpop.permute.xlu0 %2180
    %2182 = vrot.lane.b32.xlu0 %v1348, 32
    %v2183 = vpop.permute.xlu0 %2182
    %2184 = vrot.lane.b32.xlu0 %v1406, 32
    %v2185 = vpop.permute.xlu0 %2184
    %2186 = vrot.lane.b32.xlu0 %v1409, 32
    %v2187 = vpop.permute.xlu0 %2186
    %2188 = vrot.lane.b32.xlu0 %v1467, 32
    %v2189 = vpop.permute.xlu0 %2188
    %2190 = vrot.lane.b32.xlu0 %v1470, 32
    %v2191 = vpop.permute.xlu0 %2190
    %2192 = vrot.lane.b32.xlu0 %v1528, 32
    %v2193 = vpop.permute.xlu0 %2192
    %2194 = vrot.lane.b32.xlu0 %v1531, 32
    %v2195 = vpop.permute.xlu0 %2194
    %2196 = vrot.lane.b32.xlu0 %v1589, 32
    %v2197 = vpop.permute.xlu0 %2196
    %2198 = vrot.lane.b32.xlu0 %v1592, 32
    %v2199 = vpop.permute.xlu0 %2198
    %2200 = vrot.lane.b32.xlu0 %v1650, 32
    %v2201 = vpop.permute.xlu0 %2200
    %2202 = vrot.lane.b32.xlu0 %v1653, 32
    %v2203 = vpop.permute.xlu0 %2202
    %2204 = vrot.lane.b32.xlu0 %v1711, 32
    %v2205 = vpop.permute.xlu0 %2204
    %2206 = vrot.lane.b32.xlu0 %v1714, 32
    %v2207 = vpop.permute.xlu0 %2206
    %2208 = vrot.lane.b32.xlu0 %v1772, 32
    %v2209 = vpop.permute.xlu0 %2208
    %2210 = vrot.lane.b32.xlu0 %v1775, 32
    %v2211 = vpop.permute.xlu0 %2210
    %2212 = vrot.lane.b32.xlu0 %v1833, 32
    %v2213 = vpop.permute.xlu0 %2212
    %2214 = vrot.lane.b32.xlu0 %v1836, 32
    %v2215 = vpop.permute.xlu0 %2214
    %2216 = vrot.lane.b32.xlu0 %v1894, 32
    %v2217 = vpop.permute.xlu0 %2216
    %2218 = vrot.lane.b32.xlu0 %v1897, 32
    %v2219 = vpop.permute.xlu0 %2218
    %2220 = vrot.lane.b32.xlu0 %v1955, 32
    %v2221 = vpop.permute.xlu0 %2220
    %2222 = vrot.lane.b32.xlu0 %v1958, 32
    %v2223 = vpop.permute.xlu0 %2222
    %2224 = vrot.lane.b32.xlu0 %v2016, 32
    %v2225 = vpop.permute.xlu0 %2224
    %2226 = vrot.lane.b32.xlu0 %v2019, 32
    %v2227 = vpop.permute.xlu0 %2226
    %2228 = vrot.lane.b32.xlu0 %v2077, 32
    %v2229 = vpop.permute.xlu0 %2228
    %2230 = vrot.lane.b32.xlu0 %v2080, 32
    %v2231 = vpop.permute.xlu0 %2230
    %2328 = vrot.lane.b32.xlu0 %v680, 64
    %v2329 = vpop.permute.xlu0 %2328
    %2330 = vrot.lane.b32.xlu0 %v683, 64
    %v2331 = vpop.permute.xlu0 %2330
    %2332 = vrot.lane.b32.xlu0 %v741, 64
    %v2333 = vpop.permute.xlu0 %2332
    %2334 = vrot.lane.b32.xlu0 %v744, 64
    %v2335 = vpop.permute.xlu0 %2334
    %2336 = vrot.lane.b32.xlu0 %v802, 64
    %v2337 = vpop.permute.xlu0 %2336
    %2338 = vrot.lane.b32.xlu0 %v805, 64
    %v2339 = vpop.permute.xlu0 %2338
    %2340 = vrot.lane.b32.xlu0 %v863, 64
    %v2341 = vpop.permute.xlu0 %2340
    %2342 = vrot.lane.b32.xlu0 %v866, 64
    %v2343 = vpop.permute.xlu0 %2342
    %2344 = vrot.lane.b32.xlu0 %v924, 64
    %v2345 = vpop.permute.xlu0 %2344
    %2346 = vrot.lane.b32.xlu0 %v927, 64
    %v2347 = vpop.permute.xlu0 %2346
    %2348 = vrot.lane.b32.xlu0 %v985, 64
    %v2349 = vpop.permute.xlu0 %2348
    %2350 = vrot.lane.b32.xlu0 %v988, 64
    %v2351 = vpop.permute.xlu0 %2350
    %2352 = vrot.lane.b32.xlu0 %v1046, 64
    %v2353 = vpop.permute.xlu0 %2352
    %2354 = vrot.lane.b32.xlu0 %v1049, 64
    %v2355 = vpop.permute.xlu0 %2354
    %2356 = vrot.lane.b32.xlu0 %v1107, 64
    %v2357 = vpop.permute.xlu0 %2356
    %2358 = vrot.lane.b32.xlu0 %v1110, 64
    %v2359 = vpop.permute.xlu0 %2358
    %2360 = vrot.lane.b32.xlu0 %v1168, 64
    %v2361 = vpop.permute.xlu0 %2360
    %2362 = vrot.lane.b32.xlu0 %v1171, 64
    %v2363 = vpop.permute.xlu0 %2362
    %2364 = vrot.lane.b32.xlu0 %v1229, 64
    %v2365 = vpop.permute.xlu0 %2364
    %2366 = vrot.lane.b32.xlu0 %v1232, 64
    %v2367 = vpop.permute.xlu0 %2366
    %2368 = vrot.lane.b32.xlu0 %v1290, 64
    %v2369 = vpop.permute.xlu0 %2368
    %2370 = vrot.lane.b32.xlu0 %v1293, 64
    %v2371 = vpop.permute.xlu0 %2370
    %2372 = vrot.lane.b32.xlu0 %v1351, 64
    %v2373 = vpop.permute.xlu0 %2372
    %2374 = vrot.lane.b32.xlu0 %v1354, 64
    %v2375 = vpop.permute.xlu0 %2374
    %2376 = vrot.lane.b32.xlu0 %v1412, 64
    %v2377 = vpop.permute.xlu0 %2376
    %2378 = vrot.lane.b32.xlu0 %v1415, 64
    %v2379 = vpop.permute.xlu0 %2378
    %2380 = vrot.lane.b32.xlu0 %v1473, 64
    %v2381 = vpop.permute.xlu0 %2380
    %2382 = vrot.lane.b32.xlu0 %v1476, 64
    %v2383 = vpop.permute.xlu0 %2382
    %2384 = vrot.lane.b32.xlu0 %v1534, 64
    %v2385 = vpop.permute.xlu0 %2384
    %2386 = vrot.lane.b32.xlu0 %v1537, 64
    %v2387 = vpop.permute.xlu0 %2386
    %2388 = vrot.lane.b32.xlu0 %v1595, 64
    %v2389 = vpop.permute.xlu0 %2388
    %2390 = vrot.lane.b32.xlu0 %v1598, 64
    %v2391 = vpop.permute.xlu0 %2390
    %2392 = vrot.lane.b32.xlu0 %v1656, 64
    %v2393 = vpop.permute.xlu0 %2392
    %2394 = vrot.lane.b32.xlu0 %v1659, 64
    %v2395 = vpop.permute.xlu0 %2394
    %2396 = vrot.lane.b32.xlu0 %v1717, 64
    %v2397 = vpop.permute.xlu0 %2396
    %2398 = vrot.lane.b32.xlu0 %v1720, 64
    %v2399 = vpop.permute.xlu0 %2398
    %2400 = vrot.lane.b32.xlu0 %v1778, 64
    %v2401 = vpop.permute.xlu0 %2400
    %2402 = vrot.lane.b32.xlu0 %v1781, 64
    %v2403 = vpop.permute.xlu0 %2402
    %2404 = vrot.lane.b32.xlu0 %v1839, 64
    %v2405 = vpop.permute.xlu0 %2404
    %2406 = vrot.lane.b32.xlu0 %v1842, 64
    %v2407 = vpop.permute.xlu0 %2406
    %2408 = vrot.lane.b32.xlu0 %v1900, 64
    %v2409 = vpop.permute.xlu0 %2408
    %2410 = vrot.lane.b32.xlu0 %v1903, 64
    %v2411 = vpop.permute.xlu0 %2410
    %2412 = vrot.lane.b32.xlu0 %v1961, 64
    %v2413 = vpop.permute.xlu0 %2412
    %2414 = vrot.lane.b32.xlu0 %v1964, 64
    %v2415 = vpop.permute.xlu0 %2414
    %2416 = vrot.lane.b32.xlu0 %v2022, 64
    %v2417 = vpop.permute.xlu0 %2416
    %2418 = vrot.lane.b32.xlu0 %v2025, 64
    %v2419 = vpop.permute.xlu0 %2418
    %2420 = vrot.lane.b32.xlu0 %v2083, 64
    %v2421 = vpop.permute.xlu0 %2420
    %2422 = vrot.lane.b32.xlu0 %v2086, 64
    %v2423 = vpop.permute.xlu0 %2422
    %vm2472 = vcmask 261120
    %v2473 = vsel %vm2472, %v668, %v2137
    %v2474 = vsel %vm2472, %v671, %v2139
    %v2475 = vsel %vm2472, %v729, %v2141
    %v2476 = vsel %vm2472, %v732, %v2143
    %v2477 = vsel %vm2472, %v790, %v2145
    %v2478 = vsel %vm2472, %v793, %v2147
    %v2479 = vsel %vm2472, %v851, %v2149
    %v2480 = vsel %vm2472, %v854, %v2151
    %v2481 = vsel %vm2472, %v912, %v2153
    %v2482 = vsel %vm2472, %v915, %v2155
    %v2483 = vsel %vm2472, %v973, %v2157
    %v2484 = vsel %vm2472, %v976, %v2159
    %v2485 = vsel %vm2472, %v1034, %v2161
    %v2486 = vsel %vm2472, %v1037, %v2163
    %v2487 = vsel %vm2472, %v1095, %v2165
    %v2488 = vsel %vm2472, %v1098, %v2167
    %v2489 = vsel %vm2472, %v1156, %v2169
    %v2490 = vsel %vm2472, %v1159, %v2171
    %v2491 = vsel %vm2472, %v1217, %v2173
    %v2492 = vsel %vm2472, %v1220, %v2175
    %v2493 = vsel %vm2472, %v1278, %v2177
    %v2494 = vsel %vm2472, %v1281, %v2179
    %v2495 = vsel %vm2472, %v1339, %v2181
    %v2496 = vsel %vm2472, %v1342, %v2183
    %v2497 = vsel %vm2472, %v1400, %v2185
    %v2498 = vsel %vm2472, %v1403, %v2187
    %v2499 = vsel %vm2472, %v1461, %v2189
    %v2500 = vsel %vm2472, %v1464, %v2191
    %v2501 = vsel %vm2472, %v1522, %v2193
    %v2502 = vsel %vm2472, %v1525, %v2195
    %v2503 = vsel %vm2472, %v1583, %v2197
    %v2504 = vsel %vm2472, %v1586, %v2199
    %v2505 = vsel %vm2472, %v1644, %v2201
    %v2506 = vsel %vm2472, %v1647, %v2203
    %v2507 = vsel %vm2472, %v1705, %v2205
    %v2508 = vsel %vm2472, %v1708, %v2207
    %v2509 = vsel %vm2472, %v1766, %v2209
    %v2510 = vsel %vm2472, %v1769, %v2211
    %v2511 = vsel %vm2472, %v1827, %v2213
    %v2512 = vsel %vm2472, %v1830, %v2215
    %v2513 = vsel %vm2472, %v1888, %v2217
    %v2514 = vsel %vm2472, %v1891, %v2219
    %v2515 = vsel %vm2472, %v1949, %v2221
    %v2516 = vsel %vm2472, %v1952, %v2223
    %v2517 = vsel %vm2472, %v2010, %v2225
    %v2518 = vsel %vm2472, %v2013, %v2227
    %v2519 = vsel %vm2472, %v2071, %v2229
    %v2520 = vsel %vm2472, %v2074, %v2231
    %vm2521 = vcmask 523264
    %v2522 = vsel %vm2521, %v2473, %v2329
    %v2523 = vsel %vm2521, %v2474, %v2331
    %v2524 = vsel %vm2521, %v2475, %v2333
    %v2525 = vsel %vm2521, %v2476, %v2335
    %v2526 = vsel %vm2521, %v2477, %v2337
    %v2527 = vsel %vm2521, %v2478, %v2339
    %v2528 = vsel %vm2521, %v2479, %v2341
    %v2529 = vsel %vm2521, %v2480, %v2343
    %v2530 = vsel %vm2521, %v2481, %v2345
    %v2531 = vsel %vm2521, %v2482, %v2347
    %v2532 = vsel %vm2521, %v2483, %v2349
    %v2533 = vsel %vm2521, %v2484, %v2351
    %v2534 = vsel %vm2521, %v2485, %v2353
    %v2535 = vsel %vm2521, %v2486, %v2355
    %v2536 = vsel %vm2521, %v2487, %v2357
    %v2537 = vsel %vm2521, %v2488, %v2359
    %v2538 = vsel %vm2521, %v2489, %v2361
    %v2539 = vsel %vm2521, %v2490, %v2363
    %v2540 = vsel %vm2521, %v2491, %v2365
    %v2541 = vsel %vm2521, %v2492, %v2367
    %v2542 = vsel %vm2521, %v2493, %v2369
    %v2543 = vsel %vm2521, %v2494, %v2371
    %v2544 = vsel %vm2521, %v2495, %v2373
    %v2545 = vsel %vm2521, %v2496, %v2375
    %v2546 = vsel %vm2521, %v2497, %v2377
    %v2547 = vsel %vm2521, %v2498, %v2379
    %v2548 = vsel %vm2521, %v2499, %v2381
    %v2549 = vsel %vm2521, %v2500, %v2383
    %v2550 = vsel %vm2521, %v2501, %v2385
    %v2551 = vsel %vm2521, %v2502, %v2387
    %v2552 = vsel %vm2521, %v2503, %v2389
    %v2553 = vsel %vm2521, %v2504, %v2391
    %v2554 = vsel %vm2521, %v2505, %v2393
    %v2555 = vsel %vm2521, %v2506, %v2395
    %v2556 = vsel %vm2521, %v2507, %v2397
    %v2557 = vsel %vm2521, %v2508, %v2399
    %v2558 = vsel %vm2521, %v2509, %v2401
    %v2559 = vsel %vm2521, %v2510, %v2403
    %v2560 = vsel %vm2521, %v2511, %v2405
    %v2561 = vsel %vm2521, %v2512, %v2407
    %v2562 = vsel %vm2521, %v2513, %v2409
    %v2563 = vsel %vm2521, %v2514, %v2411
    %v2564 = vsel %vm2521, %v2515, %v2413
    %v2565 = vsel %vm2521, %v2516, %v2415
    %v2566 = vsel %vm2521, %v2517, %v2417
    %v2567 = vsel %vm2521, %v2518, %v2419
    %v2568 = vsel %vm2521, %v2519, %v2421
    %v2569 = vsel %vm2521, %v2520, %v2423
    %v2570 = vld [vmem:[%s4] sm:$0xff]
    %v2571 = vld [vmem:[%s4 + $0x8] sm:$0xff]
    %v2572 = vld [vmem:[%s4 + $0x10] sm:$0xff]
    %v2573 = vld [vmem:[%s4 + $0x18] sm:$0xff]
    %v2574 = vld [vmem:[%s4 + $0x20] sm:$0xff]
    %v2575 = vld [vmem:[%s4 + $0x28] sm:$0xff]
    %v2576 = vld [vmem:[%s4 + $0x30] sm:$0xff]
    %v2577 = vld [vmem:[%s4 + $0x38] sm:$0xff]
    %v2578 = vld [vmem:[%s4 + $0x40] sm:$0xff]
    %v2579 = vld [vmem:[%s4 + $0x48] sm:$0xff]
    %v2580 = vld [vmem:[%s4 + $0x50] sm:$0xff]
    %v2581 = vld [vmem:[%s4 + $0x58] sm:$0xff]
    %v2582 = vld [vmem:[%s5] sm:$0x1]
    %v2584 = vperm.slane %v2582, 0
    %vm2586 = vcmask 785408
    %v2588 = vsel %vm2586, %v2522, 0
    %v2591 = vsel %vm2586, %v2523, 0
    %v2594 = vsel %vm2586, %v2524, 0
    %v2597 = vsel %vm2586, %v2525, 0
    %v2600 = vsel %vm2586, %v2526, 0
    %v2603 = vsel %vm2586, %v2527, 0
    %v2606 = vsel %vm2586, %v2528, 0
    %v2609 = vsel %vm2586, %v2529, 0
    %v2612 = vsel %vm2586, %v2530, 0
    %v2615 = vsel %vm2586, %v2531, 0
    %v2618 = vsel %vm2586, %v2532, 0
    %v2621 = vsel %vm2586, %v2533, 0
    %v2624 = vsel %vm2586, %v2534, 0
    %v2627 = vsel %vm2586, %v2535, 0
    %v2630 = vsel %vm2586, %v2536, 0
    %v2633 = vsel %vm2586, %v2537, 0
    %v2636 = vsel %vm2586, %v2538, 0
    %v2639 = vsel %vm2586, %v2539, 0
    %v2642 = vsel %vm2586, %v2540, 0
    %v2645 = vsel %vm2586, %v2541, 0
    %v2648 = vsel %vm2586, %v2542, 0
    %v2651 = vsel %vm2586, %v2543, 0
    %v2654 = vsel %vm2586, %v2544, 0
    %v2657 = vsel %vm2586, %v2545, 0
    %v2660 = vsel %vm2586, %v2546, 0
    %v2663 = vsel %vm2586, %v2547, 0
    %v2666 = vsel %vm2586, %v2548, 0
    %v2669 = vsel %vm2586, %v2549, 0
    %v2672 = vsel %vm2586, %v2550, 0
    %v2675 = vsel %vm2586, %v2551, 0
    %v2678 = vsel %vm2586, %v2552, 0
    %v2681 = vsel %vm2586, %v2553, 0
    %v2684 = vsel %vm2586, %v2554, 0
    %v2687 = vsel %vm2586, %v2555, 0
    %v2690 = vsel %vm2586, %v2556, 0
    %v2693 = vsel %vm2586, %v2557, 0
    %v2696 = vsel %vm2586, %v2558, 0
    %v2699 = vsel %vm2586, %v2559, 0
    %v2702 = vsel %vm2586, %v2560, 0
    %v2705 = vsel %vm2586, %v2561, 0
    %v2708 = vsel %vm2586, %v2562, 0
    %v2711 = vsel %vm2586, %v2563, 0
    %v2714 = vsel %vm2586, %v2564, 0
    %v2717 = vsel %vm2586, %v2565, 0
    %v2720 = vsel %vm2586, %v2566, 0
    %v2723 = vsel %vm2586, %v2567, 0
    %v2726 = vsel %vm2586, %v2568, 0
    %v2729 = vsel %vm2586, %v2569, 0
    %2731 = vmatpush.msra.mxu0 0.0
    %2732 = vmatpush.msra.mxu0 0.0
    %2733 = vmatpush.msra.mxu0 0.0
    %2734 = vmatpush.msra.mxu0 0.0
    %2735 = vmatpush.msra.mxu0 %v2581
    %2736 = vmatpush.msra.mxu0 %v2580
    %2737 = vmatpush.msra.mxu0 %v2579
    %2738 = vmatpush.msra.mxu0 %v2578
    %2739 = vmatpush.msra.mxu0 %v2577
    %2740 = vmatpush.msra.mxu0 %v2576
    %2741 = vmatpush.msra.mxu0 %v2575
    %2742 = vmatpush.msra.mxu0 %v2574
    %2743 = vmatpush.msra.mxu0 %v2573
    %2744 = vmatpush.msra.mxu0 %v2572
    %2745 = vmatpush.msra.mxu0 %v2571
    %2746 = vmatpush.msra.mxu0 %v2570
    %2747 = vmatmul.f32.gmra.mxu0 %v2588
    %v2748 = vpop.f32.mrf.mxu0
    %v2749 = vadd.f32 %v2584, %v2748
    %2750 = vmatmul.f32.gmra.mxu0 %v2591
    %v2751 = vpop.f32.mrf.mxu0
    %v2752 = vadd.f32 %v2584, %v2751
    %2753 = vmatmul.f32.gmra.mxu0 %v2594
    %v2754 = vpop.f32.mrf.mxu0
    %v2755 = vadd.f32 %v2584, %v2754
    %2756 = vmatmul.f32.gmra.mxu0 %v2597
    %v2757 = vpop.f32.mrf.mxu0
    %v2758 = vadd.f32 %v2584, %v2757
    %2759 = vmatmul.f32.gmra.mxu0 %v2600
    %v2760 = vpop.f32.mrf.mxu0
    %v2761 = vadd.f32 %v2584, %v2760
    %2762 = vmatmul.f32.gmra.mxu0 %v2603
    %v2763 = vpop.f32.mrf.mxu0
    %v2764 = vadd.f32 %v2584, %v2763
    %2765 = vmatmul.f32.gmra.mxu0 %v2606
    %v2766 = vpop.f32.mrf.mxu0
    %v2767 = vadd.f32 %v2584, %v2766
    %2768 = vmatmul.f32.gmra.mxu0 %v2609
    %v2769 = vpop.f32.mrf.mxu0
    %v2770 = vadd.f32 %v2584, %v2769
    %2771 = vmatmul.f32.gmra.mxu0 %v2612
    %v2772 = vpop.f32.mrf.mxu0
    %v2773 = vadd.f32 %v2584, %v2772
    %2774 = vmatmul.f32.gmra.mxu0 %v2615
    %v2775 = vpop.f32.mrf.mxu0
    %v2776 = vadd.f32 %v2584, %v2775
    %2777 = vmatmul.f32.gmra.mxu0 %v2618
    %v2778 = vpop.f32.mrf.mxu0
    %v2779 = vadd.f32 %v2584, %v2778
    %2780 = vmatmul.f32.gmra.mxu0 %v2621
    %v2781 = vpop.f32.mrf.mxu0
    %v2782 = vadd.f32 %v2584, %v2781
    %2783 = vmatmul.f32.gmra.mxu0 %v2624
    %v2784 = vpop.f32.mrf.mxu0
    %v2785 = vadd.f32 %v2584, %v2784
    %2786 = vmatmul.f32.gmra.mxu0 %v2627
    %v2787 = vpop.f32.mrf.mxu0
    %v2788 = vadd.f32 %v2584, %v2787
    %2789 = vmatmul.f32.gmra.mxu0 %v2630
    %v2790 = vpop.f32.mrf.mxu0
    %v2791 = vadd.f32 %v2584, %v2790
    %2792 = vmatmul.f32.gmra.mxu0 %v2633
    %v2793 = vpop.f32.mrf.mxu0
    %v2794 = vadd.f32 %v2584, %v2793
    %2795 = vmatmul.f32.gmra.mxu0 %v2636
    %v2796 = vpop.f32.mrf.mxu0
    %v2797 = vadd.f32 %v2584, %v2796
    %2798 = vmatmul.f32.gmra.mxu0 %v2639
    %v2799 = vpop.f32.mrf.mxu0
    %v2800 = vadd.f32 %v2584, %v2799
    %2801 = vmatmul.f32.gmra.mxu0 %v2642
    %v2802 = vpop.f32.mrf.mxu0
    %v2803 = vadd.f32 %v2584, %v2802
    %2804 = vmatmul.f32.gmra.mxu0 %v2645
    %v2805 = vpop.f32.mrf.mxu0
    %v2806 = vadd.f32 %v2584, %v2805
    %2807 = vmatmul.f32.gmra.mxu0 %v2648
    %v2808 = vpop.f32.mrf.mxu0
    %v2809 = vadd.f32 %v2584, %v2808
    %2810 = vmatmul.f32.gmra.mxu0 %v2651
    %v2811 = vpop.f32.mrf.mxu0
    %v2812 = vadd.f32 %v2584, %v2811
    %2813 = vmatmul.f32.gmra.mxu0 %v2654
    %v2814 = vpop.f32.mrf.mxu0
    %v2815 = vadd.f32 %v2584, %v2814
    %2816 = vmatmul.f32.gmra.mxu0 %v2657
    %v2817 = vpop.f32.mrf.mxu0
    %v2818 = vadd.f32 %v2584, %v2817
    %2819 = vmatmul.f32.gmra.mxu0 %v2660
    %v2820 = vpop.f32.mrf.mxu0
    %v2821 = vadd.f32 %v2584, %v2820
    %2822 = vmatmul.f32.gmra.mxu0 %v2663
    %v2823 = vpop.f32.mrf.mxu0
    %v2824 = vadd.f32 %v2584, %v2823
    %2825 = vmatmul.f32.gmra.mxu0 %v2666
    %v2826 = vpop.f32.mrf.mxu0
    %v2827 = vadd.f32 %v2584, %v2826
    %2828 = vmatmul.f32.gmra.mxu0 %v2669
    %v2829 = vpop.f32.mrf.mxu0
    %v2830 = vadd.f32 %v2584, %v2829
    %2831 = vmatmul.f32.gmra.mxu0 %v2672
    %v2832 = vpop.f32.mrf.mxu0
    %v2833 = vadd.f32 %v2584, %v2832
    %2834 = vmatmul.f32.gmra.mxu0 %v2675
    %v2835 = vpop.f32.mrf.mxu0
    %v2836 = vadd.f32 %v2584, %v2835
    %2837 = vmatmul.f32.gmra.mxu0 %v2678
    %v2838 = vpop.f32.mrf.mxu0
    %v2839 = vadd.f32 %v2584, %v2838
    %2840 = vmatmul.f32.gmra.mxu0 %v2681
    %v2841 = vpop.f32.mrf.mxu0
    %v2842 = vadd.f32 %v2584, %v2841
    %2843 = vmatmul.f32.gmra.mxu0 %v2684
    %v2844 = vpop.f32.mrf.mxu0
    %v2845 = vadd.f32 %v2584, %v2844
    %2846 = vmatmul.f32.gmra.mxu0 %v2687
    %v2847 = vpop.f32.mrf.mxu0
    %v2848 = vadd.f32 %v2584, %v2847
    %2849 = vmatmul.f32.gmra.mxu0 %v2690
    %v2850 = vpop.f32.mrf.mxu0
    %v2851 = vadd.f32 %v2584, %v2850
    %2852 = vmatmul.f32.gmra.mxu0 %v2693
    %v2853 = vpop.f32.mrf.mxu0
    %v2854 = vadd.f32 %v2584, %v2853
    %2855 = vmatmul.f32.gmra.mxu0 %v2696
    %v2856 = vpop.f32.mrf.mxu0
    %v2857 = vadd.f32 %v2584, %v2856
    %2858 = vmatmul.f32.gmra.mxu0 %v2699
    %v2859 = vpop.f32.mrf.mxu0
    %v2860 = vadd.f32 %v2584, %v2859
    %2861 = vmatmul.f32.gmra.mxu0 %v2702
    %v2862 = vpop.f32.mrf.mxu0
    %v2863 = vadd.f32 %v2584, %v2862
    %2864 = vmatmul.f32.gmra.mxu0 %v2705
    %v2865 = vpop.f32.mrf.mxu0
    %v2866 = vadd.f32 %v2584, %v2865
    %2867 = vmatmul.f32.gmra.mxu0 %v2708
    %v2868 = vpop.f32.mrf.mxu0
    %v2869 = vadd.f32 %v2584, %v2868
    %2870 = vmatmul.f32.gmra.mxu0 %v2711
    %v2871 = vpop.f32.mrf.mxu0
    %v2872 = vadd.f32 %v2584, %v2871
    %2873 = vmatmul.f32.gmra.mxu0 %v2714
    %v2874 = vpop.f32.mrf.mxu0
    %v2875 = vadd.f32 %v2584, %v2874
    %2876 = vmatmul.f32.gmra.mxu0 %v2717
    %v2877 = vpop.f32.mrf.mxu0
    %v2878 = vadd.f32 %v2584, %v2877
    %2879 = vmatmul.f32.gmra.mxu0 %v2720
    %v2880 = vpop.f32.mrf.mxu0
    %v2881 = vadd.f32 %v2584, %v2880
    %2882 = vmatmul.f32.gmra.mxu0 %v2723
    %v2883 = vpop.f32.mrf.mxu0
    %v2884 = vadd.f32 %v2584, %v2883
    %2885 = vmatmul.f32.gmra.mxu0 %v2726
    %v2886 = vpop.f32.mrf.mxu0
    %v2887 = vadd.f32 %v2584, %v2886
    %2888 = vmatmul.f32.gmra.mxu0 %v2729
    %v2889 = vpop.f32.mrf.mxu0
    %v2890 = vadd.f32 %v2584, %v2889
    %2891 = vdwg.mxu0
    %v2892 = vadd.f32 %v2749, %v575
    %v2893 = vadd.f32 %v2752, %v576
    %v2894 = vadd.f32 %v2755, %v577
    %v2895 = vadd.f32 %v2758, %v578
    %v2896 = vadd.f32 %v2761, %v579
    %v2897 = vadd.f32 %v2764, %v580
    %v2898 = vadd.f32 %v2767, %v581
    %v2899 = vadd.f32 %v2770, %v582
    %v2900 = vadd.f32 %v2773, %v583
    %v2901 = vadd.f32 %v2776, %v584
    %v2902 = vadd.f32 %v2779, %v585
    %v2903 = vadd.f32 %v2782, %v586
    %v2904 = vadd.f32 %v2785, %v587
    %v2905 = vadd.f32 %v2788, %v588
    %v2906 = vadd.f32 %v2791, %v589
    %v2907 = vadd.f32 %v2794, %v590
    %v2908 = vadd.f32 %v2797, %v591
    %v2909 = vadd.f32 %v2800, %v592
    %v2910 = vadd.f32 %v2803, %v593
    %v2911 = vadd.f32 %v2806, %v594
    %v2912 = vadd.f32 %v2809, %v595
    %v2913 = vadd.f32 %v2812, %v596
    %v2914 = vadd.f32 %v2815, %v597
    %v2915 = vadd.f32 %v2818, %v598
    %v2916 = vadd.f32 %v2821, %v599
    %v2917 = vadd.f32 %v2824, %v600
    %v2918 = vadd.f32 %v2827, %v601
    %v2919 = vadd.f32 %v2830, %v602
    %v2920 = vadd.f32 %v2833, %v603
    %v2921 = vadd.f32 %v2836, %v604
    %v2922 = vadd.f32 %v2839, %v605
    %v2923 = vadd.f32 %v2842, %v606
    %v2924 = vadd.f32 %v2845, %v607
    %v2925 = vadd.f32 %v2848, %v608
    %v2926 = vadd.f32 %v2851, %v609
    %v2927 = vadd.f32 %v2854, %v610
    %v2928 = vadd.f32 %v2857, %v611
    %v2929 = vadd.f32 %v2860, %v612
    %v2930 = vadd.f32 %v2863, %v613
    %v2931 = vadd.f32 %v2866, %v614
    %v2932 = vadd.f32 %v2869, %v615
    %v2933 = vadd.f32 %v2872, %v616
    %v2934 = vadd.f32 %v2875, %v617
    %v2935 = vadd.f32 %v2878, %v618
    %v2936 = vadd.f32 %v2881, %v619
    %v2937 = vadd.f32 %v2884, %v620
    %v2938 = vadd.f32 %v2887, %v621
    %v2939 = vadd.f32 %v2890, %v622
    %v2940 = vxor.u32 %v2749, 2147483648
    %v2941 = vxor.u32 %v2752, 2147483648
    %v2942 = vxor.u32 %v2755, 2147483648
    %v2943 = vxor.u32 %v2758, 2147483648
    %v2944 = vxor.u32 %v2761, 2147483648
    %v2945 = vxor.u32 %v2764, 2147483648
    %v2946 = vxor.u32 %v2767, 2147483648
    %v2947 = vxor.u32 %v2770, 2147483648
    %v2948 = vxor.u32 %v2773, 2147483648
    %v2949 = vxor.u32 %v2776, 2147483648
    %v2950 = vxor.u32 %v2779, 2147483648
    %v2951 = vxor.u32 %v2782, 2147483648
    %v2952 = vxor.u32 %v2785, 2147483648
    %v2953 = vxor.u32 %v2788, 2147483648
    %v2954 = vxor.u32 %v2791, 2147483648
    %v2955 = vxor.u32 %v2794, 2147483648
    %v2956 = vxor.u32 %v2797, 2147483648
    %v2957 = vxor.u32 %v2800, 2147483648
    %v2958 = vxor.u32 %v2803, 2147483648
    %v2959 = vxor.u32 %v2806, 2147483648
    %v2960 = vxor.u32 %v2809, 2147483648
    %v2961 = vxor.u32 %v2812, 2147483648
    %v2962 = vxor.u32 %v2815, 2147483648
    %v2963 = vxor.u32 %v2818, 2147483648
    %v2964 = vxor.u32 %v2821, 2147483648
    %v2965 = vxor.u32 %v2824, 2147483648
    %v2966 = vxor.u32 %v2827, 2147483648
    %v2967 = vxor.u32 %v2830, 2147483648
    %v2968 = vxor.u32 %v2833, 2147483648
    %v2969 = vxor.u32 %v2836, 2147483648
    %v2970 = vxor.u32 %v2839, 2147483648
    %v2971 = vxor.u32 %v2842, 2147483648
    %v2972 = vxor.u32 %v2845, 2147483648
    %v2973 = vxor.u32 %v2848, 2147483648
    %v2974 = vxor.u32 %v2851, 2147483648
    %v2975 = vxor.u32 %v2854, 2147483648
    %v2976 = vxor.u32 %v2857, 2147483648
    %v2977 = vxor.u32 %v2860, 2147483648
    %v2978 = vxor.u32 %v2863, 2147483648
    %v2979 = vxor.u32 %v2866, 2147483648
    %v2980 = vxor.u32 %v2869, 2147483648
    %v2981 = vxor.u32 %v2872, 2147483648
    %v2982 = vxor.u32 %v2875, 2147483648
    %v2983 = vxor.u32 %v2878, 2147483648
    %v2984 = vxor.u32 %v2881, 2147483648
    %v2985 = vxor.u32 %v2884, 2147483648
    %v2986 = vxor.u32 %v2887, 2147483648
    %v2987 = vxor.u32 %v2890, 2147483648
    %v2988 = vmul.f32 %v2940, 1.442695
    %v2989 = vpow.pop %v2988
    %v2990 = vmul.f32 %v2941, 1.442695
    %v2991 = vpow.pop %v2990
    %v2992 = vmul.f32 %v2942, 1.442695
    %v2993 = vpow.pop %v2992
    %v2994 = vmul.f32 %v2943, 1.442695
    %v2995 = vpow.pop %v2994
    %v2996 = vmul.f32 %v2944, 1.442695
    %v2997 = vpow.pop %v2996
    %v2998 = vmul.f32 %v2945, 1.442695
    %v2999 = vpow.pop %v2998
    %v3000 = vmul.f32 %v2946, 1.442695
    %v3001 = vpow.pop %v3000
    %v3002 = vmul.f32 %v2947, 1.442695
    %v3003 = vpow.pop %v3002
    %v3004 = vmul.f32 %v2948, 1.442695
    %v3005 = vpow.pop %v3004
    %v3006 = vmul.f32 %v2949, 1.442695
    %v3007 = vpow.pop %v3006
    %v3008 = vmul.f32 %v2950, 1.442695
    %v3009 = vpow.pop %v3008
    %v3010 = vmul.f32 %v2951, 1.442695
    %v3011 = vpow.pop %v3010
    %v3012 = vmul.f32 %v2952, 1.442695
    %v3013 = vpow.pop %v3012
    %v3014 = vmul.f32 %v2953, 1.442695
    %v3015 = vpow.pop %v3014
    %v3016 = vmul.f32 %v2954, 1.442695
    %v3017 = vpow.pop %v3016
    %v3018 = vmul.f32 %v2955, 1.442695
    %v3019 = vpow.pop %v3018
    %v3020 = vmul.f32 %v2956, 1.442695
    %v3021 = vpow.pop %v3020
    %v3022 = vmul.f32 %v2957, 1.442695
    %v3023 = vpow.pop %v3022
    %v3024 = vmul.f32 %v2958, 1.442695
    %v3025 = vpow.pop %v3024
    %v3026 = vmul.f32 %v2959, 1.442695
    %v3027 = vpow.pop %v3026
    %v3028 = vmul.f32 %v2960, 1.442695
    %v3029 = vpow.pop %v3028
    %v3030 = vmul.f32 %v2961, 1.442695
    %v3031 = vpow.pop %v3030
    %v3032 = vmul.f32 %v2962, 1.442695
    %v3033 = vpow.pop %v3032
    %v3034 = vmul.f32 %v2963, 1.442695
    %v3035 = vpow.pop %v3034
    %v3036 = vmul.f32 %v2964, 1.442695
    %v3037 = vpow.pop %v3036
    %v3038 = vmul.f32 %v2965, 1.442695
    %v3039 = vpow.pop %v3038
    %v3040 = vmul.f32 %v2966, 1.442695
    %v3041 = vpow.pop %v3040
    %v3042 = vmul.f32 %v2967, 1.442695
    %v3043 = vpow.pop %v3042
    %v3044 = vmul.f32 %v2968, 1.442695
    %v3045 = vpow.pop %v3044
    %v3046 = vmul.f32 %v2969, 1.442695
    %v3047 = vpow.pop %v3046
    %v3048 = vmul.f32 %v2970, 1.442695
    %v3049 = vpow.pop %v3048
    %v3050 = vmul.f32 %v2971, 1.442695
    %v3051 = vpow.pop %v3050
    %v3052 = vmul.f32 %v2972, 1.442695
    %v3053 = vpow.pop %v3052
    %v3054 = vmul.f32 %v2973, 1.442695
    %v3055 = vpow.pop %v3054
    %v3056 = vmul.f32 %v2974, 1.442695
    %v3057 = vpow.pop %v3056
    %v3058 = vmul.f32 %v2975, 1.442695
    %v3059 = vpow.pop %v3058
    %v3060 = vmul.f32 %v2976, 1.442695
    %v3061 = vpow.pop %v3060
    %v3062 = vmul.f32 %v2977, 1.442695
    %v3063 = vpow.pop %v3062
    %v3064 = vmul.f32 %v2978, 1.442695
    %v3065 = vpow.pop %v3064
    %v3066 = vmul.f32 %v2979, 1.442695
    %v3067 = vpow.pop %v3066
    %v3068 = vmul.f32 %v2980, 1.442695
    %v3069 = vpow.pop %v3068
    %v3070 = vmul.f32 %v2981, 1.442695
    %v3071 = vpow.pop %v3070
    %v3072 = vmul.f32 %v2982, 1.442695
    %v3073 = vpow.pop %v3072
    %v3074 = vmul.f32 %v2983, 1.442695
    %v3075 = vpow.pop %v3074
    %v3076 = vmul.f32 %v2984, 1.442695
    %v3077 = vpow.pop %v3076
    %v3078 = vmul.f32 %v2985, 1.442695
    %v3079 = vpow.pop %v3078
    %v3080 = vmul.f32 %v2986, 1.442695
    %v3081 = vpow.pop %v3080
    %v3082 = vmul.f32 %v2987, 1.442695
    %v3083 = vpow.pop %v3082
    %v3084 = vadd.f32 %v2989, 1.0
    %v3085 = vadd.f32 %v2991, 1.0
    %v3086 = vadd.f32 %v2993, 1.0
    %v3087 = vadd.f32 %v2995, 1.0
    %v3088 = vadd.f32 %v2997, 1.0
    %v3089 = vadd.f32 %v2999, 1.0
    %v3090 = vadd.f32 %v3001, 1.0
    %v3091 = vadd.f32 %v3003, 1.0
    %v3092 = vadd.f32 %v3005, 1.0
    %v3093 = vadd.f32 %v3007, 1.0
    %v3094 = vadd.f32 %v3009, 1.0
    %v3095 = vadd.f32 %v3011, 1.0
    %v3096 = vadd.f32 %v3013, 1.0
    %v3097 = vadd.f32 %v3015, 1.0
    %v3098 = vadd.f32 %v3017, 1.0
    %v3099 = vadd.f32 %v3019, 1.0
    %v3100 = vadd.f32 %v3021, 1.0
    %v3101 = vadd.f32 %v3023, 1.0
    %v3102 = vadd.f32 %v3025, 1.0
    %v3103 = vadd.f32 %v3027, 1.0
    %v3104 = vadd.f32 %v3029, 1.0
    %v3105 = vadd.f32 %v3031, 1.0
    %v3106 = vadd.f32 %v3033, 1.0
    %v3107 = vadd.f32 %v3035, 1.0
    %v3108 = vadd.f32 %v3037, 1.0
    %v3109 = vadd.f32 %v3039, 1.0
    %v3110 = vadd.f32 %v3041, 1.0
    %v3111 = vadd.f32 %v3043, 1.0
    %v3112 = vadd.f32 %v3045, 1.0
    %v3113 = vadd.f32 %v3047, 1.0
    %v3114 = vadd.f32 %v3049, 1.0
    %v3115 = vadd.f32 %v3051, 1.0
    %v3116 = vadd.f32 %v3053, 1.0
    %v3117 = vadd.f32 %v3055, 1.0
    %v3118 = vadd.f32 %v3057, 1.0
    %v3119 = vadd.f32 %v3059, 1.0
    %v3120 = vadd.f32 %v3061, 1.0
    %v3121 = vadd.f32 %v3063, 1.0
    %v3122 = vadd.f32 %v3065, 1.0
    %v3123 = vadd.f32 %v3067, 1.0
    %v3124 = vadd.f32 %v3069, 1.0
    %v3125 = vadd.f32 %v3071, 1.0
    %v3126 = vadd.f32 %v3073, 1.0
    %v3127 = vadd.f32 %v3075, 1.0
    %v3128 = vadd.f32 %v3077, 1.0
    %v3129 = vadd.f32 %v3079, 1.0
    %v3130 = vadd.f32 %v3081, 1.0
    %v3131 = vadd.f32 %v3083, 1.0
    %v3132 = vrcp.pop %v3084
    %v3133 = vmul.f32 %v3084, %v3132
    %v3134 = vsub.f32 1.0, %v3133
    %v3135 = vmul.f32 %v3132, %v3134
    %v3136 = vadd.f32 %v3132, %v3135
    %vm3137 = vweird.f32 %v3084
    %vm3138 = vweird.f32 %v3132
    %vm3139 = vmor %vm3137, %vm3138
    %v3140 = vsel %vm3139, %v3132, %v3136
    %v3141 = vand.u32 2147483647, %v3084
    %vm3142 = vcmp.eq.f32.partialorder %v3141, 8.507059e+37
    %v3143 = vand.u32 %v3084, 2147483648
    %v3144 = vor.u32 1.1754944e-38, %v3143
    %v3145 = vsel %vm3142, %v3144, %v3140
    %v3146 = vmul.f32 1.0, %v3145
    %v3147 = vrcp.pop %v3085
    %v3148 = vmul.f32 %v3085, %v3147
    %v3149 = vsub.f32 1.0, %v3148
    %v3150 = vmul.f32 %v3147, %v3149
    %v3151 = vadd.f32 %v3147, %v3150
    %vm3152 = vweird.f32 %v3085
    %vm3153 = vweird.f32 %v3147
    %vm3154 = vmor %vm3152, %vm3153
    %v3155 = vsel %vm3154, %v3147, %v3151
    %v3156 = vand.u32 2147483647, %v3085
    %vm3157 = vcmp.eq.f32.partialorder %v3156, 8.507059e+37
    %v3158 = vand.u32 %v3085, 2147483648
    %v3159 = vor.u32 1.1754944e-38, %v3158
    %v3160 = vsel %vm3157, %v3159, %v3155
    %v3161 = vmul.f32 1.0, %v3160
    %v3162 = vrcp.pop %v3086
    %v3163 = vmul.f32 %v3086, %v3162
    %v3164 = vsub.f32 1.0, %v3163
    %v3165 = vmul.f32 %v3162, %v3164
    %v3166 = vadd.f32 %v3162, %v3165
    %vm3167 = vweird.f32 %v3086
    %vm3168 = vweird.f32 %v3162
    %vm3169 = vmor %vm3167, %vm3168
    %v3170 = vsel %vm3169, %v3162, %v3166
    %v3171 = vand.u32 2147483647, %v3086
    %vm3172 = vcmp.eq.f32.partialorder %v3171, 8.507059e+37
    %v3173 = vand.u32 %v3086, 2147483648
    %v3174 = vor.u32 1.1754944e-38, %v3173
    %v3175 = vsel %vm3172, %v3174, %v3170
    %v3176 = vmul.f32 1.0, %v3175
    %v3177 = vrcp.pop %v3087
    %v3178 = vmul.f32 %v3087, %v3177
    %v3179 = vsub.f32 1.0, %v3178
    %v3180 = vmul.f32 %v3177, %v3179
    %v3181 = vadd.f32 %v3177, %v3180
    %vm3182 = vweird.f32 %v3087
    %vm3183 = vweird.f32 %v3177
    %vm3184 = vmor %vm3182, %vm3183
    %v3185 = vsel %vm3184, %v3177, %v3181
    %v3186 = vand.u32 2147483647, %v3087
    %vm3187 = vcmp.eq.f32.partialorder %v3186, 8.507059e+37
    %v3188 = vand.u32 %v3087, 2147483648
    %v3189 = vor.u32 1.1754944e-38, %v3188
    %v3190 = vsel %vm3187, %v3189, %v3185
    %v3191 = vmul.f32 1.0, %v3190
    %v3192 = vrcp.pop %v3088
    %v3193 = vmul.f32 %v3088, %v3192
    %v3194 = vsub.f32 1.0, %v3193
    %v3195 = vmul.f32 %v3192, %v3194
    %v3196 = vadd.f32 %v3192, %v3195
    %vm3197 = vweird.f32 %v3088
    %vm3198 = vweird.f32 %v3192
    %vm3199 = vmor %vm3197, %vm3198
    %v3200 = vsel %vm3199, %v3192, %v3196
    %v3201 = vand.u32 2147483647, %v3088
    %vm3202 = vcmp.eq.f32.partialorder %v3201, 8.507059e+37
    %v3203 = vand.u32 %v3088, 2147483648
    %v3204 = vor.u32 1.1754944e-38, %v3203
    %v3205 = vsel %vm3202, %v3204, %v3200
    %v3206 = vmul.f32 1.0, %v3205
    %v3207 = vrcp.pop %v3089
    %v3208 = vmul.f32 %v3089, %v3207
    %v3209 = vsub.f32 1.0, %v3208
    %v3210 = vmul.f32 %v3207, %v3209
    %v3211 = vadd.f32 %v3207, %v3210
    %vm3212 = vweird.f32 %v3089
    %vm3213 = vweird.f32 %v3207
    %vm3214 = vmor %vm3212, %vm3213
    %v3215 = vsel %vm3214, %v3207, %v3211
    %v3216 = vand.u32 2147483647, %v3089
    %vm3217 = vcmp.eq.f32.partialorder %v3216, 8.507059e+37
    %v3218 = vand.u32 %v3089, 2147483648
    %v3219 = vor.u32 1.1754944e-38, %v3218
    %v3220 = vsel %vm3217, %v3219, %v3215
    %v3221 = vmul.f32 1.0, %v3220
    %v3222 = vrcp.pop %v3090
    %v3223 = vmul.f32 %v3090, %v3222
    %v3224 = vsub.f32 1.0, %v3223
    %v3225 = vmul.f32 %v3222, %v3224
    %v3226 = vadd.f32 %v3222, %v3225
    %vm3227 = vweird.f32 %v3090
    %vm3228 = vweird.f32 %v3222
    %vm3229 = vmor %vm3227, %vm3228
    %v3230 = vsel %vm3229, %v3222, %v3226
    %v3231 = vand.u32 2147483647, %v3090
    %vm3232 = vcmp.eq.f32.partialorder %v3231, 8.507059e+37
    %v3233 = vand.u32 %v3090, 2147483648
    %v3234 = vor.u32 1.1754944e-38, %v3233
    %v3235 = vsel %vm3232, %v3234, %v3230
    %v3236 = vmul.f32 1.0, %v3235
    %v3237 = vrcp.pop %v3091
    %v3238 = vmul.f32 %v3091, %v3237
    %v3239 = vsub.f32 1.0, %v3238
    %v3240 = vmul.f32 %v3237, %v3239
    %v3241 = vadd.f32 %v3237, %v3240
    %vm3242 = vweird.f32 %v3091
    %vm3243 = vweird.f32 %v3237
    %vm3244 = vmor %vm3242, %vm3243
    %v3245 = vsel %vm3244, %v3237, %v3241
    %v3246 = vand.u32 2147483647, %v3091
    %vm3247 = vcmp.eq.f32.partialorder %v3246, 8.507059e+37
    %v3248 = vand.u32 %v3091, 2147483648
    %v3249 = vor.u32 1.1754944e-38, %v3248
    %v3250 = vsel %vm3247, %v3249, %v3245
    %v3251 = vmul.f32 1.0, %v3250
    %v3252 = vrcp.pop %v3092
    %v3253 = vmul.f32 %v3092, %v3252
    %v3254 = vsub.f32 1.0, %v3253
    %v3255 = vmul.f32 %v3252, %v3254
    %v3256 = vadd.f32 %v3252, %v3255
    %vm3257 = vweird.f32 %v3092
    %vm3258 = vweird.f32 %v3252
    %vm3259 = vmor %vm3257, %vm3258
    %v3260 = vsel %vm3259, %v3252, %v3256
    %v3261 = vand.u32 2147483647, %v3092
    %vm3262 = vcmp.eq.f32.partialorder %v3261, 8.507059e+37
    %v3263 = vand.u32 %v3092, 2147483648
    %v3264 = vor.u32 1.1754944e-38, %v3263
    %v3265 = vsel %vm3262, %v3264, %v3260
    %v3266 = vmul.f32 1.0, %v3265
    %v3267 = vrcp.pop %v3093
    %v3268 = vmul.f32 %v3093, %v3267
    %v3269 = vsub.f32 1.0, %v3268
    %v3270 = vmul.f32 %v3267, %v3269
    %v3271 = vadd.f32 %v3267, %v3270
    %vm3272 = vweird.f32 %v3093
    %vm3273 = vweird.f32 %v3267
    %vm3274 = vmor %vm3272, %vm3273
    %v3275 = vsel %vm3274, %v3267, %v3271
    %v3276 = vand.u32 2147483647, %v3093
    %vm3277 = vcmp.eq.f32.partialorder %v3276, 8.507059e+37
    %v3278 = vand.u32 %v3093, 2147483648
    %v3279 = vor.u32 1.1754944e-38, %v3278
    %v3280 = vsel %vm3277, %v3279, %v3275
    %v3281 = vmul.f32 1.0, %v3280
    %v3282 = vrcp.pop %v3094
    %v3283 = vmul.f32 %v3094, %v3282
    %v3284 = vsub.f32 1.0, %v3283
    %v3285 = vmul.f32 %v3282, %v3284
    %v3286 = vadd.f32 %v3282, %v3285
    %vm3287 = vweird.f32 %v3094
    %vm3288 = vweird.f32 %v3282
    %vm3289 = vmor %vm3287, %vm3288
    %v3290 = vsel %vm3289, %v3282, %v3286
    %v3291 = vand.u32 2147483647, %v3094
    %vm3292 = vcmp.eq.f32.partialorder %v3291, 8.507059e+37
    %v3293 = vand.u32 %v3094, 2147483648
    %v3294 = vor.u32 1.1754944e-38, %v3293
    %v3295 = vsel %vm3292, %v3294, %v3290
    %v3296 = vmul.f32 1.0, %v3295
    %v3297 = vrcp.pop %v3095
    %v3298 = vmul.f32 %v3095, %v3297
    %v3299 = vsub.f32 1.0, %v3298
    %v3300 = vmul.f32 %v3297, %v3299
    %v3301 = vadd.f32 %v3297, %v3300
    %vm3302 = vweird.f32 %v3095
    %vm3303 = vweird.f32 %v3297
    %vm3304 = vmor %vm3302, %vm3303
    %v3305 = vsel %vm3304, %v3297, %v3301
    %v3306 = vand.u32 2147483647, %v3095
    %vm3307 = vcmp.eq.f32.partialorder %v3306, 8.507059e+37
    %v3308 = vand.u32 %v3095, 2147483648
    %v3309 = vor.u32 1.1754944e-38, %v3308
    %v3310 = vsel %vm3307, %v3309, %v3305
    %v3311 = vmul.f32 1.0, %v3310
    %v3312 = vrcp.pop %v3096
    %v3313 = vmul.f32 %v3096, %v3312
    %v3314 = vsub.f32 1.0, %v3313
    %v3315 = vmul.f32 %v3312, %v3314
    %v3316 = vadd.f32 %v3312, %v3315
    %vm3317 = vweird.f32 %v3096
    %vm3318 = vweird.f32 %v3312
    %vm3319 = vmor %vm3317, %vm3318
    %v3320 = vsel %vm3319, %v3312, %v3316
    %v3321 = vand.u32 2147483647, %v3096
    %vm3322 = vcmp.eq.f32.partialorder %v3321, 8.507059e+37
    %v3323 = vand.u32 %v3096, 2147483648
    %v3324 = vor.u32 1.1754944e-38, %v3323
    %v3325 = vsel %vm3322, %v3324, %v3320
    %v3326 = vmul.f32 1.0, %v3325
    %v3327 = vrcp.pop %v3097
    %v3328 = vmul.f32 %v3097, %v3327
    %v3329 = vsub.f32 1.0, %v3328
    %v3330 = vmul.f32 %v3327, %v3329
    %v3331 = vadd.f32 %v3327, %v3330
    %vm3332 = vweird.f32 %v3097
    %vm3333 = vweird.f32 %v3327
    %vm3334 = vmor %vm3332, %vm3333
    %v3335 = vsel %vm3334, %v3327, %v3331
    %v3336 = vand.u32 2147483647, %v3097
    %vm3337 = vcmp.eq.f32.partialorder %v3336, 8.507059e+37
    %v3338 = vand.u32 %v3097, 2147483648
    %v3339 = vor.u32 1.1754944e-38, %v3338
    %v3340 = vsel %vm3337, %v3339, %v3335
    %v3341 = vmul.f32 1.0, %v3340
    %v3342 = vrcp.pop %v3098
    %v3343 = vmul.f32 %v3098, %v3342
    %v3344 = vsub.f32 1.0, %v3343
    %v3345 = vmul.f32 %v3342, %v3344
    %v3346 = vadd.f32 %v3342, %v3345
    %vm3347 = vweird.f32 %v3098
    %vm3348 = vweird.f32 %v3342
    %vm3349 = vmor %vm3347, %vm3348
    %v3350 = vsel %vm3349, %v3342, %v3346
    %v3351 = vand.u32 2147483647, %v3098
    %vm3352 = vcmp.eq.f32.partialorder %v3351, 8.507059e+37
    %v3353 = vand.u32 %v3098, 2147483648
    %v3354 = vor.u32 1.1754944e-38, %v3353
    %v3355 = vsel %vm3352, %v3354, %v3350
    %v3356 = vmul.f32 1.0, %v3355
    %v3357 = vrcp.pop %v3099
    %v3358 = vmul.f32 %v3099, %v3357
    %v3359 = vsub.f32 1.0, %v3358
    %v3360 = vmul.f32 %v3357, %v3359
    %v3361 = vadd.f32 %v3357, %v3360
    %vm3362 = vweird.f32 %v3099
    %vm3363 = vweird.f32 %v3357
    %vm3364 = vmor %vm3362, %vm3363
    %v3365 = vsel %vm3364, %v3357, %v3361
    %v3366 = vand.u32 2147483647, %v3099
    %vm3367 = vcmp.eq.f32.partialorder %v3366, 8.507059e+37
    %v3368 = vand.u32 %v3099, 2147483648
    %v3369 = vor.u32 1.1754944e-38, %v3368
    %v3370 = vsel %vm3367, %v3369, %v3365
    %v3371 = vmul.f32 1.0, %v3370
    %v3372 = vrcp.pop %v3100
    %v3373 = vmul.f32 %v3100, %v3372
    %v3374 = vsub.f32 1.0, %v3373
    %v3375 = vmul.f32 %v3372, %v3374
    %v3376 = vadd.f32 %v3372, %v3375
    %vm3377 = vweird.f32 %v3100
    %vm3378 = vweird.f32 %v3372
    %vm3379 = vmor %vm3377, %vm3378
    %v3380 = vsel %vm3379, %v3372, %v3376
    %v3381 = vand.u32 2147483647, %v3100
    %vm3382 = vcmp.eq.f32.partialorder %v3381, 8.507059e+37
    %v3383 = vand.u32 %v3100, 2147483648
    %v3384 = vor.u32 1.1754944e-38, %v3383
    %v3385 = vsel %vm3382, %v3384, %v3380
    %v3386 = vmul.f32 1.0, %v3385
    %v3387 = vrcp.pop %v3101
    %v3388 = vmul.f32 %v3101, %v3387
    %v3389 = vsub.f32 1.0, %v3388
    %v3390 = vmul.f32 %v3387, %v3389
    %v3391 = vadd.f32 %v3387, %v3390
    %vm3392 = vweird.f32 %v3101
    %vm3393 = vweird.f32 %v3387
    %vm3394 = vmor %vm3392, %vm3393
    %v3395 = vsel %vm3394, %v3387, %v3391
    %v3396 = vand.u32 2147483647, %v3101
    %vm3397 = vcmp.eq.f32.partialorder %v3396, 8.507059e+37
    %v3398 = vand.u32 %v3101, 2147483648
    %v3399 = vor.u32 1.1754944e-38, %v3398
    %v3400 = vsel %vm3397, %v3399, %v3395
    %v3401 = vmul.f32 1.0, %v3400
    %v3402 = vrcp.pop %v3102
    %v3403 = vmul.f32 %v3102, %v3402
    %v3404 = vsub.f32 1.0, %v3403
    %v3405 = vmul.f32 %v3402, %v3404
    %v3406 = vadd.f32 %v3402, %v3405
    %vm3407 = vweird.f32 %v3102
    %vm3408 = vweird.f32 %v3402
    %vm3409 = vmor %vm3407, %vm3408
    %v3410 = vsel %vm3409, %v3402, %v3406
    %v3411 = vand.u32 2147483647, %v3102
    %vm3412 = vcmp.eq.f32.partialorder %v3411, 8.507059e+37
    %v3413 = vand.u32 %v3102, 2147483648
    %v3414 = vor.u32 1.1754944e-38, %v3413
    %v3415 = vsel %vm3412, %v3414, %v3410
    %v3416 = vmul.f32 1.0, %v3415
    %v3417 = vrcp.pop %v3103
    %v3418 = vmul.f32 %v3103, %v3417
    %v3419 = vsub.f32 1.0, %v3418
    %v3420 = vmul.f32 %v3417, %v3419
    %v3421 = vadd.f32 %v3417, %v3420
    %vm3422 = vweird.f32 %v3103
    %vm3423 = vweird.f32 %v3417
    %vm3424 = vmor %vm3422, %vm3423
    %v3425 = vsel %vm3424, %v3417, %v3421
    %v3426 = vand.u32 2147483647, %v3103
    %vm3427 = vcmp.eq.f32.partialorder %v3426, 8.507059e+37
    %v3428 = vand.u32 %v3103, 2147483648
    %v3429 = vor.u32 1.1754944e-38, %v3428
    %v3430 = vsel %vm3427, %v3429, %v3425
    %v3431 = vmul.f32 1.0, %v3430
    %v3432 = vrcp.pop %v3104
    %v3433 = vmul.f32 %v3104, %v3432
    %v3434 = vsub.f32 1.0, %v3433
    %v3435 = vmul.f32 %v3432, %v3434
    %v3436 = vadd.f32 %v3432, %v3435
    %vm3437 = vweird.f32 %v3104
    %vm3438 = vweird.f32 %v3432
    %vm3439 = vmor %vm3437, %vm3438
    %v3440 = vsel %vm3439, %v3432, %v3436
    %v3441 = vand.u32 2147483647, %v3104
    %vm3442 = vcmp.eq.f32.partialorder %v3441, 8.507059e+37
    %v3443 = vand.u32 %v3104, 2147483648
    %v3444 = vor.u32 1.1754944e-38, %v3443
    %v3445 = vsel %vm3442, %v3444, %v3440
    %v3446 = vmul.f32 1.0, %v3445
    %v3447 = vrcp.pop %v3105
    %v3448 = vmul.f32 %v3105, %v3447
    %v3449 = vsub.f32 1.0, %v3448
    %v3450 = vmul.f32 %v3447, %v3449
    %v3451 = vadd.f32 %v3447, %v3450
    %vm3452 = vweird.f32 %v3105
    %vm3453 = vweird.f32 %v3447
    %vm3454 = vmor %vm3452, %vm3453
    %v3455 = vsel %vm3454, %v3447, %v3451
    %v3456 = vand.u32 2147483647, %v3105
    %vm3457 = vcmp.eq.f32.partialorder %v3456, 8.507059e+37
    %v3458 = vand.u32 %v3105, 2147483648
    %v3459 = vor.u32 1.1754944e-38, %v3458
    %v3460 = vsel %vm3457, %v3459, %v3455
    %v3461 = vmul.f32 1.0, %v3460
    %v3462 = vrcp.pop %v3106
    %v3463 = vmul.f32 %v3106, %v3462
    %v3464 = vsub.f32 1.0, %v3463
    %v3465 = vmul.f32 %v3462, %v3464
    %v3466 = vadd.f32 %v3462, %v3465
    %vm3467 = vweird.f32 %v3106
    %vm3468 = vweird.f32 %v3462
    %vm3469 = vmor %vm3467, %vm3468
    %v3470 = vsel %vm3469, %v3462, %v3466
    %v3471 = vand.u32 2147483647, %v3106
    %vm3472 = vcmp.eq.f32.partialorder %v3471, 8.507059e+37
    %v3473 = vand.u32 %v3106, 2147483648
    %v3474 = vor.u32 1.1754944e-38, %v3473
    %v3475 = vsel %vm3472, %v3474, %v3470
    %v3476 = vmul.f32 1.0, %v3475
    %v3477 = vrcp.pop %v3107
    %v3478 = vmul.f32 %v3107, %v3477
    %v3479 = vsub.f32 1.0, %v3478
    %v3480 = vmul.f32 %v3477, %v3479
    %v3481 = vadd.f32 %v3477, %v3480
    %vm3482 = vweird.f32 %v3107
    %vm3483 = vweird.f32 %v3477
    %vm3484 = vmor %vm3482, %vm3483
    %v3485 = vsel %vm3484, %v3477, %v3481
    %v3486 = vand.u32 2147483647, %v3107
    %vm3487 = vcmp.eq.f32.partialorder %v3486, 8.507059e+37
    %v3488 = vand.u32 %v3107, 2147483648
    %v3489 = vor.u32 1.1754944e-38, %v3488
    %v3490 = vsel %vm3487, %v3489, %v3485
    %v3491 = vmul.f32 1.0, %v3490
    %v3492 = vrcp.pop %v3108
    %v3493 = vmul.f32 %v3108, %v3492
    %v3494 = vsub.f32 1.0, %v3493
    %v3495 = vmul.f32 %v3492, %v3494
    %v3496 = vadd.f32 %v3492, %v3495
    %vm3497 = vweird.f32 %v3108
    %vm3498 = vweird.f32 %v3492
    %vm3499 = vmor %vm3497, %vm3498
    %v3500 = vsel %vm3499, %v3492, %v3496
    %v3501 = vand.u32 2147483647, %v3108
    %vm3502 = vcmp.eq.f32.partialorder %v3501, 8.507059e+37
    %v3503 = vand.u32 %v3108, 2147483648
    %v3504 = vor.u32 1.1754944e-38, %v3503
    %v3505 = vsel %vm3502, %v3504, %v3500
    %v3506 = vmul.f32 1.0, %v3505
    %v3507 = vrcp.pop %v3109
    %v3508 = vmul.f32 %v3109, %v3507
    %v3509 = vsub.f32 1.0, %v3508
    %v3510 = vmul.f32 %v3507, %v3509
    %v3511 = vadd.f32 %v3507, %v3510
    %vm3512 = vweird.f32 %v3109
    %vm3513 = vweird.f32 %v3507
    %vm3514 = vmor %vm3512, %vm3513
    %v3515 = vsel %vm3514, %v3507, %v3511
    %v3516 = vand.u32 2147483647, %v3109
    %vm3517 = vcmp.eq.f32.partialorder %v3516, 8.507059e+37
    %v3518 = vand.u32 %v3109, 2147483648
    %v3519 = vor.u32 1.1754944e-38, %v3518
    %v3520 = vsel %vm3517, %v3519, %v3515
    %v3521 = vmul.f32 1.0, %v3520
    %v3522 = vrcp.pop %v3110
    %v3523 = vmul.f32 %v3110, %v3522
    %v3524 = vsub.f32 1.0, %v3523
    %v3525 = vmul.f32 %v3522, %v3524
    %v3526 = vadd.f32 %v3522, %v3525
    %vm3527 = vweird.f32 %v3110
    %vm3528 = vweird.f32 %v3522
    %vm3529 = vmor %vm3527, %vm3528
    %v3530 = vsel %vm3529, %v3522, %v3526
    %v3531 = vand.u32 2147483647, %v3110
    %vm3532 = vcmp.eq.f32.partialorder %v3531, 8.507059e+37
    %v3533 = vand.u32 %v3110, 2147483648
    %v3534 = vor.u32 1.1754944e-38, %v3533
    %v3535 = vsel %vm3532, %v3534, %v3530
    %v3536 = vmul.f32 1.0, %v3535
    %v3537 = vrcp.pop %v3111
    %v3538 = vmul.f32 %v3111, %v3537
    %v3539 = vsub.f32 1.0, %v3538
    %v3540 = vmul.f32 %v3537, %v3539
    %v3541 = vadd.f32 %v3537, %v3540
    %vm3542 = vweird.f32 %v3111
    %vm3543 = vweird.f32 %v3537
    %vm3544 = vmor %vm3542, %vm3543
    %v3545 = vsel %vm3544, %v3537, %v3541
    %v3546 = vand.u32 2147483647, %v3111
    %vm3547 = vcmp.eq.f32.partialorder %v3546, 8.507059e+37
    %v3548 = vand.u32 %v3111, 2147483648
    %v3549 = vor.u32 1.1754944e-38, %v3548
    %v3550 = vsel %vm3547, %v3549, %v3545
    %v3551 = vmul.f32 1.0, %v3550
    %v3552 = vrcp.pop %v3112
    %v3553 = vmul.f32 %v3112, %v3552
    %v3554 = vsub.f32 1.0, %v3553
    %v3555 = vmul.f32 %v3552, %v3554
    %v3556 = vadd.f32 %v3552, %v3555
    %vm3557 = vweird.f32 %v3112
    %vm3558 = vweird.f32 %v3552
    %vm3559 = vmor %vm3557, %vm3558
    %v3560 = vsel %vm3559, %v3552, %v3556
    %v3561 = vand.u32 2147483647, %v3112
    %vm3562 = vcmp.eq.f32.partialorder %v3561, 8.507059e+37
    %v3563 = vand.u32 %v3112, 2147483648
    %v3564 = vor.u32 1.1754944e-38, %v3563
    %v3565 = vsel %vm3562, %v3564, %v3560
    %v3566 = vmul.f32 1.0, %v3565
    %v3567 = vrcp.pop %v3113
    %v3568 = vmul.f32 %v3113, %v3567
    %v3569 = vsub.f32 1.0, %v3568
    %v3570 = vmul.f32 %v3567, %v3569
    %v3571 = vadd.f32 %v3567, %v3570
    %vm3572 = vweird.f32 %v3113
    %vm3573 = vweird.f32 %v3567
    %vm3574 = vmor %vm3572, %vm3573
    %v3575 = vsel %vm3574, %v3567, %v3571
    %v3576 = vand.u32 2147483647, %v3113
    %vm3577 = vcmp.eq.f32.partialorder %v3576, 8.507059e+37
    %v3578 = vand.u32 %v3113, 2147483648
    %v3579 = vor.u32 1.1754944e-38, %v3578
    %v3580 = vsel %vm3577, %v3579, %v3575
    %v3581 = vmul.f32 1.0, %v3580
    %v3582 = vrcp.pop %v3114
    %v3583 = vmul.f32 %v3114, %v3582
    %v3584 = vsub.f32 1.0, %v3583
    %v3585 = vmul.f32 %v3582, %v3584
    %v3586 = vadd.f32 %v3582, %v3585
    %vm3587 = vweird.f32 %v3114
    %vm3588 = vweird.f32 %v3582
    %vm3589 = vmor %vm3587, %vm3588
    %v3590 = vsel %vm3589, %v3582, %v3586
    %v3591 = vand.u32 2147483647, %v3114
    %vm3592 = vcmp.eq.f32.partialorder %v3591, 8.507059e+37
    %v3593 = vand.u32 %v3114, 2147483648
    %v3594 = vor.u32 1.1754944e-38, %v3593
    %v3595 = vsel %vm3592, %v3594, %v3590
    %v3596 = vmul.f32 1.0, %v3595
    %v3597 = vrcp.pop %v3115
    %v3598 = vmul.f32 %v3115, %v3597
    %v3599 = vsub.f32 1.0, %v3598
    %v3600 = vmul.f32 %v3597, %v3599
    %v3601 = vadd.f32 %v3597, %v3600
    %vm3602 = vweird.f32 %v3115
    %vm3603 = vweird.f32 %v3597
    %vm3604 = vmor %vm3602, %vm3603
    %v3605 = vsel %vm3604, %v3597, %v3601
    %v3606 = vand.u32 2147483647, %v3115
    %vm3607 = vcmp.eq.f32.partialorder %v3606, 8.507059e+37
    %v3608 = vand.u32 %v3115, 2147483648
    %v3609 = vor.u32 1.1754944e-38, %v3608
    %v3610 = vsel %vm3607, %v3609, %v3605
    %v3611 = vmul.f32 1.0, %v3610
    %v3612 = vrcp.pop %v3116
    %v3613 = vmul.f32 %v3116, %v3612
    %v3614 = vsub.f32 1.0, %v3613
    %v3615 = vmul.f32 %v3612, %v3614
    %v3616 = vadd.f32 %v3612, %v3615
    %vm3617 = vweird.f32 %v3116
    %vm3618 = vweird.f32 %v3612
    %vm3619 = vmor %vm3617, %vm3618
    %v3620 = vsel %vm3619, %v3612, %v3616
    %v3621 = vand.u32 2147483647, %v3116
    %vm3622 = vcmp.eq.f32.partialorder %v3621, 8.507059e+37
    %v3623 = vand.u32 %v3116, 2147483648
    %v3624 = vor.u32 1.1754944e-38, %v3623
    %v3625 = vsel %vm3622, %v3624, %v3620
    %v3626 = vmul.f32 1.0, %v3625
    %v3627 = vrcp.pop %v3117
    %v3628 = vmul.f32 %v3117, %v3627
    %v3629 = vsub.f32 1.0, %v3628
    %v3630 = vmul.f32 %v3627, %v3629
    %v3631 = vadd.f32 %v3627, %v3630
    %vm3632 = vweird.f32 %v3117
    %vm3633 = vweird.f32 %v3627
    %vm3634 = vmor %vm3632, %vm3633
    %v3635 = vsel %vm3634, %v3627, %v3631
    %v3636 = vand.u32 2147483647, %v3117
    %vm3637 = vcmp.eq.f32.partialorder %v3636, 8.507059e+37
    %v3638 = vand.u32 %v3117, 2147483648
    %v3639 = vor.u32 1.1754944e-38, %v3638
    %v3640 = vsel %vm3637, %v3639, %v3635
    %v3641 = vmul.f32 1.0, %v3640
    %v3642 = vrcp.pop %v3118
    %v3643 = vmul.f32 %v3118, %v3642
    %v3644 = vsub.f32 1.0, %v3643
    %v3645 = vmul.f32 %v3642, %v3644
    %v3646 = vadd.f32 %v3642, %v3645
    %vm3647 = vweird.f32 %v3118
    %vm3648 = vweird.f32 %v3642
    %vm3649 = vmor %vm3647, %vm3648
    %v3650 = vsel %vm3649, %v3642, %v3646
    %v3651 = vand.u32 2147483647, %v3118
    %vm3652 = vcmp.eq.f32.partialorder %v3651, 8.507059e+37
    %v3653 = vand.u32 %v3118, 2147483648
    %v3654 = vor.u32 1.1754944e-38, %v3653
    %v3655 = vsel %vm3652, %v3654, %v3650
    %v3656 = vmul.f32 1.0, %v3655
    %v3657 = vrcp.pop %v3119
    %v3658 = vmul.f32 %v3119, %v3657
    %v3659 = vsub.f32 1.0, %v3658
    %v3660 = vmul.f32 %v3657, %v3659
    %v3661 = vadd.f32 %v3657, %v3660
    %vm3662 = vweird.f32 %v3119
    %vm3663 = vweird.f32 %v3657
    %vm3664 = vmor %vm3662, %vm3663
    %v3665 = vsel %vm3664, %v3657, %v3661
    %v3666 = vand.u32 2147483647, %v3119
    %vm3667 = vcmp.eq.f32.partialorder %v3666, 8.507059e+37
    %v3668 = vand.u32 %v3119, 2147483648
    %v3669 = vor.u32 1.1754944e-38, %v3668
    %v3670 = vsel %vm3667, %v3669, %v3665
    %v3671 = vmul.f32 1.0, %v3670
    %v3672 = vrcp.pop %v3120
    %v3673 = vmul.f32 %v3120, %v3672
    %v3674 = vsub.f32 1.0, %v3673
    %v3675 = vmul.f32 %v3672, %v3674
    %v3676 = vadd.f32 %v3672, %v3675
    %vm3677 = vweird.f32 %v3120
    %vm3678 = vweird.f32 %v3672
    %vm3679 = vmor %vm3677, %vm3678
    %v3680 = vsel %vm3679, %v3672, %v3676
    %v3681 = vand.u32 2147483647, %v3120
    %vm3682 = vcmp.eq.f32.partialorder %v3681, 8.507059e+37
    %v3683 = vand.u32 %v3120, 2147483648
    %v3684 = vor.u32 1.1754944e-38, %v3683
    %v3685 = vsel %vm3682, %v3684, %v3680
    %v3686 = vmul.f32 1.0, %v3685
    %v3687 = vrcp.pop %v3121
    %v3688 = vmul.f32 %v3121, %v3687
    %v3689 = vsub.f32 1.0, %v3688
    %v3690 = vmul.f32 %v3687, %v3689
    %v3691 = vadd.f32 %v3687, %v3690
    %vm3692 = vweird.f32 %v3121
    %vm3693 = vweird.f32 %v3687
    %vm3694 = vmor %vm3692, %vm3693
    %v3695 = vsel %vm3694, %v3687, %v3691
    %v3696 = vand.u32 2147483647, %v3121
    %vm3697 = vcmp.eq.f32.partialorder %v3696, 8.507059e+37
    %v3698 = vand.u32 %v3121, 2147483648
    %v3699 = vor.u32 1.1754944e-38, %v3698
    %v3700 = vsel %vm3697, %v3699, %v3695
    %v3701 = vmul.f32 1.0, %v3700
    %v3702 = vrcp.pop %v3122
    %v3703 = vmul.f32 %v3122, %v3702
    %v3704 = vsub.f32 1.0, %v3703
    %v3705 = vmul.f32 %v3702, %v3704
    %v3706 = vadd.f32 %v3702, %v3705
    %vm3707 = vweird.f32 %v3122
    %vm3708 = vweird.f32 %v3702
    %vm3709 = vmor %vm3707, %vm3708
    %v3710 = vsel %vm3709, %v3702, %v3706
    %v3711 = vand.u32 2147483647, %v3122
    %vm3712 = vcmp.eq.f32.partialorder %v3711, 8.507059e+37
    %v3713 = vand.u32 %v3122, 2147483648
    %v3714 = vor.u32 1.1754944e-38, %v3713
    %v3715 = vsel %vm3712, %v3714, %v3710
    %v3716 = vmul.f32 1.0, %v3715
    %v3717 = vrcp.pop %v3123
    %v3718 = vmul.f32 %v3123, %v3717
    %v3719 = vsub.f32 1.0, %v3718
    %v3720 = vmul.f32 %v3717, %v3719
    %v3721 = vadd.f32 %v3717, %v3720
    %vm3722 = vweird.f32 %v3123
    %vm3723 = vweird.f32 %v3717
    %vm3724 = vmor %vm3722, %vm3723
    %v3725 = vsel %vm3724, %v3717, %v3721
    %v3726 = vand.u32 2147483647, %v3123
    %vm3727 = vcmp.eq.f32.partialorder %v3726, 8.507059e+37
    %v3728 = vand.u32 %v3123, 2147483648
    %v3729 = vor.u32 1.1754944e-38, %v3728
    %v3730 = vsel %vm3727, %v3729, %v3725
    %v3731 = vmul.f32 1.0, %v3730
    %v3732 = vrcp.pop %v3124
    %v3733 = vmul.f32 %v3124, %v3732
    %v3734 = vsub.f32 1.0, %v3733
    %v3735 = vmul.f32 %v3732, %v3734
    %v3736 = vadd.f32 %v3732, %v3735
    %vm3737 = vweird.f32 %v3124
    %vm3738 = vweird.f32 %v3732
    %vm3739 = vmor %vm3737, %vm3738
    %v3740 = vsel %vm3739, %v3732, %v3736
    %v3741 = vand.u32 2147483647, %v3124
    %vm3742 = vcmp.eq.f32.partialorder %v3741, 8.507059e+37
    %v3743 = vand.u32 %v3124, 2147483648
    %v3744 = vor.u32 1.1754944e-38, %v3743
    %v3745 = vsel %vm3742, %v3744, %v3740
    %v3746 = vmul.f32 1.0, %v3745
    %v3747 = vrcp.pop %v3125
    %v3748 = vmul.f32 %v3125, %v3747
    %v3749 = vsub.f32 1.0, %v3748
    %v3750 = vmul.f32 %v3747, %v3749
    %v3751 = vadd.f32 %v3747, %v3750
    %vm3752 = vweird.f32 %v3125
    %vm3753 = vweird.f32 %v3747
    %vm3754 = vmor %vm3752, %vm3753
    %v3755 = vsel %vm3754, %v3747, %v3751
    %v3756 = vand.u32 2147483647, %v3125
    %vm3757 = vcmp.eq.f32.partialorder %v3756, 8.507059e+37
    %v3758 = vand.u32 %v3125, 2147483648
    %v3759 = vor.u32 1.1754944e-38, %v3758
    %v3760 = vsel %vm3757, %v3759, %v3755
    %v3761 = vmul.f32 1.0, %v3760
    %v3762 = vrcp.pop %v3126
    %v3763 = vmul.f32 %v3126, %v3762
    %v3764 = vsub.f32 1.0, %v3763
    %v3765 = vmul.f32 %v3762, %v3764
    %v3766 = vadd.f32 %v3762, %v3765
    %vm3767 = vweird.f32 %v3126
    %vm3768 = vweird.f32 %v3762
    %vm3769 = vmor %vm3767, %vm3768
    %v3770 = vsel %vm3769, %v3762, %v3766
    %v3771 = vand.u32 2147483647, %v3126
    %vm3772 = vcmp.eq.f32.partialorder %v3771, 8.507059e+37
    %v3773 = vand.u32 %v3126, 2147483648
    %v3774 = vor.u32 1.1754944e-38, %v3773
    %v3775 = vsel %vm3772, %v3774, %v3770
    %v3776 = vmul.f32 1.0, %v3775
    %v3777 = vrcp.pop %v3127
    %v3778 = vmul.f32 %v3127, %v3777
    %v3779 = vsub.f32 1.0, %v3778
    %v3780 = vmul.f32 %v3777, %v3779
    %v3781 = vadd.f32 %v3777, %v3780
    %vm3782 = vweird.f32 %v3127
    %vm3783 = vweird.f32 %v3777
    %vm3784 = vmor %vm3782, %vm3783
    %v3785 = vsel %vm3784, %v3777, %v3781
    %v3786 = vand.u32 2147483647, %v3127
    %vm3787 = vcmp.eq.f32.partialorder %v3786, 8.507059e+37
    %v3788 = vand.u32 %v3127, 2147483648
    %v3789 = vor.u32 1.1754944e-38, %v3788
    %v3790 = vsel %vm3787, %v3789, %v3785
    %v3791 = vmul.f32 1.0, %v3790
    %v3792 = vrcp.pop %v3128
    %v3793 = vmul.f32 %v3128, %v3792
    %v3794 = vsub.f32 1.0, %v3793
    %v3795 = vmul.f32 %v3792, %v3794
    %v3796 = vadd.f32 %v3792, %v3795
    %vm3797 = vweird.f32 %v3128
    %vm3798 = vweird.f32 %v3792
    %vm3799 = vmor %vm3797, %vm3798
    %v3800 = vsel %vm3799, %v3792, %v3796
    %v3801 = vand.u32 2147483647, %v3128
    %vm3802 = vcmp.eq.f32.partialorder %v3801, 8.507059e+37
    %v3803 = vand.u32 %v3128, 2147483648
    %v3804 = vor.u32 1.1754944e-38, %v3803
    %v3805 = vsel %vm3802, %v3804, %v3800
    %v3806 = vmul.f32 1.0, %v3805
    %v3807 = vrcp.pop %v3129
    %v3808 = vmul.f32 %v3129, %v3807
    %v3809 = vsub.f32 1.0, %v3808
    %v3810 = vmul.f32 %v3807, %v3809
    %v3811 = vadd.f32 %v3807, %v3810
    %vm3812 = vweird.f32 %v3129
    %vm3813 = vweird.f32 %v3807
    %vm3814 = vmor %vm3812, %vm3813
    %v3815 = vsel %vm3814, %v3807, %v3811
    %v3816 = vand.u32 2147483647, %v3129
    %vm3817 = vcmp.eq.f32.partialorder %v3816, 8.507059e+37
    %v3818 = vand.u32 %v3129, 2147483648
    %v3819 = vor.u32 1.1754944e-38, %v3818
    %v3820 = vsel %vm3817, %v3819, %v3815
    %v3821 = vmul.f32 1.0, %v3820
    %v3822 = vrcp.pop %v3130
    %v3823 = vmul.f32 %v3130, %v3822
    %v3824 = vsub.f32 1.0, %v3823
    %v3825 = vmul.f32 %v3822, %v3824
    %v3826 = vadd.f32 %v3822, %v3825
    %vm3827 = vweird.f32 %v3130
    %vm3828 = vweird.f32 %v3822
    %vm3829 = vmor %vm3827, %vm3828
    %v3830 = vsel %vm3829, %v3822, %v3826
    %v3831 = vand.u32 2147483647, %v3130
    %vm3832 = vcmp.eq.f32.partialorder %v3831, 8.507059e+37
    %v3833 = vand.u32 %v3130, 2147483648
    %v3834 = vor.u32 1.1754944e-38, %v3833
    %v3835 = vsel %vm3832, %v3834, %v3830
    %v3836 = vmul.f32 1.0, %v3835
    %v3837 = vrcp.pop %v3131
    %v3838 = vmul.f32 %v3131, %v3837
    %v3839 = vsub.f32 1.0, %v3838
    %v3840 = vmul.f32 %v3837, %v3839
    %v3841 = vadd.f32 %v3837, %v3840
    %vm3842 = vweird.f32 %v3131
    %vm3843 = vweird.f32 %v3837
    %vm3844 = vmor %vm3842, %vm3843
    %v3845 = vsel %vm3844, %v3837, %v3841
    %v3846 = vand.u32 2147483647, %v3131
    %vm3847 = vcmp.eq.f32.partialorder %v3846, 8.507059e+37
    %v3848 = vand.u32 %v3131, 2147483648
    %v3849 = vor.u32 1.1754944e-38, %v3848
    %v3850 = vsel %vm3847, %v3849, %v3845
    %v3851 = vmul.f32 1.0, %v3850
    %3900 = vrot.lane.b32.xlu0 %v3146, 96
    %v3901 = vpop.permute.xlu0 %3900
    %3902 = vrot.lane.b32.xlu0 %v3161, 96
    %v3903 = vpop.permute.xlu0 %3902
    %3904 = vrot.lane.b32.xlu0 %v3176, 96
    %v3905 = vpop.permute.xlu0 %3904
    %3906 = vrot.lane.b32.xlu0 %v3191, 96
    %v3907 = vpop.permute.xlu0 %3906
    %3908 = vrot.lane.b32.xlu0 %v3206, 96
    %v3909 = vpop.permute.xlu0 %3908
    %3910 = vrot.lane.b32.xlu0 %v3221, 96
    %v3911 = vpop.permute.xlu0 %3910
    %3912 = vrot.lane.b32.xlu0 %v3236, 96
    %v3913 = vpop.permute.xlu0 %3912
    %3914 = vrot.lane.b32.xlu0 %v3251, 96
    %v3915 = vpop.permute.xlu0 %3914
    %3916 = vrot.lane.b32.xlu0 %v3266, 96
    %v3917 = vpop.permute.xlu0 %3916
    %3918 = vrot.lane.b32.xlu0 %v3281, 96
    %v3919 = vpop.permute.xlu0 %3918
    %3920 = vrot.lane.b32.xlu0 %v3296, 96
    %v3921 = vpop.permute.xlu0 %3920
    %3922 = vrot.lane.b32.xlu0 %v3311, 96
    %v3923 = vpop.permute.xlu0 %3922
    %3924 = vrot.lane.b32.xlu0 %v3326, 96
    %v3925 = vpop.permute.xlu0 %3924
    %3926 = vrot.lane.b32.xlu0 %v3341, 96
    %v3927 = vpop.permute.xlu0 %3926
    %3928 = vrot.lane.b32.xlu0 %v3356, 96
    %v3929 = vpop.permute.xlu0 %3928
    %3930 = vrot.lane.b32.xlu0 %v3371, 96
    %v3931 = vpop.permute.xlu0 %3930
    %3932 = vrot.lane.b32.xlu0 %v3386, 96
    %v3933 = vpop.permute.xlu0 %3932
    %3934 = vrot.lane.b32.xlu0 %v3401, 96
    %v3935 = vpop.permute.xlu0 %3934
    %3936 = vrot.lane.b32.xlu0 %v3416, 96
    %v3937 = vpop.permute.xlu0 %3936
    %3938 = vrot.lane.b32.xlu0 %v3431, 96
    %v3939 = vpop.permute.xlu0 %3938
    %3940 = vrot.lane.b32.xlu0 %v3446, 96
    %v3941 = vpop.permute.xlu0 %3940
    %3942 = vrot.lane.b32.xlu0 %v3461, 96
    %v3943 = vpop.permute.xlu0 %3942
    %3944 = vrot.lane.b32.xlu0 %v3476, 96
    %v3945 = vpop.permute.xlu0 %3944
    %3946 = vrot.lane.b32.xlu0 %v3491, 96
    %v3947 = vpop.permute.xlu0 %3946
    %3948 = vrot.lane.b32.xlu0 %v3506, 96
    %v3949 = vpop.permute.xlu0 %3948
    %3950 = vrot.lane.b32.xlu0 %v3521, 96
    %v3951 = vpop.permute.xlu0 %3950
    %3952 = vrot.lane.b32.xlu0 %v3536, 96
    %v3953 = vpop.permute.xlu0 %3952
    %3954 = vrot.lane.b32.xlu0 %v3551, 96
    %v3955 = vpop.permute.xlu0 %3954
    %3956 = vrot.lane.b32.xlu0 %v3566, 96
    %v3957 = vpop.permute.xlu0 %3956
    %3958 = vrot.lane.b32.xlu0 %v3581, 96
    %v3959 = vpop.permute.xlu0 %3958
    %3960 = vrot.lane.b32.xlu0 %v3596, 96
    %v3961 = vpop.permute.xlu0 %3960
    %3962 = vrot.lane.b32.xlu0 %v3611, 96
    %v3963 = vpop.permute.xlu0 %3962
    %3964 = vrot.lane.b32.xlu0 %v3626, 96
    %v3965 = vpop.permute.xlu0 %3964
    %3966 = vrot.lane.b32.xlu0 %v3641, 96
    %v3967 = vpop.permute.xlu0 %3966
    %3968 = vrot.lane.b32.xlu0 %v3656, 96
    %v3969 = vpop.permute.xlu0 %3968
    %3970 = vrot.lane.b32.xlu0 %v3671, 96
    %v3971 = vpop.permute.xlu0 %3970
    %3972 = vrot.lane.b32.xlu0 %v3686, 96
    %v3973 = vpop.permute.xlu0 %3972
    %3974 = vrot.lane.b32.xlu0 %v3701, 96
    %v3975 = vpop.permute.xlu0 %3974
    %3976 = vrot.lane.b32.xlu0 %v3716, 96
    %v3977 = vpop.permute.xlu0 %3976
    %3978 = vrot.lane.b32.xlu0 %v3731, 96
    %v3979 = vpop.permute.xlu0 %3978
    %3980 = vrot.lane.b32.xlu0 %v3746, 96
    %v3981 = vpop.permute.xlu0 %3980
    %3982 = vrot.lane.b32.xlu0 %v3761, 96
    %v3983 = vpop.permute.xlu0 %3982
    %3984 = vrot.lane.b32.xlu0 %v3776, 96
    %v3985 = vpop.permute.xlu0 %3984
    %3986 = vrot.lane.b32.xlu0 %v3791, 96
    %v3987 = vpop.permute.xlu0 %3986
    %3988 = vrot.lane.b32.xlu0 %v3806, 96
    %v3989 = vpop.permute.xlu0 %3988
    %3990 = vrot.lane.b32.xlu0 %v3821, 96
    %v3991 = vpop.permute.xlu0 %3990
    %3992 = vrot.lane.b32.xlu0 %v3836, 96
    %v3993 = vpop.permute.xlu0 %3992
    %3994 = vrot.lane.b32.xlu0 %v3851, 96
    %v3995 = vpop.permute.xlu0 %3994
    %v4044 = vmul.f32 %v2892, %v3901
    %v4045 = vmul.f32 %v2893, %v3903
    %v4046 = vmul.f32 %v2894, %v3905
    %v4047 = vmul.f32 %v2895, %v3907
    %v4048 = vmul.f32 %v2896, %v3909
    %v4049 = vmul.f32 %v2897, %v3911
    %v4050 = vmul.f32 %v2898, %v3913
    %v4051 = vmul.f32 %v2899, %v3915
    %v4052 = vmul.f32 %v2900, %v3917
    %v4053 = vmul.f32 %v2901, %v3919
    %v4054 = vmul.f32 %v2902, %v3921
    %v4055 = vmul.f32 %v2903, %v3923
    %v4056 = vmul.f32 %v2904, %v3925
    %v4057 = vmul.f32 %v2905, %v3927
    %v4058 = vmul.f32 %v2906, %v3929
    %v4059 = vmul.f32 %v2907, %v3931
    %v4060 = vmul.f32 %v2908, %v3933
    %v4061 = vmul.f32 %v2909, %v3935
    %v4062 = vmul.f32 %v2910, %v3937
    %v4063 = vmul.f32 %v2911, %v3939
    %v4064 = vmul.f32 %v2912, %v3941
    %v4065 = vmul.f32 %v2913, %v3943
    %v4066 = vmul.f32 %v2914, %v3945
    %v4067 = vmul.f32 %v2915, %v3947
    %v4068 = vmul.f32 %v2916, %v3949
    %v4069 = vmul.f32 %v2917, %v3951
    %v4070 = vmul.f32 %v2918, %v3953
    %v4071 = vmul.f32 %v2919, %v3955
    %v4072 = vmul.f32 %v2920, %v3957
    %v4073 = vmul.f32 %v2921, %v3959
    %v4074 = vmul.f32 %v2922, %v3961
    %v4075 = vmul.f32 %v2923, %v3963
    %v4076 = vmul.f32 %v2924, %v3965
    %v4077 = vmul.f32 %v2925, %v3967
    %v4078 = vmul.f32 %v2926, %v3969
    %v4079 = vmul.f32 %v2927, %v3971
    %v4080 = vmul.f32 %v2928, %v3973
    %v4081 = vmul.f32 %v2929, %v3975
    %v4082 = vmul.f32 %v2930, %v3977
    %v4083 = vmul.f32 %v2931, %v3979
    %v4084 = vmul.f32 %v2932, %v3981
    %v4085 = vmul.f32 %v2933, %v3983
    %v4086 = vmul.f32 %v2934, %v3985
    %v4087 = vmul.f32 %v2935, %v3987
    %v4088 = vmul.f32 %v2936, %v3989
    %v4089 = vmul.f32 %v2937, %v3991
    %v4090 = vmul.f32 %v2938, %v3993
    %v4091 = vmul.f32 %v2939, %v3995
    %v4092 = vld [vmem:[%s6] sm:$0xff]
    %v4093 = vld [vmem:[%s6 + $0x8] sm:$0xff]
    %v4094 = vld [vmem:[%s6 + $0x10] sm:$0xff]
    %v4095 = vld [vmem:[%s6 + $0x18] sm:$0xff]
    %v4097 = vsel %vm2472, %v4044, 0
    %v4100 = vsel %vm2472, %v4045, 0
    %v4103 = vsel %vm2472, %v4046, 0
    %v4106 = vsel %vm2472, %v4047, 0
    %v4109 = vsel %vm2472, %v4048, 0
    %v4112 = vsel %vm2472, %v4049, 0
    %v4115 = vsel %vm2472, %v4050, 0
    %v4118 = vsel %vm2472, %v4051, 0
    %v4121 = vsel %vm2472, %v4052, 0
    %v4124 = vsel %vm2472, %v4053, 0
    %v4127 = vsel %vm2472, %v4054, 0
    %v4130 = vsel %vm2472, %v4055, 0
    %v4133 = vsel %vm2472, %v4056, 0
    %v4136 = vsel %vm2472, %v4057, 0
    %v4139 = vsel %vm2472, %v4058, 0
    %v4142 = vsel %vm2472, %v4059, 0
    %v4145 = vsel %vm2472, %v4060, 0
    %v4148 = vsel %vm2472, %v4061, 0
    %v4151 = vsel %vm2472, %v4062, 0
    %v4154 = vsel %vm2472, %v4063, 0
    %v4157 = vsel %vm2472, %v4064, 0
    %v4160 = vsel %vm2472, %v4065, 0
    %v4163 = vsel %vm2472, %v4066, 0
    %v4166 = vsel %vm2472, %v4067, 0
    %v4169 = vsel %vm2472, %v4068, 0
    %v4172 = vsel %vm2472, %v4069, 0
    %v4175 = vsel %vm2472, %v4070, 0
    %v4178 = vsel %vm2472, %v4071, 0
    %v4181 = vsel %vm2472, %v4072, 0
    %v4184 = vsel %vm2472, %v4073, 0
    %v4187 = vsel %vm2472, %v4074, 0
    %v4190 = vsel %vm2472, %v4075, 0
    %v4193 = vsel %vm2472, %v4076, 0
    %v4196 = vsel %vm2472, %v4077, 0
    %v4199 = vsel %vm2472, %v4078, 0
    %v4202 = vsel %vm2472, %v4079, 0
    %v4205 = vsel %vm2472, %v4080, 0
    %v4208 = vsel %vm2472, %v4081, 0
    %v4211 = vsel %vm2472, %v4082, 0
    %v4214 = vsel %vm2472, %v4083, 0
    %v4217 = vsel %vm2472, %v4084, 0
    %v4220 = vsel %vm2472, %v4085, 0
    %v4223 = vsel %vm2472, %v4086, 0
    %v4226 = vsel %vm2472, %v4087, 0
    %v4229 = vsel %vm2472, %v4088, 0
    %v4232 = vsel %vm2472, %v4089, 0
    %v4235 = vsel %vm2472, %v4090, 0
    %v4238 = vsel %vm2472, %v4091, 0
    %4240 = vmatpush.msra.mxu0 0.0
    %4241 = vmatpush.msra.mxu0 0.0
    %4242 = vmatpush.msra.mxu0 0.0
    %4243 = vmatpush.msra.mxu0 0.0
    %4244 = vmatpush.msra.mxu0 0.0
    %4245 = vmatpush.msra.mxu0 0.0
    %4246 = vmatpush.msra.mxu0 0.0
    %4247 = vmatpush.msra.mxu0 0.0
    %4248 = vmatpush.msra.mxu0 0.0
    %4249 = vmatpush.msra.mxu0 0.0
    %4250 = vmatpush.msra.mxu0 0.0
    %4251 = vmatpush.msra.mxu0 0.0
    %4252 = vmatpush.msra.mxu0 %v4095
    %4253 = vmatpush.msra.mxu0 %v4094
    %4254 = vmatpush.msra.mxu0 %v4093
    %4255 = vmatpush.msra.mxu0 %v4092
    %4256 = vmatmul.f32.gmra.mxu0 %v4097
    %v4257 = vpop.f32.mrf.mxu0
    %v4258 = vadd.f32 0.0, %v4257
    %4259 = vmatmul.f32.gmra.mxu0 %v4100
    %v4260 = vpop.f32.mrf.mxu0
    %v4261 = vadd.f32 0.0, %v4260
    %4262 = vmatmul.f32.gmra.mxu0 %v4103
    %v4263 = vpop.f32.mrf.mxu0
    %v4264 = vadd.f32 0.0, %v4263
    %4265 = vmatmul.f32.gmra.mxu0 %v4106
    %v4266 = vpop.f32.mrf.mxu0
    %v4267 = vadd.f32 0.0, %v4266
    %4268 = vmatmul.f32.gmra.mxu0 %v4109
    %v4269 = vpop.f32.mrf.mxu0
    %v4270 = vadd.f32 0.0, %v4269
    %4271 = vmatmul.f32.gmra.mxu0 %v4112
    %v4272 = vpop.f32.mrf.mxu0
    %v4273 = vadd.f32 0.0, %v4272
    %4274 = vmatmul.f32.gmra.mxu0 %v4115
    %v4275 = vpop.f32.mrf.mxu0
    %v4276 = vadd.f32 0.0, %v4275
    %4277 = vmatmul.f32.gmra.mxu0 %v4118
    %v4278 = vpop.f32.mrf.mxu0
    %v4279 = vadd.f32 0.0, %v4278
    %4280 = vmatmul.f32.gmra.mxu0 %v4121
    %v4281 = vpop.f32.mrf.mxu0
    %v4282 = vadd.f32 0.0, %v4281
    %4283 = vmatmul.f32.gmra.mxu0 %v4124
    %v4284 = vpop.f32.mrf.mxu0
    %v4285 = vadd.f32 0.0, %v4284
    %4286 = vmatmul.f32.gmra.mxu0 %v4127
    %v4287 = vpop.f32.mrf.mxu0
    %v4288 = vadd.f32 0.0, %v4287
    %4289 = vmatmul.f32.gmra.mxu0 %v4130
    %v4290 = vpop.f32.mrf.mxu0
    %v4291 = vadd.f32 0.0, %v4290
    %4292 = vmatmul.f32.gmra.mxu0 %v4133
    %v4293 = vpop.f32.mrf.mxu0
    %v4294 = vadd.f32 0.0, %v4293
    %4295 = vmatmul.f32.gmra.mxu0 %v4136
    %v4296 = vpop.f32.mrf.mxu0
    %v4297 = vadd.f32 0.0, %v4296
    %4298 = vmatmul.f32.gmra.mxu0 %v4139
    %v4299 = vpop.f32.mrf.mxu0
    %v4300 = vadd.f32 0.0, %v4299
    %4301 = vmatmul.f32.gmra.mxu0 %v4142
    %v4302 = vpop.f32.mrf.mxu0
    %v4303 = vadd.f32 0.0, %v4302
    %4304 = vmatmul.f32.gmra.mxu0 %v4145
    %v4305 = vpop.f32.mrf.mxu0
    %v4306 = vadd.f32 0.0, %v4305
    %4307 = vmatmul.f32.gmra.mxu0 %v4148
    %v4308 = vpop.f32.mrf.mxu0
    %v4309 = vadd.f32 0.0, %v4308
    %4310 = vmatmul.f32.gmra.mxu0 %v4151
    %v4311 = vpop.f32.mrf.mxu0
    %v4312 = vadd.f32 0.0, %v4311
    %4313 = vmatmul.f32.gmra.mxu0 %v4154
    %v4314 = vpop.f32.mrf.mxu0
    %v4315 = vadd.f32 0.0, %v4314
    %4316 = vmatmul.f32.gmra.mxu0 %v4157
    %v4317 = vpop.f32.mrf.mxu0
    %v4318 = vadd.f32 0.0, %v4317
    %4319 = vmatmul.f32.gmra.mxu0 %v4160
    %v4320 = vpop.f32.mrf.mxu0
    %v4321 = vadd.f32 0.0, %v4320
    %4322 = vmatmul.f32.gmra.mxu0 %v4163
    %v4323 = vpop.f32.mrf.mxu0
    %v4324 = vadd.f32 0.0, %v4323
    %4325 = vmatmul.f32.gmra.mxu0 %v4166
    %v4326 = vpop.f32.mrf.mxu0
    %v4327 = vadd.f32 0.0, %v4326
    %4328 = vmatmul.f32.gmra.mxu0 %v4169
    %v4329 = vpop.f32.mrf.mxu0
    %v4330 = vadd.f32 0.0, %v4329
    %4331 = vmatmul.f32.gmra.mxu0 %v4172
    %v4332 = vpop.f32.mrf.mxu0
    %v4333 = vadd.f32 0.0, %v4332
    %4334 = vmatmul.f32.gmra.mxu0 %v4175
    %v4335 = vpop.f32.mrf.mxu0
    %v4336 = vadd.f32 0.0, %v4335
    %4337 = vmatmul.f32.gmra.mxu0 %v4178
    %v4338 = vpop.f32.mrf.mxu0
    %v4339 = vadd.f32 0.0, %v4338
    %4340 = vmatmul.f32.gmra.mxu0 %v4181
    %v4341 = vpop.f32.mrf.mxu0
    %v4342 = vadd.f32 0.0, %v4341
    %4343 = vmatmul.f32.gmra.mxu0 %v4184
    %v4344 = vpop.f32.mrf.mxu0
    %v4345 = vadd.f32 0.0, %v4344
    %4346 = vmatmul.f32.gmra.mxu0 %v4187
    %v4347 = vpop.f32.mrf.mxu0
    %v4348 = vadd.f32 0.0, %v4347
    %4349 = vmatmul.f32.gmra.mxu0 %v4190
    %v4350 = vpop.f32.mrf.mxu0
    %v4351 = vadd.f32 0.0, %v4350
    %4352 = vmatmul.f32.gmra.mxu0 %v4193
    %v4353 = vpop.f32.mrf.mxu0
    %v4354 = vadd.f32 0.0, %v4353
    %4355 = vmatmul.f32.gmra.mxu0 %v4196
    %v4356 = vpop.f32.mrf.mxu0
    %v4357 = vadd.f32 0.0, %v4356
    %4358 = vmatmul.f32.gmra.mxu0 %v4199
    %v4359 = vpop.f32.mrf.mxu0
    %v4360 = vadd.f32 0.0, %v4359
    %4361 = vmatmul.f32.gmra.mxu0 %v4202
    %v4362 = vpop.f32.mrf.mxu0
    %v4363 = vadd.f32 0.0, %v4362
    %4364 = vmatmul.f32.gmra.mxu0 %v4205
    %v4365 = vpop.f32.mrf.mxu0
    %v4366 = vadd.f32 0.0, %v4365
    %4367 = vmatmul.f32.gmra.mxu0 %v4208
    %v4368 = vpop.f32.mrf.mxu0
    %v4369 = vadd.f32 0.0, %v4368
    %4370 = vmatmul.f32.gmra.mxu0 %v4211
    %v4371 = vpop.f32.mrf.mxu0
    %v4372 = vadd.f32 0.0, %v4371
    %4373 = vmatmul.f32.gmra.mxu0 %v4214
    %v4374 = vpop.f32.mrf.mxu0
    %v4375 = vadd.f32 0.0, %v4374
    %4376 = vmatmul.f32.gmra.mxu0 %v4217
    %v4377 = vpop.f32.mrf.mxu0
    %v4378 = vadd.f32 0.0, %v4377
    %4379 = vmatmul.f32.gmra.mxu0 %v4220
    %v4380 = vpop.f32.mrf.mxu0
    %v4381 = vadd.f32 0.0, %v4380
    %4382 = vmatmul.f32.gmra.mxu0 %v4223
    %v4383 = vpop.f32.mrf.mxu0
    %v4384 = vadd.f32 0.0, %v4383
    %4385 = vmatmul.f32.gmra.mxu0 %v4226
    %v4386 = vpop.f32.mrf.mxu0
    %v4387 = vadd.f32 0.0, %v4386
    %4388 = vmatmul.f32.gmra.mxu0 %v4229
    %v4389 = vpop.f32.mrf.mxu0
    %v4390 = vadd.f32 0.0, %v4389
    %4391 = vmatmul.f32.gmra.mxu0 %v4232
    %v4392 = vpop.f32.mrf.mxu0
    %v4393 = vadd.f32 0.0, %v4392
    %4394 = vmatmul.f32.gmra.mxu0 %v4235
    %v4395 = vpop.f32.mrf.mxu0
    %v4396 = vadd.f32 0.0, %v4395
    %4397 = vmatmul.f32.gmra.mxu0 %v4238
    %v4398 = vpop.f32.mrf.mxu0
    %v4399 = vadd.f32 0.0, %v4398
    %4400 = vdwg.mxu0
    %v4401 = vld [vmem:[%s7] sm:$0x1]
    %v4403 = vperm.slane %v4401, 0
    %4404 = vrot.lane.b32.xlu0 %v4403, 32
    %v4405 = vpop.permute.xlu0 %4404
    %v4407 = vadd.f32 %v4258, %v4405
    %v4408 = vadd.f32 %v4261, %v4405
    %v4409 = vadd.f32 %v4264, %v4405
    %v4410 = vadd.f32 %v4267, %v4405
    %v4411 = vadd.f32 %v4270, %v4405
    %v4412 = vadd.f32 %v4273, %v4405
    %v4413 = vadd.f32 %v4276, %v4405
    %v4414 = vadd.f32 %v4279, %v4405
    %v4415 = vadd.f32 %v4282, %v4405
    %v4416 = vadd.f32 %v4285, %v4405
    %v4417 = vadd.f32 %v4288, %v4405
    %v4418 = vadd.f32 %v4291, %v4405
    %v4419 = vadd.f32 %v4294, %v4405
    %v4420 = vadd.f32 %v4297, %v4405
    %v4421 = vadd.f32 %v4300, %v4405
    %v4422 = vadd.f32 %v4303, %v4405
    %v4423 = vadd.f32 %v4306, %v4405
    %v4424 = vadd.f32 %v4309, %v4405
    %v4425 = vadd.f32 %v4312, %v4405
    %v4426 = vadd.f32 %v4315, %v4405
    %v4427 = vadd.f32 %v4318, %v4405
    %v4428 = vadd.f32 %v4321, %v4405
    %v4429 = vadd.f32 %v4324, %v4405
    %v4430 = vadd.f32 %v4327, %v4405
    %v4431 = vadd.f32 %v4330, %v4405
    %v4432 = vadd.f32 %v4333, %v4405
    %v4433 = vadd.f32 %v4336, %v4405
    %v4434 = vadd.f32 %v4339, %v4405
    %v4435 = vadd.f32 %v4342, %v4405
    %v4436 = vadd.f32 %v4345, %v4405
    %v4437 = vadd.f32 %v4348, %v4405
    %v4438 = vadd.f32 %v4351, %v4405
    %v4439 = vadd.f32 %v4354, %v4405
    %v4440 = vadd.f32 %v4357, %v4405
    %v4441 = vadd.f32 %v4360, %v4405
    %v4442 = vadd.f32 %v4363, %v4405
    %v4443 = vadd.f32 %v4366, %v4405
    %v4444 = vadd.f32 %v4369, %v4405
    %v4445 = vadd.f32 %v4372, %v4405
    %v4446 = vadd.f32 %v4375, %v4405
    %v4447 = vadd.f32 %v4378, %v4405
    %v4448 = vadd.f32 %v4381, %v4405
    %v4449 = vadd.f32 %v4384, %v4405
    %v4450 = vadd.f32 %v4387, %v4405
    %v4451 = vadd.f32 %v4390, %v4405
    %v4452 = vadd.f32 %v4393, %v4405
    %v4453 = vadd.f32 %v4396, %v4405
    %v4454 = vadd.f32 %v4399, %v4405
    %4500 = vrot.lane.b32.xlu0 0.0, 32
    %v4501 = vpop.permute.xlu0 %4500
    %4502 = vrot.lane.b32.xlu0 %v4258, 32
    %v4503 = vpop.permute.xlu0 %4502
    %4504 = vrot.lane.b32.xlu0 %v4261, 32
    %v4505 = vpop.permute.xlu0 %4504
    %4506 = vrot.lane.b32.xlu0 %v4264, 32
    %v4507 = vpop.permute.xlu0 %4506
    %4508 = vrot.lane.b32.xlu0 %v4267, 32
    %v4509 = vpop.permute.xlu0 %4508
    %4510 = vrot.lane.b32.xlu0 %v4270, 32
    %v4511 = vpop.permute.xlu0 %4510
    %4512 = vrot.lane.b32.xlu0 %v4273, 32
    %v4513 = vpop.permute.xlu0 %4512
    %4514 = vrot.lane.b32.xlu0 %v4276, 32
    %v4515 = vpop.permute.xlu0 %4514
    %4516 = vrot.lane.b32.xlu0 %v4279, 32
    %v4517 = vpop.permute.xlu0 %4516
    %4518 = vrot.lane.b32.xlu0 %v4282, 32
    %v4519 = vpop.permute.xlu0 %4518
    %4520 = vrot.lane.b32.xlu0 %v4285, 32
    %v4521 = vpop.permute.xlu0 %4520
    %4522 = vrot.lane.b32.xlu0 %v4288, 32
    %v4523 = vpop.permute.xlu0 %4522
    %4524 = vrot.lane.b32.xlu0 %v4291, 32
    %v4525 = vpop.permute.xlu0 %4524
    %4526 = vrot.lane.b32.xlu0 %v4294, 32
    %v4527 = vpop.permute.xlu0 %4526
    %4528 = vrot.lane.b32.xlu0 %v4297, 32
    %v4529 = vpop.permute.xlu0 %4528
    %4530 = vrot.lane.b32.xlu0 %v4300, 32
    %v4531 = vpop.permute.xlu0 %4530
    %4532 = vrot.lane.b32.xlu0 %v4303, 32
    %v4533 = vpop.permute.xlu0 %4532
    %4534 = vrot.lane.b32.xlu0 %v4306, 32
    %v4535 = vpop.permute.xlu0 %4534
    %4536 = vrot.lane.b32.xlu0 %v4309, 32
    %v4537 = vpop.permute.xlu0 %4536
    %4538 = vrot.lane.b32.xlu0 %v4312, 32
    %v4539 = vpop.permute.xlu0 %4538
    %4540 = vrot.lane.b32.xlu0 %v4315, 32
    %v4541 = vpop.permute.xlu0 %4540
    %4542 = vrot.lane.b32.xlu0 %v4318, 32
    %v4543 = vpop.permute.xlu0 %4542
    %4544 = vrot.lane.b32.xlu0 %v4321, 32
    %v4545 = vpop.permute.xlu0 %4544
    %4546 = vrot.lane.b32.xlu0 %v4324, 32
    %v4547 = vpop.permute.xlu0 %4546
    %4548 = vrot.lane.b32.xlu0 %v4327, 32
    %v4549 = vpop.permute.xlu0 %4548
    %4550 = vrot.lane.b32.xlu0 %v4330, 32
    %v4551 = vpop.permute.xlu0 %4550
    %4552 = vrot.lane.b32.xlu0 %v4333, 32
    %v4553 = vpop.permute.xlu0 %4552
    %4554 = vrot.lane.b32.xlu0 %v4336, 32
    %v4555 = vpop.permute.xlu0 %4554
    %4556 = vrot.lane.b32.xlu0 %v4339, 32
    %v4557 = vpop.permute.xlu0 %4556
    %4558 = vrot.lane.b32.xlu0 %v4342, 32
    %v4559 = vpop.permute.xlu0 %4558
    %4560 = vrot.lane.b32.xlu0 %v4345, 32
    %v4561 = vpop.permute.xlu0 %4560
    %4562 = vrot.lane.b32.xlu0 %v4348, 32
    %v4563 = vpop.permute.xlu0 %4562
    %4564 = vrot.lane.b32.xlu0 %v4351, 32
    %v4565 = vpop.permute.xlu0 %4564
    %4566 = vrot.lane.b32.xlu0 %v4354, 32
    %v4567 = vpop.permute.xlu0 %4566
    %4568 = vrot.lane.b32.xlu0 %v4357, 32
    %v4569 = vpop.permute.xlu0 %4568
    %4570 = vrot.lane.b32.xlu0 %v4360, 32
    %v4571 = vpop.permute.xlu0 %4570
    %4572 = vrot.lane.b32.xlu0 %v4363, 32
    %v4573 = vpop.permute.xlu0 %4572
    %4574 = vrot.lane.b32.xlu0 %v4366, 32
    %v4575 = vpop.permute.xlu0 %4574
    %4576 = vrot.lane.b32.xlu0 %v4369, 32
    %v4577 = vpop.permute.xlu0 %4576
    %4578 = vrot.lane.b32.xlu0 %v4372, 32
    %v4579 = vpop.permute.xlu0 %4578
    %4580 = vrot.lane.b32.xlu0 %v4375, 32
    %v4581 = vpop.permute.xlu0 %4580
    %4582 = vrot.lane.b32.xlu0 %v4378, 32
    %v4583 = vpop.permute.xlu0 %4582
    %4584 = vrot.lane.b32.xlu0 %v4381, 32
    %v4585 = vpop.permute.xlu0 %4584
    %4586 = vrot.lane.b32.xlu0 %v4384, 32
    %v4587 = vpop.permute.xlu0 %4586
    %4588 = vrot.lane.b32.xlu0 %v4387, 32
    %v4589 = vpop.permute.xlu0 %4588
    %v4635 = vadd.f32 %v4407, %v4501
    %v4636 = vadd.f32 %v4408, %v4501
    %v4637 = vadd.f32 %v4409, %v4501
    %v4638 = vadd.f32 %v4410, %v4501
    %v4639 = vadd.f32 %v4411, %v4503
    %v4640 = vadd.f32 %v4412, %v4505
    %v4641 = vadd.f32 %v4413, %v4507
    %v4642 = vadd.f32 %v4414, %v4509
    %v4643 = vadd.f32 %v4415, %v4511
    %v4644 = vadd.f32 %v4416, %v4513
    %v4645 = vadd.f32 %v4417, %v4515
    %v4646 = vadd.f32 %v4418, %v4517
    %v4647 = vadd.f32 %v4419, %v4519
    %v4648 = vadd.f32 %v4420, %v4521
    %v4649 = vadd.f32 %v4421, %v4523
    %v4650 = vadd.f32 %v4422, %v4525
    %v4651 = vadd.f32 %v4423, %v4527
    %v4652 = vadd.f32 %v4424, %v4529
    %v4653 = vadd.f32 %v4425, %v4531
    %v4654 = vadd.f32 %v4426, %v4533
    %v4655 = vadd.f32 %v4427, %v4535
    %v4656 = vadd.f32 %v4428, %v4537
    %v4657 = vadd.f32 %v4429, %v4539
    %v4658 = vadd.f32 %v4430, %v4541
    %v4659 = vadd.f32 %v4431, %v4543
    %v4660 = vadd.f32 %v4432, %v4545
    %v4661 = vadd.f32 %v4433, %v4547
    %v4662 = vadd.f32 %v4434, %v4549
    %v4663 = vadd.f32 %v4435, %v4551
    %v4664 = vadd.f32 %v4436, %v4553
    %v4665 = vadd.f32 %v4437, %v4555
    %v4666 = vadd.f32 %v4438, %v4557
    %v4667 = vadd.f32 %v4439, %v4559
    %v4668 = vadd.f32 %v4440, %v4561
    %v4669 = vadd.f32 %v4441, %v4563
    %v4670 = vadd.f32 %v4442, %v4565
    %v4671 = vadd.f32 %v4443, %v4567
    %v4672 = vadd.f32 %v4444, %v4569
    %v4673 = vadd.f32 %v4445, %v4571
    %v4674 = vadd.f32 %v4446, %v4573
    %v4675 = vadd.f32 %v4447, %v4575
    %v4676 = vadd.f32 %v4448, %v4577
    %v4677 = vadd.f32 %v4449, %v4579
    %v4678 = vadd.f32 %v4450, %v4581
    %v4679 = vadd.f32 %v4451, %v4583
    %v4680 = vadd.f32 %v4452, %v4585
    %v4681 = vadd.f32 %v4453, %v4587
    %v4682 = vadd.f32 %v4454, %v4589
    %4687 = vrot.lane.b32.xlu0 %v4270, 96
    %v4688 = vpop.permute.xlu0 %4687
    %4689 = vrot.lane.b32.xlu0 %v4273, 96
    %v4690 = vpop.permute.xlu0 %4689
    %4691 = vrot.lane.b32.xlu0 %v4276, 96
    %v4692 = vpop.permute.xlu0 %4691
    %4693 = vrot.lane.b32.xlu0 %v4279, 96
    %v4694 = vpop.permute.xlu0 %4693
    %4695 = vrot.lane.b32.xlu0 %v4282, 96
    %v4696 = vpop.permute.xlu0 %4695
    %4697 = vrot.lane.b32.xlu0 %v4285, 96
    %v4698 = vpop.permute.xlu0 %4697
    %4699 = vrot.lane.b32.xlu0 %v4288, 96
    %v4700 = vpop.permute.xlu0 %4699
    %4701 = vrot.lane.b32.xlu0 %v4291, 96
    %v4702 = vpop.permute.xlu0 %4701
    %4703 = vrot.lane.b32.xlu0 %v4294, 96
    %v4704 = vpop.permute.xlu0 %4703
    %4705 = vrot.lane.b32.xlu0 %v4297, 96
    %v4706 = vpop.permute.xlu0 %4705
    %4707 = vrot.lane.b32.xlu0 %v4300, 96
    %v4708 = vpop.permute.xlu0 %4707
    %4709 = vrot.lane.b32.xlu0 %v4303, 96
    %v4710 = vpop.permute.xlu0 %4709
    %4711 = vrot.lane.b32.xlu0 %v4306, 96
    %v4712 = vpop.permute.xlu0 %4711
    %4713 = vrot.lane.b32.xlu0 %v4309, 96
    %v4714 = vpop.permute.xlu0 %4713
    %4715 = vrot.lane.b32.xlu0 %v4312, 96
    %v4716 = vpop.permute.xlu0 %4715
    %4717 = vrot.lane.b32.xlu0 %v4315, 96
    %v4718 = vpop.permute.xlu0 %4717
    %4719 = vrot.lane.b32.xlu0 %v4318, 96
    %v4720 = vpop.permute.xlu0 %4719
    %4721 = vrot.lane.b32.xlu0 %v4321, 96
    %v4722 = vpop.permute.xlu0 %4721
    %4723 = vrot.lane.b32.xlu0 %v4324, 96
    %v4724 = vpop.permute.xlu0 %4723
    %4725 = vrot.lane.b32.xlu0 %v4327, 96
    %v4726 = vpop.permute.xlu0 %4725
    %4727 = vrot.lane.b32.xlu0 %v4330, 96
    %v4728 = vpop.permute.xlu0 %4727
    %4729 = vrot.lane.b32.xlu0 %v4333, 96
    %v4730 = vpop.permute.xlu0 %4729
    %4731 = vrot.lane.b32.xlu0 %v4336, 96
    %v4732 = vpop.permute.xlu0 %4731
    %4733 = vrot.lane.b32.xlu0 %v4339, 96
    %v4734 = vpop.permute.xlu0 %4733
    %4735 = vrot.lane.b32.xlu0 %v4342, 96
    %v4736 = vpop.permute.xlu0 %4735
    %4737 = vrot.lane.b32.xlu0 %v4345, 96
    %v4738 = vpop.permute.xlu0 %4737
    %4739 = vrot.lane.b32.xlu0 %v4348, 96
    %v4740 = vpop.permute.xlu0 %4739
    %4741 = vrot.lane.b32.xlu0 %v4351, 96
    %v4742 = vpop.permute.xlu0 %4741
    %4743 = vrot.lane.b32.xlu0 %v4354, 96
    %v4744 = vpop.permute.xlu0 %4743
    %4745 = vrot.lane.b32.xlu0 %v4357, 96
    %v4746 = vpop.permute.xlu0 %4745
    %4747 = vrot.lane.b32.xlu0 %v4360, 96
    %v4748 = vpop.permute.xlu0 %4747
    %4749 = vrot.lane.b32.xlu0 %v4363, 96
    %v4750 = vpop.permute.xlu0 %4749
    %4751 = vrot.lane.b32.xlu0 %v4366, 96
    %v4752 = vpop.permute.xlu0 %4751
    %4753 = vrot.lane.b32.xlu0 %v4369, 96
    %v4754 = vpop.permute.xlu0 %4753
    %4755 = vrot.lane.b32.xlu0 %v4372, 96
    %v4756 = vpop.permute.xlu0 %4755
    %4757 = vrot.lane.b32.xlu0 %v4375, 96
    %v4758 = vpop.permute.xlu0 %4757
    %4759 = vrot.lane.b32.xlu0 %v4378, 96
    %v4760 = vpop.permute.xlu0 %4759
    %4761 = vrot.lane.b32.xlu0 %v4381, 96
    %v4762 = vpop.permute.xlu0 %4761
    %4763 = vrot.lane.b32.xlu0 %v4384, 96
    %v4764 = vpop.permute.xlu0 %4763
    %4765 = vrot.lane.b32.xlu0 %v4387, 96
    %v4766 = vpop.permute.xlu0 %4765
    %4767 = vrot.lane.b32.xlu0 %v4390, 96
    %v4768 = vpop.permute.xlu0 %4767
    %4769 = vrot.lane.b32.xlu0 %v4393, 96
    %v4770 = vpop.permute.xlu0 %4769
    %4771 = vrot.lane.b32.xlu0 %v4396, 96
    %v4772 = vpop.permute.xlu0 %4771
    %4773 = vrot.lane.b32.xlu0 %v4399, 96
    %v4774 = vpop.permute.xlu0 %4773
    %4775 = vrot.lane.b32.xlu0 0.0, 96
    %v4776 = vpop.permute.xlu0 %4775
    %v4822 = vadd.f32 %v4635, %v4688
    %v4823 = vadd.f32 %v4636, %v4690
    %v4824 = vadd.f32 %v4637, %v4692
    %v4825 = vadd.f32 %v4638, %v4694
    %v4826 = vadd.f32 %v4639, %v4696
    %v4827 = vadd.f32 %v4640, %v4698
    %v4828 = vadd.f32 %v4641, %v4700
    %v4829 = vadd.f32 %v4642, %v4702
    %v4830 = vadd.f32 %v4643, %v4704
    %v4831 = vadd.f32 %v4644, %v4706
    %v4832 = vadd.f32 %v4645, %v4708
    %v4833 = vadd.f32 %v4646, %v4710
    %v4834 = vadd.f32 %v4647, %v4712
    %v4835 = vadd.f32 %v4648, %v4714
    %v4836 = vadd.f32 %v4649, %v4716
    %v4837 = vadd.f32 %v4650, %v4718
    %v4838 = vadd.f32 %v4651, %v4720
    %v4839 = vadd.f32 %v4652, %v4722
    %v4840 = vadd.f32 %v4653, %v4724
    %v4841 = vadd.f32 %v4654, %v4726
    %v4842 = vadd.f32 %v4655, %v4728
    %v4843 = vadd.f32 %v4656, %v4730
    %v4844 = vadd.f32 %v4657, %v4732
    %v4845 = vadd.f32 %v4658, %v4734
    %v4846 = vadd.f32 %v4659, %v4736
    %v4847 = vadd.f32 %v4660, %v4738
    %v4848 = vadd.f32 %v4661, %v4740
    %v4849 = vadd.f32 %v4662, %v4742
    %v4850 = vadd.f32 %v4663, %v4744
    %v4851 = vadd.f32 %v4664, %v4746
    %v4852 = vadd.f32 %v4665, %v4748
    %v4853 = vadd.f32 %v4666, %v4750
    %v4854 = vadd.f32 %v4667, %v4752
    %v4855 = vadd.f32 %v4668, %v4754
    %v4856 = vadd.f32 %v4669, %v4756
    %v4857 = vadd.f32 %v4670, %v4758
    %v4858 = vadd.f32 %v4671, %v4760
    %v4859 = vadd.f32 %v4672, %v4762
    %v4860 = vadd.f32 %v4673, %v4764
    %v4861 = vadd.f32 %v4674, %v4766
    %v4862 = vadd.f32 %v4675, %v4768
    %v4863 = vadd.f32 %v4676, %v4770
    %v4864 = vadd.f32 %v4677, %v4772
    %v4865 = vadd.f32 %v4678, %v4774
    %v4866 = vadd.f32 %v4679, %v4776
    %v4867 = vadd.f32 %v4680, %v4776
    %v4868 = vadd.f32 %v4681, %v4776
    %v4869 = vadd.f32 %v4682, %v4776
    %v4870 = vld [vmem:[%s8] sm:$0xff]
    %v4871 = vld [vmem:[%s8 + $0x8] sm:$0xff]
    %v4872 = vld [vmem:[%s8 + $0x10] sm:$0xff]
    %v4873 = vld [vmem:[%s8 + $0x18] sm:$0xff]
    %v4874 = vld [vmem:[%s9] sm:$0x1]
    %v4876 = vperm.slane %v4874, 0
    %4926 = vrot.lane.b32.xlu0 %v4822, 96
    %v4927 = vpop.permute.xlu0 %4926
    %4928 = vrot.lane.b32.xlu0 %v4823, 96
    %v4929 = vpop.permute.xlu0 %4928
    %4930 = vrot.lane.b32.xlu0 %v4824, 96
    %v4931 = vpop.permute.xlu0 %4930
    %4932 = vrot.lane.b32.xlu0 %v4825, 96
    %v4933 = vpop.permute.xlu0 %4932
    %4934 = vrot.lane.b32.xlu0 %v4826, 96
    %v4935 = vpop.permute.xlu0 %4934
    %4936 = vrot.lane.b32.xlu0 %v4827, 96
    %v4937 = vpop.permute.xlu0 %4936
    %4938 = vrot.lane.b32.xlu0 %v4828, 96
    %v4939 = vpop.permute.xlu0 %4938
    %4940 = vrot.lane.b32.xlu0 %v4829, 96
    %v4941 = vpop.permute.xlu0 %4940
    %4942 = vrot.lane.b32.xlu0 %v4830, 96
    %v4943 = vpop.permute.xlu0 %4942
    %4944 = vrot.lane.b32.xlu0 %v4831, 96
    %v4945 = vpop.permute.xlu0 %4944
    %4946 = vrot.lane.b32.xlu0 %v4832, 96
    %v4947 = vpop.permute.xlu0 %4946
    %4948 = vrot.lane.b32.xlu0 %v4833, 96
    %v4949 = vpop.permute.xlu0 %4948
    %4950 = vrot.lane.b32.xlu0 %v4834, 96
    %v4951 = vpop.permute.xlu0 %4950
    %4952 = vrot.lane.b32.xlu0 %v4835, 96
    %v4953 = vpop.permute.xlu0 %4952
    %4954 = vrot.lane.b32.xlu0 %v4836, 96
    %v4955 = vpop.permute.xlu0 %4954
    %4956 = vrot.lane.b32.xlu0 %v4837, 96
    %v4957 = vpop.permute.xlu0 %4956
    %4958 = vrot.lane.b32.xlu0 %v4838, 96
    %v4959 = vpop.permute.xlu0 %4958
    %4960 = vrot.lane.b32.xlu0 %v4839, 96
    %v4961 = vpop.permute.xlu0 %4960
    %4962 = vrot.lane.b32.xlu0 %v4840, 96
    %v4963 = vpop.permute.xlu0 %4962
    %4964 = vrot.lane.b32.xlu0 %v4841, 96
    %v4965 = vpop.permute.xlu0 %4964
    %4966 = vrot.lane.b32.xlu0 %v4842, 96
    %v4967 = vpop.permute.xlu0 %4966
    %4968 = vrot.lane.b32.xlu0 %v4843, 96
    %v4969 = vpop.permute.xlu0 %4968
    %4970 = vrot.lane.b32.xlu0 %v4844, 96
    %v4971 = vpop.permute.xlu0 %4970
    %4972 = vrot.lane.b32.xlu0 %v4845, 96
    %v4973 = vpop.permute.xlu0 %4972
    %4974 = vrot.lane.b32.xlu0 %v4846, 96
    %v4975 = vpop.permute.xlu0 %4974
    %4976 = vrot.lane.b32.xlu0 %v4847, 96
    %v4977 = vpop.permute.xlu0 %4976
    %4978 = vrot.lane.b32.xlu0 %v4848, 96
    %v4979 = vpop.permute.xlu0 %4978
    %4980 = vrot.lane.b32.xlu0 %v4849, 96
    %v4981 = vpop.permute.xlu0 %4980
    %4982 = vrot.lane.b32.xlu0 %v4850, 96
    %v4983 = vpop.permute.xlu0 %4982
    %4984 = vrot.lane.b32.xlu0 %v4851, 96
    %v4985 = vpop.permute.xlu0 %4984
    %4986 = vrot.lane.b32.xlu0 %v4852, 96
    %v4987 = vpop.permute.xlu0 %4986
    %4988 = vrot.lane.b32.xlu0 %v4853, 96
    %v4989 = vpop.permute.xlu0 %4988
    %4990 = vrot.lane.b32.xlu0 %v4854, 96
    %v4991 = vpop.permute.xlu0 %4990
    %4992 = vrot.lane.b32.xlu0 %v4855, 96
    %v4993 = vpop.permute.xlu0 %4992
    %4994 = vrot.lane.b32.xlu0 %v4856, 96
    %v4995 = vpop.permute.xlu0 %4994
    %4996 = vrot.lane.b32.xlu0 %v4857, 96
    %v4997 = vpop.permute.xlu0 %4996
    %4998 = vrot.lane.b32.xlu0 %v4858, 96
    %v4999 = vpop.permute.xlu0 %4998
    %5000 = vrot.lane.b32.xlu0 %v4859, 96
    %v5001 = vpop.permute.xlu0 %5000
    %5002 = vrot.lane.b32.xlu0 %v4860, 96
    %v5003 = vpop.permute.xlu0 %5002
    %5004 = vrot.lane.b32.xlu0 %v4861, 96
    %v5005 = vpop.permute.xlu0 %5004
    %5006 = vrot.lane.b32.xlu0 %v4862, 96
    %v5007 = vpop.permute.xlu0 %5006
    %5008 = vrot.lane.b32.xlu0 %v4863, 96
    %v5009 = vpop.permute.xlu0 %5008
    %5010 = vrot.lane.b32.xlu0 %v4864, 96
    %v5011 = vpop.permute.xlu0 %5010
    %5012 = vrot.lane.b32.xlu0 %v4865, 96
    %v5013 = vpop.permute.xlu0 %5012
    %5014 = vrot.lane.b32.xlu0 %v4866, 96
    %v5015 = vpop.permute.xlu0 %5014
    %5016 = vrot.lane.b32.xlu0 %v4867, 96
    %v5017 = vpop.permute.xlu0 %5016
    %5018 = vrot.lane.b32.xlu0 %v4868, 96
    %v5019 = vpop.permute.xlu0 %5018
    %5020 = vrot.lane.b32.xlu0 %v4869, 96
    %v5021 = vpop.permute.xlu0 %5020
    %v5022 = vsel %vm2472, %v4927, 0
    %v5024 = vsel %vm2472, %v4929, 0
    %v5026 = vsel %vm2472, %v4931, 0
    %v5028 = vsel %vm2472, %v4933, 0
    %v5030 = vsel %vm2472, %v4935, 0
    %v5032 = vsel %vm2472, %v4937, 0
    %v5034 = vsel %vm2472, %v4939, 0
    %v5036 = vsel %vm2472, %v4941, 0
    %v5038 = vsel %vm2472, %v4943, 0
    %v5040 = vsel %vm2472, %v4945, 0
    %v5042 = vsel %vm2472, %v4947, 0
    %v5044 = vsel %vm2472, %v4949, 0
    %v5046 = vsel %vm2472, %v4951, 0
    %v5048 = vsel %vm2472, %v4953, 0
    %v5050 = vsel %vm2472, %v4955, 0
    %v5052 = vsel %vm2472, %v4957, 0
    %v5054 = vsel %vm2472, %v4959, 0
    %v5056 = vsel %vm2472, %v4961, 0
    %v5058 = vsel %vm2472, %v4963, 0
    %v5060 = vsel %vm2472, %v4965, 0
    %v5062 = vsel %vm2472, %v4967, 0
    %v5064 = vsel %vm2472, %v4969, 0
    %v5066 = vsel %vm2472, %v4971, 0
    %v5068 = vsel %vm2472, %v4973, 0
    %v5070 = vsel %vm2472, %v4975, 0
    %v5072 = vsel %vm2472, %v4977, 0
    %v5074 = vsel %vm2472, %v4979, 0
    %v5076 = vsel %vm2472, %v4981, 0
    %v5078 = vsel %vm2472, %v4983, 0
    %v5080 = vsel %vm2472, %v4985, 0
    %v5082 = vsel %vm2472, %v4987, 0
    %v5084 = vsel %vm2472, %v4989, 0
    %v5086 = vsel %vm2472, %v4991, 0
    %v5088 = vsel %vm2472, %v4993, 0
    %v5090 = vsel %vm2472, %v4995, 0
    %v5092 = vsel %vm2472, %v4997, 0
    %v5094 = vsel %vm2472, %v4999, 0
    %v5096 = vsel %vm2472, %v5001, 0
    %v5098 = vsel %vm2472, %v5003, 0
    %v5100 = vsel %vm2472, %v5005, 0
    %v5102 = vsel %vm2472, %v5007, 0
    %v5104 = vsel %vm2472, %v5009, 0
    %v5106 = vsel %vm2472, %v5011, 0
    %v5108 = vsel %vm2472, %v5013, 0
    %v5110 = vsel %vm2472, %v5015, 0
    %v5112 = vsel %vm2472, %v5017, 0
    %v5114 = vsel %vm2472, %v5019, 0
    %v5116 = vsel %vm2472, %v5021, 0
    %5118 = vmatpush.msra.mxu0 0.0
    %5119 = vmatpush.msra.mxu0 0.0
    %5120 = vmatpush.msra.mxu0 0.0
    %5121 = vmatpush.msra.mxu0 0.0
    %5122 = vmatpush.msra.mxu0 0.0
    %5123 = vmatpush.msra.mxu0 0.0
    %5124 = vmatpush.msra.mxu0 0.0
    %5125 = vmatpush.msra.mxu0 0.0
    %5126 = vmatpush.msra.mxu0 0.0
    %5127 = vmatpush.msra.mxu0 0.0
    %5128 = vmatpush.msra.mxu0 0.0
    %5129 = vmatpush.msra.mxu0 0.0
    %5130 = vmatpush.msra.mxu0 %v4873
    %5131 = vmatpush.msra.mxu0 %v4872
    %5132 = vmatpush.msra.mxu0 %v4871
    %5133 = vmatpush.msra.mxu0 %v4870
    %5134 = vmatmul.f32.gmra.mxu0 %v5022
    %v5135 = vpop.f32.mrf.mxu0
    %v5136 = vadd.f32 %v4876, %v5135
    %5137 = vmatmul.f32.gmra.mxu0 %v5024
    %v5138 = vpop.f32.mrf.mxu0
    %v5139 = vadd.f32 %v4876, %v5138
    %5140 = vmatmul.f32.gmra.mxu0 %v5026
    %v5141 = vpop.f32.mrf.mxu0
    %v5142 = vadd.f32 %v4876, %v5141
    %5143 = vmatmul.f32.gmra.mxu0 %v5028
    %v5144 = vpop.f32.mrf.mxu0
    %v5145 = vadd.f32 %v4876, %v5144
    %5146 = vmatmul.f32.gmra.mxu0 %v5030
    %v5147 = vpop.f32.mrf.mxu0
    %v5148 = vadd.f32 %v4876, %v5147
    %5149 = vmatmul.f32.gmra.mxu0 %v5032
    %v5150 = vpop.f32.mrf.mxu0
    %v5151 = vadd.f32 %v4876, %v5150
    %5152 = vmatmul.f32.gmra.mxu0 %v5034
    %v5153 = vpop.f32.mrf.mxu0
    %v5154 = vadd.f32 %v4876, %v5153
    %5155 = vmatmul.f32.gmra.mxu0 %v5036
    %v5156 = vpop.f32.mrf.mxu0
    %v5157 = vadd.f32 %v4876, %v5156
    %5158 = vmatmul.f32.gmra.mxu0 %v5038
    %v5159 = vpop.f32.mrf.mxu0
    %v5160 = vadd.f32 %v4876, %v5159
    %5161 = vmatmul.f32.gmra.mxu0 %v5040
    %v5162 = vpop.f32.mrf.mxu0
    %v5163 = vadd.f32 %v4876, %v5162
    %5164 = vmatmul.f32.gmra.mxu0 %v5042
    %v5165 = vpop.f32.mrf.mxu0
    %v5166 = vadd.f32 %v4876, %v5165
    %5167 = vmatmul.f32.gmra.mxu0 %v5044
    %v5168 = vpop.f32.mrf.mxu0
    %v5169 = vadd.f32 %v4876, %v5168
    %5170 = vmatmul.f32.gmra.mxu0 %v5046
    %v5171 = vpop.f32.mrf.mxu0
    %v5172 = vadd.f32 %v4876, %v5171
    %5173 = vmatmul.f32.gmra.mxu0 %v5048
    %v5174 = vpop.f32.mrf.mxu0
    %v5175 = vadd.f32 %v4876, %v5174
    %5176 = vmatmul.f32.gmra.mxu0 %v5050
    %v5177 = vpop.f32.mrf.mxu0
    %v5178 = vadd.f32 %v4876, %v5177
    %5179 = vmatmul.f32.gmra.mxu0 %v5052
    %v5180 = vpop.f32.mrf.mxu0
    %v5181 = vadd.f32 %v4876, %v5180
    %5182 = vmatmul.f32.gmra.mxu0 %v5054
    %v5183 = vpop.f32.mrf.mxu0
    %v5184 = vadd.f32 %v4876, %v5183
    %5185 = vmatmul.f32.gmra.mxu0 %v5056
    %v5186 = vpop.f32.mrf.mxu0
    %v5187 = vadd.f32 %v4876, %v5186
    %5188 = vmatmul.f32.gmra.mxu0 %v5058
    %v5189 = vpop.f32.mrf.mxu0
    %v5190 = vadd.f32 %v4876, %v5189
    %5191 = vmatmul.f32.gmra.mxu0 %v5060
    %v5192 = vpop.f32.mrf.mxu0
    %v5193 = vadd.f32 %v4876, %v5192
    %5194 = vmatmul.f32.gmra.mxu0 %v5062
    %v5195 = vpop.f32.mrf.mxu0
    %v5196 = vadd.f32 %v4876, %v5195
    %5197 = vmatmul.f32.gmra.mxu0 %v5064
    %v5198 = vpop.f32.mrf.mxu0
    %v5199 = vadd.f32 %v4876, %v5198
    %5200 = vmatmul.f32.gmra.mxu0 %v5066
    %v5201 = vpop.f32.mrf.mxu0
    %v5202 = vadd.f32 %v4876, %v5201
    %5203 = vmatmul.f32.gmra.mxu0 %v5068
    %v5204 = vpop.f32.mrf.mxu0
    %v5205 = vadd.f32 %v4876, %v5204
    %5206 = vmatmul.f32.gmra.mxu0 %v5070
    %v5207 = vpop.f32.mrf.mxu0
    %v5208 = vadd.f32 %v4876, %v5207
    %5209 = vmatmul.f32.gmra.mxu0 %v5072
    %v5210 = vpop.f32.mrf.mxu0
    %v5211 = vadd.f32 %v4876, %v5210
    %5212 = vmatmul.f32.gmra.mxu0 %v5074
    %v5213 = vpop.f32.mrf.mxu0
    %v5214 = vadd.f32 %v4876, %v5213
    %5215 = vmatmul.f32.gmra.mxu0 %v5076
    %v5216 = vpop.f32.mrf.mxu0
    %v5217 = vadd.f32 %v4876, %v5216
    %5218 = vmatmul.f32.gmra.mxu0 %v5078
    %v5219 = vpop.f32.mrf.mxu0
    %v5220 = vadd.f32 %v4876, %v5219
    %5221 = vmatmul.f32.gmra.mxu0 %v5080
    %v5222 = vpop.f32.mrf.mxu0
    %v5223 = vadd.f32 %v4876, %v5222
    %5224 = vmatmul.f32.gmra.mxu0 %v5082
    %v5225 = vpop.f32.mrf.mxu0
    %v5226 = vadd.f32 %v4876, %v5225
    %5227 = vmatmul.f32.gmra.mxu0 %v5084
    %v5228 = vpop.f32.mrf.mxu0
    %v5229 = vadd.f32 %v4876, %v5228
    %5230 = vmatmul.f32.gmra.mxu0 %v5086
    %v5231 = vpop.f32.mrf.mxu0
    %v5232 = vadd.f32 %v4876, %v5231
    %5233 = vmatmul.f32.gmra.mxu0 %v5088
    %v5234 = vpop.f32.mrf.mxu0
    %v5235 = vadd.f32 %v4876, %v5234
    %5236 = vmatmul.f32.gmra.mxu0 %v5090
    %v5237 = vpop.f32.mrf.mxu0
    %v5238 = vadd.f32 %v4876, %v5237
    %5239 = vmatmul.f32.gmra.mxu0 %v5092
    %v5240 = vpop.f32.mrf.mxu0
    %v5241 = vadd.f32 %v4876, %v5240
    %5242 = vmatmul.f32.gmra.mxu0 %v5094
    %v5243 = vpop.f32.mrf.mxu0
    %v5244 = vadd.f32 %v4876, %v5243
    %5245 = vmatmul.f32.gmra.mxu0 %v5096
    %v5246 = vpop.f32.mrf.mxu0
    %v5247 = vadd.f32 %v4876, %v5246
    %5248 = vmatmul.f32.gmra.mxu0 %v5098
    %v5249 = vpop.f32.mrf.mxu0
    %v5250 = vadd.f32 %v4876, %v5249
    %5251 = vmatmul.f32.gmra.mxu0 %v5100
    %v5252 = vpop.f32.mrf.mxu0
    %v5253 = vadd.f32 %v4876, %v5252
    %5254 = vmatmul.f32.gmra.mxu0 %v5102
    %v5255 = vpop.f32.mrf.mxu0
    %v5256 = vadd.f32 %v4876, %v5255
    %5257 = vmatmul.f32.gmra.mxu0 %v5104
    %v5258 = vpop.f32.mrf.mxu0
    %v5259 = vadd.f32 %v4876, %v5258
    %5260 = vmatmul.f32.gmra.mxu0 %v5106
    %v5261 = vpop.f32.mrf.mxu0
    %v5262 = vadd.f32 %v4876, %v5261
    %5263 = vmatmul.f32.gmra.mxu0 %v5108
    %v5264 = vpop.f32.mrf.mxu0
    %v5265 = vadd.f32 %v4876, %v5264
    %5266 = vmatmul.f32.gmra.mxu0 %v5110
    %v5267 = vpop.f32.mrf.mxu0
    %v5268 = vadd.f32 %v4876, %v5267
    %5269 = vmatmul.f32.gmra.mxu0 %v5112
    %v5270 = vpop.f32.mrf.mxu0
    %v5271 = vadd.f32 %v4876, %v5270
    %5272 = vmatmul.f32.gmra.mxu0 %v5114
    %v5273 = vpop.f32.mrf.mxu0
    %v5274 = vadd.f32 %v4876, %v5273
    %5275 = vmatmul.f32.gmra.mxu0 %v5116
    %v5276 = vpop.f32.mrf.mxu0
    %v5277 = vadd.f32 %v4876, %v5276
    %5278 = vdwg.mxu0
    %5281 = vrot.lane.b32.xlu0 %v5136, 96
    %v5282 = vpop.permute.xlu0 %5281
    %5283 = vrot.lane.b32.xlu0 %v5139, 96
    %v5284 = vpop.permute.xlu0 %5283
    %5287 = vmatpush.msra.mxu0 0.0
    %5288 = vmatpush.msra.mxu0 0.0
    %5289 = vmatpush.msra.mxu0 0.0
    %5290 = vmatpush.msra.mxu0 0.0
    %5291 = vmatpush.msra.mxu0 0.0
    %5292 = vmatpush.msra.mxu0 0.0
    %5293 = vmatpush.msra.mxu0 0.0
    %5294 = vmatpush.msra.mxu0 0.0
    %5295 = vmatpush.msra.mxu0 0.0
    %5296 = vmatpush.msra.mxu0 0.0
    %5297 = vmatpush.msra.mxu0 0.0
    %5298 = vmatpush.msra.mxu0 0.0
    %5299 = vmatpush.msra.mxu0 0.0
    %5300 = vmatpush.msra.mxu0 0.0
    %5301 = vmatpush.msra.mxu0 %v5284
    %5302 = vmatpush.msra.mxu0 %v5282
    %5303 = vmatmul.f32.gmra.mxu0 %v633
    %v5304 = vpop.f32.mrf.mxu0
    %v5305 = vadd.f32 0.0, %v5304
    %5306 = vmatmul.f32.gmra.mxu0 %v636
    %v5307 = vpop.f32.mrf.mxu0
    %v5308 = vadd.f32 0.0, %v5307
    %5309 = vmatmul.f32.gmra.mxu0 %v639
    %v5310 = vpop.f32.mrf.mxu0
    %v5311 = vadd.f32 0.0, %v5310
    %5312 = vmatmul.f32.gmra.mxu0 %v642
    %v5313 = vpop.f32.mrf.mxu0
    %v5314 = vadd.f32 0.0, %v5313
    %5315 = vmatmul.f32.gmra.mxu0 %v645
    %v5316 = vpop.f32.mrf.mxu0
    %v5317 = vadd.f32 0.0, %v5316
    %5318 = vmatmul.f32.gmra.mxu0 %v648
    %v5319 = vpop.f32.mrf.mxu0
    %v5320 = vadd.f32 0.0, %v5319
    %5321 = vdwg.mxu0
    %5324 = vrot.lane.b32.xlu0 %v5142, 96
    %v5325 = vpop.permute.xlu0 %5324
    %5326 = vrot.lane.b32.xlu0 %v5145, 96
    %v5327 = vpop.permute.xlu0 %5326
    %5330 = vmatpush.msra.mxu0 0.0
    %5331 = vmatpush.msra.mxu0 0.0
    %5332 = vmatpush.msra.mxu0 0.0
    %5333 = vmatpush.msra.mxu0 0.0
    %5334 = vmatpush.msra.mxu0 0.0
    %5335 = vmatpush.msra.mxu0 0.0
    %5336 = vmatpush.msra.mxu0 0.0
    %5337 = vmatpush.msra.mxu0 0.0
    %5338 = vmatpush.msra.mxu0 0.0
    %5339 = vmatpush.msra.mxu0 0.0
    %5340 = vmatpush.msra.mxu0 0.0
    %5341 = vmatpush.msra.mxu0 0.0
    %5342 = vmatpush.msra.mxu0 0.0
    %5343 = vmatpush.msra.mxu0 0.0
    %5344 = vmatpush.msra.mxu0 %v5327
    %5345 = vmatpush.msra.mxu0 %v5325
    %5346 = vmatmul.f32.gmra.mxu0 %v694
    %v5347 = vpop.f32.mrf.mxu0
    %v5348 = vadd.f32 0.0, %v5347
    %5349 = vmatmul.f32.gmra.mxu0 %v697
    %v5350 = vpop.f32.mrf.mxu0
    %v5351 = vadd.f32 0.0, %v5350
    %5352 = vmatmul.f32.gmra.mxu0 %v700
    %v5353 = vpop.f32.mrf.mxu0
    %v5354 = vadd.f32 0.0, %v5353
    %5355 = vmatmul.f32.gmra.mxu0 %v703
    %v5356 = vpop.f32.mrf.mxu0
    %v5357 = vadd.f32 0.0, %v5356
    %5358 = vmatmul.f32.gmra.mxu0 %v706
    %v5359 = vpop.f32.mrf.mxu0
    %v5360 = vadd.f32 0.0, %v5359
    %5361 = vmatmul.f32.gmra.mxu0 %v709
    %v5362 = vpop.f32.mrf.mxu0
    %v5363 = vadd.f32 0.0, %v5362
    %5364 = vdwg.mxu0
    %5367 = vrot.lane.b32.xlu0 %v5148, 96
    %v5368 = vpop.permute.xlu0 %5367
    %5369 = vrot.lane.b32.xlu0 %v5151, 96
    %v5370 = vpop.permute.xlu0 %5369
    %5373 = vmatpush.msra.mxu0 0.0
    %5374 = vmatpush.msra.mxu0 0.0
    %5375 = vmatpush.msra.mxu0 0.0
    %5376 = vmatpush.msra.mxu0 0.0
    %5377 = vmatpush.msra.mxu0 0.0
    %5378 = vmatpush.msra.mxu0 0.0
    %5379 = vmatpush.msra.mxu0 0.0
    %5380 = vmatpush.msra.mxu0 0.0
    %5381 = vmatpush.msra.mxu0 0.0
    %5382 = vmatpush.msra.mxu0 0.0
    %5383 = vmatpush.msra.mxu0 0.0
    %5384 = vmatpush.msra.mxu0 0.0
    %5385 = vmatpush.msra.mxu0 0.0
    %5386 = vmatpush.msra.mxu0 0.0
    %5387 = vmatpush.msra.mxu0 %v5370
    %5388 = vmatpush.msra.mxu0 %v5368
    %5389 = vmatmul.f32.gmra.mxu0 %v755
    %v5390 = vpop.f32.mrf.mxu0
    %v5391 = vadd.f32 0.0, %v5390
    %5392 = vmatmul.f32.gmra.mxu0 %v758
    %v5393 = vpop.f32.mrf.mxu0
    %v5394 = vadd.f32 0.0, %v5393
    %5395 = vmatmul.f32.gmra.mxu0 %v761
    %v5396 = vpop.f32.mrf.mxu0
    %v5397 = vadd.f32 0.0, %v5396
    %5398 = vmatmul.f32.gmra.mxu0 %v764
    %v5399 = vpop.f32.mrf.mxu0
    %v5400 = vadd.f32 0.0, %v5399
    %5401 = vmatmul.f32.gmra.mxu0 %v767
    %v5402 = vpop.f32.mrf.mxu0
    %v5403 = vadd.f32 0.0, %v5402
    %5404 = vmatmul.f32.gmra.mxu0 %v770
    %v5405 = vpop.f32.mrf.mxu0
    %v5406 = vadd.f32 0.0, %v5405
    %5407 = vdwg.mxu0
    %5410 = vrot.lane.b32.xlu0 %v5154, 96
    %v5411 = vpop.permute.xlu0 %5410
    %5412 = vrot.lane.b32.xlu0 %v5157, 96
    %v5413 = vpop.permute.xlu0 %5412
    %5416 = vmatpush.msra.mxu0 0.0
    %5417 = vmatpush.msra.mxu0 0.0
    %5418 = vmatpush.msra.mxu0 0.0
    %5419 = vmatpush.msra.mxu0 0.0
    %5420 = vmatpush.msra.mxu0 0.0
    %5421 = vmatpush.msra.mxu0 0.0
    %5422 = vmatpush.msra.mxu0 0.0
    %5423 = vmatpush.msra.mxu0 0.0
    %5424 = vmatpush.msra.mxu0 0.0
    %5425 = vmatpush.msra.mxu0 0.0
    %5426 = vmatpush.msra.mxu0 0.0
    %5427 = vmatpush.msra.mxu0 0.0
    %5428 = vmatpush.msra.mxu0 0.0
    %5429 = vmatpush.msra.mxu0 0.0
    %5430 = vmatpush.msra.mxu0 %v5413
    %5431 = vmatpush.msra.mxu0 %v5411
    %5432 = vmatmul.f32.gmra.mxu0 %v816
    %v5433 = vpop.f32.mrf.mxu0
    %v5434 = vadd.f32 0.0, %v5433
    %5435 = vmatmul.f32.gmra.mxu0 %v819
    %v5436 = vpop.f32.mrf.mxu0
    %v5437 = vadd.f32 0.0, %v5436
    %5438 = vmatmul.f32.gmra.mxu0 %v822
    %v5439 = vpop.f32.mrf.mxu0
    %v5440 = vadd.f32 0.0, %v5439
    %5441 = vmatmul.f32.gmra.mxu0 %v825
    %v5442 = vpop.f32.mrf.mxu0
    %v5443 = vadd.f32 0.0, %v5442
    %5444 = vmatmul.f32.gmra.mxu0 %v828
    %v5445 = vpop.f32.mrf.mxu0
    %v5446 = vadd.f32 0.0, %v5445
    %5447 = vmatmul.f32.gmra.mxu0 %v831
    %v5448 = vpop.f32.mrf.mxu0
    %v5449 = vadd.f32 0.0, %v5448
    %5450 = vdwg.mxu0
    %5453 = vrot.lane.b32.xlu0 %v5160, 96
    %v5454 = vpop.permute.xlu0 %5453
    %5455 = vrot.lane.b32.xlu0 %v5163, 96
    %v5456 = vpop.permute.xlu0 %5455
    %5459 = vmatpush.msra.mxu0 0.0
    %5460 = vmatpush.msra.mxu0 0.0
    %5461 = vmatpush.msra.mxu0 0.0
    %5462 = vmatpush.msra.mxu0 0.0
    %5463 = vmatpush.msra.mxu0 0.0
    %5464 = vmatpush.msra.mxu0 0.0
    %5465 = vmatpush.msra.mxu0 0.0
    %5466 = vmatpush.msra.mxu0 0.0
    %5467 = vmatpush.msra.mxu0 0.0
    %5468 = vmatpush.msra.mxu0 0.0
    %5469 = vmatpush.msra.mxu0 0.0
    %5470 = vmatpush.msra.mxu0 0.0
    %5471 = vmatpush.msra.mxu0 0.0
    %5472 = vmatpush.msra.mxu0 0.0
    %5473 = vmatpush.msra.mxu0 %v5456
    %5474 = vmatpush.msra.mxu0 %v5454
    %5475 = vmatmul.f32.gmra.mxu0 %v877
    %v5476 = vpop.f32.mrf.mxu0
    %v5477 = vadd.f32 0.0, %v5476
    %5478 = vmatmul.f32.gmra.mxu0 %v880
    %v5479 = vpop.f32.mrf.mxu0
    %v5480 = vadd.f32 0.0, %v5479
    %5481 = vmatmul.f32.gmra.mxu0 %v883
    %v5482 = vpop.f32.mrf.mxu0
    %v5483 = vadd.f32 0.0, %v5482
    %5484 = vmatmul.f32.gmra.mxu0 %v886
    %v5485 = vpop.f32.mrf.mxu0
    %v5486 = vadd.f32 0.0, %v5485
    %5487 = vmatmul.f32.gmra.mxu0 %v889
    %v5488 = vpop.f32.mrf.mxu0
    %v5489 = vadd.f32 0.0, %v5488
    %5490 = vmatmul.f32.gmra.mxu0 %v892
    %v5491 = vpop.f32.mrf.mxu0
    %v5492 = vadd.f32 0.0, %v5491
    %5493 = vdwg.mxu0
    %5496 = vrot.lane.b32.xlu0 %v5166, 96
    %v5497 = vpop.permute.xlu0 %5496
    %5498 = vrot.lane.b32.xlu0 %v5169, 96
    %v5499 = vpop.permute.xlu0 %5498
    %5502 = vmatpush.msra.mxu0 0.0
    %5503 = vmatpush.msra.mxu0 0.0
    %5504 = vmatpush.msra.mxu0 0.0
    %5505 = vmatpush.msra.mxu0 0.0
    %5506 = vmatpush.msra.mxu0 0.0
    %5507 = vmatpush.msra.mxu0 0.0
    %5508 = vmatpush.msra.mxu0 0.0
    %5509 = vmatpush.msra.mxu0 0.0
    %5510 = vmatpush.msra.mxu0 0.0
    %5511 = vmatpush.msra.mxu0 0.0
    %5512 = vmatpush.msra.mxu0 0.0
    %5513 = vmatpush.msra.mxu0 0.0
    %5514 = vmatpush.msra.mxu0 0.0
    %5515 = vmatpush.msra.mxu0 0.0
    %5516 = vmatpush.msra.mxu0 %v5499
    %5517 = vmatpush.msra.mxu0 %v5497
    %5518 = vmatmul.f32.gmra.mxu0 %v938
    %v5519 = vpop.f32.mrf.mxu0
    %v5520 = vadd.f32 0.0, %v5519
    %5521 = vmatmul.f32.gmra.mxu0 %v941
    %v5522 = vpop.f32.mrf.mxu0
    %v5523 = vadd.f32 0.0, %v5522
    %5524 = vmatmul.f32.gmra.mxu0 %v944
    %v5525 = vpop.f32.mrf.mxu0
    %v5526 = vadd.f32 0.0, %v5525
    %5527 = vmatmul.f32.gmra.mxu0 %v947
    %v5528 = vpop.f32.mrf.mxu0
    %v5529 = vadd.f32 0.0, %v5528
    %5530 = vmatmul.f32.gmra.mxu0 %v950
    %v5531 = vpop.f32.mrf.mxu0
    %v5532 = vadd.f32 0.0, %v5531
    %5533 = vmatmul.f32.gmra.mxu0 %v953
    %v5534 = vpop.f32.mrf.mxu0
    %v5535 = vadd.f32 0.0, %v5534
    %5536 = vdwg.mxu0
    %5539 = vrot.lane.b32.xlu0 %v5172, 96
    %v5540 = vpop.permute.xlu0 %5539
    %5541 = vrot.lane.b32.xlu0 %v5175, 96
    %v5542 = vpop.permute.xlu0 %5541
    %5545 = vmatpush.msra.mxu0 0.0
    %5546 = vmatpush.msra.mxu0 0.0
    %5547 = vmatpush.msra.mxu0 0.0
    %5548 = vmatpush.msra.mxu0 0.0
    %5549 = vmatpush.msra.mxu0 0.0
    %5550 = vmatpush.msra.mxu0 0.0
    %5551 = vmatpush.msra.mxu0 0.0
    %5552 = vmatpush.msra.mxu0 0.0
    %5553 = vmatpush.msra.mxu0 0.0
    %5554 = vmatpush.msra.mxu0 0.0
    %5555 = vmatpush.msra.mxu0 0.0
    %5556 = vmatpush.msra.mxu0 0.0
    %5557 = vmatpush.msra.mxu0 0.0
    %5558 = vmatpush.msra.mxu0 0.0
    %5559 = vmatpush.msra.mxu0 %v5542
    %5560 = vmatpush.msra.mxu0 %v5540
    %5561 = vmatmul.f32.gmra.mxu0 %v999
    %v5562 = vpop.f32.mrf.mxu0
    %v5563 = vadd.f32 0.0, %v5562
    %5564 = vmatmul.f32.gmra.mxu0 %v1002
    %v5565 = vpop.f32.mrf.mxu0
    %v5566 = vadd.f32 0.0, %v5565
    %5567 = vmatmul.f32.gmra.mxu0 %v1005
    %v5568 = vpop.f32.mrf.mxu0
    %v5569 = vadd.f32 0.0, %v5568
    %5570 = vmatmul.f32.gmra.mxu0 %v1008
    %v5571 = vpop.f32.mrf.mxu0
    %v5572 = vadd.f32 0.0, %v5571
    %5573 = vmatmul.f32.gmra.mxu0 %v1011
    %v5574 = vpop.f32.mrf.mxu0
    %v5575 = vadd.f32 0.0, %v5574
    %5576 = vmatmul.f32.gmra.mxu0 %v1014
    %v5577 = vpop.f32.mrf.mxu0
    %v5578 = vadd.f32 0.0, %v5577
    %5579 = vdwg.mxu0
    %5582 = vrot.lane.b32.xlu0 %v5178, 96
    %v5583 = vpop.permute.xlu0 %5582
    %5584 = vrot.lane.b32.xlu0 %v5181, 96
    %v5585 = vpop.permute.xlu0 %5584
    %5588 = vmatpush.msra.mxu0 0.0
    %5589 = vmatpush.msra.mxu0 0.0
    %5590 = vmatpush.msra.mxu0 0.0
    %5591 = vmatpush.msra.mxu0 0.0
    %5592 = vmatpush.msra.mxu0 0.0
    %5593 = vmatpush.msra.mxu0 0.0
    %5594 = vmatpush.msra.mxu0 0.0
    %5595 = vmatpush.msra.mxu0 0.0
    %5596 = vmatpush.msra.mxu0 0.0
    %5597 = vmatpush.msra.mxu0 0.0
    %5598 = vmatpush.msra.mxu0 0.0
    %5599 = vmatpush.msra.mxu0 0.0
    %5600 = vmatpush.msra.mxu0 0.0
    %5601 = vmatpush.msra.mxu0 0.0
    %5602 = vmatpush.msra.mxu0 %v5585
    %5603 = vmatpush.msra.mxu0 %v5583
    %5604 = vmatmul.f32.gmra.mxu0 %v1060
    %v5605 = vpop.f32.mrf.mxu0
    %v5606 = vadd.f32 0.0, %v5605
    %5607 = vmatmul.f32.gmra.mxu0 %v1063
    %v5608 = vpop.f32.mrf.mxu0
    %v5609 = vadd.f32 0.0, %v5608
    %5610 = vmatmul.f32.gmra.mxu0 %v1066
    %v5611 = vpop.f32.mrf.mxu0
    %v5612 = vadd.f32 0.0, %v5611
    %5613 = vmatmul.f32.gmra.mxu0 %v1069
    %v5614 = vpop.f32.mrf.mxu0
    %v5615 = vadd.f32 0.0, %v5614
    %5616 = vmatmul.f32.gmra.mxu0 %v1072
    %v5617 = vpop.f32.mrf.mxu0
    %v5618 = vadd.f32 0.0, %v5617
    %5619 = vmatmul.f32.gmra.mxu0 %v1075
    %v5620 = vpop.f32.mrf.mxu0
    %v5621 = vadd.f32 0.0, %v5620
    %5622 = vdwg.mxu0
    %5625 = vrot.lane.b32.xlu0 %v5184, 96
    %v5626 = vpop.permute.xlu0 %5625
    %5627 = vrot.lane.b32.xlu0 %v5187, 96
    %v5628 = vpop.permute.xlu0 %5627
    %5631 = vmatpush.msra.mxu0 0.0
    %5632 = vmatpush.msra.mxu0 0.0
    %5633 = vmatpush.msra.mxu0 0.0
    %5634 = vmatpush.msra.mxu0 0.0
    %5635 = vmatpush.msra.mxu0 0.0
    %5636 = vmatpush.msra.mxu0 0.0
    %5637 = vmatpush.msra.mxu0 0.0
    %5638 = vmatpush.msra.mxu0 0.0
    %5639 = vmatpush.msra.mxu0 0.0
    %5640 = vmatpush.msra.mxu0 0.0
    %5641 = vmatpush.msra.mxu0 0.0
    %5642 = vmatpush.msra.mxu0 0.0
    %5643 = vmatpush.msra.mxu0 0.0
    %5644 = vmatpush.msra.mxu0 0.0
    %5645 = vmatpush.msra.mxu0 %v5628
    %5646 = vmatpush.msra.mxu0 %v5626
    %5647 = vmatmul.f32.gmra.mxu0 %v1121
    %v5648 = vpop.f32.mrf.mxu0
    %v5649 = vadd.f32 0.0, %v5648
    %5650 = vmatmul.f32.gmra.mxu0 %v1124
    %v5651 = vpop.f32.mrf.mxu0
    %v5652 = vadd.f32 0.0, %v5651
    %5653 = vmatmul.f32.gmra.mxu0 %v1127
    %v5654 = vpop.f32.mrf.mxu0
    %v5655 = vadd.f32 0.0, %v5654
    %5656 = vmatmul.f32.gmra.mxu0 %v1130
    %v5657 = vpop.f32.mrf.mxu0
    %v5658 = vadd.f32 0.0, %v5657
    %5659 = vmatmul.f32.gmra.mxu0 %v1133
    %v5660 = vpop.f32.mrf.mxu0
    %v5661 = vadd.f32 0.0, %v5660
    %5662 = vmatmul.f32.gmra.mxu0 %v1136
    %v5663 = vpop.f32.mrf.mxu0
    %v5664 = vadd.f32 0.0, %v5663
    %5665 = vdwg.mxu0
    %5668 = vrot.lane.b32.xlu0 %v5190, 96
    %v5669 = vpop.permute.xlu0 %5668
    %5670 = vrot.lane.b32.xlu0 %v5193, 96
    %v5671 = vpop.permute.xlu0 %5670
    %5674 = vmatpush.msra.mxu0 0.0
    %5675 = vmatpush.msra.mxu0 0.0
    %5676 = vmatpush.msra.mxu0 0.0
    %5677 = vmatpush.msra.mxu0 0.0
    %5678 = vmatpush.msra.mxu0 0.0
    %5679 = vmatpush.msra.mxu0 0.0
    %5680 = vmatpush.msra.mxu0 0.0
    %5681 = vmatpush.msra.mxu0 0.0
    %5682 = vmatpush.msra.mxu0 0.0
    %5683 = vmatpush.msra.mxu0 0.0
    %5684 = vmatpush.msra.mxu0 0.0
    %5685 = vmatpush.msra.mxu0 0.0
    %5686 = vmatpush.msra.mxu0 0.0
    %5687 = vmatpush.msra.mxu0 0.0
    %5688 = vmatpush.msra.mxu0 %v5671
    %5689 = vmatpush.msra.mxu0 %v5669
    %5690 = vmatmul.f32.gmra.mxu0 %v1182
    %v5691 = vpop.f32.mrf.mxu0
    %v5692 = vadd.f32 0.0, %v5691
    %5693 = vmatmul.f32.gmra.mxu0 %v1185
    %v5694 = vpop.f32.mrf.mxu0
    %v5695 = vadd.f32 0.0, %v5694
    %5696 = vmatmul.f32.gmra.mxu0 %v1188
    %v5697 = vpop.f32.mrf.mxu0
    %v5698 = vadd.f32 0.0, %v5697
    %5699 = vmatmul.f32.gmra.mxu0 %v1191
    %v5700 = vpop.f32.mrf.mxu0
    %v5701 = vadd.f32 0.0, %v5700
    %5702 = vmatmul.f32.gmra.mxu0 %v1194
    %v5703 = vpop.f32.mrf.mxu0
    %v5704 = vadd.f32 0.0, %v5703
    %5705 = vmatmul.f32.gmra.mxu0 %v1197
    %v5706 = vpop.f32.mrf.mxu0
    %v5707 = vadd.f32 0.0, %v5706
    %5708 = vdwg.mxu0
    %5711 = vrot.lane.b32.xlu0 %v5196, 96
    %v5712 = vpop.permute.xlu0 %5711
    %5713 = vrot.lane.b32.xlu0 %v5199, 96
    %v5714 = vpop.permute.xlu0 %5713
    %5717 = vmatpush.msra.mxu0 0.0
    %5718 = vmatpush.msra.mxu0 0.0
    %5719 = vmatpush.msra.mxu0 0.0
    %5720 = vmatpush.msra.mxu0 0.0
    %5721 = vmatpush.msra.mxu0 0.0
    %5722 = vmatpush.msra.mxu0 0.0
    %5723 = vmatpush.msra.mxu0 0.0
    %5724 = vmatpush.msra.mxu0 0.0
    %5725 = vmatpush.msra.mxu0 0.0
    %5726 = vmatpush.msra.mxu0 0.0
    %5727 = vmatpush.msra.mxu0 0.0
    %5728 = vmatpush.msra.mxu0 0.0
    %5729 = vmatpush.msra.mxu0 0.0
    %5730 = vmatpush.msra.mxu0 0.0
    %5731 = vmatpush.msra.mxu0 %v5714
    %5732 = vmatpush.msra.mxu0 %v5712
    %5733 = vmatmul.f32.gmra.mxu0 %v1243
    %v5734 = vpop.f32.mrf.mxu0
    %v5735 = vadd.f32 0.0, %v5734
    %5736 = vmatmul.f32.gmra.mxu0 %v1246
    %v5737 = vpop.f32.mrf.mxu0
    %v5738 = vadd.f32 0.0, %v5737
    %5739 = vmatmul.f32.gmra.mxu0 %v1249
    %v5740 = vpop.f32.mrf.mxu0
    %v5741 = vadd.f32 0.0, %v5740
    %5742 = vmatmul.f32.gmra.mxu0 %v1252
    %v5743 = vpop.f32.mrf.mxu0
    %v5744 = vadd.f32 0.0, %v5743
    %5745 = vmatmul.f32.gmra.mxu0 %v1255
    %v5746 = vpop.f32.mrf.mxu0
    %v5747 = vadd.f32 0.0, %v5746
    %5748 = vmatmul.f32.gmra.mxu0 %v1258
    %v5749 = vpop.f32.mrf.mxu0
    %v5750 = vadd.f32 0.0, %v5749
    %5751 = vdwg.mxu0
    %5754 = vrot.lane.b32.xlu0 %v5202, 96
    %v5755 = vpop.permute.xlu0 %5754
    %5756 = vrot.lane.b32.xlu0 %v5205, 96
    %v5757 = vpop.permute.xlu0 %5756
    %5760 = vmatpush.msra.mxu0 0.0
    %5761 = vmatpush.msra.mxu0 0.0
    %5762 = vmatpush.msra.mxu0 0.0
    %5763 = vmatpush.msra.mxu0 0.0
    %5764 = vmatpush.msra.mxu0 0.0
    %5765 = vmatpush.msra.mxu0 0.0
    %5766 = vmatpush.msra.mxu0 0.0
    %5767 = vmatpush.msra.mxu0 0.0
    %5768 = vmatpush.msra.mxu0 0.0
    %5769 = vmatpush.msra.mxu0 0.0
    %5770 = vmatpush.msra.mxu0 0.0
    %5771 = vmatpush.msra.mxu0 0.0
    %5772 = vmatpush.msra.mxu0 0.0
    %5773 = vmatpush.msra.mxu0 0.0
    %5774 = vmatpush.msra.mxu0 %v5757
    %5775 = vmatpush.msra.mxu0 %v5755
    %5776 = vmatmul.f32.gmra.mxu0 %v1304
    %v5777 = vpop.f32.mrf.mxu0
    %v5778 = vadd.f32 0.0, %v5777
    %5779 = vmatmul.f32.gmra.mxu0 %v1307
    %v5780 = vpop.f32.mrf.mxu0
    %v5781 = vadd.f32 0.0, %v5780
    %5782 = vmatmul.f32.gmra.mxu0 %v1310
    %v5783 = vpop.f32.mrf.mxu0
    %v5784 = vadd.f32 0.0, %v5783
    %5785 = vmatmul.f32.gmra.mxu0 %v1313
    %v5786 = vpop.f32.mrf.mxu0
    %v5787 = vadd.f32 0.0, %v5786
    %5788 = vmatmul.f32.gmra.mxu0 %v1316
    %v5789 = vpop.f32.mrf.mxu0
    %v5790 = vadd.f32 0.0, %v5789
    %5791 = vmatmul.f32.gmra.mxu0 %v1319
    %v5792 = vpop.f32.mrf.mxu0
    %v5793 = vadd.f32 0.0, %v5792
    %5794 = vdwg.mxu0
    %5797 = vrot.lane.b32.xlu0 %v5208, 96
    %v5798 = vpop.permute.xlu0 %5797
    %5799 = vrot.lane.b32.xlu0 %v5211, 96
    %v5800 = vpop.permute.xlu0 %5799
    %5803 = vmatpush.msra.mxu0 0.0
    %5804 = vmatpush.msra.mxu0 0.0
    %5805 = vmatpush.msra.mxu0 0.0
    %5806 = vmatpush.msra.mxu0 0.0
    %5807 = vmatpush.msra.mxu0 0.0
    %5808 = vmatpush.msra.mxu0 0.0
    %5809 = vmatpush.msra.mxu0 0.0
    %5810 = vmatpush.msra.mxu0 0.0
    %5811 = vmatpush.msra.mxu0 0.0
    %5812 = vmatpush.msra.mxu0 0.0
    %5813 = vmatpush.msra.mxu0 0.0
    %5814 = vmatpush.msra.mxu0 0.0
    %5815 = vmatpush.msra.mxu0 0.0
    %5816 = vmatpush.msra.mxu0 0.0
    %5817 = vmatpush.msra.mxu0 %v5800
    %5818 = vmatpush.msra.mxu0 %v5798
    %5819 = vmatmul.f32.gmra.mxu0 %v1365
    %v5820 = vpop.f32.mrf.mxu0
    %v5821 = vadd.f32 0.0, %v5820
    %5822 = vmatmul.f32.gmra.mxu0 %v1368
    %v5823 = vpop.f32.mrf.mxu0
    %v5824 = vadd.f32 0.0, %v5823
    %5825 = vmatmul.f32.gmra.mxu0 %v1371
    %v5826 = vpop.f32.mrf.mxu0
    %v5827 = vadd.f32 0.0, %v5826
    %5828 = vmatmul.f32.gmra.mxu0 %v1374
    %v5829 = vpop.f32.mrf.mxu0
    %v5830 = vadd.f32 0.0, %v5829
    %5831 = vmatmul.f32.gmra.mxu0 %v1377
    %v5832 = vpop.f32.mrf.mxu0
    %v5833 = vadd.f32 0.0, %v5832
    %5834 = vmatmul.f32.gmra.mxu0 %v1380
    %v5835 = vpop.f32.mrf.mxu0
    %v5836 = vadd.f32 0.0, %v5835
    %5837 = vdwg.mxu0
    %5840 = vrot.lane.b32.xlu0 %v5214, 96
    %v5841 = vpop.permute.xlu0 %5840
    %5842 = vrot.lane.b32.xlu0 %v5217, 96
    %v5843 = vpop.permute.xlu0 %5842
    %5846 = vmatpush.msra.mxu0 0.0
    %5847 = vmatpush.msra.mxu0 0.0
    %5848 = vmatpush.msra.mxu0 0.0
    %5849 = vmatpush.msra.mxu0 0.0
    %5850 = vmatpush.msra.mxu0 0.0
    %5851 = vmatpush.msra.mxu0 0.0
    %5852 = vmatpush.msra.mxu0 0.0
    %5853 = vmatpush.msra.mxu0 0.0
    %5854 = vmatpush.msra.mxu0 0.0
    %5855 = vmatpush.msra.mxu0 0.0
    %5856 = vmatpush.msra.mxu0 0.0
    %5857 = vmatpush.msra.mxu0 0.0
    %5858 = vmatpush.msra.mxu0 0.0
    %5859 = vmatpush.msra.mxu0 0.0
    %5860 = vmatpush.msra.mxu0 %v5843
    %5861 = vmatpush.msra.mxu0 %v5841
    %5862 = vmatmul.f32.gmra.mxu0 %v1426
    %v5863 = vpop.f32.mrf.mxu0
    %v5864 = vadd.f32 0.0, %v5863
    %5865 = vmatmul.f32.gmra.mxu0 %v1429
    %v5866 = vpop.f32.mrf.mxu0
    %v5867 = vadd.f32 0.0, %v5866
    %5868 = vmatmul.f32.gmra.mxu0 %v1432
    %v5869 = vpop.f32.mrf.mxu0
    %v5870 = vadd.f32 0.0, %v5869
    %5871 = vmatmul.f32.gmra.mxu0 %v1435
    %v5872 = vpop.f32.mrf.mxu0
    %v5873 = vadd.f32 0.0, %v5872
    %5874 = vmatmul.f32.gmra.mxu0 %v1438
    %v5875 = vpop.f32.mrf.mxu0
    %v5876 = vadd.f32 0.0, %v5875
    %5877 = vmatmul.f32.gmra.mxu0 %v1441
    %v5878 = vpop.f32.mrf.mxu0
    %v5879 = vadd.f32 0.0, %v5878
    %5880 = vdwg.mxu0
    %5883 = vrot.lane.b32.xlu0 %v5220, 96
    %v5884 = vpop.permute.xlu0 %5883
    %5885 = vrot.lane.b32.xlu0 %v5223, 96
    %v5886 = vpop.permute.xlu0 %5885
    %5889 = vmatpush.msra.mxu0 0.0
    %5890 = vmatpush.msra.mxu0 0.0
    %5891 = vmatpush.msra.mxu0 0.0
    %5892 = vmatpush.msra.mxu0 0.0
    %5893 = vmatpush.msra.mxu0 0.0
    %5894 = vmatpush.msra.mxu0 0.0
    %5895 = vmatpush.msra.mxu0 0.0
    %5896 = vmatpush.msra.mxu0 0.0
    %5897 = vmatpush.msra.mxu0 0.0
    %5898 = vmatpush.msra.mxu0 0.0
    %5899 = vmatpush.msra.mxu0 0.0
    %5900 = vmatpush.msra.mxu0 0.0
    %5901 = vmatpush.msra.mxu0 0.0
    %5902 = vmatpush.msra.mxu0 0.0
    %5903 = vmatpush.msra.mxu0 %v5886
    %5904 = vmatpush.msra.mxu0 %v5884
    %5905 = vmatmul.f32.gmra.mxu0 %v1487
    %v5906 = vpop.f32.mrf.mxu0
    %v5907 = vadd.f32 0.0, %v5906
    %5908 = vmatmul.f32.gmra.mxu0 %v1490
    %v5909 = vpop.f32.mrf.mxu0
    %v5910 = vadd.f32 0.0, %v5909
    %5911 = vmatmul.f32.gmra.mxu0 %v1493
    %v5912 = vpop.f32.mrf.mxu0
    %v5913 = vadd.f32 0.0, %v5912
    %5914 = vmatmul.f32.gmra.mxu0 %v1496
    %v5915 = vpop.f32.mrf.mxu0
    %v5916 = vadd.f32 0.0, %v5915
    %5917 = vmatmul.f32.gmra.mxu0 %v1499
    %v5918 = vpop.f32.mrf.mxu0
    %v5919 = vadd.f32 0.0, %v5918
    %5920 = vmatmul.f32.gmra.mxu0 %v1502
    %v5921 = vpop.f32.mrf.mxu0
    %v5922 = vadd.f32 0.0, %v5921
    %5923 = vdwg.mxu0
    %5926 = vrot.lane.b32.xlu0 %v5226, 96
    %v5927 = vpop.permute.xlu0 %5926
    %5928 = vrot.lane.b32.xlu0 %v5229, 96
    %v5929 = vpop.permute.xlu0 %5928
    %5932 = vmatpush.msra.mxu0 0.0
    %5933 = vmatpush.msra.mxu0 0.0
    %5934 = vmatpush.msra.mxu0 0.0
    %5935 = vmatpush.msra.mxu0 0.0
    %5936 = vmatpush.msra.mxu0 0.0
    %5937 = vmatpush.msra.mxu0 0.0
    %5938 = vmatpush.msra.mxu0 0.0
    %5939 = vmatpush.msra.mxu0 0.0
    %5940 = vmatpush.msra.mxu0 0.0
    %5941 = vmatpush.msra.mxu0 0.0
    %5942 = vmatpush.msra.mxu0 0.0
    %5943 = vmatpush.msra.mxu0 0.0
    %5944 = vmatpush.msra.mxu0 0.0
    %5945 = vmatpush.msra.mxu0 0.0
    %5946 = vmatpush.msra.mxu0 %v5929
    %5947 = vmatpush.msra.mxu0 %v5927
    %5948 = vmatmul.f32.gmra.mxu0 %v1548
    %v5949 = vpop.f32.mrf.mxu0
    %v5950 = vadd.f32 0.0, %v5949
    %5951 = vmatmul.f32.gmra.mxu0 %v1551
    %v5952 = vpop.f32.mrf.mxu0
    %v5953 = vadd.f32 0.0, %v5952
    %5954 = vmatmul.f32.gmra.mxu0 %v1554
    %v5955 = vpop.f32.mrf.mxu0
    %v5956 = vadd.f32 0.0, %v5955
    %5957 = vmatmul.f32.gmra.mxu0 %v1557
    %v5958 = vpop.f32.mrf.mxu0
    %v5959 = vadd.f32 0.0, %v5958
    %5960 = vmatmul.f32.gmra.mxu0 %v1560
    %v5961 = vpop.f32.mrf.mxu0
    %v5962 = vadd.f32 0.0, %v5961
    %5963 = vmatmul.f32.gmra.mxu0 %v1563
    %v5964 = vpop.f32.mrf.mxu0
    %v5965 = vadd.f32 0.0, %v5964
    %5966 = vdwg.mxu0
    %5969 = vrot.lane.b32.xlu0 %v5232, 96
    %v5970 = vpop.permute.xlu0 %5969
    %5971 = vrot.lane.b32.xlu0 %v5235, 96
    %v5972 = vpop.permute.xlu0 %5971
    %5975 = vmatpush.msra.mxu0 0.0
    %5976 = vmatpush.msra.mxu0 0.0
    %5977 = vmatpush.msra.mxu0 0.0
    %5978 = vmatpush.msra.mxu0 0.0
    %5979 = vmatpush.msra.mxu0 0.0
    %5980 = vmatpush.msra.mxu0 0.0
    %5981 = vmatpush.msra.mxu0 0.0
    %5982 = vmatpush.msra.mxu0 0.0
    %5983 = vmatpush.msra.mxu0 0.0
    %5984 = vmatpush.msra.mxu0 0.0
    %5985 = vmatpush.msra.mxu0 0.0
    %5986 = vmatpush.msra.mxu0 0.0
    %5987 = vmatpush.msra.mxu0 0.0
    %5988 = vmatpush.msra.mxu0 0.0
    %5989 = vmatpush.msra.mxu0 %v5972
    %5990 = vmatpush.msra.mxu0 %v5970
    %5991 = vmatmul.f32.gmra.mxu0 %v1609
    %v5992 = vpop.f32.mrf.mxu0
    %v5993 = vadd.f32 0.0, %v5992
    %5994 = vmatmul.f32.gmra.mxu0 %v1612
    %v5995 = vpop.f32.mrf.mxu0
    %v5996 = vadd.f32 0.0, %v5995
    %5997 = vmatmul.f32.gmra.mxu0 %v1615
    %v5998 = vpop.f32.mrf.mxu0
    %v5999 = vadd.f32 0.0, %v5998
    %6000 = vmatmul.f32.gmra.mxu0 %v1618
    %v6001 = vpop.f32.mrf.mxu0
    %v6002 = vadd.f32 0.0, %v6001
    %6003 = vmatmul.f32.gmra.mxu0 %v1621
    %v6004 = vpop.f32.mrf.mxu0
    %v6005 = vadd.f32 0.0, %v6004
    %6006 = vmatmul.f32.gmra.mxu0 %v1624
    %v6007 = vpop.f32.mrf.mxu0
    %v6008 = vadd.f32 0.0, %v6007
    %6009 = vdwg.mxu0
    %6012 = vrot.lane.b32.xlu0 %v5238, 96
    %v6013 = vpop.permute.xlu0 %6012
    %6014 = vrot.lane.b32.xlu0 %v5241, 96
    %v6015 = vpop.permute.xlu0 %6014
    %6018 = vmatpush.msra.mxu0 0.0
    %6019 = vmatpush.msra.mxu0 0.0
    %6020 = vmatpush.msra.mxu0 0.0
    %6021 = vmatpush.msra.mxu0 0.0
    %6022 = vmatpush.msra.mxu0 0.0
    %6023 = vmatpush.msra.mxu0 0.0
    %6024 = vmatpush.msra.mxu0 0.0
    %6025 = vmatpush.msra.mxu0 0.0
    %6026 = vmatpush.msra.mxu0 0.0
    %6027 = vmatpush.msra.mxu0 0.0
    %6028 = vmatpush.msra.mxu0 0.0
    %6029 = vmatpush.msra.mxu0 0.0
    %6030 = vmatpush.msra.mxu0 0.0
    %6031 = vmatpush.msra.mxu0 0.0
    %6032 = vmatpush.msra.mxu0 %v6015
    %6033 = vmatpush.msra.mxu0 %v6013
    %6034 = vmatmul.f32.gmra.mxu0 %v1670
    %v6035 = vpop.f32.mrf.mxu0
    %v6036 = vadd.f32 0.0, %v6035
    %6037 = vmatmul.f32.gmra.mxu0 %v1673
    %v6038 = vpop.f32.mrf.mxu0
    %v6039 = vadd.f32 0.0, %v6038
    %6040 = vmatmul.f32.gmra.mxu0 %v1676
    %v6041 = vpop.f32.mrf.mxu0
    %v6042 = vadd.f32 0.0, %v6041
    %6043 = vmatmul.f32.gmra.mxu0 %v1679
    %v6044 = vpop.f32.mrf.mxu0
    %v6045 = vadd.f32 0.0, %v6044
    %6046 = vmatmul.f32.gmra.mxu0 %v1682
    %v6047 = vpop.f32.mrf.mxu0
    %v6048 = vadd.f32 0.0, %v6047
    %6049 = vmatmul.f32.gmra.mxu0 %v1685
    %v6050 = vpop.f32.mrf.mxu0
    %v6051 = vadd.f32 0.0, %v6050
    %6052 = vdwg.mxu0
    %6055 = vrot.lane.b32.xlu0 %v5244, 96
    %v6056 = vpop.permute.xlu0 %6055
    %6057 = vrot.lane.b32.xlu0 %v5247, 96
    %v6058 = vpop.permute.xlu0 %6057
    %6061 = vmatpush.msra.mxu0 0.0
    %6062 = vmatpush.msra.mxu0 0.0
    %6063 = vmatpush.msra.mxu0 0.0
    %6064 = vmatpush.msra.mxu0 0.0
    %6065 = vmatpush.msra.mxu0 0.0
    %6066 = vmatpush.msra.mxu0 0.0
    %6067 = vmatpush.msra.mxu0 0.0
    %6068 = vmatpush.msra.mxu0 0.0
    %6069 = vmatpush.msra.mxu0 0.0
    %6070 = vmatpush.msra.mxu0 0.0
    %6071 = vmatpush.msra.mxu0 0.0
    %6072 = vmatpush.msra.mxu0 0.0
    %6073 = vmatpush.msra.mxu0 0.0
    %6074 = vmatpush.msra.mxu0 0.0
    %6075 = vmatpush.msra.mxu0 %v6058
    %6076 = vmatpush.msra.mxu0 %v6056
    %6077 = vmatmul.f32.gmra.mxu0 %v1731
    %v6078 = vpop.f32.mrf.mxu0
    %v6079 = vadd.f32 0.0, %v6078
    %6080 = vmatmul.f32.gmra.mxu0 %v1734
    %v6081 = vpop.f32.mrf.mxu0
    %v6082 = vadd.f32 0.0, %v6081
    %6083 = vmatmul.f32.gmra.mxu0 %v1737
    %v6084 = vpop.f32.mrf.mxu0
    %v6085 = vadd.f32 0.0, %v6084
    %6086 = vmatmul.f32.gmra.mxu0 %v1740
    %v6087 = vpop.f32.mrf.mxu0
    %v6088 = vadd.f32 0.0, %v6087
    %6089 = vmatmul.f32.gmra.mxu0 %v1743
    %v6090 = vpop.f32.mrf.mxu0
    %v6091 = vadd.f32 0.0, %v6090
    %6092 = vmatmul.f32.gmra.mxu0 %v1746
    %v6093 = vpop.f32.mrf.mxu0
    %v6094 = vadd.f32 0.0, %v6093
    %6095 = vdwg.mxu0
    %6098 = vrot.lane.b32.xlu0 %v5250, 96
    %v6099 = vpop.permute.xlu0 %6098
    %6100 = vrot.lane.b32.xlu0 %v5253, 96
    %v6101 = vpop.permute.xlu0 %6100
    %6104 = vmatpush.msra.mxu0 0.0
    %6105 = vmatpush.msra.mxu0 0.0
    %6106 = vmatpush.msra.mxu0 0.0
    %6107 = vmatpush.msra.mxu0 0.0
    %6108 = vmatpush.msra.mxu0 0.0
    %6109 = vmatpush.msra.mxu0 0.0
    %6110 = vmatpush.msra.mxu0 0.0
    %6111 = vmatpush.msra.mxu0 0.0
    %6112 = vmatpush.msra.mxu0 0.0
    %6113 = vmatpush.msra.mxu0 0.0
    %6114 = vmatpush.msra.mxu0 0.0
    %6115 = vmatpush.msra.mxu0 0.0
    %6116 = vmatpush.msra.mxu0 0.0
    %6117 = vmatpush.msra.mxu0 0.0
    %6118 = vmatpush.msra.mxu0 %v6101
    %6119 = vmatpush.msra.mxu0 %v6099
    %6120 = vmatmul.f32.gmra.mxu0 %v1792
    %v6121 = vpop.f32.mrf.mxu0
    %v6122 = vadd.f32 0.0, %v6121
    %6123 = vmatmul.f32.gmra.mxu0 %v1795
    %v6124 = vpop.f32.mrf.mxu0
    %v6125 = vadd.f32 0.0, %v6124
    %6126 = vmatmul.f32.gmra.mxu0 %v1798
    %v6127 = vpop.f32.mrf.mxu0
    %v6128 = vadd.f32 0.0, %v6127
    %6129 = vmatmul.f32.gmra.mxu0 %v1801
    %v6130 = vpop.f32.mrf.mxu0
    %v6131 = vadd.f32 0.0, %v6130
    %6132 = vmatmul.f32.gmra.mxu0 %v1804
    %v6133 = vpop.f32.mrf.mxu0
    %v6134 = vadd.f32 0.0, %v6133
    %6135 = vmatmul.f32.gmra.mxu0 %v1807
    %v6136 = vpop.f32.mrf.mxu0
    %v6137 = vadd.f32 0.0, %v6136
    %6138 = vdwg.mxu0
    %6141 = vrot.lane.b32.xlu0 %v5256, 96
    %v6142 = vpop.permute.xlu0 %6141
    %6143 = vrot.lane.b32.xlu0 %v5259, 96
    %v6144 = vpop.permute.xlu0 %6143
    %6147 = vmatpush.msra.mxu0 0.0
    %6148 = vmatpush.msra.mxu0 0.0
    %6149 = vmatpush.msra.mxu0 0.0
    %6150 = vmatpush.msra.mxu0 0.0
    %6151 = vmatpush.msra.mxu0 0.0
    %6152 = vmatpush.msra.mxu0 0.0
    %6153 = vmatpush.msra.mxu0 0.0
    %6154 = vmatpush.msra.mxu0 0.0
    %6155 = vmatpush.msra.mxu0 0.0
    %6156 = vmatpush.msra.mxu0 0.0
    %6157 = vmatpush.msra.mxu0 0.0
    %6158 = vmatpush.msra.mxu0 0.0
    %6159 = vmatpush.msra.mxu0 0.0
    %6160 = vmatpush.msra.mxu0 0.0
    %6161 = vmatpush.msra.mxu0 %v6144
    %6162 = vmatpush.msra.mxu0 %v6142
    %6163 = vmatmul.f32.gmra.mxu0 %v1853
    %v6164 = vpop.f32.mrf.mxu0
    %v6165 = vadd.f32 0.0, %v6164
    %6166 = vmatmul.f32.gmra.mxu0 %v1856
    %v6167 = vpop.f32.mrf.mxu0
    %v6168 = vadd.f32 0.0, %v6167
    %6169 = vmatmul.f32.gmra.mxu0 %v1859
    %v6170 = vpop.f32.mrf.mxu0
    %v6171 = vadd.f32 0.0, %v6170
    %6172 = vmatmul.f32.gmra.mxu0 %v1862
    %v6173 = vpop.f32.mrf.mxu0
    %v6174 = vadd.f32 0.0, %v6173
    %6175 = vmatmul.f32.gmra.mxu0 %v1865
    %v6176 = vpop.f32.mrf.mxu0
    %v6177 = vadd.f32 0.0, %v6176
    %6178 = vmatmul.f32.gmra.mxu0 %v1868
    %v6179 = vpop.f32.mrf.mxu0
    %v6180 = vadd.f32 0.0, %v6179
    %6181 = vdwg.mxu0
    %6184 = vrot.lane.b32.xlu0 %v5262, 96
    %v6185 = vpop.permute.xlu0 %6184
    %6186 = vrot.lane.b32.xlu0 %v5265, 96
    %v6187 = vpop.permute.xlu0 %6186
    %6190 = vmatpush.msra.mxu0 0.0
    %6191 = vmatpush.msra.mxu0 0.0
    %6192 = vmatpush.msra.mxu0 0.0
    %6193 = vmatpush.msra.mxu0 0.0
    %6194 = vmatpush.msra.mxu0 0.0
    %6195 = vmatpush.msra.mxu0 0.0
    %6196 = vmatpush.msra.mxu0 0.0
    %6197 = vmatpush.msra.mxu0 0.0
    %6198 = vmatpush.msra.mxu0 0.0
    %6199 = vmatpush.msra.mxu0 0.0
    %6200 = vmatpush.msra.mxu0 0.0
    %6201 = vmatpush.msra.mxu0 0.0
    %6202 = vmatpush.msra.mxu0 0.0
    %6203 = vmatpush.msra.mxu0 0.0
    %6204 = vmatpush.msra.mxu0 %v6187
    %6205 = vmatpush.msra.mxu0 %v6185
    %6206 = vmatmul.f32.gmra.mxu0 %v1914
    %v6207 = vpop.f32.mrf.mxu0
    %v6208 = vadd.f32 0.0, %v6207
    %6209 = vmatmul.f32.gmra.mxu0 %v1917
    %v6210 = vpop.f32.mrf.mxu0
    %v6211 = vadd.f32 0.0, %v6210
    %6212 = vmatmul.f32.gmra.mxu0 %v1920
    %v6213 = vpop.f32.mrf.mxu0
    %v6214 = vadd.f32 0.0, %v6213
    %6215 = vmatmul.f32.gmra.mxu0 %v1923
    %v6216 = vpop.f32.mrf.mxu0
    %v6217 = vadd.f32 0.0, %v6216
    %6218 = vmatmul.f32.gmra.mxu0 %v1926
    %v6219 = vpop.f32.mrf.mxu0
    %v6220 = vadd.f32 0.0, %v6219
    %6221 = vmatmul.f32.gmra.mxu0 %v1929
    %v6222 = vpop.f32.mrf.mxu0
    %v6223 = vadd.f32 0.0, %v6222
    %6224 = vdwg.mxu0
    %6227 = vrot.lane.b32.xlu0 %v5268, 96
    %v6228 = vpop.permute.xlu0 %6227
    %6229 = vrot.lane.b32.xlu0 %v5271, 96
    %v6230 = vpop.permute.xlu0 %6229
    %6233 = vmatpush.msra.mxu0 0.0
    %6234 = vmatpush.msra.mxu0 0.0
    %6235 = vmatpush.msra.mxu0 0.0
    %6236 = vmatpush.msra.mxu0 0.0
    %6237 = vmatpush.msra.mxu0 0.0
    %6238 = vmatpush.msra.mxu0 0.0
    %6239 = vmatpush.msra.mxu0 0.0
    %6240 = vmatpush.msra.mxu0 0.0
    %6241 = vmatpush.msra.mxu0 0.0
    %6242 = vmatpush.msra.mxu0 0.0
    %6243 = vmatpush.msra.mxu0 0.0
    %6244 = vmatpush.msra.mxu0 0.0
    %6245 = vmatpush.msra.mxu0 0.0
    %6246 = vmatpush.msra.mxu0 0.0
    %6247 = vmatpush.msra.mxu0 %v6230
    %6248 = vmatpush.msra.mxu0 %v6228
    %6249 = vmatmul.f32.gmra.mxu0 %v1975
    %v6250 = vpop.f32.mrf.mxu0
    %v6251 = vadd.f32 0.0, %v6250
    %6252 = vmatmul.f32.gmra.mxu0 %v1978
    %v6253 = vpop.f32.mrf.mxu0
    %v6254 = vadd.f32 0.0, %v6253
    %6255 = vmatmul.f32.gmra.mxu0 %v1981
    %v6256 = vpop.f32.mrf.mxu0
    %v6257 = vadd.f32 0.0, %v6256
    %6258 = vmatmul.f32.gmra.mxu0 %v1984
    %v6259 = vpop.f32.mrf.mxu0
    %v6260 = vadd.f32 0.0, %v6259
    %6261 = vmatmul.f32.gmra.mxu0 %v1987
    %v6262 = vpop.f32.mrf.mxu0
    %v6263 = vadd.f32 0.0, %v6262
    %6264 = vmatmul.f32.gmra.mxu0 %v1990
    %v6265 = vpop.f32.mrf.mxu0
    %v6266 = vadd.f32 0.0, %v6265
    %6267 = vdwg.mxu0
    %6270 = vrot.lane.b32.xlu0 %v5274, 96
    %v6271 = vpop.permute.xlu0 %6270
    %6272 = vrot.lane.b32.xlu0 %v5277, 96
    %v6273 = vpop.permute.xlu0 %6272
    %6276 = vmatpush.msra.mxu0 0.0
    %6277 = vmatpush.msra.mxu0 0.0
    %6278 = vmatpush.msra.mxu0 0.0
    %6279 = vmatpush.msra.mxu0 0.0
    %6280 = vmatpush.msra.mxu0 0.0
    %6281 = vmatpush.msra.mxu0 0.0
    %6282 = vmatpush.msra.mxu0 0.0
    %6283 = vmatpush.msra.mxu0 0.0
    %6284 = vmatpush.msra.mxu0 0.0
    %6285 = vmatpush.msra.mxu0 0.0
    %6286 = vmatpush.msra.mxu0 0.0
    %6287 = vmatpush.msra.mxu0 0.0
    %6288 = vmatpush.msra.mxu0 0.0
    %6289 = vmatpush.msra.mxu0 0.0
    %6290 = vmatpush.msra.mxu0 %v6273
    %6291 = vmatpush.msra.mxu0 %v6271
    %6292 = vmatmul.f32.gmra.mxu0 %v2036
    %v6293 = vpop.f32.mrf.mxu0
    %v6294 = vadd.f32 0.0, %v6293
    %6295 = vmatmul.f32.gmra.mxu0 %v2039
    %v6296 = vpop.f32.mrf.mxu0
    %v6297 = vadd.f32 0.0, %v6296
    %6298 = vmatmul.f32.gmra.mxu0 %v2042
    %v6299 = vpop.f32.mrf.mxu0
    %v6300 = vadd.f32 0.0, %v6299
    %6301 = vmatmul.f32.gmra.mxu0 %v2045
    %v6302 = vpop.f32.mrf.mxu0
    %v6303 = vadd.f32 0.0, %v6302
    %6304 = vmatmul.f32.gmra.mxu0 %v2048
    %v6305 = vpop.f32.mrf.mxu0
    %v6306 = vadd.f32 0.0, %v6305
    %6307 = vmatmul.f32.gmra.mxu0 %v2051
    %v6308 = vpop.f32.mrf.mxu0
    %v6309 = vadd.f32 0.0, %v6308
    %6310 = vdwg.mxu0
    %6359 = vrot.lane.b32.xlu0 %v5311, 32
    %v6360 = vpop.permute.xlu0 %6359
    %6361 = vrot.lane.b32.xlu0 %v5314, 32
    %v6362 = vpop.permute.xlu0 %6361
    %6363 = vrot.lane.b32.xlu0 %v5354, 32
    %v6364 = vpop.permute.xlu0 %6363
    %6365 = vrot.lane.b32.xlu0 %v5357, 32
    %v6366 = vpop.permute.xlu0 %6365
    %6367 = vrot.lane.b32.xlu0 %v5397, 32
    %v6368 = vpop.permute.xlu0 %6367
    %6369 = vrot.lane.b32.xlu0 %v5400, 32
    %v6370 = vpop.permute.xlu0 %6369
    %6371 = vrot.lane.b32.xlu0 %v5440, 32
    %v6372 = vpop.permute.xlu0 %6371
    %6373 = vrot.lane.b32.xlu0 %v5443, 32
    %v6374 = vpop.permute.xlu0 %6373
    %6375 = vrot.lane.b32.xlu0 %v5483, 32
    %v6376 = vpop.permute.xlu0 %6375
    %6377 = vrot.lane.b32.xlu0 %v5486, 32
    %v6378 = vpop.permute.xlu0 %6377
    %6379 = vrot.lane.b32.xlu0 %v5526, 32
    %v6380 = vpop.permute.xlu0 %6379
    %6381 = vrot.lane.b32.xlu0 %v5529, 32
    %v6382 = vpop.permute.xlu0 %6381
    %6383 = vrot.lane.b32.xlu0 %v5569, 32
    %v6384 = vpop.permute.xlu0 %6383
    %6385 = vrot.lane.b32.xlu0 %v5572, 32
    %v6386 = vpop.permute.xlu0 %6385
    %6387 = vrot.lane.b32.xlu0 %v5612, 32
    %v6388 = vpop.permute.xlu0 %6387
    %6389 = vrot.lane.b32.xlu0 %v5615, 32
    %v6390 = vpop.permute.xlu0 %6389
    %6391 = vrot.lane.b32.xlu0 %v5655, 32
    %v6392 = vpop.permute.xlu0 %6391
    %6393 = vrot.lane.b32.xlu0 %v5658, 32
    %v6394 = vpop.permute.xlu0 %6393
    %6395 = vrot.lane.b32.xlu0 %v5698, 32
    %v6396 = vpop.permute.xlu0 %6395
    %6397 = vrot.lane.b32.xlu0 %v5701, 32
    %v6398 = vpop.permute.xlu0 %6397
    %6399 = vrot.lane.b32.xlu0 %v5741, 32
    %v6400 = vpop.permute.xlu0 %6399
    %6401 = vrot.lane.b32.xlu0 %v5744, 32
    %v6402 = vpop.permute.xlu0 %6401
    %6403 = vrot.lane.b32.xlu0 %v5784, 32
    %v6404 = vpop.permute.xlu0 %6403
    %6405 = vrot.lane.b32.xlu0 %v5787, 32
    %v6406 = vpop.permute.xlu0 %6405
    %6407 = vrot.lane.b32.xlu0 %v5827, 32
    %v6408 = vpop.permute.xlu0 %6407
    %6409 = vrot.lane.b32.xlu0 %v5830, 32
    %v6410 = vpop.permute.xlu0 %6409
    %6411 = vrot.lane.b32.xlu0 %v5870, 32
    %v6412 = vpop.permute.xlu0 %6411
    %6413 = vrot.lane.b32.xlu0 %v5873, 32
    %v6414 = vpop.permute.xlu0 %6413
    %6415 = vrot.lane.b32.xlu0 %v5913, 32
    %v6416 = vpop.permute.xlu0 %6415
    %6417 = vrot.lane.b32.xlu0 %v5916, 32
    %v6418 = vpop.permute.xlu0 %6417
    %6419 = vrot.lane.b32.xlu0 %v5956, 32
    %v6420 = vpop.permute.xlu0 %6419
    %6421 = vrot.lane.b32.xlu0 %v5959, 32
    %v6422 = vpop.permute.xlu0 %6421
    %6423 = vrot.lane.b32.xlu0 %v5999, 32
    %v6424 = vpop.permute.xlu0 %6423
    %6425 = vrot.lane.b32.xlu0 %v6002, 32
    %v6426 = vpop.permute.xlu0 %6425
    %6427 = vrot.lane.b32.xlu0 %v6042, 32
    %v6428 = vpop.permute.xlu0 %6427
    %6429 = vrot.lane.b32.xlu0 %v6045, 32
    %v6430 = vpop.permute.xlu0 %6429
    %6431 = vrot.lane.b32.xlu0 %v6085, 32
    %v6432 = vpop.permute.xlu0 %6431
    %6433 = vrot.lane.b32.xlu0 %v6088, 32
    %v6434 = vpop.permute.xlu0 %6433
    %6435 = vrot.lane.b32.xlu0 %v6128, 32
    %v6436 = vpop.permute.xlu0 %6435
    %6437 = vrot.lane.b32.xlu0 %v6131, 32
    %v6438 = vpop.permute.xlu0 %6437
    %6439 = vrot.lane.b32.xlu0 %v6171, 32
    %v6440 = vpop.permute.xlu0 %6439
    %6441 = vrot.lane.b32.xlu0 %v6174, 32
    %v6442 = vpop.permute.xlu0 %6441
    %6443 = vrot.lane.b32.xlu0 %v6214, 32
    %v6444 = vpop.permute.xlu0 %6443
    %6445 = vrot.lane.b32.xlu0 %v6217, 32
    %v6446 = vpop.permute.xlu0 %6445
    %6447 = vrot.lane.b32.xlu0 %v6257, 32
    %v6448 = vpop.permute.xlu0 %6447
    %6449 = vrot.lane.b32.xlu0 %v6260, 32
    %v6450 = vpop.permute.xlu0 %6449
    %6451 = vrot.lane.b32.xlu0 %v6300, 32
    %v6452 = vpop.permute.xlu0 %6451
    %6453 = vrot.lane.b32.xlu0 %v6303, 32
    %v6454 = vpop.permute.xlu0 %6453
    %6551 = vrot.lane.b32.xlu0 %v5317, 64
    %v6552 = vpop.permute.xlu0 %6551
    %6553 = vrot.lane.b32.xlu0 %v5320, 64
    %v6554 = vpop.permute.xlu0 %6553
    %6555 = vrot.lane.b32.xlu0 %v5360, 64
    %v6556 = vpop.permute.xlu0 %6555
    %6557 = vrot.lane.b32.xlu0 %v5363, 64
    %v6558 = vpop.permute.xlu0 %6557
    %6559 = vrot.lane.b32.xlu0 %v5403, 64
    %v6560 = vpop.permute.xlu0 %6559
    %6561 = vrot.lane.b32.xlu0 %v5406, 64
    %v6562 = vpop.permute.xlu0 %6561
    %6563 = vrot.lane.b32.xlu0 %v5446, 64
    %v6564 = vpop.permute.xlu0 %6563
    %6565 = vrot.lane.b32.xlu0 %v5449, 64
    %v6566 = vpop.permute.xlu0 %6565
    %6567 = vrot.lane.b32.xlu0 %v5489, 64
    %v6568 = vpop.permute.xlu0 %6567
    %6569 = vrot.lane.b32.xlu0 %v5492, 64
    %v6570 = vpop.permute.xlu0 %6569
    %6571 = vrot.lane.b32.xlu0 %v5532, 64
    %v6572 = vpop.permute.xlu0 %6571
    %6573 = vrot.lane.b32.xlu0 %v5535, 64
    %v6574 = vpop.permute.xlu0 %6573
    %6575 = vrot.lane.b32.xlu0 %v5575, 64
    %v6576 = vpop.permute.xlu0 %6575
    %6577 = vrot.lane.b32.xlu0 %v5578, 64
    %v6578 = vpop.permute.xlu0 %6577
    %6579 = vrot.lane.b32.xlu0 %v5618, 64
    %v6580 = vpop.permute.xlu0 %6579
    %6581 = vrot.lane.b32.xlu0 %v5621, 64
    %v6582 = vpop.permute.xlu0 %6581
    %6583 = vrot.lane.b32.xlu0 %v5661, 64
    %v6584 = vpop.permute.xlu0 %6583
    %6585 = vrot.lane.b32.xlu0 %v5664, 64
    %v6586 = vpop.permute.xlu0 %6585
    %6587 = vrot.lane.b32.xlu0 %v5704, 64
    %v6588 = vpop.permute.xlu0 %6587
    %6589 = vrot.lane.b32.xlu0 %v5707, 64
    %v6590 = vpop.permute.xlu0 %6589
    %6591 = vrot.lane.b32.xlu0 %v5747, 64
    %v6592 = vpop.permute.xlu0 %6591
    %6593 = vrot.lane.b32.xlu0 %v5750, 64
    %v6594 = vpop.permute.xlu0 %6593
    %6595 = vrot.lane.b32.xlu0 %v5790, 64
    %v6596 = vpop.permute.xlu0 %6595
    %6597 = vrot.lane.b32.xlu0 %v5793, 64
    %v6598 = vpop.permute.xlu0 %6597
    %6599 = vrot.lane.b32.xlu0 %v5833, 64
    %v6600 = vpop.permute.xlu0 %6599
    %6601 = vrot.lane.b32.xlu0 %v5836, 64
    %v6602 = vpop.permute.xlu0 %6601
    %6603 = vrot.lane.b32.xlu0 %v5876, 64
    %v6604 = vpop.permute.xlu0 %6603
    %6605 = vrot.lane.b32.xlu0 %v5879, 64
    %v6606 = vpop.permute.xlu0 %6605
    %6607 = vrot.lane.b32.xlu0 %v5919, 64
    %v6608 = vpop.permute.xlu0 %6607
    %6609 = vrot.lane.b32.xlu0 %v5922, 64
    %v6610 = vpop.permute.xlu0 %6609
    %6611 = vrot.lane.b32.xlu0 %v5962, 64
    %v6612 = vpop.permute.xlu0 %6611
    %6613 = vrot.lane.b32.xlu0 %v5965, 64
    %v6614 = vpop.permute.xlu0 %6613
    %6615 = vrot.lane.b32.xlu0 %v6005, 64
    %v6616 = vpop.permute.xlu0 %6615
    %6617 = vrot.lane.b32.xlu0 %v6008, 64
    %v6618 = vpop.permute.xlu0 %6617
    %6619 = vrot.lane.b32.xlu0 %v6048, 64
    %v6620 = vpop.permute.xlu0 %6619
    %6621 = vrot.lane.b32.xlu0 %v6051, 64
    %v6622 = vpop.permute.xlu0 %6621
    %6623 = vrot.lane.b32.xlu0 %v6091, 64
    %v6624 = vpop.permute.xlu0 %6623
    %6625 = vrot.lane.b32.xlu0 %v6094, 64
    %v6626 = vpop.permute.xlu0 %6625
    %6627 = vrot.lane.b32.xlu0 %v6134, 64
    %v6628 = vpop.permute.xlu0 %6627
    %6629 = vrot.lane.b32.xlu0 %v6137, 64
    %v6630 = vpop.permute.xlu0 %6629
    %6631 = vrot.lane.b32.xlu0 %v6177, 64
    %v6632 = vpop.permute.xlu0 %6631
    %6633 = vrot.lane.b32.xlu0 %v6180, 64
    %v6634 = vpop.permute.xlu0 %6633
    %6635 = vrot.lane.b32.xlu0 %v6220, 64
    %v6636 = vpop.permute.xlu0 %6635
    %6637 = vrot.lane.b32.xlu0 %v6223, 64
    %v6638 = vpop.permute.xlu0 %6637
    %6639 = vrot.lane.b32.xlu0 %v6263, 64
    %v6640 = vpop.permute.xlu0 %6639
    %6641 = vrot.lane.b32.xlu0 %v6266, 64
    %v6642 = vpop.permute.xlu0 %6641
    %6643 = vrot.lane.b32.xlu0 %v6306, 64
    %v6644 = vpop.permute.xlu0 %6643
    %6645 = vrot.lane.b32.xlu0 %v6309, 64
    %v6646 = vpop.permute.xlu0 %6645
    %v6695 = vsel %vm2472, %v5305, %v6360
    %v6696 = vsel %vm2472, %v5308, %v6362
    %v6697 = vsel %vm2472, %v5348, %v6364
    %v6698 = vsel %vm2472, %v5351, %v6366
    %v6699 = vsel %vm2472, %v5391, %v6368
    %v6700 = vsel %vm2472, %v5394, %v6370
    %v6701 = vsel %vm2472, %v5434, %v6372
    %v6702 = vsel %vm2472, %v5437, %v6374
    %v6703 = vsel %vm2472, %v5477, %v6376
    %v6704 = vsel %vm2472, %v5480, %v6378
    %v6705 = vsel %vm2472, %v5520, %v6380
    %v6706 = vsel %vm2472, %v5523, %v6382
    %v6707 = vsel %vm2472, %v5563, %v6384
    %v6708 = vsel %vm2472, %v5566, %v6386
    %v6709 = vsel %vm2472, %v5606, %v6388
    %v6710 = vsel %vm2472, %v5609, %v6390
    %v6711 = vsel %vm2472, %v5649, %v6392
    %v6712 = vsel %vm2472, %v5652, %v6394
    %v6713 = vsel %vm2472, %v5692, %v6396
    %v6714 = vsel %vm2472, %v5695, %v6398
    %v6715 = vsel %vm2472, %v5735, %v6400
    %v6716 = vsel %vm2472, %v5738, %v6402
    %v6717 = vsel %vm2472, %v5778, %v6404
    %v6718 = vsel %vm2472, %v5781, %v6406
    %v6719 = vsel %vm2472, %v5821, %v6408
    %v6720 = vsel %vm2472, %v5824, %v6410
    %v6721 = vsel %vm2472, %v5864, %v6412
    %v6722 = vsel %vm2472, %v5867, %v6414
    %v6723 = vsel %vm2472, %v5907, %v6416
    %v6724 = vsel %vm2472, %v5910, %v6418
    %v6725 = vsel %vm2472, %v5950, %v6420
    %v6726 = vsel %vm2472, %v5953, %v6422
    %v6727 = vsel %vm2472, %v5993, %v6424
    %v6728 = vsel %vm2472, %v5996, %v6426
    %v6729 = vsel %vm2472, %v6036, %v6428
    %v6730 = vsel %vm2472, %v6039, %v6430
    %v6731 = vsel %vm2472, %v6079, %v6432
    %v6732 = vsel %vm2472, %v6082, %v6434
    %v6733 = vsel %vm2472, %v6122, %v6436
    %v6734 = vsel %vm2472, %v6125, %v6438
    %v6735 = vsel %vm2472, %v6165, %v6440
    %v6736 = vsel %vm2472, %v6168, %v6442
    %v6737 = vsel %vm2472, %v6208, %v6444
    %v6738 = vsel %vm2472, %v6211, %v6446
    %v6739 = vsel %vm2472, %v6251, %v6448
    %v6740 = vsel %vm2472, %v6254, %v6450
    %v6741 = vsel %vm2472, %v6294, %v6452
    %v6742 = vsel %vm2472, %v6297, %v6454
    %v6743 = vsel %vm2521, %v6695, %v6552
    %v6744 = vsel %vm2521, %v6696, %v6554
    %v6745 = vsel %vm2521, %v6697, %v6556
    %v6746 = vsel %vm2521, %v6698, %v6558
    %v6747 = vsel %vm2521, %v6699, %v6560
    %v6748 = vsel %vm2521, %v6700, %v6562
    %v6749 = vsel %vm2521, %v6701, %v6564
    %v6750 = vsel %vm2521, %v6702, %v6566
    %v6751 = vsel %vm2521, %v6703, %v6568
    %v6752 = vsel %vm2521, %v6704, %v6570
    %v6753 = vsel %vm2521, %v6705, %v6572
    %v6754 = vsel %vm2521, %v6706, %v6574
    %v6755 = vsel %vm2521, %v6707, %v6576
    %v6756 = vsel %vm2521, %v6708, %v6578
    %v6757 = vsel %vm2521, %v6709, %v6580
    %v6758 = vsel %vm2521, %v6710, %v6582
    %v6759 = vsel %vm2521, %v6711, %v6584
    %v6760 = vsel %vm2521, %v6712, %v6586
    %v6761 = vsel %vm2521, %v6713, %v6588
    %v6762 = vsel %vm2521, %v6714, %v6590
    %v6763 = vsel %vm2521, %v6715, %v6592
    %v6764 = vsel %vm2521, %v6716, %v6594
    %v6765 = vsel %vm2521, %v6717, %v6596
    %v6766 = vsel %vm2521, %v6718, %v6598
    %v6767 = vsel %vm2521, %v6719, %v6600
    %v6768 = vsel %vm2521, %v6720, %v6602
    %v6769 = vsel %vm2521, %v6721, %v6604
    %v6770 = vsel %vm2521, %v6722, %v6606
    %v6771 = vsel %vm2521, %v6723, %v6608
    %v6772 = vsel %vm2521, %v6724, %v6610
    %v6773 = vsel %vm2521, %v6725, %v6612
    %v6774 = vsel %vm2521, %v6726, %v6614
    %v6775 = vsel %vm2521, %v6727, %v6616
    %v6776 = vsel %vm2521, %v6728, %v6618
    %v6777 = vsel %vm2521, %v6729, %v6620
    %v6778 = vsel %vm2521, %v6730, %v6622
    %v6779 = vsel %vm2521, %v6731, %v6624
    %v6780 = vsel %vm2521, %v6732, %v6626
    %v6781 = vsel %vm2521, %v6733, %v6628
    %v6782 = vsel %vm2521, %v6734, %v6630
    %v6783 = vsel %vm2521, %v6735, %v6632
    %v6784 = vsel %vm2521, %v6736, %v6634
    %v6785 = vsel %vm2521, %v6737, %v6636
    %v6786 = vsel %vm2521, %v6738, %v6638
    %v6787 = vsel %vm2521, %v6739, %v6640
    %v6788 = vsel %vm2521, %v6740, %v6642
    %v6789 = vsel %vm2521, %v6741, %v6644
    %v6790 = vsel %vm2521, %v6742, %v6646
    %v6791 = vld [vmem:[%s10] sm:$0xff]
    %v6792 = vld [vmem:[%s10 + $0x8] sm:$0xff]
    %v6793 = vld [vmem:[%s10 + $0x10] sm:$0xff]
    %v6794 = vld [vmem:[%s10 + $0x18] sm:$0xff]
    %v6795 = vld [vmem:[%s10 + $0x20] sm:$0xff]
    %v6796 = vld [vmem:[%s10 + $0x28] sm:$0xff]
    %v6797 = vld [vmem:[%s10 + $0x30] sm:$0xff]
    %v6798 = vld [vmem:[%s10 + $0x38] sm:$0xff]
    %v6799 = vld [vmem:[%s10 + $0x40] sm:$0xff]
    %v6800 = vld [vmem:[%s10 + $0x48] sm:$0xff]
    %v6801 = vld [vmem:[%s10 + $0x50] sm:$0xff]
    %v6802 = vld [vmem:[%s10 + $0x58] sm:$0xff]
    %v6803 = vld [vmem:[%s11] sm:$0x1]
    %v6805 = vperm.slane %v6803, 0
    %v6808 = vsel %vm2586, %v6743, 0
    %v6811 = vsel %vm2586, %v6744, 0
    %v6814 = vsel %vm2586, %v6745, 0
    %v6817 = vsel %vm2586, %v6746, 0
    %v6820 = vsel %vm2586, %v6747, 0
    %v6823 = vsel %vm2586, %v6748, 0
    %v6826 = vsel %vm2586, %v6749, 0
    %v6829 = vsel %vm2586, %v6750, 0
    %v6832 = vsel %vm2586, %v6751, 0
    %v6835 = vsel %vm2586, %v6752, 0
    %v6838 = vsel %vm2586, %v6753, 0
    %v6841 = vsel %vm2586, %v6754, 0
    %v6844 = vsel %vm2586, %v6755, 0
    %v6847 = vsel %vm2586, %v6756, 0
    %v6850 = vsel %vm2586, %v6757, 0
    %v6853 = vsel %vm2586, %v6758, 0
    %v6856 = vsel %vm2586, %v6759, 0
    %v6859 = vsel %vm2586, %v6760, 0
    %v6862 = vsel %vm2586, %v6761, 0
    %v6865 = vsel %vm2586, %v6762, 0
    %v6868 = vsel %vm2586, %v6763, 0
    %v6871 = vsel %vm2586, %v6764, 0
    %v6874 = vsel %vm2586, %v6765, 0
    %v6877 = vsel %vm2586, %v6766, 0
    %v6880 = vsel %vm2586, %v6767, 0
    %v6883 = vsel %vm2586, %v6768, 0
    %v6886 = vsel %vm2586, %v6769, 0
    %v6889 = vsel %vm2586, %v6770, 0
    %v6892 = vsel %vm2586, %v6771, 0
    %v6895 = vsel %vm2586, %v6772, 0
    %v6898 = vsel %vm2586, %v6773, 0
    %v6901 = vsel %vm2586, %v6774, 0
    %v6904 = vsel %vm2586, %v6775, 0
    %v6907 = vsel %vm2586, %v6776, 0
    %v6910 = vsel %vm2586, %v6777, 0
    %v6913 = vsel %vm2586, %v6778, 0
    %v6916 = vsel %vm2586, %v6779, 0
    %v6919 = vsel %vm2586, %v6780, 0
    %v6922 = vsel %vm2586, %v6781, 0
    %v6925 = vsel %vm2586, %v6782, 0
    %v6928 = vsel %vm2586, %v6783, 0
    %v6931 = vsel %vm2586, %v6784, 0
    %v6934 = vsel %vm2586, %v6785, 0
    %v6937 = vsel %vm2586, %v6786, 0
    %v6940 = vsel %vm2586, %v6787, 0
    %v6943 = vsel %vm2586, %v6788, 0
    %v6946 = vsel %vm2586, %v6789, 0
    %v6949 = vsel %vm2586, %v6790, 0
    %6951 = vmatpush.msra.mxu0 0.0
    %6952 = vmatpush.msra.mxu0 0.0
    %6953 = vmatpush.msra.mxu0 0.0
    %6954 = vmatpush.msra.mxu0 0.0
    %6955 = vmatpush.msra.mxu0 %v6802
    %6956 = vmatpush.msra.mxu0 %v6801
    %6957 = vmatpush.msra.mxu0 %v6800
    %6958 = vmatpush.msra.mxu0 %v6799
    %6959 = vmatpush.msra.mxu0 %v6798
    %6960 = vmatpush.msra.mxu0 %v6797
    %6961 = vmatpush.msra.mxu0 %v6796
    %6962 = vmatpush.msra.mxu0 %v6795
    %6963 = vmatpush.msra.mxu0 %v6794
    %6964 = vmatpush.msra.mxu0 %v6793
    %6965 = vmatpush.msra.mxu0 %v6792
    %6966 = vmatpush.msra.mxu0 %v6791
    %6967 = vmatmul.f32.gmra.mxu0 %v6808
    %v6968 = vpop.f32.mrf.mxu0
    %v6969 = vadd.f32 %v6805, %v6968
    %6970 = vmatmul.f32.gmra.mxu0 %v6811
    %v6971 = vpop.f32.mrf.mxu0
    %v6972 = vadd.f32 %v6805, %v6971
    %6973 = vmatmul.f32.gmra.mxu0 %v6814
    %v6974 = vpop.f32.mrf.mxu0
    %v6975 = vadd.f32 %v6805, %v6974
    %6976 = vmatmul.f32.gmra.mxu0 %v6817
    %v6977 = vpop.f32.mrf.mxu0
    %v6978 = vadd.f32 %v6805, %v6977
    %6979 = vmatmul.f32.gmra.mxu0 %v6820
    %v6980 = vpop.f32.mrf.mxu0
    %v6981 = vadd.f32 %v6805, %v6980
    %6982 = vmatmul.f32.gmra.mxu0 %v6823
    %v6983 = vpop.f32.mrf.mxu0
    %v6984 = vadd.f32 %v6805, %v6983
    %6985 = vmatmul.f32.gmra.mxu0 %v6826
    %v6986 = vpop.f32.mrf.mxu0
    %v6987 = vadd.f32 %v6805, %v6986
    %6988 = vmatmul.f32.gmra.mxu0 %v6829
    %v6989 = vpop.f32.mrf.mxu0
    %v6990 = vadd.f32 %v6805, %v6989
    %6991 = vmatmul.f32.gmra.mxu0 %v6832
    %v6992 = vpop.f32.mrf.mxu0
    %v6993 = vadd.f32 %v6805, %v6992
    %6994 = vmatmul.f32.gmra.mxu0 %v6835
    %v6995 = vpop.f32.mrf.mxu0
    %v6996 = vadd.f32 %v6805, %v6995
    %6997 = vmatmul.f32.gmra.mxu0 %v6838
    %v6998 = vpop.f32.mrf.mxu0
    %v6999 = vadd.f32 %v6805, %v6998
    %7000 = vmatmul.f32.gmra.mxu0 %v6841
    %v7001 = vpop.f32.mrf.mxu0
    %v7002 = vadd.f32 %v6805, %v7001
    %7003 = vmatmul.f32.gmra.mxu0 %v6844
    %v7004 = vpop.f32.mrf.mxu0
    %v7005 = vadd.f32 %v6805, %v7004
    %7006 = vmatmul.f32.gmra.mxu0 %v6847
    %v7007 = vpop.f32.mrf.mxu0
    %v7008 = vadd.f32 %v6805, %v7007
    %7009 = vmatmul.f32.gmra.mxu0 %v6850
    %v7010 = vpop.f32.mrf.mxu0
    %v7011 = vadd.f32 %v6805, %v7010
    %7012 = vmatmul.f32.gmra.mxu0 %v6853
    %v7013 = vpop.f32.mrf.mxu0
    %v7014 = vadd.f32 %v6805, %v7013
    %7015 = vmatmul.f32.gmra.mxu0 %v6856
    %v7016 = vpop.f32.mrf.mxu0
    %v7017 = vadd.f32 %v6805, %v7016
    %7018 = vmatmul.f32.gmra.mxu0 %v6859
    %v7019 = vpop.f32.mrf.mxu0
    %v7020 = vadd.f32 %v6805, %v7019
    %7021 = vmatmul.f32.gmra.mxu0 %v6862
    %v7022 = vpop.f32.mrf.mxu0
    %v7023 = vadd.f32 %v6805, %v7022
    %7024 = vmatmul.f32.gmra.mxu0 %v6865
    %v7025 = vpop.f32.mrf.mxu0
    %v7026 = vadd.f32 %v6805, %v7025
    %7027 = vmatmul.f32.gmra.mxu0 %v6868
    %v7028 = vpop.f32.mrf.mxu0
    %v7029 = vadd.f32 %v6805, %v7028
    %7030 = vmatmul.f32.gmra.mxu0 %v6871
    %v7031 = vpop.f32.mrf.mxu0
    %v7032 = vadd.f32 %v6805, %v7031
    %7033 = vmatmul.f32.gmra.mxu0 %v6874
    %v7034 = vpop.f32.mrf.mxu0
    %v7035 = vadd.f32 %v6805, %v7034
    %7036 = vmatmul.f32.gmra.mxu0 %v6877
    %v7037 = vpop.f32.mrf.mxu0
    %v7038 = vadd.f32 %v6805, %v7037
    %7039 = vmatmul.f32.gmra.mxu0 %v6880
    %v7040 = vpop.f32.mrf.mxu0
    %v7041 = vadd.f32 %v6805, %v7040
    %7042 = vmatmul.f32.gmra.mxu0 %v6883
    %v7043 = vpop.f32.mrf.mxu0
    %v7044 = vadd.f32 %v6805, %v7043
    %7045 = vmatmul.f32.gmra.mxu0 %v6886
    %v7046 = vpop.f32.mrf.mxu0
    %v7047 = vadd.f32 %v6805, %v7046
    %7048 = vmatmul.f32.gmra.mxu0 %v6889
    %v7049 = vpop.f32.mrf.mxu0
    %v7050 = vadd.f32 %v6805, %v7049
    %7051 = vmatmul.f32.gmra.mxu0 %v6892
    %v7052 = vpop.f32.mrf.mxu0
    %v7053 = vadd.f32 %v6805, %v7052
    %7054 = vmatmul.f32.gmra.mxu0 %v6895
    %v7055 = vpop.f32.mrf.mxu0
    %v7056 = vadd.f32 %v6805, %v7055
    %7057 = vmatmul.f32.gmra.mxu0 %v6898
    %v7058 = vpop.f32.mrf.mxu0
    %v7059 = vadd.f32 %v6805, %v7058
    %7060 = vmatmul.f32.gmra.mxu0 %v6901
    %v7061 = vpop.f32.mrf.mxu0
    %v7062 = vadd.f32 %v6805, %v7061
    %7063 = vmatmul.f32.gmra.mxu0 %v6904
    %v7064 = vpop.f32.mrf.mxu0
    %v7065 = vadd.f32 %v6805, %v7064
    %7066 = vmatmul.f32.gmra.mxu0 %v6907
    %v7067 = vpop.f32.mrf.mxu0
    %v7068 = vadd.f32 %v6805, %v7067
    %7069 = vmatmul.f32.gmra.mxu0 %v6910
    %v7070 = vpop.f32.mrf.mxu0
    %v7071 = vadd.f32 %v6805, %v7070
    %7072 = vmatmul.f32.gmra.mxu0 %v6913
    %v7073 = vpop.f32.mrf.mxu0
    %v7074 = vadd.f32 %v6805, %v7073
    %7075 = vmatmul.f32.gmra.mxu0 %v6916
    %v7076 = vpop.f32.mrf.mxu0
    %v7077 = vadd.f32 %v6805, %v7076
    %7078 = vmatmul.f32.gmra.mxu0 %v6919
    %v7079 = vpop.f32.mrf.mxu0
    %v7080 = vadd.f32 %v6805, %v7079
    %7081 = vmatmul.f32.gmra.mxu0 %v6922
    %v7082 = vpop.f32.mrf.mxu0
    %v7083 = vadd.f32 %v6805, %v7082
    %7084 = vmatmul.f32.gmra.mxu0 %v6925
    %v7085 = vpop.f32.mrf.mxu0
    %v7086 = vadd.f32 %v6805, %v7085
    %7087 = vmatmul.f32.gmra.mxu0 %v6928
    %v7088 = vpop.f32.mrf.mxu0
    %v7089 = vadd.f32 %v6805, %v7088
    %7090 = vmatmul.f32.gmra.mxu0 %v6931
    %v7091 = vpop.f32.mrf.mxu0
    %v7092 = vadd.f32 %v6805, %v7091
    %7093 = vmatmul.f32.gmra.mxu0 %v6934
    %v7094 = vpop.f32.mrf.mxu0
    %v7095 = vadd.f32 %v6805, %v7094
    %7096 = vmatmul.f32.gmra.mxu0 %v6937
    %v7097 = vpop.f32.mrf.mxu0
    %v7098 = vadd.f32 %v6805, %v7097
    %7099 = vmatmul.f32.gmra.mxu0 %v6940
    %v7100 = vpop.f32.mrf.mxu0
    %v7101 = vadd.f32 %v6805, %v7100
    %7102 = vmatmul.f32.gmra.mxu0 %v6943
    %v7103 = vpop.f32.mrf.mxu0
    %v7104 = vadd.f32 %v6805, %v7103
    %7105 = vmatmul.f32.gmra.mxu0 %v6946
    %v7106 = vpop.f32.mrf.mxu0
    %v7107 = vadd.f32 %v6805, %v7106
    %7108 = vmatmul.f32.gmra.mxu0 %v6949
    %v7109 = vpop.f32.mrf.mxu0
    %v7110 = vadd.f32 %v6805, %v7109
    %7111 = vdwg.mxu0
    %v7112 = vadd.f32 %v6969, %v5136
    %v7113 = vadd.f32 %v6972, %v5139
    %v7114 = vadd.f32 %v6975, %v5142
    %v7115 = vadd.f32 %v6978, %v5145
    %v7116 = vadd.f32 %v6981, %v5148
    %v7117 = vadd.f32 %v6984, %v5151
    %v7118 = vadd.f32 %v6987, %v5154
    %v7119 = vadd.f32 %v6990, %v5157
    %v7120 = vadd.f32 %v6993, %v5160
    %v7121 = vadd.f32 %v6996, %v5163
    %v7122 = vadd.f32 %v6999, %v5166
    %v7123 = vadd.f32 %v7002, %v5169
    %v7124 = vadd.f32 %v7005, %v5172
    %v7125 = vadd.f32 %v7008, %v5175
    %v7126 = vadd.f32 %v7011, %v5178
    %v7127 = vadd.f32 %v7014, %v5181
    %v7128 = vadd.f32 %v7017, %v5184
    %v7129 = vadd.f32 %v7020, %v5187
    %v7130 = vadd.f32 %v7023, %v5190
    %v7131 = vadd.f32 %v7026, %v5193
    %v7132 = vadd.f32 %v7029, %v5196
    %v7133 = vadd.f32 %v7032, %v5199
    %v7134 = vadd.f32 %v7035, %v5202
    %v7135 = vadd.f32 %v7038, %v5205
    %v7136 = vadd.f32 %v7041, %v5208
    %v7137 = vadd.f32 %v7044, %v5211
    %v7138 = vadd.f32 %v7047, %v5214
    %v7139 = vadd.f32 %v7050, %v5217
    %v7140 = vadd.f32 %v7053, %v5220
    %v7141 = vadd.f32 %v7056, %v5223
    %v7142 = vadd.f32 %v7059, %v5226
    %v7143 = vadd.f32 %v7062, %v5229
    %v7144 = vadd.f32 %v7065, %v5232
    %v7145 = vadd.f32 %v7068, %v5235
    %v7146 = vadd.f32 %v7071, %v5238
    %v7147 = vadd.f32 %v7074, %v5241
    %v7148 = vadd.f32 %v7077, %v5244
    %v7149 = vadd.f32 %v7080, %v5247
    %v7150 = vadd.f32 %v7083, %v5250
    %v7151 = vadd.f32 %v7086, %v5253
    %v7152 = vadd.f32 %v7089, %v5256
    %v7153 = vadd.f32 %v7092, %v5259
    %v7154 = vadd.f32 %v7095, %v5262
    %v7155 = vadd.f32 %v7098, %v5265
    %v7156 = vadd.f32 %v7101, %v5268
    %v7157 = vadd.f32 %v7104, %v5271
    %v7158 = vadd.f32 %v7107, %v5274
    %v7159 = vadd.f32 %v7110, %v5277
    %v7160 = vxor.u32 %v6969, 2147483648
    %v7161 = vxor.u32 %v6972, 2147483648
    %v7162 = vxor.u32 %v6975, 2147483648
    %v7163 = vxor.u32 %v6978, 2147483648
    %v7164 = vxor.u32 %v6981, 2147483648
    %v7165 = vxor.u32 %v6984, 2147483648
    %v7166 = vxor.u32 %v6987, 2147483648
    %v7167 = vxor.u32 %v6990, 2147483648
    %v7168 = vxor.u32 %v6993, 2147483648
    %v7169 = vxor.u32 %v6996, 2147483648
    %v7170 = vxor.u32 %v6999, 2147483648
    %v7171 = vxor.u32 %v7002, 2147483648
    %v7172 = vxor.u32 %v7005, 2147483648
    %v7173 = vxor.u32 %v7008, 2147483648
    %v7174 = vxor.u32 %v7011, 2147483648
    %v7175 = vxor.u32 %v7014, 2147483648
    %v7176 = vxor.u32 %v7017, 2147483648
    %v7177 = vxor.u32 %v7020, 2147483648
    %v7178 = vxor.u32 %v7023, 2147483648
    %v7179 = vxor.u32 %v7026, 2147483648
    %v7180 = vxor.u32 %v7029, 2147483648
    %v7181 = vxor.u32 %v7032, 2147483648
    %v7182 = vxor.u32 %v7035, 2147483648
    %v7183 = vxor.u32 %v7038, 2147483648
    %v7184 = vxor.u32 %v7041, 2147483648
    %v7185 = vxor.u32 %v7044, 2147483648
    %v7186 = vxor.u32 %v7047, 2147483648
    %v7187 = vxor.u32 %v7050, 2147483648
    %v7188 = vxor.u32 %v7053, 2147483648
    %v7189 = vxor.u32 %v7056, 2147483648
    %v7190 = vxor.u32 %v7059, 2147483648
    %v7191 = vxor.u32 %v7062, 2147483648
    %v7192 = vxor.u32 %v7065, 2147483648
    %v7193 = vxor.u32 %v7068, 2147483648
    %v7194 = vxor.u32 %v7071, 2147483648
    %v7195 = vxor.u32 %v7074, 2147483648
    %v7196 = vxor.u32 %v7077, 2147483648
    %v7197 = vxor.u32 %v7080, 2147483648
    %v7198 = vxor.u32 %v7083, 2147483648
    %v7199 = vxor.u32 %v7086, 2147483648
    %v7200 = vxor.u32 %v7089, 2147483648
    %v7201 = vxor.u32 %v7092, 2147483648
    %v7202 = vxor.u32 %v7095, 2147483648
    %v7203 = vxor.u32 %v7098, 2147483648
    %v7204 = vxor.u32 %v7101, 2147483648
    %v7205 = vxor.u32 %v7104, 2147483648
    %v7206 = vxor.u32 %v7107, 2147483648
    %v7207 = vxor.u32 %v7110, 2147483648
    %v7208 = vmul.f32 %v7160, 1.442695
    %v7209 = vpow.pop %v7208
    %v7210 = vmul.f32 %v7161, 1.442695
    %v7211 = vpow.pop %v7210
    %v7212 = vmul.f32 %v7162, 1.442695
    %v7213 = vpow.pop %v7212
    %v7214 = vmul.f32 %v7163, 1.442695
    %v7215 = vpow.pop %v7214
    %v7216 = vmul.f32 %v7164, 1.442695
    %v7217 = vpow.pop %v7216
    %v7218 = vmul.f32 %v7165, 1.442695
    %v7219 = vpow.pop %v7218
    %v7220 = vmul.f32 %v7166, 1.442695
    %v7221 = vpow.pop %v7220
    %v7222 = vmul.f32 %v7167, 1.442695
    %v7223 = vpow.pop %v7222
    %v7224 = vmul.f32 %v7168, 1.442695
    %v7225 = vpow.pop %v7224
    %v7226 = vmul.f32 %v7169, 1.442695
    %v7227 = vpow.pop %v7226
    %v7228 = vmul.f32 %v7170, 1.442695
    %v7229 = vpow.pop %v7228
    %v7230 = vmul.f32 %v7171, 1.442695
    %v7231 = vpow.pop %v7230
    %v7232 = vmul.f32 %v7172, 1.442695
    %v7233 = vpow.pop %v7232
    %v7234 = vmul.f32 %v7173, 1.442695
    %v7235 = vpow.pop %v7234
    %v7236 = vmul.f32 %v7174, 1.442695
    %v7237 = vpow.pop %v7236
    %v7238 = vmul.f32 %v7175, 1.442695
    %v7239 = vpow.pop %v7238
    %v7240 = vmul.f32 %v7176, 1.442695
    %v7241 = vpow.pop %v7240
    %v7242 = vmul.f32 %v7177, 1.442695
    %v7243 = vpow.pop %v7242
    %v7244 = vmul.f32 %v7178, 1.442695
    %v7245 = vpow.pop %v7244
    %v7246 = vmul.f32 %v7179, 1.442695
    %v7247 = vpow.pop %v7246
    %v7248 = vmul.f32 %v7180, 1.442695
    %v7249 = vpow.pop %v7248
    %v7250 = vmul.f32 %v7181, 1.442695
    %v7251 = vpow.pop %v7250
    %v7252 = vmul.f32 %v7182, 1.442695
    %v7253 = vpow.pop %v7252
    %v7254 = vmul.f32 %v7183, 1.442695
    %v7255 = vpow.pop %v7254
    %v7256 = vmul.f32 %v7184, 1.442695
    %v7257 = vpow.pop %v7256
    %v7258 = vmul.f32 %v7185, 1.442695
    %v7259 = vpow.pop %v7258
    %v7260 = vmul.f32 %v7186, 1.442695
    %v7261 = vpow.pop %v7260
    %v7262 = vmul.f32 %v7187, 1.442695
    %v7263 = vpow.pop %v7262
    %v7264 = vmul.f32 %v7188, 1.442695
    %v7265 = vpow.pop %v7264
    %v7266 = vmul.f32 %v7189, 1.442695
    %v7267 = vpow.pop %v7266
    %v7268 = vmul.f32 %v7190, 1.442695
    %v7269 = vpow.pop %v7268
    %v7270 = vmul.f32 %v7191, 1.442695
    %v7271 = vpow.pop %v7270
    %v7272 = vmul.f32 %v7192, 1.442695
    %v7273 = vpow.pop %v7272
    %v7274 = vmul.f32 %v7193, 1.442695
    %v7275 = vpow.pop %v7274
    %v7276 = vmul.f32 %v7194, 1.442695
    %v7277 = vpow.pop %v7276
    %v7278 = vmul.f32 %v7195, 1.442695
    %v7279 = vpow.pop %v7278
    %v7280 = vmul.f32 %v7196, 1.442695
    %v7281 = vpow.pop %v7280
    %v7282 = vmul.f32 %v7197, 1.442695
    %v7283 = vpow.pop %v7282
    %v7284 = vmul.f32 %v7198, 1.442695
    %v7285 = vpow.pop %v7284
    %v7286 = vmul.f32 %v7199, 1.442695
    %v7287 = vpow.pop %v7286
    %v7288 = vmul.f32 %v7200, 1.442695
    %v7289 = vpow.pop %v7288
    %v7290 = vmul.f32 %v7201, 1.442695
    %v7291 = vpow.pop %v7290
    %v7292 = vmul.f32 %v7202, 1.442695
    %v7293 = vpow.pop %v7292
    %v7294 = vmul.f32 %v7203, 1.442695
    %v7295 = vpow.pop %v7294
    %v7296 = vmul.f32 %v7204, 1.442695
    %v7297 = vpow.pop %v7296
    %v7298 = vmul.f32 %v7205, 1.442695
    %v7299 = vpow.pop %v7298
    %v7300 = vmul.f32 %v7206, 1.442695
    %v7301 = vpow.pop %v7300
    %v7302 = vmul.f32 %v7207, 1.442695
    %v7303 = vpow.pop %v7302
    %v7304 = vadd.f32 %v7209, 1.0
    %v7305 = vadd.f32 %v7211, 1.0
    %v7306 = vadd.f32 %v7213, 1.0
    %v7307 = vadd.f32 %v7215, 1.0
    %v7308 = vadd.f32 %v7217, 1.0
    %v7309 = vadd.f32 %v7219, 1.0
    %v7310 = vadd.f32 %v7221, 1.0
    %v7311 = vadd.f32 %v7223, 1.0
    %v7312 = vadd.f32 %v7225, 1.0
    %v7313 = vadd.f32 %v7227, 1.0
    %v7314 = vadd.f32 %v7229, 1.0
    %v7315 = vadd.f32 %v7231, 1.0
    %v7316 = vadd.f32 %v7233, 1.0
    %v7317 = vadd.f32 %v7235, 1.0
    %v7318 = vadd.f32 %v7237, 1.0
    %v7319 = vadd.f32 %v7239, 1.0
    %v7320 = vadd.f32 %v7241, 1.0
    %v7321 = vadd.f32 %v7243, 1.0
    %v7322 = vadd.f32 %v7245, 1.0
    %v7323 = vadd.f32 %v7247, 1.0
    %v7324 = vadd.f32 %v7249, 1.0
    %v7325 = vadd.f32 %v7251, 1.0
    %v7326 = vadd.f32 %v7253, 1.0
    %v7327 = vadd.f32 %v7255, 1.0
    %v7328 = vadd.f32 %v7257, 1.0
    %v7329 = vadd.f32 %v7259, 1.0
    %v7330 = vadd.f32 %v7261, 1.0
    %v7331 = vadd.f32 %v7263, 1.0
    %v7332 = vadd.f32 %v7265, 1.0
    %v7333 = vadd.f32 %v7267, 1.0
    %v7334 = vadd.f32 %v7269, 1.0
    %v7335 = vadd.f32 %v7271, 1.0
    %v7336 = vadd.f32 %v7273, 1.0
    %v7337 = vadd.f32 %v7275, 1.0
    %v7338 = vadd.f32 %v7277, 1.0
    %v7339 = vadd.f32 %v7279, 1.0
    %v7340 = vadd.f32 %v7281, 1.0
    %v7341 = vadd.f32 %v7283, 1.0
    %v7342 = vadd.f32 %v7285, 1.0
    %v7343 = vadd.f32 %v7287, 1.0
    %v7344 = vadd.f32 %v7289, 1.0
    %v7345 = vadd.f32 %v7291, 1.0
    %v7346 = vadd.f32 %v7293, 1.0
    %v7347 = vadd.f32 %v7295, 1.0
    %v7348 = vadd.f32 %v7297, 1.0
    %v7349 = vadd.f32 %v7299, 1.0
    %v7350 = vadd.f32 %v7301, 1.0
    %v7351 = vadd.f32 %v7303, 1.0
    %v7352 = vrcp.pop %v7304
    %v7353 = vmul.f32 %v7304, %v7352
    %v7354 = vsub.f32 1.0, %v7353
    %v7355 = vmul.f32 %v7352, %v7354
    %v7356 = vadd.f32 %v7352, %v7355
    %vm7357 = vweird.f32 %v7304
    %vm7358 = vweird.f32 %v7352
    %vm7359 = vmor %vm7357, %vm7358
    %v7360 = vsel %vm7359, %v7352, %v7356
    %v7361 = vand.u32 2147483647, %v7304
    %vm7362 = vcmp.eq.f32.partialorder %v7361, 8.507059e+37
    %v7363 = vand.u32 %v7304, 2147483648
    %v7364 = vor.u32 1.1754944e-38, %v7363
    %v7365 = vsel %vm7362, %v7364, %v7360
    %v7366 = vmul.f32 1.0, %v7365
    %v7367 = vrcp.pop %v7305
    %v7368 = vmul.f32 %v7305, %v7367
    %v7369 = vsub.f32 1.0, %v7368
    %v7370 = vmul.f32 %v7367, %v7369
    %v7371 = vadd.f32 %v7367, %v7370
    %vm7372 = vweird.f32 %v7305
    %vm7373 = vweird.f32 %v7367
    %vm7374 = vmor %vm7372, %vm7373
    %v7375 = vsel %vm7374, %v7367, %v7371
    %v7376 = vand.u32 2147483647, %v7305
    %vm7377 = vcmp.eq.f32.partialorder %v7376, 8.507059e+37
    %v7378 = vand.u32 %v7305, 2147483648
    %v7379 = vor.u32 1.1754944e-38, %v7378
    %v7380 = vsel %vm7377, %v7379, %v7375
    %v7381 = vmul.f32 1.0, %v7380
    %v7382 = vrcp.pop %v7306
    %v7383 = vmul.f32 %v7306, %v7382
    %v7384 = vsub.f32 1.0, %v7383
    %v7385 = vmul.f32 %v7382, %v7384
    %v7386 = vadd.f32 %v7382, %v7385
    %vm7387 = vweird.f32 %v7306
    %vm7388 = vweird.f32 %v7382
    %vm7389 = vmor %vm7387, %vm7388
    %v7390 = vsel %vm7389, %v7382, %v7386
    %v7391 = vand.u32 2147483647, %v7306
    %vm7392 = vcmp.eq.f32.partialorder %v7391, 8.507059e+37
    %v7393 = vand.u32 %v7306, 2147483648
    %v7394 = vor.u32 1.1754944e-38, %v7393
    %v7395 = vsel %vm7392, %v7394, %v7390
    %v7396 = vmul.f32 1.0, %v7395
    %v7397 = vrcp.pop %v7307
    %v7398 = vmul.f32 %v7307, %v7397
    %v7399 = vsub.f32 1.0, %v7398
    %v7400 = vmul.f32 %v7397, %v7399
    %v7401 = vadd.f32 %v7397, %v7400
    %vm7402 = vweird.f32 %v7307
    %vm7403 = vweird.f32 %v7397
    %vm7404 = vmor %vm7402, %vm7403
    %v7405 = vsel %vm7404, %v7397, %v7401
    %v7406 = vand.u32 2147483647, %v7307
    %vm7407 = vcmp.eq.f32.partialorder %v7406, 8.507059e+37
    %v7408 = vand.u32 %v7307, 2147483648
    %v7409 = vor.u32 1.1754944e-38, %v7408
    %v7410 = vsel %vm7407, %v7409, %v7405
    %v7411 = vmul.f32 1.0, %v7410
    %v7412 = vrcp.pop %v7308
    %v7413 = vmul.f32 %v7308, %v7412
    %v7414 = vsub.f32 1.0, %v7413
    %v7415 = vmul.f32 %v7412, %v7414
    %v7416 = vadd.f32 %v7412, %v7415
    %vm7417 = vweird.f32 %v7308
    %vm7418 = vweird.f32 %v7412
    %vm7419 = vmor %vm7417, %vm7418
    %v7420 = vsel %vm7419, %v7412, %v7416
    %v7421 = vand.u32 2147483647, %v7308
    %vm7422 = vcmp.eq.f32.partialorder %v7421, 8.507059e+37
    %v7423 = vand.u32 %v7308, 2147483648
    %v7424 = vor.u32 1.1754944e-38, %v7423
    %v7425 = vsel %vm7422, %v7424, %v7420
    %v7426 = vmul.f32 1.0, %v7425
    %v7427 = vrcp.pop %v7309
    %v7428 = vmul.f32 %v7309, %v7427
    %v7429 = vsub.f32 1.0, %v7428
    %v7430 = vmul.f32 %v7427, %v7429
    %v7431 = vadd.f32 %v7427, %v7430
    %vm7432 = vweird.f32 %v7309
    %vm7433 = vweird.f32 %v7427
    %vm7434 = vmor %vm7432, %vm7433
    %v7435 = vsel %vm7434, %v7427, %v7431
    %v7436 = vand.u32 2147483647, %v7309
    %vm7437 = vcmp.eq.f32.partialorder %v7436, 8.507059e+37
    %v7438 = vand.u32 %v7309, 2147483648
    %v7439 = vor.u32 1.1754944e-38, %v7438
    %v7440 = vsel %vm7437, %v7439, %v7435
    %v7441 = vmul.f32 1.0, %v7440
    %v7442 = vrcp.pop %v7310
    %v7443 = vmul.f32 %v7310, %v7442
    %v7444 = vsub.f32 1.0, %v7443
    %v7445 = vmul.f32 %v7442, %v7444
    %v7446 = vadd.f32 %v7442, %v7445
    %vm7447 = vweird.f32 %v7310
    %vm7448 = vweird.f32 %v7442
    %vm7449 = vmor %vm7447, %vm7448
    %v7450 = vsel %vm7449, %v7442, %v7446
    %v7451 = vand.u32 2147483647, %v7310
    %vm7452 = vcmp.eq.f32.partialorder %v7451, 8.507059e+37
    %v7453 = vand.u32 %v7310, 2147483648
    %v7454 = vor.u32 1.1754944e-38, %v7453
    %v7455 = vsel %vm7452, %v7454, %v7450
    %v7456 = vmul.f32 1.0, %v7455
    %v7457 = vrcp.pop %v7311
    %v7458 = vmul.f32 %v7311, %v7457
    %v7459 = vsub.f32 1.0, %v7458
    %v7460 = vmul.f32 %v7457, %v7459
    %v7461 = vadd.f32 %v7457, %v7460
    %vm7462 = vweird.f32 %v7311
    %vm7463 = vweird.f32 %v7457
    %vm7464 = vmor %vm7462, %vm7463
    %v7465 = vsel %vm7464, %v7457, %v7461
    %v7466 = vand.u32 2147483647, %v7311
    %vm7467 = vcmp.eq.f32.partialorder %v7466, 8.507059e+37
    %v7468 = vand.u32 %v7311, 2147483648
    %v7469 = vor.u32 1.1754944e-38, %v7468
    %v7470 = vsel %vm7467, %v7469, %v7465
    %v7471 = vmul.f32 1.0, %v7470
    %v7472 = vrcp.pop %v7312
    %v7473 = vmul.f32 %v7312, %v7472
    %v7474 = vsub.f32 1.0, %v7473
    %v7475 = vmul.f32 %v7472, %v7474
    %v7476 = vadd.f32 %v7472, %v7475
    %vm7477 = vweird.f32 %v7312
    %vm7478 = vweird.f32 %v7472
    %vm7479 = vmor %vm7477, %vm7478
    %v7480 = vsel %vm7479, %v7472, %v7476
    %v7481 = vand.u32 2147483647, %v7312
    %vm7482 = vcmp.eq.f32.partialorder %v7481, 8.507059e+37
    %v7483 = vand.u32 %v7312, 2147483648
    %v7484 = vor.u32 1.1754944e-38, %v7483
    %v7485 = vsel %vm7482, %v7484, %v7480
    %v7486 = vmul.f32 1.0, %v7485
    %v7487 = vrcp.pop %v7313
    %v7488 = vmul.f32 %v7313, %v7487
    %v7489 = vsub.f32 1.0, %v7488
    %v7490 = vmul.f32 %v7487, %v7489
    %v7491 = vadd.f32 %v7487, %v7490
    %vm7492 = vweird.f32 %v7313
    %vm7493 = vweird.f32 %v7487
    %vm7494 = vmor %vm7492, %vm7493
    %v7495 = vsel %vm7494, %v7487, %v7491
    %v7496 = vand.u32 2147483647, %v7313
    %vm7497 = vcmp.eq.f32.partialorder %v7496, 8.507059e+37
    %v7498 = vand.u32 %v7313, 2147483648
    %v7499 = vor.u32 1.1754944e-38, %v7498
    %v7500 = vsel %vm7497, %v7499, %v7495
    %v7501 = vmul.f32 1.0, %v7500
    %v7502 = vrcp.pop %v7314
    %v7503 = vmul.f32 %v7314, %v7502
    %v7504 = vsub.f32 1.0, %v7503
    %v7505 = vmul.f32 %v7502, %v7504
    %v7506 = vadd.f32 %v7502, %v7505
    %vm7507 = vweird.f32 %v7314
    %vm7508 = vweird.f32 %v7502
    %vm7509 = vmor %vm7507, %vm7508
    %v7510 = vsel %vm7509, %v7502, %v7506
    %v7511 = vand.u32 2147483647, %v7314
    %vm7512 = vcmp.eq.f32.partialorder %v7511, 8.507059e+37
    %v7513 = vand.u32 %v7314, 2147483648
    %v7514 = vor.u32 1.1754944e-38, %v7513
    %v7515 = vsel %vm7512, %v7514, %v7510
    %v7516 = vmul.f32 1.0, %v7515
    %v7517 = vrcp.pop %v7315
    %v7518 = vmul.f32 %v7315, %v7517
    %v7519 = vsub.f32 1.0, %v7518
    %v7520 = vmul.f32 %v7517, %v7519
    %v7521 = vadd.f32 %v7517, %v7520
    %vm7522 = vweird.f32 %v7315
    %vm7523 = vweird.f32 %v7517
    %vm7524 = vmor %vm7522, %vm7523
    %v7525 = vsel %vm7524, %v7517, %v7521
    %v7526 = vand.u32 2147483647, %v7315
    %vm7527 = vcmp.eq.f32.partialorder %v7526, 8.507059e+37
    %v7528 = vand.u32 %v7315, 2147483648
    %v7529 = vor.u32 1.1754944e-38, %v7528
    %v7530 = vsel %vm7527, %v7529, %v7525
    %v7531 = vmul.f32 1.0, %v7530
    %v7532 = vrcp.pop %v7316
    %v7533 = vmul.f32 %v7316, %v7532
    %v7534 = vsub.f32 1.0, %v7533
    %v7535 = vmul.f32 %v7532, %v7534
    %v7536 = vadd.f32 %v7532, %v7535
    %vm7537 = vweird.f32 %v7316
    %vm7538 = vweird.f32 %v7532
    %vm7539 = vmor %vm7537, %vm7538
    %v7540 = vsel %vm7539, %v7532, %v7536
    %v7541 = vand.u32 2147483647, %v7316
    %vm7542 = vcmp.eq.f32.partialorder %v7541, 8.507059e+37
    %v7543 = vand.u32 %v7316, 2147483648
    %v7544 = vor.u32 1.1754944e-38, %v7543
    %v7545 = vsel %vm7542, %v7544, %v7540
    %v7546 = vmul.f32 1.0, %v7545
    %v7547 = vrcp.pop %v7317
    %v7548 = vmul.f32 %v7317, %v7547
    %v7549 = vsub.f32 1.0, %v7548
    %v7550 = vmul.f32 %v7547, %v7549
    %v7551 = vadd.f32 %v7547, %v7550
    %vm7552 = vweird.f32 %v7317
    %vm7553 = vweird.f32 %v7547
    %vm7554 = vmor %vm7552, %vm7553
    %v7555 = vsel %vm7554, %v7547, %v7551
    %v7556 = vand.u32 2147483647, %v7317
    %vm7557 = vcmp.eq.f32.partialorder %v7556, 8.507059e+37
    %v7558 = vand.u32 %v7317, 2147483648
    %v7559 = vor.u32 1.1754944e-38, %v7558
    %v7560 = vsel %vm7557, %v7559, %v7555
    %v7561 = vmul.f32 1.0, %v7560
    %v7562 = vrcp.pop %v7318
    %v7563 = vmul.f32 %v7318, %v7562
    %v7564 = vsub.f32 1.0, %v7563
    %v7565 = vmul.f32 %v7562, %v7564
    %v7566 = vadd.f32 %v7562, %v7565
    %vm7567 = vweird.f32 %v7318
    %vm7568 = vweird.f32 %v7562
    %vm7569 = vmor %vm7567, %vm7568
    %v7570 = vsel %vm7569, %v7562, %v7566
    %v7571 = vand.u32 2147483647, %v7318
    %vm7572 = vcmp.eq.f32.partialorder %v7571, 8.507059e+37
    %v7573 = vand.u32 %v7318, 2147483648
    %v7574 = vor.u32 1.1754944e-38, %v7573
    %v7575 = vsel %vm7572, %v7574, %v7570
    %v7576 = vmul.f32 1.0, %v7575
    %v7577 = vrcp.pop %v7319
    %v7578 = vmul.f32 %v7319, %v7577
    %v7579 = vsub.f32 1.0, %v7578
    %v7580 = vmul.f32 %v7577, %v7579
    %v7581 = vadd.f32 %v7577, %v7580
    %vm7582 = vweird.f32 %v7319
    %vm7583 = vweird.f32 %v7577
    %vm7584 = vmor %vm7582, %vm7583
    %v7585 = vsel %vm7584, %v7577, %v7581
    %v7586 = vand.u32 2147483647, %v7319
    %vm7587 = vcmp.eq.f32.partialorder %v7586, 8.507059e+37
    %v7588 = vand.u32 %v7319, 2147483648
    %v7589 = vor.u32 1.1754944e-38, %v7588
    %v7590 = vsel %vm7587, %v7589, %v7585
    %v7591 = vmul.f32 1.0, %v7590
    %v7592 = vrcp.pop %v7320
    %v7593 = vmul.f32 %v7320, %v7592
    %v7594 = vsub.f32 1.0, %v7593
    %v7595 = vmul.f32 %v7592, %v7594
    %v7596 = vadd.f32 %v7592, %v7595
    %vm7597 = vweird.f32 %v7320
    %vm7598 = vweird.f32 %v7592
    %vm7599 = vmor %vm7597, %vm7598
    %v7600 = vsel %vm7599, %v7592, %v7596
    %v7601 = vand.u32 2147483647, %v7320
    %vm7602 = vcmp.eq.f32.partialorder %v7601, 8.507059e+37
    %v7603 = vand.u32 %v7320, 2147483648
    %v7604 = vor.u32 1.1754944e-38, %v7603
    %v7605 = vsel %vm7602, %v7604, %v7600
    %v7606 = vmul.f32 1.0, %v7605
    %v7607 = vrcp.pop %v7321
    %v7608 = vmul.f32 %v7321, %v7607
    %v7609 = vsub.f32 1.0, %v7608
    %v7610 = vmul.f32 %v7607, %v7609
    %v7611 = vadd.f32 %v7607, %v7610
    %vm7612 = vweird.f32 %v7321
    %vm7613 = vweird.f32 %v7607
    %vm7614 = vmor %vm7612, %vm7613
    %v7615 = vsel %vm7614, %v7607, %v7611
    %v7616 = vand.u32 2147483647, %v7321
    %vm7617 = vcmp.eq.f32.partialorder %v7616, 8.507059e+37
    %v7618 = vand.u32 %v7321, 2147483648
    %v7619 = vor.u32 1.1754944e-38, %v7618
    %v7620 = vsel %vm7617, %v7619, %v7615
    %v7621 = vmul.f32 1.0, %v7620
    %v7622 = vrcp.pop %v7322
    %v7623 = vmul.f32 %v7322, %v7622
    %v7624 = vsub.f32 1.0, %v7623
    %v7625 = vmul.f32 %v7622, %v7624
    %v7626 = vadd.f32 %v7622, %v7625
    %vm7627 = vweird.f32 %v7322
    %vm7628 = vweird.f32 %v7622
    %vm7629 = vmor %vm7627, %vm7628
    %v7630 = vsel %vm7629, %v7622, %v7626
    %v7631 = vand.u32 2147483647, %v7322
    %vm7632 = vcmp.eq.f32.partialorder %v7631, 8.507059e+37
    %v7633 = vand.u32 %v7322, 2147483648
    %v7634 = vor.u32 1.1754944e-38, %v7633
    %v7635 = vsel %vm7632, %v7634, %v7630
    %v7636 = vmul.f32 1.0, %v7635
    %v7637 = vrcp.pop %v7323
    %v7638 = vmul.f32 %v7323, %v7637
    %v7639 = vsub.f32 1.0, %v7638
    %v7640 = vmul.f32 %v7637, %v7639
    %v7641 = vadd.f32 %v7637, %v7640
    %vm7642 = vweird.f32 %v7323
    %vm7643 = vweird.f32 %v7637
    %vm7644 = vmor %vm7642, %vm7643
    %v7645 = vsel %vm7644, %v7637, %v7641
    %v7646 = vand.u32 2147483647, %v7323
    %vm7647 = vcmp.eq.f32.partialorder %v7646, 8.507059e+37
    %v7648 = vand.u32 %v7323, 2147483648
    %v7649 = vor.u32 1.1754944e-38, %v7648
    %v7650 = vsel %vm7647, %v7649, %v7645
    %v7651 = vmul.f32 1.0, %v7650
    %v7652 = vrcp.pop %v7324
    %v7653 = vmul.f32 %v7324, %v7652
    %v7654 = vsub.f32 1.0, %v7653
    %v7655 = vmul.f32 %v7652, %v7654
    %v7656 = vadd.f32 %v7652, %v7655
    %vm7657 = vweird.f32 %v7324
    %vm7658 = vweird.f32 %v7652
    %vm7659 = vmor %vm7657, %vm7658
    %v7660 = vsel %vm7659, %v7652, %v7656
    %v7661 = vand.u32 2147483647, %v7324
    %vm7662 = vcmp.eq.f32.partialorder %v7661, 8.507059e+37
    %v7663 = vand.u32 %v7324, 2147483648
    %v7664 = vor.u32 1.1754944e-38, %v7663
    %v7665 = vsel %vm7662, %v7664, %v7660
    %v7666 = vmul.f32 1.0, %v7665
    %v7667 = vrcp.pop %v7325
    %v7668 = vmul.f32 %v7325, %v7667
    %v7669 = vsub.f32 1.0, %v7668
    %v7670 = vmul.f32 %v7667, %v7669
    %v7671 = vadd.f32 %v7667, %v7670
    %vm7672 = vweird.f32 %v7325
    %vm7673 = vweird.f32 %v7667
    %vm7674 = vmor %vm7672, %vm7673
    %v7675 = vsel %vm7674, %v7667, %v7671
    %v7676 = vand.u32 2147483647, %v7325
    %vm7677 = vcmp.eq.f32.partialorder %v7676, 8.507059e+37
    %v7678 = vand.u32 %v7325, 2147483648
    %v7679 = vor.u32 1.1754944e-38, %v7678
    %v7680 = vsel %vm7677, %v7679, %v7675
    %v7681 = vmul.f32 1.0, %v7680
    %v7682 = vrcp.pop %v7326
    %v7683 = vmul.f32 %v7326, %v7682
    %v7684 = vsub.f32 1.0, %v7683
    %v7685 = vmul.f32 %v7682, %v7684
    %v7686 = vadd.f32 %v7682, %v7685
    %vm7687 = vweird.f32 %v7326
    %vm7688 = vweird.f32 %v7682
    %vm7689 = vmor %vm7687, %vm7688
    %v7690 = vsel %vm7689, %v7682, %v7686
    %v7691 = vand.u32 2147483647, %v7326
    %vm7692 = vcmp.eq.f32.partialorder %v7691, 8.507059e+37
    %v7693 = vand.u32 %v7326, 2147483648
    %v7694 = vor.u32 1.1754944e-38, %v7693
    %v7695 = vsel %vm7692, %v7694, %v7690
    %v7696 = vmul.f32 1.0, %v7695
    %v7697 = vrcp.pop %v7327
    %v7698 = vmul.f32 %v7327, %v7697
    %v7699 = vsub.f32 1.0, %v7698
    %v7700 = vmul.f32 %v7697, %v7699
    %v7701 = vadd.f32 %v7697, %v7700
    %vm7702 = vweird.f32 %v7327
    %vm7703 = vweird.f32 %v7697
    %vm7704 = vmor %vm7702, %vm7703
    %v7705 = vsel %vm7704, %v7697, %v7701
    %v7706 = vand.u32 2147483647, %v7327
    %vm7707 = vcmp.eq.f32.partialorder %v7706, 8.507059e+37
    %v7708 = vand.u32 %v7327, 2147483648
    %v7709 = vor.u32 1.1754944e-38, %v7708
    %v7710 = vsel %vm7707, %v7709, %v7705
    %v7711 = vmul.f32 1.0, %v7710
    %v7712 = vrcp.pop %v7328
    %v7713 = vmul.f32 %v7328, %v7712
    %v7714 = vsub.f32 1.0, %v7713
    %v7715 = vmul.f32 %v7712, %v7714
    %v7716 = vadd.f32 %v7712, %v7715
    %vm7717 = vweird.f32 %v7328
    %vm7718 = vweird.f32 %v7712
    %vm7719 = vmor %vm7717, %vm7718
    %v7720 = vsel %vm7719, %v7712, %v7716
    %v7721 = vand.u32 2147483647, %v7328
    %vm7722 = vcmp.eq.f32.partialorder %v7721, 8.507059e+37
    %v7723 = vand.u32 %v7328, 2147483648
    %v7724 = vor.u32 1.1754944e-38, %v7723
    %v7725 = vsel %vm7722, %v7724, %v7720
    %v7726 = vmul.f32 1.0, %v7725
    %v7727 = vrcp.pop %v7329
    %v7728 = vmul.f32 %v7329, %v7727
    %v7729 = vsub.f32 1.0, %v7728
    %v7730 = vmul.f32 %v7727, %v7729
    %v7731 = vadd.f32 %v7727, %v7730
    %vm7732 = vweird.f32 %v7329
    %vm7733 = vweird.f32 %v7727
    %vm7734 = vmor %vm7732, %vm7733
    %v7735 = vsel %vm7734, %v7727, %v7731
    %v7736 = vand.u32 2147483647, %v7329
    %vm7737 = vcmp.eq.f32.partialorder %v7736, 8.507059e+37
    %v7738 = vand.u32 %v7329, 2147483648
    %v7739 = vor.u32 1.1754944e-38, %v7738
    %v7740 = vsel %vm7737, %v7739, %v7735
    %v7741 = vmul.f32 1.0, %v7740
    %v7742 = vrcp.pop %v7330
    %v7743 = vmul.f32 %v7330, %v7742
    %v7744 = vsub.f32 1.0, %v7743
    %v7745 = vmul.f32 %v7742, %v7744
    %v7746 = vadd.f32 %v7742, %v7745
    %vm7747 = vweird.f32 %v7330
    %vm7748 = vweird.f32 %v7742
    %vm7749 = vmor %vm7747, %vm7748
    %v7750 = vsel %vm7749, %v7742, %v7746
    %v7751 = vand.u32 2147483647, %v7330
    %vm7752 = vcmp.eq.f32.partialorder %v7751, 8.507059e+37
    %v7753 = vand.u32 %v7330, 2147483648
    %v7754 = vor.u32 1.1754944e-38, %v7753
    %v7755 = vsel %vm7752, %v7754, %v7750
    %v7756 = vmul.f32 1.0, %v7755
    %v7757 = vrcp.pop %v7331
    %v7758 = vmul.f32 %v7331, %v7757
    %v7759 = vsub.f32 1.0, %v7758
    %v7760 = vmul.f32 %v7757, %v7759
    %v7761 = vadd.f32 %v7757, %v7760
    %vm7762 = vweird.f32 %v7331
    %vm7763 = vweird.f32 %v7757
    %vm7764 = vmor %vm7762, %vm7763
    %v7765 = vsel %vm7764, %v7757, %v7761
    %v7766 = vand.u32 2147483647, %v7331
    %vm7767 = vcmp.eq.f32.partialorder %v7766, 8.507059e+37
    %v7768 = vand.u32 %v7331, 2147483648
    %v7769 = vor.u32 1.1754944e-38, %v7768
    %v7770 = vsel %vm7767, %v7769, %v7765
    %v7771 = vmul.f32 1.0, %v7770
    %v7772 = vrcp.pop %v7332
    %v7773 = vmul.f32 %v7332, %v7772
    %v7774 = vsub.f32 1.0, %v7773
    %v7775 = vmul.f32 %v7772, %v7774
    %v7776 = vadd.f32 %v7772, %v7775
    %vm7777 = vweird.f32 %v7332
    %vm7778 = vweird.f32 %v7772
    %vm7779 = vmor %vm7777, %vm7778
    %v7780 = vsel %vm7779, %v7772, %v7776
    %v7781 = vand.u32 2147483647, %v7332
    %vm7782 = vcmp.eq.f32.partialorder %v7781, 8.507059e+37
    %v7783 = vand.u32 %v7332, 2147483648
    %v7784 = vor.u32 1.1754944e-38, %v7783
    %v7785 = vsel %vm7782, %v7784, %v7780
    %v7786 = vmul.f32 1.0, %v7785
    %v7787 = vrcp.pop %v7333
    %v7788 = vmul.f32 %v7333, %v7787
    %v7789 = vsub.f32 1.0, %v7788
    %v7790 = vmul.f32 %v7787, %v7789
    %v7791 = vadd.f32 %v7787, %v7790
    %vm7792 = vweird.f32 %v7333
    %vm7793 = vweird.f32 %v7787
    %vm7794 = vmor %vm7792, %vm7793
    %v7795 = vsel %vm7794, %v7787, %v7791
    %v7796 = vand.u32 2147483647, %v7333
    %vm7797 = vcmp.eq.f32.partialorder %v7796, 8.507059e+37
    %v7798 = vand.u32 %v7333, 2147483648
    %v7799 = vor.u32 1.1754944e-38, %v7798
    %v7800 = vsel %vm7797, %v7799, %v7795
    %v7801 = vmul.f32 1.0, %v7800
    %v7802 = vrcp.pop %v7334
    %v7803 = vmul.f32 %v7334, %v7802
    %v7804 = vsub.f32 1.0, %v7803
    %v7805 = vmul.f32 %v7802, %v7804
    %v7806 = vadd.f32 %v7802, %v7805
    %vm7807 = vweird.f32 %v7334
    %vm7808 = vweird.f32 %v7802
    %vm7809 = vmor %vm7807, %vm7808
    %v7810 = vsel %vm7809, %v7802, %v7806
    %v7811 = vand.u32 2147483647, %v7334
    %vm7812 = vcmp.eq.f32.partialorder %v7811, 8.507059e+37
    %v7813 = vand.u32 %v7334, 2147483648
    %v7814 = vor.u32 1.1754944e-38, %v7813
    %v7815 = vsel %vm7812, %v7814, %v7810
    %v7816 = vmul.f32 1.0, %v7815
    %v7817 = vrcp.pop %v7335
    %v7818 = vmul.f32 %v7335, %v7817
    %v7819 = vsub.f32 1.0, %v7818
    %v7820 = vmul.f32 %v7817, %v7819
    %v7821 = vadd.f32 %v7817, %v7820
    %vm7822 = vweird.f32 %v7335
    %vm7823 = vweird.f32 %v7817
    %vm7824 = vmor %vm7822, %vm7823
    %v7825 = vsel %vm7824, %v7817, %v7821
    %v7826 = vand.u32 2147483647, %v7335
    %vm7827 = vcmp.eq.f32.partialorder %v7826, 8.507059e+37
    %v7828 = vand.u32 %v7335, 2147483648
    %v7829 = vor.u32 1.1754944e-38, %v7828
    %v7830 = vsel %vm7827, %v7829, %v7825
    %v7831 = vmul.f32 1.0, %v7830
    %v7832 = vrcp.pop %v7336
    %v7833 = vmul.f32 %v7336, %v7832
    %v7834 = vsub.f32 1.0, %v7833
    %v7835 = vmul.f32 %v7832, %v7834
    %v7836 = vadd.f32 %v7832, %v7835
    %vm7837 = vweird.f32 %v7336
    %vm7838 = vweird.f32 %v7832
    %vm7839 = vmor %vm7837, %vm7838
    %v7840 = vsel %vm7839, %v7832, %v7836
    %v7841 = vand.u32 2147483647, %v7336
    %vm7842 = vcmp.eq.f32.partialorder %v7841, 8.507059e+37
    %v7843 = vand.u32 %v7336, 2147483648
    %v7844 = vor.u32 1.1754944e-38, %v7843
    %v7845 = vsel %vm7842, %v7844, %v7840
    %v7846 = vmul.f32 1.0, %v7845
    %v7847 = vrcp.pop %v7337
    %v7848 = vmul.f32 %v7337, %v7847
    %v7849 = vsub.f32 1.0, %v7848
    %v7850 = vmul.f32 %v7847, %v7849
    %v7851 = vadd.f32 %v7847, %v7850
    %vm7852 = vweird.f32 %v7337
    %vm7853 = vweird.f32 %v7847
    %vm7854 = vmor %vm7852, %vm7853
    %v7855 = vsel %vm7854, %v7847, %v7851
    %v7856 = vand.u32 2147483647, %v7337
    %vm7857 = vcmp.eq.f32.partialorder %v7856, 8.507059e+37
    %v7858 = vand.u32 %v7337, 2147483648
    %v7859 = vor.u32 1.1754944e-38, %v7858
    %v7860 = vsel %vm7857, %v7859, %v7855
    %v7861 = vmul.f32 1.0, %v7860
    %v7862 = vrcp.pop %v7338
    %v7863 = vmul.f32 %v7338, %v7862
    %v7864 = vsub.f32 1.0, %v7863
    %v7865 = vmul.f32 %v7862, %v7864
    %v7866 = vadd.f32 %v7862, %v7865
    %vm7867 = vweird.f32 %v7338
    %vm7868 = vweird.f32 %v7862
    %vm7869 = vmor %vm7867, %vm7868
    %v7870 = vsel %vm7869, %v7862, %v7866
    %v7871 = vand.u32 2147483647, %v7338
    %vm7872 = vcmp.eq.f32.partialorder %v7871, 8.507059e+37
    %v7873 = vand.u32 %v7338, 2147483648
    %v7874 = vor.u32 1.1754944e-38, %v7873
    %v7875 = vsel %vm7872, %v7874, %v7870
    %v7876 = vmul.f32 1.0, %v7875
    %v7877 = vrcp.pop %v7339
    %v7878 = vmul.f32 %v7339, %v7877
    %v7879 = vsub.f32 1.0, %v7878
    %v7880 = vmul.f32 %v7877, %v7879
    %v7881 = vadd.f32 %v7877, %v7880
    %vm7882 = vweird.f32 %v7339
    %vm7883 = vweird.f32 %v7877
    %vm7884 = vmor %vm7882, %vm7883
    %v7885 = vsel %vm7884, %v7877, %v7881
    %v7886 = vand.u32 2147483647, %v7339
    %vm7887 = vcmp.eq.f32.partialorder %v7886, 8.507059e+37
    %v7888 = vand.u32 %v7339, 2147483648
    %v7889 = vor.u32 1.1754944e-38, %v7888
    %v7890 = vsel %vm7887, %v7889, %v7885
    %v7891 = vmul.f32 1.0, %v7890
    %v7892 = vrcp.pop %v7340
    %v7893 = vmul.f32 %v7340, %v7892
    %v7894 = vsub.f32 1.0, %v7893
    %v7895 = vmul.f32 %v7892, %v7894
    %v7896 = vadd.f32 %v7892, %v7895
    %vm7897 = vweird.f32 %v7340
    %vm7898 = vweird.f32 %v7892
    %vm7899 = vmor %vm7897, %vm7898
    %v7900 = vsel %vm7899, %v7892, %v7896
    %v7901 = vand.u32 2147483647, %v7340
    %vm7902 = vcmp.eq.f32.partialorder %v7901, 8.507059e+37
    %v7903 = vand.u32 %v7340, 2147483648
    %v7904 = vor.u32 1.1754944e-38, %v7903
    %v7905 = vsel %vm7902, %v7904, %v7900
    %v7906 = vmul.f32 1.0, %v7905
    %v7907 = vrcp.pop %v7341
    %v7908 = vmul.f32 %v7341, %v7907
    %v7909 = vsub.f32 1.0, %v7908
    %v7910 = vmul.f32 %v7907, %v7909
    %v7911 = vadd.f32 %v7907, %v7910
    %vm7912 = vweird.f32 %v7341
    %vm7913 = vweird.f32 %v7907
    %vm7914 = vmor %vm7912, %vm7913
    %v7915 = vsel %vm7914, %v7907, %v7911
    %v7916 = vand.u32 2147483647, %v7341
    %vm7917 = vcmp.eq.f32.partialorder %v7916, 8.507059e+37
    %v7918 = vand.u32 %v7341, 2147483648
    %v7919 = vor.u32 1.1754944e-38, %v7918
    %v7920 = vsel %vm7917, %v7919, %v7915
    %v7921 = vmul.f32 1.0, %v7920
    %v7922 = vrcp.pop %v7342
    %v7923 = vmul.f32 %v7342, %v7922
    %v7924 = vsub.f32 1.0, %v7923
    %v7925 = vmul.f32 %v7922, %v7924
    %v7926 = vadd.f32 %v7922, %v7925
    %vm7927 = vweird.f32 %v7342
    %vm7928 = vweird.f32 %v7922
    %vm7929 = vmor %vm7927, %vm7928
    %v7930 = vsel %vm7929, %v7922, %v7926
    %v7931 = vand.u32 2147483647, %v7342
    %vm7932 = vcmp.eq.f32.partialorder %v7931, 8.507059e+37
    %v7933 = vand.u32 %v7342, 2147483648
    %v7934 = vor.u32 1.1754944e-38, %v7933
    %v7935 = vsel %vm7932, %v7934, %v7930
    %v7936 = vmul.f32 1.0, %v7935
    %v7937 = vrcp.pop %v7343
    %v7938 = vmul.f32 %v7343, %v7937
    %v7939 = vsub.f32 1.0, %v7938
    %v7940 = vmul.f32 %v7937, %v7939
    %v7941 = vadd.f32 %v7937, %v7940
    %vm7942 = vweird.f32 %v7343
    %vm7943 = vweird.f32 %v7937
    %vm7944 = vmor %vm7942, %vm7943
    %v7945 = vsel %vm7944, %v7937, %v7941
    %v7946 = vand.u32 2147483647, %v7343
    %vm7947 = vcmp.eq.f32.partialorder %v7946, 8.507059e+37
    %v7948 = vand.u32 %v7343, 2147483648
    %v7949 = vor.u32 1.1754944e-38, %v7948
    %v7950 = vsel %vm7947, %v7949, %v7945
    %v7951 = vmul.f32 1.0, %v7950
    %v7952 = vrcp.pop %v7344
    %v7953 = vmul.f32 %v7344, %v7952
    %v7954 = vsub.f32 1.0, %v7953
    %v7955 = vmul.f32 %v7952, %v7954
    %v7956 = vadd.f32 %v7952, %v7955
    %vm7957 = vweird.f32 %v7344
    %vm7958 = vweird.f32 %v7952
    %vm7959 = vmor %vm7957, %vm7958
    %v7960 = vsel %vm7959, %v7952, %v7956
    %v7961 = vand.u32 2147483647, %v7344
    %vm7962 = vcmp.eq.f32.partialorder %v7961, 8.507059e+37
    %v7963 = vand.u32 %v7344, 2147483648
    %v7964 = vor.u32 1.1754944e-38, %v7963
    %v7965 = vsel %vm7962, %v7964, %v7960
    %v7966 = vmul.f32 1.0, %v7965
    %v7967 = vrcp.pop %v7345
    %v7968 = vmul.f32 %v7345, %v7967
    %v7969 = vsub.f32 1.0, %v7968
    %v7970 = vmul.f32 %v7967, %v7969
    %v7971 = vadd.f32 %v7967, %v7970
    %vm7972 = vweird.f32 %v7345
    %vm7973 = vweird.f32 %v7967
    %vm7974 = vmor %vm7972, %vm7973
    %v7975 = vsel %vm7974, %v7967, %v7971
    %v7976 = vand.u32 2147483647, %v7345
    %vm7977 = vcmp.eq.f32.partialorder %v7976, 8.507059e+37
    %v7978 = vand.u32 %v7345, 2147483648
    %v7979 = vor.u32 1.1754944e-38, %v7978
    %v7980 = vsel %vm7977, %v7979, %v7975
    %v7981 = vmul.f32 1.0, %v7980
    %v7982 = vrcp.pop %v7346
    %v7983 = vmul.f32 %v7346, %v7982
    %v7984 = vsub.f32 1.0, %v7983
    %v7985 = vmul.f32 %v7982, %v7984
    %v7986 = vadd.f32 %v7982, %v7985
    %vm7987 = vweird.f32 %v7346
    %vm7988 = vweird.f32 %v7982
    %vm7989 = vmor %vm7987, %vm7988
    %v7990 = vsel %vm7989, %v7982, %v7986
    %v7991 = vand.u32 2147483647, %v7346
    %vm7992 = vcmp.eq.f32.partialorder %v7991, 8.507059e+37
    %v7993 = vand.u32 %v7346, 2147483648
    %v7994 = vor.u32 1.1754944e-38, %v7993
    %v7995 = vsel %vm7992, %v7994, %v7990
    %v7996 = vmul.f32 1.0, %v7995
    %v7997 = vrcp.pop %v7347
    %v7998 = vmul.f32 %v7347, %v7997
    %v7999 = vsub.f32 1.0, %v7998
    %v8000 = vmul.f32 %v7997, %v7999
    %v8001 = vadd.f32 %v7997, %v8000
    %vm8002 = vweird.f32 %v7347
    %vm8003 = vweird.f32 %v7997
    %vm8004 = vmor %vm8002, %vm8003
    %v8005 = vsel %vm8004, %v7997, %v8001
    %v8006 = vand.u32 2147483647, %v7347
    %vm8007 = vcmp.eq.f32.partialorder %v8006, 8.507059e+37
    %v8008 = vand.u32 %v7347, 2147483648
    %v8009 = vor.u32 1.1754944e-38, %v8008
    %v8010 = vsel %vm8007, %v8009, %v8005
    %v8011 = vmul.f32 1.0, %v8010
    %v8012 = vrcp.pop %v7348
    %v8013 = vmul.f32 %v7348, %v8012
    %v8014 = vsub.f32 1.0, %v8013
    %v8015 = vmul.f32 %v8012, %v8014
    %v8016 = vadd.f32 %v8012, %v8015
    %vm8017 = vweird.f32 %v7348
    %vm8018 = vweird.f32 %v8012
    %vm8019 = vmor %vm8017, %vm8018
    %v8020 = vsel %vm8019, %v8012, %v8016
    %v8021 = vand.u32 2147483647, %v7348
    %vm8022 = vcmp.eq.f32.partialorder %v8021, 8.507059e+37
    %v8023 = vand.u32 %v7348, 2147483648
    %v8024 = vor.u32 1.1754944e-38, %v8023
    %v8025 = vsel %vm8022, %v8024, %v8020
    %v8026 = vmul.f32 1.0, %v8025
    %v8027 = vrcp.pop %v7349
    %v8028 = vmul.f32 %v7349, %v8027
    %v8029 = vsub.f32 1.0, %v8028
    %v8030 = vmul.f32 %v8027, %v8029
    %v8031 = vadd.f32 %v8027, %v8030
    %vm8032 = vweird.f32 %v7349
    %vm8033 = vweird.f32 %v8027
    %vm8034 = vmor %vm8032, %vm8033
    %v8035 = vsel %vm8034, %v8027, %v8031
    %v8036 = vand.u32 2147483647, %v7349
    %vm8037 = vcmp.eq.f32.partialorder %v8036, 8.507059e+37
    %v8038 = vand.u32 %v7349, 2147483648
    %v8039 = vor.u32 1.1754944e-38, %v8038
    %v8040 = vsel %vm8037, %v8039, %v8035
    %v8041 = vmul.f32 1.0, %v8040
    %v8042 = vrcp.pop %v7350
    %v8043 = vmul.f32 %v7350, %v8042
    %v8044 = vsub.f32 1.0, %v8043
    %v8045 = vmul.f32 %v8042, %v8044
    %v8046 = vadd.f32 %v8042, %v8045
    %vm8047 = vweird.f32 %v7350
    %vm8048 = vweird.f32 %v8042
    %vm8049 = vmor %vm8047, %vm8048
    %v8050 = vsel %vm8049, %v8042, %v8046
    %v8051 = vand.u32 2147483647, %v7350
    %vm8052 = vcmp.eq.f32.partialorder %v8051, 8.507059e+37
    %v8053 = vand.u32 %v7350, 2147483648
    %v8054 = vor.u32 1.1754944e-38, %v8053
    %v8055 = vsel %vm8052, %v8054, %v8050
    %v8056 = vmul.f32 1.0, %v8055
    %v8057 = vrcp.pop %v7351
    %v8058 = vmul.f32 %v7351, %v8057
    %v8059 = vsub.f32 1.0, %v8058
    %v8060 = vmul.f32 %v8057, %v8059
    %v8061 = vadd.f32 %v8057, %v8060
    %vm8062 = vweird.f32 %v7351
    %vm8063 = vweird.f32 %v8057
    %vm8064 = vmor %vm8062, %vm8063
    %v8065 = vsel %vm8064, %v8057, %v8061
    %v8066 = vand.u32 2147483647, %v7351
    %vm8067 = vcmp.eq.f32.partialorder %v8066, 8.507059e+37
    %v8068 = vand.u32 %v7351, 2147483648
    %v8069 = vor.u32 1.1754944e-38, %v8068
    %v8070 = vsel %vm8067, %v8069, %v8065
    %v8071 = vmul.f32 1.0, %v8070
    %8120 = vrot.lane.b32.xlu0 %v7366, 96
    %v8121 = vpop.permute.xlu0 %8120
    %8122 = vrot.lane.b32.xlu0 %v7381, 96
    %v8123 = vpop.permute.xlu0 %8122
    %8124 = vrot.lane.b32.xlu0 %v7396, 96
    %v8125 = vpop.permute.xlu0 %8124
    %8126 = vrot.lane.b32.xlu0 %v7411, 96
    %v8127 = vpop.permute.xlu0 %8126
    %8128 = vrot.lane.b32.xlu0 %v7426, 96
    %v8129 = vpop.permute.xlu0 %8128
    %8130 = vrot.lane.b32.xlu0 %v7441, 96
    %v8131 = vpop.permute.xlu0 %8130
    %8132 = vrot.lane.b32.xlu0 %v7456, 96
    %v8133 = vpop.permute.xlu0 %8132
    %8134 = vrot.lane.b32.xlu0 %v7471, 96
    %v8135 = vpop.permute.xlu0 %8134
    %8136 = vrot.lane.b32.xlu0 %v7486, 96
    %v8137 = vpop.permute.xlu0 %8136
    %8138 = vrot.lane.b32.xlu0 %v7501, 96
    %v8139 = vpop.permute.xlu0 %8138
    %8140 = vrot.lane.b32.xlu0 %v7516, 96
    %v8141 = vpop.permute.xlu0 %8140
    %8142 = vrot.lane.b32.xlu0 %v7531, 96
    %v8143 = vpop.permute.xlu0 %8142
    %8144 = vrot.lane.b32.xlu0 %v7546, 96
    %v8145 = vpop.permute.xlu0 %8144
    %8146 = vrot.lane.b32.xlu0 %v7561, 96
    %v8147 = vpop.permute.xlu0 %8146
    %8148 = vrot.lane.b32.xlu0 %v7576, 96
    %v8149 = vpop.permute.xlu0 %8148
    %8150 = vrot.lane.b32.xlu0 %v7591, 96
    %v8151 = vpop.permute.xlu0 %8150
    %8152 = vrot.lane.b32.xlu0 %v7606, 96
    %v8153 = vpop.permute.xlu0 %8152
    %8154 = vrot.lane.b32.xlu0 %v7621, 96
    %v8155 = vpop.permute.xlu0 %8154
    %8156 = vrot.lane.b32.xlu0 %v7636, 96
    %v8157 = vpop.permute.xlu0 %8156
    %8158 = vrot.lane.b32.xlu0 %v7651, 96
    %v8159 = vpop.permute.xlu0 %8158
    %8160 = vrot.lane.b32.xlu0 %v7666, 96
    %v8161 = vpop.permute.xlu0 %8160
    %8162 = vrot.lane.b32.xlu0 %v7681, 96
    %v8163 = vpop.permute.xlu0 %8162
    %8164 = vrot.lane.b32.xlu0 %v7696, 96
    %v8165 = vpop.permute.xlu0 %8164
    %8166 = vrot.lane.b32.xlu0 %v7711, 96
    %v8167 = vpop.permute.xlu0 %8166
    %8168 = vrot.lane.b32.xlu0 %v7726, 96
    %v8169 = vpop.permute.xlu0 %8168
    %8170 = vrot.lane.b32.xlu0 %v7741, 96
    %v8171 = vpop.permute.xlu0 %8170
    %8172 = vrot.lane.b32.xlu0 %v7756, 96
    %v8173 = vpop.permute.xlu0 %8172
    %8174 = vrot.lane.b32.xlu0 %v7771, 96
    %v8175 = vpop.permute.xlu0 %8174
    %8176 = vrot.lane.b32.xlu0 %v7786, 96
    %v8177 = vpop.permute.xlu0 %8176
    %8178 = vrot.lane.b32.xlu0 %v7801, 96
    %v8179 = vpop.permute.xlu0 %8178
    %8180 = vrot.lane.b32.xlu0 %v7816, 96
    %v8181 = vpop.permute.xlu0 %8180
    %8182 = vrot.lane.b32.xlu0 %v7831, 96
    %v8183 = vpop.permute.xlu0 %8182
    %8184 = vrot.lane.b32.xlu0 %v7846, 96
    %v8185 = vpop.permute.xlu0 %8184
    %8186 = vrot.lane.b32.xlu0 %v7861, 96
    %v8187 = vpop.permute.xlu0 %8186
    %8188 = vrot.lane.b32.xlu0 %v7876, 96
    %v8189 = vpop.permute.xlu0 %8188
    %8190 = vrot.lane.b32.xlu0 %v7891, 96
    %v8191 = vpop.permute.xlu0 %8190
    %8192 = vrot.lane.b32.xlu0 %v7906, 96
    %v8193 = vpop.permute.xlu0 %8192
    %8194 = vrot.lane.b32.xlu0 %v7921, 96
    %v8195 = vpop.permute.xlu0 %8194
    %8196 = vrot.lane.b32.xlu0 %v7936, 96
    %v8197 = vpop.permute.xlu0 %8196
    %8198 = vrot.lane.b32.xlu0 %v7951, 96
    %v8199 = vpop.permute.xlu0 %8198
    %8200 = vrot.lane.b32.xlu0 %v7966, 96
    %v8201 = vpop.permute.xlu0 %8200
    %8202 = vrot.lane.b32.xlu0 %v7981, 96
    %v8203 = vpop.permute.xlu0 %8202
    %8204 = vrot.lane.b32.xlu0 %v7996, 96
    %v8205 = vpop.permute.xlu0 %8204
    %8206 = vrot.lane.b32.xlu0 %v8011, 96
    %v8207 = vpop.permute.xlu0 %8206
    %8208 = vrot.lane.b32.xlu0 %v8026, 96
    %v8209 = vpop.permute.xlu0 %8208
    %8210 = vrot.lane.b32.xlu0 %v8041, 96
    %v8211 = vpop.permute.xlu0 %8210
    %8212 = vrot.lane.b32.xlu0 %v8056, 96
    %v8213 = vpop.permute.xlu0 %8212
    %8214 = vrot.lane.b32.xlu0 %v8071, 96
    %v8215 = vpop.permute.xlu0 %8214
    %v8264 = vmul.f32 %v7112, %v8121
    %v8265 = vmul.f32 %v7113, %v8123
    %v8266 = vmul.f32 %v7114, %v8125
    %v8267 = vmul.f32 %v7115, %v8127
    %v8268 = vmul.f32 %v7116, %v8129
    %v8269 = vmul.f32 %v7117, %v8131
    %v8270 = vmul.f32 %v7118, %v8133
    %v8271 = vmul.f32 %v7119, %v8135
    %v8272 = vmul.f32 %v7120, %v8137
    %v8273 = vmul.f32 %v7121, %v8139
    %v8274 = vmul.f32 %v7122, %v8141
    %v8275 = vmul.f32 %v7123, %v8143
    %v8276 = vmul.f32 %v7124, %v8145
    %v8277 = vmul.f32 %v7125, %v8147
    %v8278 = vmul.f32 %v7126, %v8149
    %v8279 = vmul.f32 %v7127, %v8151
    %v8280 = vmul.f32 %v7128, %v8153
    %v8281 = vmul.f32 %v7129, %v8155
    %v8282 = vmul.f32 %v7130, %v8157
    %v8283 = vmul.f32 %v7131, %v8159
    %v8284 = vmul.f32 %v7132, %v8161
    %v8285 = vmul.f32 %v7133, %v8163
    %v8286 = vmul.f32 %v7134, %v8165
    %v8287 = vmul.f32 %v7135, %v8167
    %v8288 = vmul.f32 %v7136, %v8169
    %v8289 = vmul.f32 %v7137, %v8171
    %v8290 = vmul.f32 %v7138, %v8173
    %v8291 = vmul.f32 %v7139, %v8175
    %v8292 = vmul.f32 %v7140, %v8177
    %v8293 = vmul.f32 %v7141, %v8179
    %v8294 = vmul.f32 %v7142, %v8181
    %v8295 = vmul.f32 %v7143, %v8183
    %v8296 = vmul.f32 %v7144, %v8185
    %v8297 = vmul.f32 %v7145, %v8187
    %v8298 = vmul.f32 %v7146, %v8189
    %v8299 = vmul.f32 %v7147, %v8191
    %v8300 = vmul.f32 %v7148, %v8193
    %v8301 = vmul.f32 %v7149, %v8195
    %v8302 = vmul.f32 %v7150, %v8197
    %v8303 = vmul.f32 %v7151, %v8199
    %v8304 = vmul.f32 %v7152, %v8201
    %v8305 = vmul.f32 %v7153, %v8203
    %v8306 = vmul.f32 %v7154, %v8205
    %v8307 = vmul.f32 %v7155, %v8207
    %v8308 = vmul.f32 %v7156, %v8209
    %v8309 = vmul.f32 %v7157, %v8211
    %v8310 = vmul.f32 %v7158, %v8213
    %v8311 = vmul.f32 %v7159, %v8215
    %v8312 = vld [vmem:[%s12] sm:$0xff]
    %v8313 = vld [vmem:[%s12 + $0x8] sm:$0xff]
    %v8314 = vld [vmem:[%s12 + $0x10] sm:$0xff]
    %v8315 = vld [vmem:[%s12 + $0x18] sm:$0xff]
    %v8317 = vsel %vm2472, %v8264, 0
    %v8320 = vsel %vm2472, %v8265, 0
    %v8323 = vsel %vm2472, %v8266, 0
    %v8326 = vsel %vm2472, %v8267, 0
    %v8329 = vsel %vm2472, %v8268, 0
    %v8332 = vsel %vm2472, %v8269, 0
    %v8335 = vsel %vm2472, %v8270, 0
    %v8338 = vsel %vm2472, %v8271, 0
    %v8341 = vsel %vm2472, %v8272, 0
    %v8344 = vsel %vm2472, %v8273, 0
    %v8347 = vsel %vm2472, %v8274, 0
    %v8350 = vsel %vm2472, %v8275, 0
    %v8353 = vsel %vm2472, %v8276, 0
    %v8356 = vsel %vm2472, %v8277, 0
    %v8359 = vsel %vm2472, %v8278, 0
    %v8362 = vsel %vm2472, %v8279, 0
    %v8365 = vsel %vm2472, %v8280, 0
    %v8368 = vsel %vm2472, %v8281, 0
    %v8371 = vsel %vm2472, %v8282, 0
    %v8374 = vsel %vm2472, %v8283, 0
    %v8377 = vsel %vm2472, %v8284, 0
    %v8380 = vsel %vm2472, %v8285, 0
    %v8383 = vsel %vm2472, %v8286, 0
    %v8386 = vsel %vm2472, %v8287, 0
    %v8389 = vsel %vm2472, %v8288, 0
    %v8392 = vsel %vm2472, %v8289, 0
    %v8395 = vsel %vm2472, %v8290, 0
    %v8398 = vsel %vm2472, %v8291, 0
    %v8401 = vsel %vm2472, %v8292, 0
    %v8404 = vsel %vm2472, %v8293, 0
    %v8407 = vsel %vm2472, %v8294, 0
    %v8410 = vsel %vm2472, %v8295, 0
    %v8413 = vsel %vm2472, %v8296, 0
    %v8416 = vsel %vm2472, %v8297, 0
    %v8419 = vsel %vm2472, %v8298, 0
    %v8422 = vsel %vm2472, %v8299, 0
    %v8425 = vsel %vm2472, %v8300, 0
    %v8428 = vsel %vm2472, %v8301, 0
    %v8431 = vsel %vm2472, %v8302, 0
    %v8434 = vsel %vm2472, %v8303, 0
    %v8437 = vsel %vm2472, %v8304, 0
    %v8440 = vsel %vm2472, %v8305, 0
    %v8443 = vsel %vm2472, %v8306, 0
    %v8446 = vsel %vm2472, %v8307, 0
    %v8449 = vsel %vm2472, %v8308, 0
    %v8452 = vsel %vm2472, %v8309, 0
    %v8455 = vsel %vm2472, %v8310, 0
    %v8458 = vsel %vm2472, %v8311, 0
    %8460 = vmatpush.msra.mxu0 0.0
    %8461 = vmatpush.msra.mxu0 0.0
    %8462 = vmatpush.msra.mxu0 0.0
    %8463 = vmatpush.msra.mxu0 0.0
    %8464 = vmatpush.msra.mxu0 0.0
    %8465 = vmatpush.msra.mxu0 0.0
    %8466 = vmatpush.msra.mxu0 0.0
    %8467 = vmatpush.msra.mxu0 0.0
    %8468 = vmatpush.msra.mxu0 0.0
    %8469 = vmatpush.msra.mxu0 0.0
    %8470 = vmatpush.msra.mxu0 0.0
    %8471 = vmatpush.msra.mxu0 0.0
    %8472 = vmatpush.msra.mxu0 %v8315
    %8473 = vmatpush.msra.mxu0 %v8314
    %8474 = vmatpush.msra.mxu0 %v8313
    %8475 = vmatpush.msra.mxu0 %v8312
    %8476 = vmatmul.f32.gmra.mxu0 %v8317
    %v8477 = vpop.f32.mrf.mxu0
    %v8478 = vadd.f32 0.0, %v8477
    %8479 = vmatmul.f32.gmra.mxu0 %v8320
    %v8480 = vpop.f32.mrf.mxu0
    %v8481 = vadd.f32 0.0, %v8480
    %8482 = vmatmul.f32.gmra.mxu0 %v8323
    %v8483 = vpop.f32.mrf.mxu0
    %v8484 = vadd.f32 0.0, %v8483
    %8485 = vmatmul.f32.gmra.mxu0 %v8326
    %v8486 = vpop.f32.mrf.mxu0
    %v8487 = vadd.f32 0.0, %v8486
    %8488 = vmatmul.f32.gmra.mxu0 %v8329
    %v8489 = vpop.f32.mrf.mxu0
    %v8490 = vadd.f32 0.0, %v8489
    %8491 = vmatmul.f32.gmra.mxu0 %v8332
    %v8492 = vpop.f32.mrf.mxu0
    %v8493 = vadd.f32 0.0, %v8492
    %8494 = vmatmul.f32.gmra.mxu0 %v8335
    %v8495 = vpop.f32.mrf.mxu0
    %v8496 = vadd.f32 0.0, %v8495
    %8497 = vmatmul.f32.gmra.mxu0 %v8338
    %v8498 = vpop.f32.mrf.mxu0
    %v8499 = vadd.f32 0.0, %v8498
    %8500 = vmatmul.f32.gmra.mxu0 %v8341
    %v8501 = vpop.f32.mrf.mxu0
    %v8502 = vadd.f32 0.0, %v8501
    %8503 = vmatmul.f32.gmra.mxu0 %v8344
    %v8504 = vpop.f32.mrf.mxu0
    %v8505 = vadd.f32 0.0, %v8504
    %8506 = vmatmul.f32.gmra.mxu0 %v8347
    %v8507 = vpop.f32.mrf.mxu0
    %v8508 = vadd.f32 0.0, %v8507
    %8509 = vmatmul.f32.gmra.mxu0 %v8350
    %v8510 = vpop.f32.mrf.mxu0
    %v8511 = vadd.f32 0.0, %v8510
    %8512 = vmatmul.f32.gmra.mxu0 %v8353
    %v8513 = vpop.f32.mrf.mxu0
    %v8514 = vadd.f32 0.0, %v8513
    %8515 = vmatmul.f32.gmra.mxu0 %v8356
    %v8516 = vpop.f32.mrf.mxu0
    %v8517 = vadd.f32 0.0, %v8516
    %8518 = vmatmul.f32.gmra.mxu0 %v8359
    %v8519 = vpop.f32.mrf.mxu0
    %v8520 = vadd.f32 0.0, %v8519
    %8521 = vmatmul.f32.gmra.mxu0 %v8362
    %v8522 = vpop.f32.mrf.mxu0
    %v8523 = vadd.f32 0.0, %v8522
    %8524 = vmatmul.f32.gmra.mxu0 %v8365
    %v8525 = vpop.f32.mrf.mxu0
    %v8526 = vadd.f32 0.0, %v8525
    %8527 = vmatmul.f32.gmra.mxu0 %v8368
    %v8528 = vpop.f32.mrf.mxu0
    %v8529 = vadd.f32 0.0, %v8528
    %8530 = vmatmul.f32.gmra.mxu0 %v8371
    %v8531 = vpop.f32.mrf.mxu0
    %v8532 = vadd.f32 0.0, %v8531
    %8533 = vmatmul.f32.gmra.mxu0 %v8374
    %v8534 = vpop.f32.mrf.mxu0
    %v8535 = vadd.f32 0.0, %v8534
    %8536 = vmatmul.f32.gmra.mxu0 %v8377
    %v8537 = vpop.f32.mrf.mxu0
    %v8538 = vadd.f32 0.0, %v8537
    %8539 = vmatmul.f32.gmra.mxu0 %v8380
    %v8540 = vpop.f32.mrf.mxu0
    %v8541 = vadd.f32 0.0, %v8540
    %8542 = vmatmul.f32.gmra.mxu0 %v8383
    %v8543 = vpop.f32.mrf.mxu0
    %v8544 = vadd.f32 0.0, %v8543
    %8545 = vmatmul.f32.gmra.mxu0 %v8386
    %v8546 = vpop.f32.mrf.mxu0
    %v8547 = vadd.f32 0.0, %v8546
    %8548 = vmatmul.f32.gmra.mxu0 %v8389
    %v8549 = vpop.f32.mrf.mxu0
    %v8550 = vadd.f32 0.0, %v8549
    %8551 = vmatmul.f32.gmra.mxu0 %v8392
    %v8552 = vpop.f32.mrf.mxu0
    %v8553 = vadd.f32 0.0, %v8552
    %8554 = vmatmul.f32.gmra.mxu0 %v8395
    %v8555 = vpop.f32.mrf.mxu0
    %v8556 = vadd.f32 0.0, %v8555
    %8557 = vmatmul.f32.gmra.mxu0 %v8398
    %v8558 = vpop.f32.mrf.mxu0
    %v8559 = vadd.f32 0.0, %v8558
    %8560 = vmatmul.f32.gmra.mxu0 %v8401
    %v8561 = vpop.f32.mrf.mxu0
    %v8562 = vadd.f32 0.0, %v8561
    %8563 = vmatmul.f32.gmra.mxu0 %v8404
    %v8564 = vpop.f32.mrf.mxu0
    %v8565 = vadd.f32 0.0, %v8564
    %8566 = vmatmul.f32.gmra.mxu0 %v8407
    %v8567 = vpop.f32.mrf.mxu0
    %v8568 = vadd.f32 0.0, %v8567
    %8569 = vmatmul.f32.gmra.mxu0 %v8410
    %v8570 = vpop.f32.mrf.mxu0
    %v8571 = vadd.f32 0.0, %v8570
    %8572 = vmatmul.f32.gmra.mxu0 %v8413
    %v8573 = vpop.f32.mrf.mxu0
    %v8574 = vadd.f32 0.0, %v8573
    %8575 = vmatmul.f32.gmra.mxu0 %v8416
    %v8576 = vpop.f32.mrf.mxu0
    %v8577 = vadd.f32 0.0, %v8576
    %8578 = vmatmul.f32.gmra.mxu0 %v8419
    %v8579 = vpop.f32.mrf.mxu0
    %v8580 = vadd.f32 0.0, %v8579
    %8581 = vmatmul.f32.gmra.mxu0 %v8422
    %v8582 = vpop.f32.mrf.mxu0
    %v8583 = vadd.f32 0.0, %v8582
    %8584 = vmatmul.f32.gmra.mxu0 %v8425
    %v8585 = vpop.f32.mrf.mxu0
    %v8586 = vadd.f32 0.0, %v8585
    %8587 = vmatmul.f32.gmra.mxu0 %v8428
    %v8588 = vpop.f32.mrf.mxu0
    %v8589 = vadd.f32 0.0, %v8588
    %8590 = vmatmul.f32.gmra.mxu0 %v8431
    %v8591 = vpop.f32.mrf.mxu0
    %v8592 = vadd.f32 0.0, %v8591
    %8593 = vmatmul.f32.gmra.mxu0 %v8434
    %v8594 = vpop.f32.mrf.mxu0
    %v8595 = vadd.f32 0.0, %v8594
    %8596 = vmatmul.f32.gmra.mxu0 %v8437
    %v8597 = vpop.f32.mrf.mxu0
    %v8598 = vadd.f32 0.0, %v8597
    %8599 = vmatmul.f32.gmra.mxu0 %v8440
    %v8600 = vpop.f32.mrf.mxu0
    %v8601 = vadd.f32 0.0, %v8600
    %8602 = vmatmul.f32.gmra.mxu0 %v8443
    %v8603 = vpop.f32.mrf.mxu0
    %v8604 = vadd.f32 0.0, %v8603
    %8605 = vmatmul.f32.gmra.mxu0 %v8446
    %v8606 = vpop.f32.mrf.mxu0
    %v8607 = vadd.f32 0.0, %v8606
    %8608 = vmatmul.f32.gmra.mxu0 %v8449
    %v8609 = vpop.f32.mrf.mxu0
    %v8610 = vadd.f32 0.0, %v8609
    %8611 = vmatmul.f32.gmra.mxu0 %v8452
    %v8612 = vpop.f32.mrf.mxu0
    %v8613 = vadd.f32 0.0, %v8612
    %8614 = vmatmul.f32.gmra.mxu0 %v8455
    %v8615 = vpop.f32.mrf.mxu0
    %v8616 = vadd.f32 0.0, %v8615
    %8617 = vmatmul.f32.gmra.mxu0 %v8458
    %v8618 = vpop.f32.mrf.mxu0
    %v8619 = vadd.f32 0.0, %v8618
    %8620 = vdwg.mxu0
    %v8621 = vld [vmem:[%s13] sm:$0x1]
    %v8623 = vperm.slane %v8621, 0
    %8624 = vrot.lane.b32.xlu0 %v8623, 32
    %v8625 = vpop.permute.xlu0 %8624
    %v8627 = vadd.f32 %v8478, %v8625
    %v8628 = vadd.f32 %v8481, %v8625
    %v8629 = vadd.f32 %v8484, %v8625
    %v8630 = vadd.f32 %v8487, %v8625
    %v8631 = vadd.f32 %v8490, %v8625
    %v8632 = vadd.f32 %v8493, %v8625
    %v8633 = vadd.f32 %v8496, %v8625
    %v8634 = vadd.f32 %v8499, %v8625
    %v8635 = vadd.f32 %v8502, %v8625
    %v8636 = vadd.f32 %v8505, %v8625
    %v8637 = vadd.f32 %v8508, %v8625
    %v8638 = vadd.f32 %v8511, %v8625
    %v8639 = vadd.f32 %v8514, %v8625
    %v8640 = vadd.f32 %v8517, %v8625
    %v8641 = vadd.f32 %v8520, %v8625
    %v8642 = vadd.f32 %v8523, %v8625
    %v8643 = vadd.f32 %v8526, %v8625
    %v8644 = vadd.f32 %v8529, %v8625
    %v8645 = vadd.f32 %v8532, %v8625
    %v8646 = vadd.f32 %v8535, %v8625
    %v8647 = vadd.f32 %v8538, %v8625
    %v8648 = vadd.f32 %v8541, %v8625
    %v8649 = vadd.f32 %v8544, %v8625
    %v8650 = vadd.f32 %v8547, %v8625
    %v8651 = vadd.f32 %v8550, %v8625
    %v8652 = vadd.f32 %v8553, %v8625
    %v8653 = vadd.f32 %v8556, %v8625
    %v8654 = vadd.f32 %v8559, %v8625
    %v8655 = vadd.f32 %v8562, %v8625
    %v8656 = vadd.f32 %v8565, %v8625
    %v8657 = vadd.f32 %v8568, %v8625
    %v8658 = vadd.f32 %v8571, %v8625
    %v8659 = vadd.f32 %v8574, %v8625
    %v8660 = vadd.f32 %v8577, %v8625
    %v8661 = vadd.f32 %v8580, %v8625
    %v8662 = vadd.f32 %v8583, %v8625
    %v8663 = vadd.f32 %v8586, %v8625
    %v8664 = vadd.f32 %v8589, %v8625
    %v8665 = vadd.f32 %v8592, %v8625
    %v8666 = vadd.f32 %v8595, %v8625
    %v8667 = vadd.f32 %v8598, %v8625
    %v8668 = vadd.f32 %v8601, %v8625
    %v8669 = vadd.f32 %v8604, %v8625
    %v8670 = vadd.f32 %v8607, %v8625
    %v8671 = vadd.f32 %v8610, %v8625
    %v8672 = vadd.f32 %v8613, %v8625
    %v8673 = vadd.f32 %v8616, %v8625
    %v8674 = vadd.f32 %v8619, %v8625
    %8719 = vrot.lane.b32.xlu0 %v8478, 32
    %v8720 = vpop.permute.xlu0 %8719
    %8721 = vrot.lane.b32.xlu0 %v8481, 32
    %v8722 = vpop.permute.xlu0 %8721
    %8723 = vrot.lane.b32.xlu0 %v8484, 32
    %v8724 = vpop.permute.xlu0 %8723
    %8725 = vrot.lane.b32.xlu0 %v8487, 32
    %v8726 = vpop.permute.xlu0 %8725
    %8727 = vrot.lane.b32.xlu0 %v8490, 32
    %v8728 = vpop.permute.xlu0 %8727
    %8729 = vrot.lane.b32.xlu0 %v8493, 32
    %v8730 = vpop.permute.xlu0 %8729
    %8731 = vrot.lane.b32.xlu0 %v8496, 32
    %v8732 = vpop.permute.xlu0 %8731
    %8733 = vrot.lane.b32.xlu0 %v8499, 32
    %v8734 = vpop.permute.xlu0 %8733
    %8735 = vrot.lane.b32.xlu0 %v8502, 32
    %v8736 = vpop.permute.xlu0 %8735
    %8737 = vrot.lane.b32.xlu0 %v8505, 32
    %v8738 = vpop.permute.xlu0 %8737
    %8739 = vrot.lane.b32.xlu0 %v8508, 32
    %v8740 = vpop.permute.xlu0 %8739
    %8741 = vrot.lane.b32.xlu0 %v8511, 32
    %v8742 = vpop.permute.xlu0 %8741
    %8743 = vrot.lane.b32.xlu0 %v8514, 32
    %v8744 = vpop.permute.xlu0 %8743
    %8745 = vrot.lane.b32.xlu0 %v8517, 32
    %v8746 = vpop.permute.xlu0 %8745
    %8747 = vrot.lane.b32.xlu0 %v8520, 32
    %v8748 = vpop.permute.xlu0 %8747
    %8749 = vrot.lane.b32.xlu0 %v8523, 32
    %v8750 = vpop.permute.xlu0 %8749
    %8751 = vrot.lane.b32.xlu0 %v8526, 32
    %v8752 = vpop.permute.xlu0 %8751
    %8753 = vrot.lane.b32.xlu0 %v8529, 32
    %v8754 = vpop.permute.xlu0 %8753
    %8755 = vrot.lane.b32.xlu0 %v8532, 32
    %v8756 = vpop.permute.xlu0 %8755
    %8757 = vrot.lane.b32.xlu0 %v8535, 32
    %v8758 = vpop.permute.xlu0 %8757
    %8759 = vrot.lane.b32.xlu0 %v8538, 32
    %v8760 = vpop.permute.xlu0 %8759
    %8761 = vrot.lane.b32.xlu0 %v8541, 32
    %v8762 = vpop.permute.xlu0 %8761
    %8763 = vrot.lane.b32.xlu0 %v8544, 32
    %v8764 = vpop.permute.xlu0 %8763
    %8765 = vrot.lane.b32.xlu0 %v8547, 32
    %v8766 = vpop.permute.xlu0 %8765
    %8767 = vrot.lane.b32.xlu0 %v8550, 32
    %v8768 = vpop.permute.xlu0 %8767
    %8769 = vrot.lane.b32.xlu0 %v8553, 32
    %v8770 = vpop.permute.xlu0 %8769
    %8771 = vrot.lane.b32.xlu0 %v8556, 32
    %v8772 = vpop.permute.xlu0 %8771
    %8773 = vrot.lane.b32.xlu0 %v8559, 32
    %v8774 = vpop.permute.xlu0 %8773
    %8775 = vrot.lane.b32.xlu0 %v8562, 32
    %v8776 = vpop.permute.xlu0 %8775
    %8777 = vrot.lane.b32.xlu0 %v8565, 32
    %v8778 = vpop.permute.xlu0 %8777
    %8779 = vrot.lane.b32.xlu0 %v8568, 32
    %v8780 = vpop.permute.xlu0 %8779
    %8781 = vrot.lane.b32.xlu0 %v8571, 32
    %v8782 = vpop.permute.xlu0 %8781
    %8783 = vrot.lane.b32.xlu0 %v8574, 32
    %v8784 = vpop.permute.xlu0 %8783
    %8785 = vrot.lane.b32.xlu0 %v8577, 32
    %v8786 = vpop.permute.xlu0 %8785
    %8787 = vrot.lane.b32.xlu0 %v8580, 32
    %v8788 = vpop.permute.xlu0 %8787
    %8789 = vrot.lane.b32.xlu0 %v8583, 32
    %v8790 = vpop.permute.xlu0 %8789
    %8791 = vrot.lane.b32.xlu0 %v8586, 32
    %v8792 = vpop.permute.xlu0 %8791
    %8793 = vrot.lane.b32.xlu0 %v8589, 32
    %v8794 = vpop.permute.xlu0 %8793
    %8795 = vrot.lane.b32.xlu0 %v8592, 32
    %v8796 = vpop.permute.xlu0 %8795
    %8797 = vrot.lane.b32.xlu0 %v8595, 32
    %v8798 = vpop.permute.xlu0 %8797
    %8799 = vrot.lane.b32.xlu0 %v8598, 32
    %v8800 = vpop.permute.xlu0 %8799
    %8801 = vrot.lane.b32.xlu0 %v8601, 32
    %v8802 = vpop.permute.xlu0 %8801
    %8803 = vrot.lane.b32.xlu0 %v8604, 32
    %v8804 = vpop.permute.xlu0 %8803
    %8805 = vrot.lane.b32.xlu0 %v8607, 32
    %v8806 = vpop.permute.xlu0 %8805
    %v8851 = vadd.f32 %v8627, %v4501
    %v8852 = vadd.f32 %v8628, %v4501
    %v8853 = vadd.f32 %v8629, %v4501
    %v8854 = vadd.f32 %v8630, %v4501
    %v8855 = vadd.f32 %v8631, %v8720
    %v8856 = vadd.f32 %v8632, %v8722
    %v8857 = vadd.f32 %v8633, %v8724
    %v8858 = vadd.f32 %v8634, %v8726
    %v8859 = vadd.f32 %v8635, %v8728
    %v8860 = vadd.f32 %v8636, %v8730
    %v8861 = vadd.f32 %v8637, %v8732
    %v8862 = vadd.f32 %v8638, %v8734
    %v8863 = vadd.f32 %v8639, %v8736
    %v8864 = vadd.f32 %v8640, %v8738
    %v8865 = vadd.f32 %v8641, %v8740
    %v8866 = vadd.f32 %v8642, %v8742
    %v8867 = vadd.f32 %v8643, %v8744
    %v8868 = vadd.f32 %v8644, %v8746
    %v8869 = vadd.f32 %v8645, %v8748
    %v8870 = vadd.f32 %v8646, %v8750
    %v8871 = vadd.f32 %v8647, %v8752
    %v8872 = vadd.f32 %v8648, %v8754
    %v8873 = vadd.f32 %v8649, %v8756
    %v8874 = vadd.f32 %v8650, %v8758
    %v8875 = vadd.f32 %v8651, %v8760
    %v8876 = vadd.f32 %v8652, %v8762
    %v8877 = vadd.f32 %v8653, %v8764
    %v8878 = vadd.f32 %v8654, %v8766
    %v8879 = vadd.f32 %v8655, %v8768
    %v8880 = vadd.f32 %v8656, %v8770
    %v8881 = vadd.f32 %v8657, %v8772
    %v8882 = vadd.f32 %v8658, %v8774
    %v8883 = vadd.f32 %v8659, %v8776
    %v8884 = vadd.f32 %v8660, %v8778
    %v8885 = vadd.f32 %v8661, %v8780
    %v8886 = vadd.f32 %v8662, %v8782
    %v8887 = vadd.f32 %v8663, %v8784
    %v8888 = vadd.f32 %v8664, %v8786
    %v8889 = vadd.f32 %v8665, %v8788
    %v8890 = vadd.f32 %v8666, %v8790
    %v8891 = vadd.f32 %v8667, %v8792
    %v8892 = vadd.f32 %v8668, %v8794
    %v8893 = vadd.f32 %v8669, %v8796
    %v8894 = vadd.f32 %v8670, %v8798
    %v8895 = vadd.f32 %v8671, %v8800
    %v8896 = vadd.f32 %v8672, %v8802
    %v8897 = vadd.f32 %v8673, %v8804
    %v8898 = vadd.f32 %v8674, %v8806
    %8903 = vrot.lane.b32.xlu0 %v8490, 96
    %v8904 = vpop.permute.xlu0 %8903
    %8905 = vrot.lane.b32.xlu0 %v8493, 96
    %v8906 = vpop.permute.xlu0 %8905
    %8907 = vrot.lane.b32.xlu0 %v8496, 96
    %v8908 = vpop.permute.xlu0 %8907
    %8909 = vrot.lane.b32.xlu0 %v8499, 96
    %v8910 = vpop.permute.xlu0 %8909
    %8911 = vrot.lane.b32.xlu0 %v8502, 96
    %v8912 = vpop.permute.xlu0 %8911
    %8913 = vrot.lane.b32.xlu0 %v8505, 96
    %v8914 = vpop.permute.xlu0 %8913
    %8915 = vrot.lane.b32.xlu0 %v8508, 96
    %v8916 = vpop.permute.xlu0 %8915
    %8917 = vrot.lane.b32.xlu0 %v8511, 96
    %v8918 = vpop.permute.xlu0 %8917
    %8919 = vrot.lane.b32.xlu0 %v8514, 96
    %v8920 = vpop.permute.xlu0 %8919
    %8921 = vrot.lane.b32.xlu0 %v8517, 96
    %v8922 = vpop.permute.xlu0 %8921
    %8923 = vrot.lane.b32.xlu0 %v8520, 96
    %v8924 = vpop.permute.xlu0 %8923
    %8925 = vrot.lane.b32.xlu0 %v8523, 96
    %v8926 = vpop.permute.xlu0 %8925
    %8927 = vrot.lane.b32.xlu0 %v8526, 96
    %v8928 = vpop.permute.xlu0 %8927
    %8929 = vrot.lane.b32.xlu0 %v8529, 96
    %v8930 = vpop.permute.xlu0 %8929
    %8931 = vrot.lane.b32.xlu0 %v8532, 96
    %v8932 = vpop.permute.xlu0 %8931
    %8933 = vrot.lane.b32.xlu0 %v8535, 96
    %v8934 = vpop.permute.xlu0 %8933
    %8935 = vrot.lane.b32.xlu0 %v8538, 96
    %v8936 = vpop.permute.xlu0 %8935
    %8937 = vrot.lane.b32.xlu0 %v8541, 96
    %v8938 = vpop.permute.xlu0 %8937
    %8939 = vrot.lane.b32.xlu0 %v8544, 96
    %v8940 = vpop.permute.xlu0 %8939
    %8941 = vrot.lane.b32.xlu0 %v8547, 96
    %v8942 = vpop.permute.xlu0 %8941
    %8943 = vrot.lane.b32.xlu0 %v8550, 96
    %v8944 = vpop.permute.xlu0 %8943
    %8945 = vrot.lane.b32.xlu0 %v8553, 96
    %v8946 = vpop.permute.xlu0 %8945
    %8947 = vrot.lane.b32.xlu0 %v8556, 96
    %v8948 = vpop.permute.xlu0 %8947
    %8949 = vrot.lane.b32.xlu0 %v8559, 96
    %v8950 = vpop.permute.xlu0 %8949
    %8951 = vrot.lane.b32.xlu0 %v8562, 96
    %v8952 = vpop.permute.xlu0 %8951
    %8953 = vrot.lane.b32.xlu0 %v8565, 96
    %v8954 = vpop.permute.xlu0 %8953
    %8955 = vrot.lane.b32.xlu0 %v8568, 96
    %v8956 = vpop.permute.xlu0 %8955
    %8957 = vrot.lane.b32.xlu0 %v8571, 96
    %v8958 = vpop.permute.xlu0 %8957
    %8959 = vrot.lane.b32.xlu0 %v8574, 96
    %v8960 = vpop.permute.xlu0 %8959
    %8961 = vrot.lane.b32.xlu0 %v8577, 96
    %v8962 = vpop.permute.xlu0 %8961
    %8963 = vrot.lane.b32.xlu0 %v8580, 96
    %v8964 = vpop.permute.xlu0 %8963
    %8965 = vrot.lane.b32.xlu0 %v8583, 96
    %v8966 = vpop.permute.xlu0 %8965
    %8967 = vrot.lane.b32.xlu0 %v8586, 96
    %v8968 = vpop.permute.xlu0 %8967
    %8969 = vrot.lane.b32.xlu0 %v8589, 96
    %v8970 = vpop.permute.xlu0 %8969
    %8971 = vrot.lane.b32.xlu0 %v8592, 96
    %v8972 = vpop.permute.xlu0 %8971
    %8973 = vrot.lane.b32.xlu0 %v8595, 96
    %v8974 = vpop.permute.xlu0 %8973
    %8975 = vrot.lane.b32.xlu0 %v8598, 96
    %v8976 = vpop.permute.xlu0 %8975
    %8977 = vrot.lane.b32.xlu0 %v8601, 96
    %v8978 = vpop.permute.xlu0 %8977
    %8979 = vrot.lane.b32.xlu0 %v8604, 96
    %v8980 = vpop.permute.xlu0 %8979
    %8981 = vrot.lane.b32.xlu0 %v8607, 96
    %v8982 = vpop.permute.xlu0 %8981
    %8983 = vrot.lane.b32.xlu0 %v8610, 96
    %v8984 = vpop.permute.xlu0 %8983
    %8985 = vrot.lane.b32.xlu0 %v8613, 96
    %v8986 = vpop.permute.xlu0 %8985
    %8987 = vrot.lane.b32.xlu0 %v8616, 96
    %v8988 = vpop.permute.xlu0 %8987
    %8989 = vrot.lane.b32.xlu0 %v8619, 96
    %v8990 = vpop.permute.xlu0 %8989
    %v9035 = vadd.f32 %v8851, %v8904
    %v9036 = vadd.f32 %v8852, %v8906
    %v9037 = vadd.f32 %v8853, %v8908
    %v9038 = vadd.f32 %v8854, %v8910
    %v9039 = vadd.f32 %v8855, %v8912
    %v9040 = vadd.f32 %v8856, %v8914
    %v9041 = vadd.f32 %v8857, %v8916
    %v9042 = vadd.f32 %v8858, %v8918
    %v9043 = vadd.f32 %v8859, %v8920
    %v9044 = vadd.f32 %v8860, %v8922
    %v9045 = vadd.f32 %v8861, %v8924
    %v9046 = vadd.f32 %v8862, %v8926
    %v9047 = vadd.f32 %v8863, %v8928
    %v9048 = vadd.f32 %v8864, %v8930
    %v9049 = vadd.f32 %v8865, %v8932
    %v9050 = vadd.f32 %v8866, %v8934
    %v9051 = vadd.f32 %v8867, %v8936
    %v9052 = vadd.f32 %v8868, %v8938
    %v9053 = vadd.f32 %v8869, %v8940
    %v9054 = vadd.f32 %v8870, %v8942
    %v9055 = vadd.f32 %v8871, %v8944
    %v9056 = vadd.f32 %v8872, %v8946
    %v9057 = vadd.f32 %v8873, %v8948
    %v9058 = vadd.f32 %v8874, %v8950
    %v9059 = vadd.f32 %v8875, %v8952
    %v9060 = vadd.f32 %v8876, %v8954
    %v9061 = vadd.f32 %v8877, %v8956
    %v9062 = vadd.f32 %v8878, %v8958
    %v9063 = vadd.f32 %v8879, %v8960
    %v9064 = vadd.f32 %v8880, %v8962
    %v9065 = vadd.f32 %v8881, %v8964
    %v9066 = vadd.f32 %v8882, %v8966
    %v9067 = vadd.f32 %v8883, %v8968
    %v9068 = vadd.f32 %v8884, %v8970
    %v9069 = vadd.f32 %v8885, %v8972
    %v9070 = vadd.f32 %v8886, %v8974
    %v9071 = vadd.f32 %v8887, %v8976
    %v9072 = vadd.f32 %v8888, %v8978
    %v9073 = vadd.f32 %v8889, %v8980
    %v9074 = vadd.f32 %v8890, %v8982
    %v9075 = vadd.f32 %v8891, %v8984
    %v9076 = vadd.f32 %v8892, %v8986
    %v9077 = vadd.f32 %v8893, %v8988
    %v9078 = vadd.f32 %v8894, %v8990
    %v9079 = vadd.f32 %v8895, %v4776
    %v9080 = vadd.f32 %v8896, %v4776
    %v9081 = vadd.f32 %v8897, %v4776
    %v9082 = vadd.f32 %v8898, %v4776
    %v9083 = vld [vmem:[%s14] sm:$0xff]
    %v9084 = vld [vmem:[%s14 + $0x8] sm:$0xff]
    %v9085 = vld [vmem:[%s14 + $0x10] sm:$0xff]
    %v9086 = vld [vmem:[%s14 + $0x18] sm:$0xff]
    %v9087 = vld [vmem:[%s15] sm:$0x1]
    %v9089 = vperm.slane %v9087, 0
    %9139 = vrot.lane.b32.xlu0 %v9035, 96
    %v9140 = vpop.permute.xlu0 %9139
    %9141 = vrot.lane.b32.xlu0 %v9036, 96
    %v9142 = vpop.permute.xlu0 %9141
    %9143 = vrot.lane.b32.xlu0 %v9037, 96
    %v9144 = vpop.permute.xlu0 %9143
    %9145 = vrot.lane.b32.xlu0 %v9038, 96
    %v9146 = vpop.permute.xlu0 %9145
    %9147 = vrot.lane.b32.xlu0 %v9039, 96
    %v9148 = vpop.permute.xlu0 %9147
    %9149 = vrot.lane.b32.xlu0 %v9040, 96
    %v9150 = vpop.permute.xlu0 %9149
    %9151 = vrot.lane.b32.xlu0 %v9041, 96
    %v9152 = vpop.permute.xlu0 %9151
    %9153 = vrot.lane.b32.xlu0 %v9042, 96
    %v9154 = vpop.permute.xlu0 %9153
    %9155 = vrot.lane.b32.xlu0 %v9043, 96
    %v9156 = vpop.permute.xlu0 %9155
    %9157 = vrot.lane.b32.xlu0 %v9044, 96
    %v9158 = vpop.permute.xlu0 %9157
    %9159 = vrot.lane.b32.xlu0 %v9045, 96
    %v9160 = vpop.permute.xlu0 %9159
    %9161 = vrot.lane.b32.xlu0 %v9046, 96
    %v9162 = vpop.permute.xlu0 %9161
    %9163 = vrot.lane.b32.xlu0 %v9047, 96
    %v9164 = vpop.permute.xlu0 %9163
    %9165 = vrot.lane.b32.xlu0 %v9048, 96
    %v9166 = vpop.permute.xlu0 %9165
    %9167 = vrot.lane.b32.xlu0 %v9049, 96
    %v9168 = vpop.permute.xlu0 %9167
    %9169 = vrot.lane.b32.xlu0 %v9050, 96
    %v9170 = vpop.permute.xlu0 %9169
    %9171 = vrot.lane.b32.xlu0 %v9051, 96
    %v9172 = vpop.permute.xlu0 %9171
    %9173 = vrot.lane.b32.xlu0 %v9052, 96
    %v9174 = vpop.permute.xlu0 %9173
    %9175 = vrot.lane.b32.xlu0 %v9053, 96
    %v9176 = vpop.permute.xlu0 %9175
    %9177 = vrot.lane.b32.xlu0 %v9054, 96
    %v9178 = vpop.permute.xlu0 %9177
    %9179 = vrot.lane.b32.xlu0 %v9055, 96
    %v9180 = vpop.permute.xlu0 %9179
    %9181 = vrot.lane.b32.xlu0 %v9056, 96
    %v9182 = vpop.permute.xlu0 %9181
    %9183 = vrot.lane.b32.xlu0 %v9057, 96
    %v9184 = vpop.permute.xlu0 %9183
    %9185 = vrot.lane.b32.xlu0 %v9058, 96
    %v9186 = vpop.permute.xlu0 %9185
    %9187 = vrot.lane.b32.xlu0 %v9059, 96
    %v9188 = vpop.permute.xlu0 %9187
    %9189 = vrot.lane.b32.xlu0 %v9060, 96
    %v9190 = vpop.permute.xlu0 %9189
    %9191 = vrot.lane.b32.xlu0 %v9061, 96
    %v9192 = vpop.permute.xlu0 %9191
    %9193 = vrot.lane.b32.xlu0 %v9062, 96
    %v9194 = vpop.permute.xlu0 %9193
    %9195 = vrot.lane.b32.xlu0 %v9063, 96
    %v9196 = vpop.permute.xlu0 %9195
    %9197 = vrot.lane.b32.xlu0 %v9064, 96
    %v9198 = vpop.permute.xlu0 %9197
    %9199 = vrot.lane.b32.xlu0 %v9065, 96
    %v9200 = vpop.permute.xlu0 %9199
    %9201 = vrot.lane.b32.xlu0 %v9066, 96
    %v9202 = vpop.permute.xlu0 %9201
    %9203 = vrot.lane.b32.xlu0 %v9067, 96
    %v9204 = vpop.permute.xlu0 %9203
    %9205 = vrot.lane.b32.xlu0 %v9068, 96
    %v9206 = vpop.permute.xlu0 %9205
    %9207 = vrot.lane.b32.xlu0 %v9069, 96
    %v9208 = vpop.permute.xlu0 %9207
    %9209 = vrot.lane.b32.xlu0 %v9070, 96
    %v9210 = vpop.permute.xlu0 %9209
    %9211 = vrot.lane.b32.xlu0 %v9071, 96
    %v9212 = vpop.permute.xlu0 %9211
    %9213 = vrot.lane.b32.xlu0 %v9072, 96
    %v9214 = vpop.permute.xlu0 %9213
    %9215 = vrot.lane.b32.xlu0 %v9073, 96
    %v9216 = vpop.permute.xlu0 %9215
    %9217 = vrot.lane.b32.xlu0 %v9074, 96
    %v9218 = vpop.permute.xlu0 %9217
    %9219 = vrot.lane.b32.xlu0 %v9075, 96
    %v9220 = vpop.permute.xlu0 %9219
    %9221 = vrot.lane.b32.xlu0 %v9076, 96
    %v9222 = vpop.permute.xlu0 %9221
    %9223 = vrot.lane.b32.xlu0 %v9077, 96
    %v9224 = vpop.permute.xlu0 %9223
    %9225 = vrot.lane.b32.xlu0 %v9078, 96
    %v9226 = vpop.permute.xlu0 %9225
    %9227 = vrot.lane.b32.xlu0 %v9079, 96
    %v9228 = vpop.permute.xlu0 %9227
    %9229 = vrot.lane.b32.xlu0 %v9080, 96
    %v9230 = vpop.permute.xlu0 %9229
    %9231 = vrot.lane.b32.xlu0 %v9081, 96
    %v9232 = vpop.permute.xlu0 %9231
    %9233 = vrot.lane.b32.xlu0 %v9082, 96
    %v9234 = vpop.permute.xlu0 %9233
    %v9235 = vsel %vm2472, %v9140, 0
    %v9237 = vsel %vm2472, %v9142, 0
    %v9239 = vsel %vm2472, %v9144, 0
    %v9241 = vsel %vm2472, %v9146, 0
    %v9243 = vsel %vm2472, %v9148, 0
    %v9245 = vsel %vm2472, %v9150, 0
    %v9247 = vsel %vm2472, %v9152, 0
    %v9249 = vsel %vm2472, %v9154, 0
    %v9251 = vsel %vm2472, %v9156, 0
    %v9253 = vsel %vm2472, %v9158, 0
    %v9255 = vsel %vm2472, %v9160, 0
    %v9257 = vsel %vm2472, %v9162, 0
    %v9259 = vsel %vm2472, %v9164, 0
    %v9261 = vsel %vm2472, %v9166, 0
    %v9263 = vsel %vm2472, %v9168, 0
    %v9265 = vsel %vm2472, %v9170, 0
    %v9267 = vsel %vm2472, %v9172, 0
    %v9269 = vsel %vm2472, %v9174, 0
    %v9271 = vsel %vm2472, %v9176, 0
    %v9273 = vsel %vm2472, %v9178, 0
    %v9275 = vsel %vm2472, %v9180, 0
    %v9277 = vsel %vm2472, %v9182, 0
    %v9279 = vsel %vm2472, %v9184, 0
    %v9281 = vsel %vm2472, %v9186, 0
    %v9283 = vsel %vm2472, %v9188, 0
    %v9285 = vsel %vm2472, %v9190, 0
    %v9287 = vsel %vm2472, %v9192, 0
    %v9289 = vsel %vm2472, %v9194, 0
    %v9291 = vsel %vm2472, %v9196, 0
    %v9293 = vsel %vm2472, %v9198, 0
    %v9295 = vsel %vm2472, %v9200, 0
    %v9297 = vsel %vm2472, %v9202, 0
    %v9299 = vsel %vm2472, %v9204, 0
    %v9301 = vsel %vm2472, %v9206, 0
    %v9303 = vsel %vm2472, %v9208, 0
    %v9305 = vsel %vm2472, %v9210, 0
    %v9307 = vsel %vm2472, %v9212, 0
    %v9309 = vsel %vm2472, %v9214, 0
    %v9311 = vsel %vm2472, %v9216, 0
    %v9313 = vsel %vm2472, %v9218, 0
    %v9315 = vsel %vm2472, %v9220, 0
    %v9317 = vsel %vm2472, %v9222, 0
    %v9319 = vsel %vm2472, %v9224, 0
    %v9321 = vsel %vm2472, %v9226, 0
    %v9323 = vsel %vm2472, %v9228, 0
    %v9325 = vsel %vm2472, %v9230, 0
    %v9327 = vsel %vm2472, %v9232, 0
    %v9329 = vsel %vm2472, %v9234, 0
    %9331 = vmatpush.msra.mxu0 0.0
    %9332 = vmatpush.msra.mxu0 0.0
    %9333 = vmatpush.msra.mxu0 0.0
    %9334 = vmatpush.msra.mxu0 0.0
    %9335 = vmatpush.msra.mxu0 0.0
    %9336 = vmatpush.msra.mxu0 0.0
    %9337 = vmatpush.msra.mxu0 0.0
    %9338 = vmatpush.msra.mxu0 0.0
    %9339 = vmatpush.msra.mxu0 0.0
    %9340 = vmatpush.msra.mxu0 0.0
    %9341 = vmatpush.msra.mxu0 0.0
    %9342 = vmatpush.msra.mxu0 0.0
    %9343 = vmatpush.msra.mxu0 %v9086
    %9344 = vmatpush.msra.mxu0 %v9085
    %9345 = vmatpush.msra.mxu0 %v9084
    %9346 = vmatpush.msra.mxu0 %v9083
    %9347 = vmatmul.f32.gmra.mxu0 %v9235
    %v9348 = vpop.f32.mrf.mxu0
    %v9349 = vadd.f32 %v9089, %v9348
    %9350 = vmatmul.f32.gmra.mxu0 %v9237
    %v9351 = vpop.f32.mrf.mxu0
    %v9352 = vadd.f32 %v9089, %v9351
    %9353 = vmatmul.f32.gmra.mxu0 %v9239
    %v9354 = vpop.f32.mrf.mxu0
    %v9355 = vadd.f32 %v9089, %v9354
    %9356 = vmatmul.f32.gmra.mxu0 %v9241
    %v9357 = vpop.f32.mrf.mxu0
    %v9358 = vadd.f32 %v9089, %v9357
    %9359 = vmatmul.f32.gmra.mxu0 %v9243
    %v9360 = vpop.f32.mrf.mxu0
    %v9361 = vadd.f32 %v9089, %v9360
    %9362 = vmatmul.f32.gmra.mxu0 %v9245
    %v9363 = vpop.f32.mrf.mxu0
    %v9364 = vadd.f32 %v9089, %v9363
    %9365 = vmatmul.f32.gmra.mxu0 %v9247
    %v9366 = vpop.f32.mrf.mxu0
    %v9367 = vadd.f32 %v9089, %v9366
    %9368 = vmatmul.f32.gmra.mxu0 %v9249
    %v9369 = vpop.f32.mrf.mxu0
    %v9370 = vadd.f32 %v9089, %v9369
    %9371 = vmatmul.f32.gmra.mxu0 %v9251
    %v9372 = vpop.f32.mrf.mxu0
    %v9373 = vadd.f32 %v9089, %v9372
    %9374 = vmatmul.f32.gmra.mxu0 %v9253
    %v9375 = vpop.f32.mrf.mxu0
    %v9376 = vadd.f32 %v9089, %v9375
    %9377 = vmatmul.f32.gmra.mxu0 %v9255
    %v9378 = vpop.f32.mrf.mxu0
    %v9379 = vadd.f32 %v9089, %v9378
    %9380 = vmatmul.f32.gmra.mxu0 %v9257
    %v9381 = vpop.f32.mrf.mxu0
    %v9382 = vadd.f32 %v9089, %v9381
    %9383 = vmatmul.f32.gmra.mxu0 %v9259
    %v9384 = vpop.f32.mrf.mxu0
    %v9385 = vadd.f32 %v9089, %v9384
    %9386 = vmatmul.f32.gmra.mxu0 %v9261
    %v9387 = vpop.f32.mrf.mxu0
    %v9388 = vadd.f32 %v9089, %v9387
    %9389 = vmatmul.f32.gmra.mxu0 %v9263
    %v9390 = vpop.f32.mrf.mxu0
    %v9391 = vadd.f32 %v9089, %v9390
    %9392 = vmatmul.f32.gmra.mxu0 %v9265
    %v9393 = vpop.f32.mrf.mxu0
    %v9394 = vadd.f32 %v9089, %v9393
    %9395 = vmatmul.f32.gmra.mxu0 %v9267
    %v9396 = vpop.f32.mrf.mxu0
    %v9397 = vadd.f32 %v9089, %v9396
    %9398 = vmatmul.f32.gmra.mxu0 %v9269
    %v9399 = vpop.f32.mrf.mxu0
    %v9400 = vadd.f32 %v9089, %v9399
    %9401 = vmatmul.f32.gmra.mxu0 %v9271
    %v9402 = vpop.f32.mrf.mxu0
    %v9403 = vadd.f32 %v9089, %v9402
    %9404 = vmatmul.f32.gmra.mxu0 %v9273
    %v9405 = vpop.f32.mrf.mxu0
    %v9406 = vadd.f32 %v9089, %v9405
    %9407 = vmatmul.f32.gmra.mxu0 %v9275
    %v9408 = vpop.f32.mrf.mxu0
    %v9409 = vadd.f32 %v9089, %v9408
    %9410 = vmatmul.f32.gmra.mxu0 %v9277
    %v9411 = vpop.f32.mrf.mxu0
    %v9412 = vadd.f32 %v9089, %v9411
    %9413 = vmatmul.f32.gmra.mxu0 %v9279
    %v9414 = vpop.f32.mrf.mxu0
    %v9415 = vadd.f32 %v9089, %v9414
    %9416 = vmatmul.f32.gmra.mxu0 %v9281
    %v9417 = vpop.f32.mrf.mxu0
    %v9418 = vadd.f32 %v9089, %v9417
    %9419 = vmatmul.f32.gmra.mxu0 %v9283
    %v9420 = vpop.f32.mrf.mxu0
    %v9421 = vadd.f32 %v9089, %v9420
    %9422 = vmatmul.f32.gmra.mxu0 %v9285
    %v9423 = vpop.f32.mrf.mxu0
    %v9424 = vadd.f32 %v9089, %v9423
    %9425 = vmatmul.f32.gmra.mxu0 %v9287
    %v9426 = vpop.f32.mrf.mxu0
    %v9427 = vadd.f32 %v9089, %v9426
    %9428 = vmatmul.f32.gmra.mxu0 %v9289
    %v9429 = vpop.f32.mrf.mxu0
    %v9430 = vadd.f32 %v9089, %v9429
    %9431 = vmatmul.f32.gmra.mxu0 %v9291
    %v9432 = vpop.f32.mrf.mxu0
    %v9433 = vadd.f32 %v9089, %v9432
    %9434 = vmatmul.f32.gmra.mxu0 %v9293
    %v9435 = vpop.f32.mrf.mxu0
    %v9436 = vadd.f32 %v9089, %v9435
    %9437 = vmatmul.f32.gmra.mxu0 %v9295
    %v9438 = vpop.f32.mrf.mxu0
    %v9439 = vadd.f32 %v9089, %v9438
    %9440 = vmatmul.f32.gmra.mxu0 %v9297
    %v9441 = vpop.f32.mrf.mxu0
    %v9442 = vadd.f32 %v9089, %v9441
    %9443 = vmatmul.f32.gmra.mxu0 %v9299
    %v9444 = vpop.f32.mrf.mxu0
    %v9445 = vadd.f32 %v9089, %v9444
    %9446 = vmatmul.f32.gmra.mxu0 %v9301
    %v9447 = vpop.f32.mrf.mxu0
    %v9448 = vadd.f32 %v9089, %v9447
    %9449 = vmatmul.f32.gmra.mxu0 %v9303
    %v9450 = vpop.f32.mrf.mxu0
    %v9451 = vadd.f32 %v9089, %v9450
    %9452 = vmatmul.f32.gmra.mxu0 %v9305
    %v9453 = vpop.f32.mrf.mxu0
    %v9454 = vadd.f32 %v9089, %v9453
    %9455 = vmatmul.f32.gmra.mxu0 %v9307
    %v9456 = vpop.f32.mrf.mxu0
    %v9457 = vadd.f32 %v9089, %v9456
    %9458 = vmatmul.f32.gmra.mxu0 %v9309
    %v9459 = vpop.f32.mrf.mxu0
    %v9460 = vadd.f32 %v9089, %v9459
    %9461 = vmatmul.f32.gmra.mxu0 %v9311
    %v9462 = vpop.f32.mrf.mxu0
    %v9463 = vadd.f32 %v9089, %v9462
    %9464 = vmatmul.f32.gmra.mxu0 %v9313
    %v9465 = vpop.f32.mrf.mxu0
    %v9466 = vadd.f32 %v9089, %v9465
    %9467 = vmatmul.f32.gmra.mxu0 %v9315
    %v9468 = vpop.f32.mrf.mxu0
    %v9469 = vadd.f32 %v9089, %v9468
    %9470 = vmatmul.f32.gmra.mxu0 %v9317
    %v9471 = vpop.f32.mrf.mxu0
    %v9472 = vadd.f32 %v9089, %v9471
    %9473 = vmatmul.f32.gmra.mxu0 %v9319
    %v9474 = vpop.f32.mrf.mxu0
    %v9475 = vadd.f32 %v9089, %v9474
    %9476 = vmatmul.f32.gmra.mxu0 %v9321
    %v9477 = vpop.f32.mrf.mxu0
    %v9478 = vadd.f32 %v9089, %v9477
    %9479 = vmatmul.f32.gmra.mxu0 %v9323
    %v9480 = vpop.f32.mrf.mxu0
    %v9481 = vadd.f32 %v9089, %v9480
    %9482 = vmatmul.f32.gmra.mxu0 %v9325
    %v9483 = vpop.f32.mrf.mxu0
    %v9484 = vadd.f32 %v9089, %v9483
    %9485 = vmatmul.f32.gmra.mxu0 %v9327
    %v9486 = vpop.f32.mrf.mxu0
    %v9487 = vadd.f32 %v9089, %v9486
    %9488 = vmatmul.f32.gmra.mxu0 %v9329
    %v9489 = vpop.f32.mrf.mxu0
    %v9490 = vadd.f32 %v9089, %v9489
    %9491 = vdwg.mxu0
    %9494 = vrot.lane.b32.xlu0 %v9349, 96
    %v9495 = vpop.permute.xlu0 %9494
    %9496 = vrot.lane.b32.xlu0 %v9352, 96
    %v9497 = vpop.permute.xlu0 %9496
    %9500 = vmatpush.msra.mxu0 0.0
    %9501 = vmatpush.msra.mxu0 0.0
    %9502 = vmatpush.msra.mxu0 0.0
    %9503 = vmatpush.msra.mxu0 0.0
    %9504 = vmatpush.msra.mxu0 0.0
    %9505 = vmatpush.msra.mxu0 0.0
    %9506 = vmatpush.msra.mxu0 0.0
    %9507 = vmatpush.msra.mxu0 0.0
    %9508 = vmatpush.msra.mxu0 0.0
    %9509 = vmatpush.msra.mxu0 0.0
    %9510 = vmatpush.msra.mxu0 0.0
    %9511 = vmatpush.msra.mxu0 0.0
    %9512 = vmatpush.msra.mxu0 0.0
    %9513 = vmatpush.msra.mxu0 0.0
    %9514 = vmatpush.msra.mxu0 %v9497
    %9515 = vmatpush.msra.mxu0 %v9495
    %9516 = vmatmul.f32.gmra.mxu0 %v633
    %v9517 = vpop.f32.mrf.mxu0
    %v9518 = vadd.f32 0.0, %v9517
    %9519 = vmatmul.f32.gmra.mxu0 %v636
    %v9520 = vpop.f32.mrf.mxu0
    %v9521 = vadd.f32 0.0, %v9520
    %9522 = vmatmul.f32.gmra.mxu0 %v639
    %v9523 = vpop.f32.mrf.mxu0
    %v9524 = vadd.f32 0.0, %v9523
    %9525 = vmatmul.f32.gmra.mxu0 %v642
    %v9526 = vpop.f32.mrf.mxu0
    %v9527 = vadd.f32 0.0, %v9526
    %9528 = vmatmul.f32.gmra.mxu0 %v645
    %v9529 = vpop.f32.mrf.mxu0
    %v9530 = vadd.f32 0.0, %v9529
    %9531 = vmatmul.f32.gmra.mxu0 %v648
    %v9532 = vpop.f32.mrf.mxu0
    %v9533 = vadd.f32 0.0, %v9532
    %9534 = vdwg.mxu0
    %9537 = vrot.lane.b32.xlu0 %v9355, 96
    %v9538 = vpop.permute.xlu0 %9537
    %9539 = vrot.lane.b32.xlu0 %v9358, 96
    %v9540 = vpop.permute.xlu0 %9539
    %9543 = vmatpush.msra.mxu0 0.0
    %9544 = vmatpush.msra.mxu0 0.0
    %9545 = vmatpush.msra.mxu0 0.0
    %9546 = vmatpush.msra.mxu0 0.0
    %9547 = vmatpush.msra.mxu0 0.0
    %9548 = vmatpush.msra.mxu0 0.0
    %9549 = vmatpush.msra.mxu0 0.0
    %9550 = vmatpush.msra.mxu0 0.0
    %9551 = vmatpush.msra.mxu0 0.0
    %9552 = vmatpush.msra.mxu0 0.0
    %9553 = vmatpush.msra.mxu0 0.0
    %9554 = vmatpush.msra.mxu0 0.0
    %9555 = vmatpush.msra.mxu0 0.0
    %9556 = vmatpush.msra.mxu0 0.0
    %9557 = vmatpush.msra.mxu0 %v9540
    %9558 = vmatpush.msra.mxu0 %v9538
    %9559 = vmatmul.f32.gmra.mxu0 %v694
    %v9560 = vpop.f32.mrf.mxu0
    %v9561 = vadd.f32 0.0, %v9560
    %9562 = vmatmul.f32.gmra.mxu0 %v697
    %v9563 = vpop.f32.mrf.mxu0
    %v9564 = vadd.f32 0.0, %v9563
    %9565 = vmatmul.f32.gmra.mxu0 %v700
    %v9566 = vpop.f32.mrf.mxu0
    %v9567 = vadd.f32 0.0, %v9566
    %9568 = vmatmul.f32.gmra.mxu0 %v703
    %v9569 = vpop.f32.mrf.mxu0
    %v9570 = vadd.f32 0.0, %v9569
    %9571 = vmatmul.f32.gmra.mxu0 %v706
    %v9572 = vpop.f32.mrf.mxu0
    %v9573 = vadd.f32 0.0, %v9572
    %9574 = vmatmul.f32.gmra.mxu0 %v709
    %v9575 = vpop.f32.mrf.mxu0
    %v9576 = vadd.f32 0.0, %v9575
    %9577 = vdwg.mxu0
    %9580 = vrot.lane.b32.xlu0 %v9361, 96
    %v9581 = vpop.permute.xlu0 %9580
    %9582 = vrot.lane.b32.xlu0 %v9364, 96
    %v9583 = vpop.permute.xlu0 %9582
    %9586 = vmatpush.msra.mxu0 0.0
    %9587 = vmatpush.msra.mxu0 0.0
    %9588 = vmatpush.msra.mxu0 0.0
    %9589 = vmatpush.msra.mxu0 0.0
    %9590 = vmatpush.msra.mxu0 0.0
    %9591 = vmatpush.msra.mxu0 0.0
    %9592 = vmatpush.msra.mxu0 0.0
    %9593 = vmatpush.msra.mxu0 0.0
    %9594 = vmatpush.msra.mxu0 0.0
    %9595 = vmatpush.msra.mxu0 0.0
    %9596 = vmatpush.msra.mxu0 0.0
    %9597 = vmatpush.msra.mxu0 0.0
    %9598 = vmatpush.msra.mxu0 0.0
    %9599 = vmatpush.msra.mxu0 0.0
    %9600 = vmatpush.msra.mxu0 %v9583
    %9601 = vmatpush.msra.mxu0 %v9581
    %9602 = vmatmul.f32.gmra.mxu0 %v755
    %v9603 = vpop.f32.mrf.mxu0
    %v9604 = vadd.f32 0.0, %v9603
    %9605 = vmatmul.f32.gmra.mxu0 %v758
    %v9606 = vpop.f32.mrf.mxu0
    %v9607 = vadd.f32 0.0, %v9606
    %9608 = vmatmul.f32.gmra.mxu0 %v761
    %v9609 = vpop.f32.mrf.mxu0
    %v9610 = vadd.f32 0.0, %v9609
    %9611 = vmatmul.f32.gmra.mxu0 %v764
    %v9612 = vpop.f32.mrf.mxu0
    %v9613 = vadd.f32 0.0, %v9612
    %9614 = vmatmul.f32.gmra.mxu0 %v767
    %v9615 = vpop.f32.mrf.mxu0
    %v9616 = vadd.f32 0.0, %v9615
    %9617 = vmatmul.f32.gmra.mxu0 %v770
    %v9618 = vpop.f32.mrf.mxu0
    %v9619 = vadd.f32 0.0, %v9618
    %9620 = vdwg.mxu0
    %9623 = vrot.lane.b32.xlu0 %v9367, 96
    %v9624 = vpop.permute.xlu0 %9623
    %9625 = vrot.lane.b32.xlu0 %v9370, 96
    %v9626 = vpop.permute.xlu0 %9625
    %9629 = vmatpush.msra.mxu0 0.0
    %9630 = vmatpush.msra.mxu0 0.0
    %9631 = vmatpush.msra.mxu0 0.0
    %9632 = vmatpush.msra.mxu0 0.0
    %9633 = vmatpush.msra.mxu0 0.0
    %9634 = vmatpush.msra.mxu0 0.0
    %9635 = vmatpush.msra.mxu0 0.0
    %9636 = vmatpush.msra.mxu0 0.0
    %9637 = vmatpush.msra.mxu0 0.0
    %9638 = vmatpush.msra.mxu0 0.0
    %9639 = vmatpush.msra.mxu0 0.0
    %9640 = vmatpush.msra.mxu0 0.0
    %9641 = vmatpush.msra.mxu0 0.0
    %9642 = vmatpush.msra.mxu0 0.0
    %9643 = vmatpush.msra.mxu0 %v9626
    %9644 = vmatpush.msra.mxu0 %v9624
    %9645 = vmatmul.f32.gmra.mxu0 %v816
    %v9646 = vpop.f32.mrf.mxu0
    %v9647 = vadd.f32 0.0, %v9646
    %9648 = vmatmul.f32.gmra.mxu0 %v819
    %v9649 = vpop.f32.mrf.mxu0
    %v9650 = vadd.f32 0.0, %v9649
    %9651 = vmatmul.f32.gmra.mxu0 %v822
    %v9652 = vpop.f32.mrf.mxu0
    %v9653 = vadd.f32 0.0, %v9652
    %9654 = vmatmul.f32.gmra.mxu0 %v825
    %v9655 = vpop.f32.mrf.mxu0
    %v9656 = vadd.f32 0.0, %v9655
    %9657 = vmatmul.f32.gmra.mxu0 %v828
    %v9658 = vpop.f32.mrf.mxu0
    %v9659 = vadd.f32 0.0, %v9658
    %9660 = vmatmul.f32.gmra.mxu0 %v831
    %v9661 = vpop.f32.mrf.mxu0
    %v9662 = vadd.f32 0.0, %v9661
    %9663 = vdwg.mxu0
    %9666 = vrot.lane.b32.xlu0 %v9373, 96
    %v9667 = vpop.permute.xlu0 %9666
    %9668 = vrot.lane.b32.xlu0 %v9376, 96
    %v9669 = vpop.permute.xlu0 %9668
    %9672 = vmatpush.msra.mxu0 0.0
    %9673 = vmatpush.msra.mxu0 0.0
    %9674 = vmatpush.msra.mxu0 0.0
    %9675 = vmatpush.msra.mxu0 0.0
    %9676 = vmatpush.msra.mxu0 0.0
    %9677 = vmatpush.msra.mxu0 0.0
    %9678 = vmatpush.msra.mxu0 0.0
    %9679 = vmatpush.msra.mxu0 0.0
    %9680 = vmatpush.msra.mxu0 0.0
    %9681 = vmatpush.msra.mxu0 0.0
    %9682 = vmatpush.msra.mxu0 0.0
    %9683 = vmatpush.msra.mxu0 0.0
    %9684 = vmatpush.msra.mxu0 0.0
    %9685 = vmatpush.msra.mxu0 0.0
    %9686 = vmatpush.msra.mxu0 %v9669
    %9687 = vmatpush.msra.mxu0 %v9667
    %9688 = vmatmul.f32.gmra.mxu0 %v877
    %v9689 = vpop.f32.mrf.mxu0
    %v9690 = vadd.f32 0.0, %v9689
    %9691 = vmatmul.f32.gmra.mxu0 %v880
    %v9692 = vpop.f32.mrf.mxu0
    %v9693 = vadd.f32 0.0, %v9692
    %9694 = vmatmul.f32.gmra.mxu0 %v883
    %v9695 = vpop.f32.mrf.mxu0
    %v9696 = vadd.f32 0.0, %v9695
    %9697 = vmatmul.f32.gmra.mxu0 %v886
    %v9698 = vpop.f32.mrf.mxu0
    %v9699 = vadd.f32 0.0, %v9698
    %9700 = vmatmul.f32.gmra.mxu0 %v889
    %v9701 = vpop.f32.mrf.mxu0
    %v9702 = vadd.f32 0.0, %v9701
    %9703 = vmatmul.f32.gmra.mxu0 %v892
    %v9704 = vpop.f32.mrf.mxu0
    %v9705 = vadd.f32 0.0, %v9704
    %9706 = vdwg.mxu0
    %9709 = vrot.lane.b32.xlu0 %v9379, 96
    %v9710 = vpop.permute.xlu0 %9709
    %9711 = vrot.lane.b32.xlu0 %v9382, 96
    %v9712 = vpop.permute.xlu0 %9711
    %9715 = vmatpush.msra.mxu0 0.0
    %9716 = vmatpush.msra.mxu0 0.0
    %9717 = vmatpush.msra.mxu0 0.0
    %9718 = vmatpush.msra.mxu0 0.0
    %9719 = vmatpush.msra.mxu0 0.0
    %9720 = vmatpush.msra.mxu0 0.0
    %9721 = vmatpush.msra.mxu0 0.0
    %9722 = vmatpush.msra.mxu0 0.0
    %9723 = vmatpush.msra.mxu0 0.0
    %9724 = vmatpush.msra.mxu0 0.0
    %9725 = vmatpush.msra.mxu0 0.0
    %9726 = vmatpush.msra.mxu0 0.0
    %9727 = vmatpush.msra.mxu0 0.0
    %9728 = vmatpush.msra.mxu0 0.0
    %9729 = vmatpush.msra.mxu0 %v9712
    %9730 = vmatpush.msra.mxu0 %v9710
    %9731 = vmatmul.f32.gmra.mxu0 %v938
    %v9732 = vpop.f32.mrf.mxu0
    %v9733 = vadd.f32 0.0, %v9732
    %9734 = vmatmul.f32.gmra.mxu0 %v941
    %v9735 = vpop.f32.mrf.mxu0
    %v9736 = vadd.f32 0.0, %v9735
    %9737 = vmatmul.f32.gmra.mxu0 %v944
    %v9738 = vpop.f32.mrf.mxu0
    %v9739 = vadd.f32 0.0, %v9738
    %9740 = vmatmul.f32.gmra.mxu0 %v947
    %v9741 = vpop.f32.mrf.mxu0
    %v9742 = vadd.f32 0.0, %v9741
    %9743 = vmatmul.f32.gmra.mxu0 %v950
    %v9744 = vpop.f32.mrf.mxu0
    %v9745 = vadd.f32 0.0, %v9744
    %9746 = vmatmul.f32.gmra.mxu0 %v953
    %v9747 = vpop.f32.mrf.mxu0
    %v9748 = vadd.f32 0.0, %v9747
    %9749 = vdwg.mxu0
    %9752 = vrot.lane.b32.xlu0 %v9385, 96
    %v9753 = vpop.permute.xlu0 %9752
    %9754 = vrot.lane.b32.xlu0 %v9388, 96
    %v9755 = vpop.permute.xlu0 %9754
    %9758 = vmatpush.msra.mxu0 0.0
    %9759 = vmatpush.msra.mxu0 0.0
    %9760 = vmatpush.msra.mxu0 0.0
    %9761 = vmatpush.msra.mxu0 0.0
    %9762 = vmatpush.msra.mxu0 0.0
    %9763 = vmatpush.msra.mxu0 0.0
    %9764 = vmatpush.msra.mxu0 0.0
    %9765 = vmatpush.msra.mxu0 0.0
    %9766 = vmatpush.msra.mxu0 0.0
    %9767 = vmatpush.msra.mxu0 0.0
    %9768 = vmatpush.msra.mxu0 0.0
    %9769 = vmatpush.msra.mxu0 0.0
    %9770 = vmatpush.msra.mxu0 0.0
    %9771 = vmatpush.msra.mxu0 0.0
    %9772 = vmatpush.msra.mxu0 %v9755
    %9773 = vmatpush.msra.mxu0 %v9753
    %9774 = vmatmul.f32.gmra.mxu0 %v999
    %v9775 = vpop.f32.mrf.mxu0
    %v9776 = vadd.f32 0.0, %v9775
    %9777 = vmatmul.f32.gmra.mxu0 %v1002
    %v9778 = vpop.f32.mrf.mxu0
    %v9779 = vadd.f32 0.0, %v9778
    %9780 = vmatmul.f32.gmra.mxu0 %v1005
    %v9781 = vpop.f32.mrf.mxu0
    %v9782 = vadd.f32 0.0, %v9781
    %9783 = vmatmul.f32.gmra.mxu0 %v1008
    %v9784 = vpop.f32.mrf.mxu0
    %v9785 = vadd.f32 0.0, %v9784
    %9786 = vmatmul.f32.gmra.mxu0 %v1011
    %v9787 = vpop.f32.mrf.mxu0
    %v9788 = vadd.f32 0.0, %v9787
    %9789 = vmatmul.f32.gmra.mxu0 %v1014
    %v9790 = vpop.f32.mrf.mxu0
    %v9791 = vadd.f32 0.0, %v9790
    %9792 = vdwg.mxu0
    %9795 = vrot.lane.b32.xlu0 %v9391, 96
    %v9796 = vpop.permute.xlu0 %9795
    %9797 = vrot.lane.b32.xlu0 %v9394, 96
    %v9798 = vpop.permute.xlu0 %9797
    %9801 = vmatpush.msra.mxu0 0.0
    %9802 = vmatpush.msra.mxu0 0.0
    %9803 = vmatpush.msra.mxu0 0.0
    %9804 = vmatpush.msra.mxu0 0.0
    %9805 = vmatpush.msra.mxu0 0.0
    %9806 = vmatpush.msra.mxu0 0.0
    %9807 = vmatpush.msra.mxu0 0.0
    %9808 = vmatpush.msra.mxu0 0.0
    %9809 = vmatpush.msra.mxu0 0.0
    %9810 = vmatpush.msra.mxu0 0.0
    %9811 = vmatpush.msra.mxu0 0.0
    %9812 = vmatpush.msra.mxu0 0.0
    %9813 = vmatpush.msra.mxu0 0.0
    %9814 = vmatpush.msra.mxu0 0.0
    %9815 = vmatpush.msra.mxu0 %v9798
    %9816 = vmatpush.msra.mxu0 %v9796
    %9817 = vmatmul.f32.gmra.mxu0 %v1060
    %v9818 = vpop.f32.mrf.mxu0
    %v9819 = vadd.f32 0.0, %v9818
    %9820 = vmatmul.f32.gmra.mxu0 %v1063
    %v9821 = vpop.f32.mrf.mxu0
    %v9822 = vadd.f32 0.0, %v9821
    %9823 = vmatmul.f32.gmra.mxu0 %v1066
    %v9824 = vpop.f32.mrf.mxu0
    %v9825 = vadd.f32 0.0, %v9824
    %9826 = vmatmul.f32.gmra.mxu0 %v1069
    %v9827 = vpop.f32.mrf.mxu0
    %v9828 = vadd.f32 0.0, %v9827
    %9829 = vmatmul.f32.gmra.mxu0 %v1072
    %v9830 = vpop.f32.mrf.mxu0
    %v9831 = vadd.f32 0.0, %v9830
    %9832 = vmatmul.f32.gmra.mxu0 %v1075
    %v9833 = vpop.f32.mrf.mxu0
    %v9834 = vadd.f32 0.0, %v9833
    %9835 = vdwg.mxu0
    %9838 = vrot.lane.b32.xlu0 %v9397, 96
    %v9839 = vpop.permute.xlu0 %9838
    %9840 = vrot.lane.b32.xlu0 %v9400, 96
    %v9841 = vpop.permute.xlu0 %9840
    %9844 = vmatpush.msra.mxu0 0.0
    %9845 = vmatpush.msra.mxu0 0.0
    %9846 = vmatpush.msra.mxu0 0.0
    %9847 = vmatpush.msra.mxu0 0.0
    %9848 = vmatpush.msra.mxu0 0.0
    %9849 = vmatpush.msra.mxu0 0.0
    %9850 = vmatpush.msra.mxu0 0.0
    %9851 = vmatpush.msra.mxu0 0.0
    %9852 = vmatpush.msra.mxu0 0.0
    %9853 = vmatpush.msra.mxu0 0.0
    %9854 = vmatpush.msra.mxu0 0.0
    %9855 = vmatpush.msra.mxu0 0.0
    %9856 = vmatpush.msra.mxu0 0.0
    %9857 = vmatpush.msra.mxu0 0.0
    %9858 = vmatpush.msra.mxu0 %v9841
    %9859 = vmatpush.msra.mxu0 %v9839
    %9860 = vmatmul.f32.gmra.mxu0 %v1121
    %v9861 = vpop.f32.mrf.mxu0
    %v9862 = vadd.f32 0.0, %v9861
    %9863 = vmatmul.f32.gmra.mxu0 %v1124
    %v9864 = vpop.f32.mrf.mxu0
    %v9865 = vadd.f32 0.0, %v9864
    %9866 = vmatmul.f32.gmra.mxu0 %v1127
    %v9867 = vpop.f32.mrf.mxu0
    %v9868 = vadd.f32 0.0, %v9867
    %9869 = vmatmul.f32.gmra.mxu0 %v1130
    %v9870 = vpop.f32.mrf.mxu0
    %v9871 = vadd.f32 0.0, %v9870
    %9872 = vmatmul.f32.gmra.mxu0 %v1133
    %v9873 = vpop.f32.mrf.mxu0
    %v9874 = vadd.f32 0.0, %v9873
    %9875 = vmatmul.f32.gmra.mxu0 %v1136
    %v9876 = vpop.f32.mrf.mxu0
    %v9877 = vadd.f32 0.0, %v9876
    %9878 = vdwg.mxu0
    %9881 = vrot.lane.b32.xlu0 %v9403, 96
    %v9882 = vpop.permute.xlu0 %9881
    %9883 = vrot.lane.b32.xlu0 %v9406, 96
    %v9884 = vpop.permute.xlu0 %9883
    %9887 = vmatpush.msra.mxu0 0.0
    %9888 = vmatpush.msra.mxu0 0.0
    %9889 = vmatpush.msra.mxu0 0.0
    %9890 = vmatpush.msra.mxu0 0.0
    %9891 = vmatpush.msra.mxu0 0.0
    %9892 = vmatpush.msra.mxu0 0.0
    %9893 = vmatpush.msra.mxu0 0.0
    %9894 = vmatpush.msra.mxu0 0.0
    %9895 = vmatpush.msra.mxu0 0.0
    %9896 = vmatpush.msra.mxu0 0.0
    %9897 = vmatpush.msra.mxu0 0.0
    %9898 = vmatpush.msra.mxu0 0.0
    %9899 = vmatpush.msra.mxu0 0.0
    %9900 = vmatpush.msra.mxu0 0.0
    %9901 = vmatpush.msra.mxu0 %v9884
    %9902 = vmatpush.msra.mxu0 %v9882
    %9903 = vmatmul.f32.gmra.mxu0 %v1182
    %v9904 = vpop.f32.mrf.mxu0
    %v9905 = vadd.f32 0.0, %v9904
    %9906 = vmatmul.f32.gmra.mxu0 %v1185
    %v9907 = vpop.f32.mrf.mxu0
    %v9908 = vadd.f32 0.0, %v9907
    %9909 = vmatmul.f32.gmra.mxu0 %v1188
    %v9910 = vpop.f32.mrf.mxu0
    %v9911 = vadd.f32 0.0, %v9910
    %9912 = vmatmul.f32.gmra.mxu0 %v1191
    %v9913 = vpop.f32.mrf.mxu0
    %v9914 = vadd.f32 0.0, %v9913
    %9915 = vmatmul.f32.gmra.mxu0 %v1194
    %v9916 = vpop.f32.mrf.mxu0
    %v9917 = vadd.f32 0.0, %v9916
    %9918 = vmatmul.f32.gmra.mxu0 %v1197
    %v9919 = vpop.f32.mrf.mxu0
    %v9920 = vadd.f32 0.0, %v9919
    %9921 = vdwg.mxu0
    %9924 = vrot.lane.b32.xlu0 %v9409, 96
    %v9925 = vpop.permute.xlu0 %9924
    %9926 = vrot.lane.b32.xlu0 %v9412, 96
    %v9927 = vpop.permute.xlu0 %9926
    %9930 = vmatpush.msra.mxu0 0.0
    %9931 = vmatpush.msra.mxu0 0.0
    %9932 = vmatpush.msra.mxu0 0.0
    %9933 = vmatpush.msra.mxu0 0.0
    %9934 = vmatpush.msra.mxu0 0.0
    %9935 = vmatpush.msra.mxu0 0.0
    %9936 = vmatpush.msra.mxu0 0.0
    %9937 = vmatpush.msra.mxu0 0.0
    %9938 = vmatpush.msra.mxu0 0.0
    %9939 = vmatpush.msra.mxu0 0.0
    %9940 = vmatpush.msra.mxu0 0.0
    %9941 = vmatpush.msra.mxu0 0.0
    %9942 = vmatpush.msra.mxu0 0.0
    %9943 = vmatpush.msra.mxu0 0.0
    %9944 = vmatpush.msra.mxu0 %v9927
    %9945 = vmatpush.msra.mxu0 %v9925
    %9946 = vmatmul.f32.gmra.mxu0 %v1243
    %v9947 = vpop.f32.mrf.mxu0
    %v9948 = vadd.f32 0.0, %v9947
    %9949 = vmatmul.f32.gmra.mxu0 %v1246
    %v9950 = vpop.f32.mrf.mxu0
    %v9951 = vadd.f32 0.0, %v9950
    %9952 = vmatmul.f32.gmra.mxu0 %v1249
    %v9953 = vpop.f32.mrf.mxu0
    %v9954 = vadd.f32 0.0, %v9953
    %9955 = vmatmul.f32.gmra.mxu0 %v1252
    %v9956 = vpop.f32.mrf.mxu0
    %v9957 = vadd.f32 0.0, %v9956
    %9958 = vmatmul.f32.gmra.mxu0 %v1255
    %v9959 = vpop.f32.mrf.mxu0
    %v9960 = vadd.f32 0.0, %v9959
    %9961 = vmatmul.f32.gmra.mxu0 %v1258
    %v9962 = vpop.f32.mrf.mxu0
    %v9963 = vadd.f32 0.0, %v9962
    %9964 = vdwg.mxu0
    %9967 = vrot.lane.b32.xlu0 %v9415, 96
    %v9968 = vpop.permute.xlu0 %9967
    %9969 = vrot.lane.b32.xlu0 %v9418, 96
    %v9970 = vpop.permute.xlu0 %9969
    %9973 = vmatpush.msra.mxu0 0.0
    %9974 = vmatpush.msra.mxu0 0.0
    %9975 = vmatpush.msra.mxu0 0.0
    %9976 = vmatpush.msra.mxu0 0.0
    %9977 = vmatpush.msra.mxu0 0.0
    %9978 = vmatpush.msra.mxu0 0.0
    %9979 = vmatpush.msra.mxu0 0.0
    %9980 = vmatpush.msra.mxu0 0.0
    %9981 = vmatpush.msra.mxu0 0.0
    %9982 = vmatpush.msra.mxu0 0.0
    %9983 = vmatpush.msra.mxu0 0.0
    %9984 = vmatpush.msra.mxu0 0.0
    %9985 = vmatpush.msra.mxu0 0.0
    %9986 = vmatpush.msra.mxu0 0.0
    %9987 = vmatpush.msra.mxu0 %v9970
    %9988 = vmatpush.msra.mxu0 %v9968
    %9989 = vmatmul.f32.gmra.mxu0 %v1304
    %v9990 = vpop.f32.mrf.mxu0
    %v9991 = vadd.f32 0.0, %v9990
    %9992 = vmatmul.f32.gmra.mxu0 %v1307
    %v9993 = vpop.f32.mrf.mxu0
    %v9994 = vadd.f32 0.0, %v9993
    %9995 = vmatmul.f32.gmra.mxu0 %v1310
    %v9996 = vpop.f32.mrf.mxu0
    %v9997 = vadd.f32 0.0, %v9996
    %9998 = vmatmul.f32.gmra.mxu0 %v1313
    %v9999 = vpop.f32.mrf.mxu0
    %v10000 = vadd.f32 0.0, %v9999
    %10001 = vmatmul.f32.gmra.mxu0 %v1316
    %v10002 = vpop.f32.mrf.mxu0
    %v10003 = vadd.f32 0.0, %v10002
    %10004 = vmatmul.f32.gmra.mxu0 %v1319
    %v10005 = vpop.f32.mrf.mxu0
    %v10006 = vadd.f32 0.0, %v10005
    %10007 = vdwg.mxu0
    %10010 = vrot.lane.b32.xlu0 %v9421, 96
    %v10011 = vpop.permute.xlu0 %10010
    %10012 = vrot.lane.b32.xlu0 %v9424, 96
    %v10013 = vpop.permute.xlu0 %10012
    %10016 = vmatpush.msra.mxu0 0.0
    %10017 = vmatpush.msra.mxu0 0.0
    %10018 = vmatpush.msra.mxu0 0.0
    %10019 = vmatpush.msra.mxu0 0.0
    %10020 = vmatpush.msra.mxu0 0.0
    %10021 = vmatpush.msra.mxu0 0.0
    %10022 = vmatpush.msra.mxu0 0.0
    %10023 = vmatpush.msra.mxu0 0.0
    %10024 = vmatpush.msra.mxu0 0.0
    %10025 = vmatpush.msra.mxu0 0.0
    %10026 = vmatpush.msra.mxu0 0.0
    %10027 = vmatpush.msra.mxu0 0.0
    %10028 = vmatpush.msra.mxu0 0.0
    %10029 = vmatpush.msra.mxu0 0.0
    %10030 = vmatpush.msra.mxu0 %v10013
    %10031 = vmatpush.msra.mxu0 %v10011
    %10032 = vmatmul.f32.gmra.mxu0 %v1365
    %v10033 = vpop.f32.mrf.mxu0
    %v10034 = vadd.f32 0.0, %v10033
    %10035 = vmatmul.f32.gmra.mxu0 %v1368
    %v10036 = vpop.f32.mrf.mxu0
    %v10037 = vadd.f32 0.0, %v10036
    %10038 = vmatmul.f32.gmra.mxu0 %v1371
    %v10039 = vpop.f32.mrf.mxu0
    %v10040 = vadd.f32 0.0, %v10039
    %10041 = vmatmul.f32.gmra.mxu0 %v1374
    %v10042 = vpop.f32.mrf.mxu0
    %v10043 = vadd.f32 0.0, %v10042
    %10044 = vmatmul.f32.gmra.mxu0 %v1377
    %v10045 = vpop.f32.mrf.mxu0
    %v10046 = vadd.f32 0.0, %v10045
    %10047 = vmatmul.f32.gmra.mxu0 %v1380
    %v10048 = vpop.f32.mrf.mxu0
    %v10049 = vadd.f32 0.0, %v10048
    %10050 = vdwg.mxu0
    %10053 = vrot.lane.b32.xlu0 %v9427, 96
    %v10054 = vpop.permute.xlu0 %10053
    %10055 = vrot.lane.b32.xlu0 %v9430, 96
    %v10056 = vpop.permute.xlu0 %10055
    %10059 = vmatpush.msra.mxu0 0.0
    %10060 = vmatpush.msra.mxu0 0.0
    %10061 = vmatpush.msra.mxu0 0.0
    %10062 = vmatpush.msra.mxu0 0.0
    %10063 = vmatpush.msra.mxu0 0.0
    %10064 = vmatpush.msra.mxu0 0.0
    %10065 = vmatpush.msra.mxu0 0.0
    %10066 = vmatpush.msra.mxu0 0.0
    %10067 = vmatpush.msra.mxu0 0.0
    %10068 = vmatpush.msra.mxu0 0.0
    %10069 = vmatpush.msra.mxu0 0.0
    %10070 = vmatpush.msra.mxu0 0.0
    %10071 = vmatpush.msra.mxu0 0.0
    %10072 = vmatpush.msra.mxu0 0.0
    %10073 = vmatpush.msra.mxu0 %v10056
    %10074 = vmatpush.msra.mxu0 %v10054
    %10075 = vmatmul.f32.gmra.mxu0 %v1426
    %v10076 = vpop.f32.mrf.mxu0
    %v10077 = vadd.f32 0.0, %v10076
    %10078 = vmatmul.f32.gmra.mxu0 %v1429
    %v10079 = vpop.f32.mrf.mxu0
    %v10080 = vadd.f32 0.0, %v10079
    %10081 = vmatmul.f32.gmra.mxu0 %v1432
    %v10082 = vpop.f32.mrf.mxu0
    %v10083 = vadd.f32 0.0, %v10082
    %10084 = vmatmul.f32.gmra.mxu0 %v1435
    %v10085 = vpop.f32.mrf.mxu0
    %v10086 = vadd.f32 0.0, %v10085
    %10087 = vmatmul.f32.gmra.mxu0 %v1438
    %v10088 = vpop.f32.mrf.mxu0
    %v10089 = vadd.f32 0.0, %v10088
    %10090 = vmatmul.f32.gmra.mxu0 %v1441
    %v10091 = vpop.f32.mrf.mxu0
    %v10092 = vadd.f32 0.0, %v10091
    %10093 = vdwg.mxu0
    %10096 = vrot.lane.b32.xlu0 %v9433, 96
    %v10097 = vpop.permute.xlu0 %10096
    %10098 = vrot.lane.b32.xlu0 %v9436, 96
    %v10099 = vpop.permute.xlu0 %10098
    %10102 = vmatpush.msra.mxu0 0.0
    %10103 = vmatpush.msra.mxu0 0.0
    %10104 = vmatpush.msra.mxu0 0.0
    %10105 = vmatpush.msra.mxu0 0.0
    %10106 = vmatpush.msra.mxu0 0.0
    %10107 = vmatpush.msra.mxu0 0.0
    %10108 = vmatpush.msra.mxu0 0.0
    %10109 = vmatpush.msra.mxu0 0.0
    %10110 = vmatpush.msra.mxu0 0.0
    %10111 = vmatpush.msra.mxu0 0.0
    %10112 = vmatpush.msra.mxu0 0.0
    %10113 = vmatpush.msra.mxu0 0.0
    %10114 = vmatpush.msra.mxu0 0.0
    %10115 = vmatpush.msra.mxu0 0.0
    %10116 = vmatpush.msra.mxu0 %v10099
    %10117 = vmatpush.msra.mxu0 %v10097
    %10118 = vmatmul.f32.gmra.mxu0 %v1487
    %v10119 = vpop.f32.mrf.mxu0
    %v10120 = vadd.f32 0.0, %v10119
    %10121 = vmatmul.f32.gmra.mxu0 %v1490
    %v10122 = vpop.f32.mrf.mxu0
    %v10123 = vadd.f32 0.0, %v10122
    %10124 = vmatmul.f32.gmra.mxu0 %v1493
    %v10125 = vpop.f32.mrf.mxu0
    %v10126 = vadd.f32 0.0, %v10125
    %10127 = vmatmul.f32.gmra.mxu0 %v1496
    %v10128 = vpop.f32.mrf.mxu0
    %v10129 = vadd.f32 0.0, %v10128
    %10130 = vmatmul.f32.gmra.mxu0 %v1499
    %v10131 = vpop.f32.mrf.mxu0
    %v10132 = vadd.f32 0.0, %v10131
    %10133 = vmatmul.f32.gmra.mxu0 %v1502
    %v10134 = vpop.f32.mrf.mxu0
    %v10135 = vadd.f32 0.0, %v10134
    %10136 = vdwg.mxu0
    %10139 = vrot.lane.b32.xlu0 %v9439, 96
    %v10140 = vpop.permute.xlu0 %10139
    %10141 = vrot.lane.b32.xlu0 %v9442, 96
    %v10142 = vpop.permute.xlu0 %10141
    %10145 = vmatpush.msra.mxu0 0.0
    %10146 = vmatpush.msra.mxu0 0.0
    %10147 = vmatpush.msra.mxu0 0.0
    %10148 = vmatpush.msra.mxu0 0.0
    %10149 = vmatpush.msra.mxu0 0.0
    %10150 = vmatpush.msra.mxu0 0.0
    %10151 = vmatpush.msra.mxu0 0.0
    %10152 = vmatpush.msra.mxu0 0.0
    %10153 = vmatpush.msra.mxu0 0.0
    %10154 = vmatpush.msra.mxu0 0.0
    %10155 = vmatpush.msra.mxu0 0.0
    %10156 = vmatpush.msra.mxu0 0.0
    %10157 = vmatpush.msra.mxu0 0.0
    %10158 = vmatpush.msra.mxu0 0.0
    %10159 = vmatpush.msra.mxu0 %v10142
    %10160 = vmatpush.msra.mxu0 %v10140
    %10161 = vmatmul.f32.gmra.mxu0 %v1548
    %v10162 = vpop.f32.mrf.mxu0
    %v10163 = vadd.f32 0.0, %v10162
    %10164 = vmatmul.f32.gmra.mxu0 %v1551
    %v10165 = vpop.f32.mrf.mxu0
    %v10166 = vadd.f32 0.0, %v10165
    %10167 = vmatmul.f32.gmra.mxu0 %v1554
    %v10168 = vpop.f32.mrf.mxu0
    %v10169 = vadd.f32 0.0, %v10168
    %10170 = vmatmul.f32.gmra.mxu0 %v1557
    %v10171 = vpop.f32.mrf.mxu0
    %v10172 = vadd.f32 0.0, %v10171
    %10173 = vmatmul.f32.gmra.mxu0 %v1560
    %v10174 = vpop.f32.mrf.mxu0
    %v10175 = vadd.f32 0.0, %v10174
    %10176 = vmatmul.f32.gmra.mxu0 %v1563
    %v10177 = vpop.f32.mrf.mxu0
    %v10178 = vadd.f32 0.0, %v10177
    %10179 = vdwg.mxu0
    %10182 = vrot.lane.b32.xlu0 %v9445, 96
    %v10183 = vpop.permute.xlu0 %10182
    %10184 = vrot.lane.b32.xlu0 %v9448, 96
    %v10185 = vpop.permute.xlu0 %10184
    %10188 = vmatpush.msra.mxu0 0.0
    %10189 = vmatpush.msra.mxu0 0.0
    %10190 = vmatpush.msra.mxu0 0.0
    %10191 = vmatpush.msra.mxu0 0.0
    %10192 = vmatpush.msra.mxu0 0.0
    %10193 = vmatpush.msra.mxu0 0.0
    %10194 = vmatpush.msra.mxu0 0.0
    %10195 = vmatpush.msra.mxu0 0.0
    %10196 = vmatpush.msra.mxu0 0.0
    %10197 = vmatpush.msra.mxu0 0.0
    %10198 = vmatpush.msra.mxu0 0.0
    %10199 = vmatpush.msra.mxu0 0.0
    %10200 = vmatpush.msra.mxu0 0.0
    %10201 = vmatpush.msra.mxu0 0.0
    %10202 = vmatpush.msra.mxu0 %v10185
    %10203 = vmatpush.msra.mxu0 %v10183
    %10204 = vmatmul.f32.gmra.mxu0 %v1609
    %v10205 = vpop.f32.mrf.mxu0
    %v10206 = vadd.f32 0.0, %v10205
    %10207 = vmatmul.f32.gmra.mxu0 %v1612
    %v10208 = vpop.f32.mrf.mxu0
    %v10209 = vadd.f32 0.0, %v10208
    %10210 = vmatmul.f32.gmra.mxu0 %v1615
    %v10211 = vpop.f32.mrf.mxu0
    %v10212 = vadd.f32 0.0, %v10211
    %10213 = vmatmul.f32.gmra.mxu0 %v1618
    %v10214 = vpop.f32.mrf.mxu0
    %v10215 = vadd.f32 0.0, %v10214
    %10216 = vmatmul.f32.gmra.mxu0 %v1621
    %v10217 = vpop.f32.mrf.mxu0
    %v10218 = vadd.f32 0.0, %v10217
    %10219 = vmatmul.f32.gmra.mxu0 %v1624
    %v10220 = vpop.f32.mrf.mxu0
    %v10221 = vadd.f32 0.0, %v10220
    %10222 = vdwg.mxu0
    %10225 = vrot.lane.b32.xlu0 %v9451, 96
    %v10226 = vpop.permute.xlu0 %10225
    %10227 = vrot.lane.b32.xlu0 %v9454, 96
    %v10228 = vpop.permute.xlu0 %10227
    %10231 = vmatpush.msra.mxu0 0.0
    %10232 = vmatpush.msra.mxu0 0.0
    %10233 = vmatpush.msra.mxu0 0.0
    %10234 = vmatpush.msra.mxu0 0.0
    %10235 = vmatpush.msra.mxu0 0.0
    %10236 = vmatpush.msra.mxu0 0.0
    %10237 = vmatpush.msra.mxu0 0.0
    %10238 = vmatpush.msra.mxu0 0.0
    %10239 = vmatpush.msra.mxu0 0.0
    %10240 = vmatpush.msra.mxu0 0.0
    %10241 = vmatpush.msra.mxu0 0.0
    %10242 = vmatpush.msra.mxu0 0.0
    %10243 = vmatpush.msra.mxu0 0.0
    %10244 = vmatpush.msra.mxu0 0.0
    %10245 = vmatpush.msra.mxu0 %v10228
    %10246 = vmatpush.msra.mxu0 %v10226
    %10247 = vmatmul.f32.gmra.mxu0 %v1670
    %v10248 = vpop.f32.mrf.mxu0
    %v10249 = vadd.f32 0.0, %v10248
    %10250 = vmatmul.f32.gmra.mxu0 %v1673
    %v10251 = vpop.f32.mrf.mxu0
    %v10252 = vadd.f32 0.0, %v10251
    %10253 = vmatmul.f32.gmra.mxu0 %v1676
    %v10254 = vpop.f32.mrf.mxu0
    %v10255 = vadd.f32 0.0, %v10254
    %10256 = vmatmul.f32.gmra.mxu0 %v1679
    %v10257 = vpop.f32.mrf.mxu0
    %v10258 = vadd.f32 0.0, %v10257
    %10259 = vmatmul.f32.gmra.mxu0 %v1682
    %v10260 = vpop.f32.mrf.mxu0
    %v10261 = vadd.f32 0.0, %v10260
    %10262 = vmatmul.f32.gmra.mxu0 %v1685
    %v10263 = vpop.f32.mrf.mxu0
    %v10264 = vadd.f32 0.0, %v10263
    %10265 = vdwg.mxu0
    %10268 = vrot.lane.b32.xlu0 %v9457, 96
    %v10269 = vpop.permute.xlu0 %10268
    %10270 = vrot.lane.b32.xlu0 %v9460, 96
    %v10271 = vpop.permute.xlu0 %10270
    %10274 = vmatpush.msra.mxu0 0.0
    %10275 = vmatpush.msra.mxu0 0.0
    %10276 = vmatpush.msra.mxu0 0.0
    %10277 = vmatpush.msra.mxu0 0.0
    %10278 = vmatpush.msra.mxu0 0.0
    %10279 = vmatpush.msra.mxu0 0.0
    %10280 = vmatpush.msra.mxu0 0.0
    %10281 = vmatpush.msra.mxu0 0.0
    %10282 = vmatpush.msra.mxu0 0.0
    %10283 = vmatpush.msra.mxu0 0.0
    %10284 = vmatpush.msra.mxu0 0.0
    %10285 = vmatpush.msra.mxu0 0.0
    %10286 = vmatpush.msra.mxu0 0.0
    %10287 = vmatpush.msra.mxu0 0.0
    %10288 = vmatpush.msra.mxu0 %v10271
    %10289 = vmatpush.msra.mxu0 %v10269
    %10290 = vmatmul.f32.gmra.mxu0 %v1731
    %v10291 = vpop.f32.mrf.mxu0
    %v10292 = vadd.f32 0.0, %v10291
    %10293 = vmatmul.f32.gmra.mxu0 %v1734
    %v10294 = vpop.f32.mrf.mxu0
    %v10295 = vadd.f32 0.0, %v10294
    %10296 = vmatmul.f32.gmra.mxu0 %v1737
    %v10297 = vpop.f32.mrf.mxu0
    %v10298 = vadd.f32 0.0, %v10297
    %10299 = vmatmul.f32.gmra.mxu0 %v1740
    %v10300 = vpop.f32.mrf.mxu0
    %v10301 = vadd.f32 0.0, %v10300
    %10302 = vmatmul.f32.gmra.mxu0 %v1743
    %v10303 = vpop.f32.mrf.mxu0
    %v10304 = vadd.f32 0.0, %v10303
    %10305 = vmatmul.f32.gmra.mxu0 %v1746
    %v10306 = vpop.f32.mrf.mxu0
    %v10307 = vadd.f32 0.0, %v10306
    %10308 = vdwg.mxu0
    %10311 = vrot.lane.b32.xlu0 %v9463, 96
    %v10312 = vpop.permute.xlu0 %10311
    %10313 = vrot.lane.b32.xlu0 %v9466, 96
    %v10314 = vpop.permute.xlu0 %10313
    %10317 = vmatpush.msra.mxu0 0.0
    %10318 = vmatpush.msra.mxu0 0.0
    %10319 = vmatpush.msra.mxu0 0.0
    %10320 = vmatpush.msra.mxu0 0.0
    %10321 = vmatpush.msra.mxu0 0.0
    %10322 = vmatpush.msra.mxu0 0.0
    %10323 = vmatpush.msra.mxu0 0.0
    %10324 = vmatpush.msra.mxu0 0.0
    %10325 = vmatpush.msra.mxu0 0.0
    %10326 = vmatpush.msra.mxu0 0.0
    %10327 = vmatpush.msra.mxu0 0.0
    %10328 = vmatpush.msra.mxu0 0.0
    %10329 = vmatpush.msra.mxu0 0.0
    %10330 = vmatpush.msra.mxu0 0.0
    %10331 = vmatpush.msra.mxu0 %v10314
    %10332 = vmatpush.msra.mxu0 %v10312
    %10333 = vmatmul.f32.gmra.mxu0 %v1792
    %v10334 = vpop.f32.mrf.mxu0
    %v10335 = vadd.f32 0.0, %v10334
    %10336 = vmatmul.f32.gmra.mxu0 %v1795
    %v10337 = vpop.f32.mrf.mxu0
    %v10338 = vadd.f32 0.0, %v10337
    %10339 = vmatmul.f32.gmra.mxu0 %v1798
    %v10340 = vpop.f32.mrf.mxu0
    %v10341 = vadd.f32 0.0, %v10340
    %10342 = vmatmul.f32.gmra.mxu0 %v1801
    %v10343 = vpop.f32.mrf.mxu0
    %v10344 = vadd.f32 0.0, %v10343
    %10345 = vmatmul.f32.gmra.mxu0 %v1804
    %v10346 = vpop.f32.mrf.mxu0
    %v10347 = vadd.f32 0.0, %v10346
    %10348 = vmatmul.f32.gmra.mxu0 %v1807
    %v10349 = vpop.f32.mrf.mxu0
    %v10350 = vadd.f32 0.0, %v10349
    %10351 = vdwg.mxu0
    %10354 = vrot.lane.b32.xlu0 %v9469, 96
    %v10355 = vpop.permute.xlu0 %10354
    %10356 = vrot.lane.b32.xlu0 %v9472, 96
    %v10357 = vpop.permute.xlu0 %10356
    %10360 = vmatpush.msra.mxu0 0.0
    %10361 = vmatpush.msra.mxu0 0.0
    %10362 = vmatpush.msra.mxu0 0.0
    %10363 = vmatpush.msra.mxu0 0.0
    %10364 = vmatpush.msra.mxu0 0.0
    %10365 = vmatpush.msra.mxu0 0.0
    %10366 = vmatpush.msra.mxu0 0.0
    %10367 = vmatpush.msra.mxu0 0.0
    %10368 = vmatpush.msra.mxu0 0.0
    %10369 = vmatpush.msra.mxu0 0.0
    %10370 = vmatpush.msra.mxu0 0.0
    %10371 = vmatpush.msra.mxu0 0.0
    %10372 = vmatpush.msra.mxu0 0.0
    %10373 = vmatpush.msra.mxu0 0.0
    %10374 = vmatpush.msra.mxu0 %v10357
    %10375 = vmatpush.msra.mxu0 %v10355
    %10376 = vmatmul.f32.gmra.mxu0 %v1853
    %v10377 = vpop.f32.mrf.mxu0
    %v10378 = vadd.f32 0.0, %v10377
    %10379 = vmatmul.f32.gmra.mxu0 %v1856
    %v10380 = vpop.f32.mrf.mxu0
    %v10381 = vadd.f32 0.0, %v10380
    %10382 = vmatmul.f32.gmra.mxu0 %v1859
    %v10383 = vpop.f32.mrf.mxu0
    %v10384 = vadd.f32 0.0, %v10383
    %10385 = vmatmul.f32.gmra.mxu0 %v1862
    %v10386 = vpop.f32.mrf.mxu0
    %v10387 = vadd.f32 0.0, %v10386
    %10388 = vmatmul.f32.gmra.mxu0 %v1865
    %v10389 = vpop.f32.mrf.mxu0
    %v10390 = vadd.f32 0.0, %v10389
    %10391 = vmatmul.f32.gmra.mxu0 %v1868
    %v10392 = vpop.f32.mrf.mxu0
    %v10393 = vadd.f32 0.0, %v10392
    %10394 = vdwg.mxu0
    %10397 = vrot.lane.b32.xlu0 %v9475, 96
    %v10398 = vpop.permute.xlu0 %10397
    %10399 = vrot.lane.b32.xlu0 %v9478, 96
    %v10400 = vpop.permute.xlu0 %10399
    %10403 = vmatpush.msra.mxu0 0.0
    %10404 = vmatpush.msra.mxu0 0.0
    %10405 = vmatpush.msra.mxu0 0.0
    %10406 = vmatpush.msra.mxu0 0.0
    %10407 = vmatpush.msra.mxu0 0.0
    %10408 = vmatpush.msra.mxu0 0.0
    %10409 = vmatpush.msra.mxu0 0.0
    %10410 = vmatpush.msra.mxu0 0.0
    %10411 = vmatpush.msra.mxu0 0.0
    %10412 = vmatpush.msra.mxu0 0.0
    %10413 = vmatpush.msra.mxu0 0.0
    %10414 = vmatpush.msra.mxu0 0.0
    %10415 = vmatpush.msra.mxu0 0.0
    %10416 = vmatpush.msra.mxu0 0.0
    %10417 = vmatpush.msra.mxu0 %v10400
    %10418 = vmatpush.msra.mxu0 %v10398
    %10419 = vmatmul.f32.gmra.mxu0 %v1914
    %v10420 = vpop.f32.mrf.mxu0
    %v10421 = vadd.f32 0.0, %v10420
    %10422 = vmatmul.f32.gmra.mxu0 %v1917
    %v10423 = vpop.f32.mrf.mxu0
    %v10424 = vadd.f32 0.0, %v10423
    %10425 = vmatmul.f32.gmra.mxu0 %v1920
    %v10426 = vpop.f32.mrf.mxu0
    %v10427 = vadd.f32 0.0, %v10426
    %10428 = vmatmul.f32.gmra.mxu0 %v1923
    %v10429 = vpop.f32.mrf.mxu0
    %v10430 = vadd.f32 0.0, %v10429
    %10431 = vmatmul.f32.gmra.mxu0 %v1926
    %v10432 = vpop.f32.mrf.mxu0
    %v10433 = vadd.f32 0.0, %v10432
    %10434 = vmatmul.f32.gmra.mxu0 %v1929
    %v10435 = vpop.f32.mrf.mxu0
    %v10436 = vadd.f32 0.0, %v10435
    %10437 = vdwg.mxu0
    %10440 = vrot.lane.b32.xlu0 %v9481, 96
    %v10441 = vpop.permute.xlu0 %10440
    %10442 = vrot.lane.b32.xlu0 %v9484, 96
    %v10443 = vpop.permute.xlu0 %10442
    %10446 = vmatpush.msra.mxu0 0.0
    %10447 = vmatpush.msra.mxu0 0.0
    %10448 = vmatpush.msra.mxu0 0.0
    %10449 = vmatpush.msra.mxu0 0.0
    %10450 = vmatpush.msra.mxu0 0.0
    %10451 = vmatpush.msra.mxu0 0.0
    %10452 = vmatpush.msra.mxu0 0.0
    %10453 = vmatpush.msra.mxu0 0.0
    %10454 = vmatpush.msra.mxu0 0.0
    %10455 = vmatpush.msra.mxu0 0.0
    %10456 = vmatpush.msra.mxu0 0.0
    %10457 = vmatpush.msra.mxu0 0.0
    %10458 = vmatpush.msra.mxu0 0.0
    %10459 = vmatpush.msra.mxu0 0.0
    %10460 = vmatpush.msra.mxu0 %v10443
    %10461 = vmatpush.msra.mxu0 %v10441
    %10462 = vmatmul.f32.gmra.mxu0 %v1975
    %v10463 = vpop.f32.mrf.mxu0
    %v10464 = vadd.f32 0.0, %v10463
    %10465 = vmatmul.f32.gmra.mxu0 %v1978
    %v10466 = vpop.f32.mrf.mxu0
    %v10467 = vadd.f32 0.0, %v10466
    %10468 = vmatmul.f32.gmra.mxu0 %v1981
    %v10469 = vpop.f32.mrf.mxu0
    %v10470 = vadd.f32 0.0, %v10469
    %10471 = vmatmul.f32.gmra.mxu0 %v1984
    %v10472 = vpop.f32.mrf.mxu0
    %v10473 = vadd.f32 0.0, %v10472
    %10474 = vmatmul.f32.gmra.mxu0 %v1987
    %v10475 = vpop.f32.mrf.mxu0
    %v10476 = vadd.f32 0.0, %v10475
    %10477 = vmatmul.f32.gmra.mxu0 %v1990
    %v10478 = vpop.f32.mrf.mxu0
    %v10479 = vadd.f32 0.0, %v10478
    %10480 = vdwg.mxu0
    %10483 = vrot.lane.b32.xlu0 %v9487, 96
    %v10484 = vpop.permute.xlu0 %10483
    %10485 = vrot.lane.b32.xlu0 %v9490, 96
    %v10486 = vpop.permute.xlu0 %10485
    %10489 = vmatpush.msra.mxu0 0.0
    %10490 = vmatpush.msra.mxu0 0.0
    %10491 = vmatpush.msra.mxu0 0.0
    %10492 = vmatpush.msra.mxu0 0.0
    %10493 = vmatpush.msra.mxu0 0.0
    %10494 = vmatpush.msra.mxu0 0.0
    %10495 = vmatpush.msra.mxu0 0.0
    %10496 = vmatpush.msra.mxu0 0.0
    %10497 = vmatpush.msra.mxu0 0.0
    %10498 = vmatpush.msra.mxu0 0.0
    %10499 = vmatpush.msra.mxu0 0.0
    %10500 = vmatpush.msra.mxu0 0.0
    %10501 = vmatpush.msra.mxu0 0.0
    %10502 = vmatpush.msra.mxu0 0.0
    %10503 = vmatpush.msra.mxu0 %v10486
    %10504 = vmatpush.msra.mxu0 %v10484
    %10505 = vmatmul.f32.gmra.mxu0 %v2036
    %v10506 = vpop.f32.mrf.mxu0
    %v10507 = vadd.f32 0.0, %v10506
    %10508 = vmatmul.f32.gmra.mxu0 %v2039
    %v10509 = vpop.f32.mrf.mxu0
    %v10510 = vadd.f32 0.0, %v10509
    %10511 = vmatmul.f32.gmra.mxu0 %v2042
    %v10512 = vpop.f32.mrf.mxu0
    %v10513 = vadd.f32 0.0, %v10512
    %10514 = vmatmul.f32.gmra.mxu0 %v2045
    %v10515 = vpop.f32.mrf.mxu0
    %v10516 = vadd.f32 0.0, %v10515
    %10517 = vmatmul.f32.gmra.mxu0 %v2048
    %v10518 = vpop.f32.mrf.mxu0
    %v10519 = vadd.f32 0.0, %v10518
    %10520 = vmatmul.f32.gmra.mxu0 %v2051
    %v10521 = vpop.f32.mrf.mxu0
    %v10522 = vadd.f32 0.0, %v10521
    %10523 = vdwg.mxu0
    %10572 = vrot.lane.b32.xlu0 %v9524, 32
    %v10573 = vpop.permute.xlu0 %10572
    %10574 = vrot.lane.b32.xlu0 %v9527, 32
    %v10575 = vpop.permute.xlu0 %10574
    %10576 = vrot.lane.b32.xlu0 %v9567, 32
    %v10577 = vpop.permute.xlu0 %10576
    %10578 = vrot.lane.b32.xlu0 %v9570, 32
    %v10579 = vpop.permute.xlu0 %10578
    %10580 = vrot.lane.b32.xlu0 %v9610, 32
    %v10581 = vpop.permute.xlu0 %10580
    %10582 = vrot.lane.b32.xlu0 %v9613, 32
    %v10583 = vpop.permute.xlu0 %10582
    %10584 = vrot.lane.b32.xlu0 %v9653, 32
    %v10585 = vpop.permute.xlu0 %10584
    %10586 = vrot.lane.b32.xlu0 %v9656, 32
    %v10587 = vpop.permute.xlu0 %10586
    %10588 = vrot.lane.b32.xlu0 %v9696, 32
    %v10589 = vpop.permute.xlu0 %10588
    %10590 = vrot.lane.b32.xlu0 %v9699, 32
    %v10591 = vpop.permute.xlu0 %10590
    %10592 = vrot.lane.b32.xlu0 %v9739, 32
    %v10593 = vpop.permute.xlu0 %10592
    %10594 = vrot.lane.b32.xlu0 %v9742, 32
    %v10595 = vpop.permute.xlu0 %10594
    %10596 = vrot.lane.b32.xlu0 %v9782, 32
    %v10597 = vpop.permute.xlu0 %10596
    %10598 = vrot.lane.b32.xlu0 %v9785, 32
    %v10599 = vpop.permute.xlu0 %10598
    %10600 = vrot.lane.b32.xlu0 %v9825, 32
    %v10601 = vpop.permute.xlu0 %10600
    %10602 = vrot.lane.b32.xlu0 %v9828, 32
    %v10603 = vpop.permute.xlu0 %10602
    %10604 = vrot.lane.b32.xlu0 %v9868, 32
    %v10605 = vpop.permute.xlu0 %10604
    %10606 = vrot.lane.b32.xlu0 %v9871, 32
    %v10607 = vpop.permute.xlu0 %10606
    %10608 = vrot.lane.b32.xlu0 %v9911, 32
    %v10609 = vpop.permute.xlu0 %10608
    %10610 = vrot.lane.b32.xlu0 %v9914, 32
    %v10611 = vpop.permute.xlu0 %10610
    %10612 = vrot.lane.b32.xlu0 %v9954, 32
    %v10613 = vpop.permute.xlu0 %10612
    %10614 = vrot.lane.b32.xlu0 %v9957, 32
    %v10615 = vpop.permute.xlu0 %10614
    %10616 = vrot.lane.b32.xlu0 %v9997, 32
    %v10617 = vpop.permute.xlu0 %10616
    %10618 = vrot.lane.b32.xlu0 %v10000, 32
    %v10619 = vpop.permute.xlu0 %10618
    %10620 = vrot.lane.b32.xlu0 %v10040, 32
    %v10621 = vpop.permute.xlu0 %10620
    %10622 = vrot.lane.b32.xlu0 %v10043, 32
    %v10623 = vpop.permute.xlu0 %10622
    %10624 = vrot.lane.b32.xlu0 %v10083, 32
    %v10625 = vpop.permute.xlu0 %10624
    %10626 = vrot.lane.b32.xlu0 %v10086, 32
    %v10627 = vpop.permute.xlu0 %10626
    %10628 = vrot.lane.b32.xlu0 %v10126, 32
    %v10629 = vpop.permute.xlu0 %10628
    %10630 = vrot.lane.b32.xlu0 %v10129, 32
    %v10631 = vpop.permute.xlu0 %10630
    %10632 = vrot.lane.b32.xlu0 %v10169, 32
    %v10633 = vpop.permute.xlu0 %10632
    %10634 = vrot.lane.b32.xlu0 %v10172, 32
    %v10635 = vpop.permute.xlu0 %10634
    %10636 = vrot.lane.b32.xlu0 %v10212, 32
    %v10637 = vpop.permute.xlu0 %10636
    %10638 = vrot.lane.b32.xlu0 %v10215, 32
    %v10639 = vpop.permute.xlu0 %10638
    %10640 = vrot.lane.b32.xlu0 %v10255, 32
    %v10641 = vpop.permute.xlu0 %10640
    %10642 = vrot.lane.b32.xlu0 %v10258, 32
    %v10643 = vpop.permute.xlu0 %10642
    %10644 = vrot.lane.b32.xlu0 %v10298, 32
    %v10645 = vpop.permute.xlu0 %10644
    %10646 = vrot.lane.b32.xlu0 %v10301, 32
    %v10647 = vpop.permute.xlu0 %10646
    %10648 = vrot.lane.b32.xlu0 %v10341, 32
    %v10649 = vpop.permute.xlu0 %10648
    %10650 = vrot.lane.b32.xlu0 %v10344, 32
    %v10651 = vpop.permute.xlu0 %10650
    %10652 = vrot.lane.b32.xlu0 %v10384, 32
    %v10653 = vpop.permute.xlu0 %10652
    %10654 = vrot.lane.b32.xlu0 %v10387, 32
    %v10655 = vpop.permute.xlu0 %10654
    %10656 = vrot.lane.b32.xlu0 %v10427, 32
    %v10657 = vpop.permute.xlu0 %10656
    %10658 = vrot.lane.b32.xlu0 %v10430, 32
    %v10659 = vpop.permute.xlu0 %10658
    %10660 = vrot.lane.b32.xlu0 %v10470, 32
    %v10661 = vpop.permute.xlu0 %10660
    %10662 = vrot.lane.b32.xlu0 %v10473, 32
    %v10663 = vpop.permute.xlu0 %10662
    %10664 = vrot.lane.b32.xlu0 %v10513, 32
    %v10665 = vpop.permute.xlu0 %10664
    %10666 = vrot.lane.b32.xlu0 %v10516, 32
    %v10667 = vpop.permute.xlu0 %10666
    %10764 = vrot.lane.b32.xlu0 %v9530, 64
    %v10765 = vpop.permute.xlu0 %10764
    %10766 = vrot.lane.b32.xlu0 %v9533, 64
    %v10767 = vpop.permute.xlu0 %10766
    %10768 = vrot.lane.b32.xlu0 %v9573, 64
    %v10769 = vpop.permute.xlu0 %10768
    %10770 = vrot.lane.b32.xlu0 %v9576, 64
    %v10771 = vpop.permute.xlu0 %10770
    %10772 = vrot.lane.b32.xlu0 %v9616, 64
    %v10773 = vpop.permute.xlu0 %10772
    %10774 = vrot.lane.b32.xlu0 %v9619, 64
    %v10775 = vpop.permute.xlu0 %10774
    %10776 = vrot.lane.b32.xlu0 %v9659, 64
    %v10777 = vpop.permute.xlu0 %10776
    %10778 = vrot.lane.b32.xlu0 %v9662, 64
    %v10779 = vpop.permute.xlu0 %10778
    %10780 = vrot.lane.b32.xlu0 %v9702, 64
    %v10781 = vpop.permute.xlu0 %10780
    %10782 = vrot.lane.b32.xlu0 %v9705, 64
    %v10783 = vpop.permute.xlu0 %10782
    %10784 = vrot.lane.b32.xlu0 %v9745, 64
    %v10785 = vpop.permute.xlu0 %10784
    %10786 = vrot.lane.b32.xlu0 %v9748, 64
    %v10787 = vpop.permute.xlu0 %10786
    %10788 = vrot.lane.b32.xlu0 %v9788, 64
    %v10789 = vpop.permute.xlu0 %10788
    %10790 = vrot.lane.b32.xlu0 %v9791, 64
    %v10791 = vpop.permute.xlu0 %10790
    %10792 = vrot.lane.b32.xlu0 %v9831, 64
    %v10793 = vpop.permute.xlu0 %10792
    %10794 = vrot.lane.b32.xlu0 %v9834, 64
    %v10795 = vpop.permute.xlu0 %10794
    %10796 = vrot.lane.b32.xlu0 %v9874, 64
    %v10797 = vpop.permute.xlu0 %10796
    %10798 = vrot.lane.b32.xlu0 %v9877, 64
    %v10799 = vpop.permute.xlu0 %10798
    %10800 = vrot.lane.b32.xlu0 %v9917, 64
    %v10801 = vpop.permute.xlu0 %10800
    %10802 = vrot.lane.b32.xlu0 %v9920, 64
    %v10803 = vpop.permute.xlu0 %10802
    %10804 = vrot.lane.b32.xlu0 %v9960, 64
    %v10805 = vpop.permute.xlu0 %10804
    %10806 = vrot.lane.b32.xlu0 %v9963, 64
    %v10807 = vpop.permute.xlu0 %10806
    %10808 = vrot.lane.b32.xlu0 %v10003, 64
    %v10809 = vpop.permute.xlu0 %10808
    %10810 = vrot.lane.b32.xlu0 %v10006, 64
    %v10811 = vpop.permute.xlu0 %10810
    %10812 = vrot.lane.b32.xlu0 %v10046, 64
    %v10813 = vpop.permute.xlu0 %10812
    %10814 = vrot.lane.b32.xlu0 %v10049, 64
    %v10815 = vpop.permute.xlu0 %10814
    %10816 = vrot.lane.b32.xlu0 %v10089, 64
    %v10817 = vpop.permute.xlu0 %10816
    %10818 = vrot.lane.b32.xlu0 %v10092, 64
    %v10819 = vpop.permute.xlu0 %10818
    %10820 = vrot.lane.b32.xlu0 %v10132, 64
    %v10821 = vpop.permute.xlu0 %10820
    %10822 = vrot.lane.b32.xlu0 %v10135, 64
    %v10823 = vpop.permute.xlu0 %10822
    %10824 = vrot.lane.b32.xlu0 %v10175, 64
    %v10825 = vpop.permute.xlu0 %10824
    %10826 = vrot.lane.b32.xlu0 %v10178, 64
    %v10827 = vpop.permute.xlu0 %10826
    %10828 = vrot.lane.b32.xlu0 %v10218, 64
    %v10829 = vpop.permute.xlu0 %10828
    %10830 = vrot.lane.b32.xlu0 %v10221, 64
    %v10831 = vpop.permute.xlu0 %10830
    %10832 = vrot.lane.b32.xlu0 %v10261, 64
    %v10833 = vpop.permute.xlu0 %10832
    %10834 = vrot.lane.b32.xlu0 %v10264, 64
    %v10835 = vpop.permute.xlu0 %10834
    %10836 = vrot.lane.b32.xlu0 %v10304, 64
    %v10837 = vpop.permute.xlu0 %10836
    %10838 = vrot.lane.b32.xlu0 %v10307, 64
    %v10839 = vpop.permute.xlu0 %10838
    %10840 = vrot.lane.b32.xlu0 %v10347, 64
    %v10841 = vpop.permute.xlu0 %10840
    %10842 = vrot.lane.b32.xlu0 %v10350, 64
    %v10843 = vpop.permute.xlu0 %10842
    %10844 = vrot.lane.b32.xlu0 %v10390, 64
    %v10845 = vpop.permute.xlu0 %10844
    %10846 = vrot.lane.b32.xlu0 %v10393, 64
    %v10847 = vpop.permute.xlu0 %10846
    %10848 = vrot.lane.b32.xlu0 %v10433, 64
    %v10849 = vpop.permute.xlu0 %10848
    %10850 = vrot.lane.b32.xlu0 %v10436, 64
    %v10851 = vpop.permute.xlu0 %10850
    %10852 = vrot.lane.b32.xlu0 %v10476, 64
    %v10853 = vpop.permute.xlu0 %10852
    %10854 = vrot.lane.b32.xlu0 %v10479, 64
    %v10855 = vpop.permute.xlu0 %10854
    %10856 = vrot.lane.b32.xlu0 %v10519, 64
    %v10857 = vpop.permute.xlu0 %10856
    %10858 = vrot.lane.b32.xlu0 %v10522, 64
    %v10859 = vpop.permute.xlu0 %10858
    %v10908 = vsel %vm2472, %v9518, %v10573
    %v10909 = vsel %vm2472, %v9521, %v10575
    %v10910 = vsel %vm2472, %v9561, %v10577
    %v10911 = vsel %vm2472, %v9564, %v10579
    %v10912 = vsel %vm2472, %v9604, %v10581
    %v10913 = vsel %vm2472, %v9607, %v10583
    %v10914 = vsel %vm2472, %v9647, %v10585
    %v10915 = vsel %vm2472, %v9650, %v10587
    %v10916 = vsel %vm2472, %v9690, %v10589
    %v10917 = vsel %vm2472, %v9693, %v10591
    %v10918 = vsel %vm2472, %v9733, %v10593
    %v10919 = vsel %vm2472, %v9736, %v10595
    %v10920 = vsel %vm2472, %v9776, %v10597
    %v10921 = vsel %vm2472, %v9779, %v10599
    %v10922 = vsel %vm2472, %v9819, %v10601
    %v10923 = vsel %vm2472, %v9822, %v10603
    %v10924 = vsel %vm2472, %v9862, %v10605
    %v10925 = vsel %vm2472, %v9865, %v10607
    %v10926 = vsel %vm2472, %v9905, %v10609
    %v10927 = vsel %vm2472, %v9908, %v10611
    %v10928 = vsel %vm2472, %v9948, %v10613
    %v10929 = vsel %vm2472, %v9951, %v10615
    %v10930 = vsel %vm2472, %v9991, %v10617
    %v10931 = vsel %vm2472, %v9994, %v10619
    %v10932 = vsel %vm2472, %v10034, %v10621
    %v10933 = vsel %vm2472, %v10037, %v10623
    %v10934 = vsel %vm2472, %v10077, %v10625
    %v10935 = vsel %vm2472, %v10080, %v10627
    %v10936 = vsel %vm2472, %v10120, %v10629
    %v10937 = vsel %vm2472, %v10123, %v10631
    %v10938 = vsel %vm2472, %v10163, %v10633
    %v10939 = vsel %vm2472, %v10166, %v10635
    %v10940 = vsel %vm2472, %v10206, %v10637
    %v10941 = vsel %vm2472, %v10209, %v10639
    %v10942 = vsel %vm2472, %v10249, %v10641
    %v10943 = vsel %vm2472, %v10252, %v10643
    %v10944 = vsel %vm2472, %v10292, %v10645
    %v10945 = vsel %vm2472, %v10295, %v10647
    %v10946 = vsel %vm2472, %v10335, %v10649
    %v10947 = vsel %vm2472, %v10338, %v10651
    %v10948 = vsel %vm2472, %v10378, %v10653
    %v10949 = vsel %vm2472, %v10381, %v10655
    %v10950 = vsel %vm2472, %v10421, %v10657
    %v10951 = vsel %vm2472, %v10424, %v10659
    %v10952 = vsel %vm2472, %v10464, %v10661
    %v10953 = vsel %vm2472, %v10467, %v10663
    %v10954 = vsel %vm2472, %v10507, %v10665
    %v10955 = vsel %vm2472, %v10510, %v10667
    %v10956 = vsel %vm2521, %v10908, %v10765
    %v10957 = vsel %vm2521, %v10909, %v10767
    %v10958 = vsel %vm2521, %v10910, %v10769
    %v10959 = vsel %vm2521, %v10911, %v10771
    %v10960 = vsel %vm2521, %v10912, %v10773
    %v10961 = vsel %vm2521, %v10913, %v10775
    %v10962 = vsel %vm2521, %v10914, %v10777
    %v10963 = vsel %vm2521, %v10915, %v10779
    %v10964 = vsel %vm2521, %v10916, %v10781
    %v10965 = vsel %vm2521, %v10917, %v10783
    %v10966 = vsel %vm2521, %v10918, %v10785
    %v10967 = vsel %vm2521, %v10919, %v10787
    %v10968 = vsel %vm2521, %v10920, %v10789
    %v10969 = vsel %vm2521, %v10921, %v10791
    %v10970 = vsel %vm2521, %v10922, %v10793
    %v10971 = vsel %vm2521, %v10923, %v10795
    %v10972 = vsel %vm2521, %v10924, %v10797
    %v10973 = vsel %vm2521, %v10925, %v10799
    %v10974 = vsel %vm2521, %v10926, %v10801
    %v10975 = vsel %vm2521, %v10927, %v10803
    %v10976 = vsel %vm2521, %v10928, %v10805
    %v10977 = vsel %vm2521, %v10929, %v10807
    %v10978 = vsel %vm2521, %v10930, %v10809
    %v10979 = vsel %vm2521, %v10931, %v10811
    %v10980 = vsel %vm2521, %v10932, %v10813
    %v10981 = vsel %vm2521, %v10933, %v10815
    %v10982 = vsel %vm2521, %v10934, %v10817
    %v10983 = vsel %vm2521, %v10935, %v10819
    %v10984 = vsel %vm2521, %v10936, %v10821
    %v10985 = vsel %vm2521, %v10937, %v10823
    %v10986 = vsel %vm2521, %v10938, %v10825
    %v10987 = vsel %vm2521, %v10939, %v10827
    %v10988 = vsel %vm2521, %v10940, %v10829
    %v10989 = vsel %vm2521, %v10941, %v10831
    %v10990 = vsel %vm2521, %v10942, %v10833
    %v10991 = vsel %vm2521, %v10943, %v10835
    %v10992 = vsel %vm2521, %v10944, %v10837
    %v10993 = vsel %vm2521, %v10945, %v10839
    %v10994 = vsel %vm2521, %v10946, %v10841
    %v10995 = vsel %vm2521, %v10947, %v10843
    %v10996 = vsel %vm2521, %v10948, %v10845
    %v10997 = vsel %vm2521, %v10949, %v10847
    %v10998 = vsel %vm2521, %v10950, %v10849
    %v10999 = vsel %vm2521, %v10951, %v10851
    %v11000 = vsel %vm2521, %v10952, %v10853
    %v11001 = vsel %vm2521, %v10953, %v10855
    %v11002 = vsel %vm2521, %v10954, %v10857
    %v11003 = vsel %vm2521, %v10955, %v10859
    %v11004 = vld [vmem:[%s16] sm:$0xff]
    %v11005 = vld [vmem:[%s16 + $0x8] sm:$0xff]
    %v11006 = vld [vmem:[%s16 + $0x10] sm:$0xff]
    %v11007 = vld [vmem:[%s16 + $0x18] sm:$0xff]
    %v11008 = vld [vmem:[%s16 + $0x20] sm:$0xff]
    %v11009 = vld [vmem:[%s16 + $0x28] sm:$0xff]
    %v11010 = vld [vmem:[%s16 + $0x30] sm:$0xff]
    %v11011 = vld [vmem:[%s16 + $0x38] sm:$0xff]
    %v11012 = vld [vmem:[%s16 + $0x40] sm:$0xff]
    %v11013 = vld [vmem:[%s16 + $0x48] sm:$0xff]
    %v11014 = vld [vmem:[%s16 + $0x50] sm:$0xff]
    %v11015 = vld [vmem:[%s16 + $0x58] sm:$0xff]
    %v11016 = vld [vmem:[%s17] sm:$0x1]
    %v11018 = vperm.slane %v11016, 0
    %v11021 = vsel %vm2586, %v10956, 0
    %v11024 = vsel %vm2586, %v10957, 0
    %v11027 = vsel %vm2586, %v10958, 0
    %v11030 = vsel %vm2586, %v10959, 0
    %v11033 = vsel %vm2586, %v10960, 0
    %v11036 = vsel %vm2586, %v10961, 0
    %v11039 = vsel %vm2586, %v10962, 0
    %v11042 = vsel %vm2586, %v10963, 0
    %v11045 = vsel %vm2586, %v10964, 0
    %v11048 = vsel %vm2586, %v10965, 0
    %v11051 = vsel %vm2586, %v10966, 0
    %v11054 = vsel %vm2586, %v10967, 0
    %v11057 = vsel %vm2586, %v10968, 0
    %v11060 = vsel %vm2586, %v10969, 0
    %v11063 = vsel %vm2586, %v10970, 0
    %v11066 = vsel %vm2586, %v10971, 0
    %v11069 = vsel %vm2586, %v10972, 0
    %v11072 = vsel %vm2586, %v10973, 0
    %v11075 = vsel %vm2586, %v10974, 0
    %v11078 = vsel %vm2586, %v10975, 0
    %v11081 = vsel %vm2586, %v10976, 0
    %v11084 = vsel %vm2586, %v10977, 0
    %v11087 = vsel %vm2586, %v10978, 0
    %v11090 = vsel %vm2586, %v10979, 0
    %v11093 = vsel %vm2586, %v10980, 0
    %v11096 = vsel %vm2586, %v10981, 0
    %v11099 = vsel %vm2586, %v10982, 0
    %v11102 = vsel %vm2586, %v10983, 0
    %v11105 = vsel %vm2586, %v10984, 0
    %v11108 = vsel %vm2586, %v10985, 0
    %v11111 = vsel %vm2586, %v10986, 0
    %v11114 = vsel %vm2586, %v10987, 0
    %v11117 = vsel %vm2586, %v10988, 0
    %v11120 = vsel %vm2586, %v10989, 0
    %v11123 = vsel %vm2586, %v10990, 0
    %v11126 = vsel %vm2586, %v10991, 0
    %v11129 = vsel %vm2586, %v10992, 0
    %v11132 = vsel %vm2586, %v10993, 0
    %v11135 = vsel %vm2586, %v10994, 0
    %v11138 = vsel %vm2586, %v10995, 0
    %v11141 = vsel %vm2586, %v10996, 0
    %v11144 = vsel %vm2586, %v10997, 0
    %v11147 = vsel %vm2586, %v10998, 0
    %v11150 = vsel %vm2586, %v10999, 0
    %v11153 = vsel %vm2586, %v11000, 0
    %v11156 = vsel %vm2586, %v11001, 0
    %v11159 = vsel %vm2586, %v11002, 0
    %v11162 = vsel %vm2586, %v11003, 0
    %11164 = vmatpush.msra.mxu0 0.0
    %11165 = vmatpush.msra.mxu0 0.0
    %11166 = vmatpush.msra.mxu0 0.0
    %11167 = vmatpush.msra.mxu0 0.0
    %11168 = vmatpush.msra.mxu0 %v11015
    %11169 = vmatpush.msra.mxu0 %v11014
    %11170 = vmatpush.msra.mxu0 %v11013
    %11171 = vmatpush.msra.mxu0 %v11012
    %11172 = vmatpush.msra.mxu0 %v11011
    %11173 = vmatpush.msra.mxu0 %v11010
    %11174 = vmatpush.msra.mxu0 %v11009
    %11175 = vmatpush.msra.mxu0 %v11008
    %11176 = vmatpush.msra.mxu0 %v11007
    %11177 = vmatpush.msra.mxu0 %v11006
    %11178 = vmatpush.msra.mxu0 %v11005
    %11179 = vmatpush.msra.mxu0 %v11004
    %11180 = vmatmul.f32.gmra.mxu0 %v11021
    %v11181 = vpop.f32.mrf.mxu0
    %v11182 = vadd.f32 %v11018, %v11181
    %11183 = vmatmul.f32.gmra.mxu0 %v11024
    %v11184 = vpop.f32.mrf.mxu0
    %v11185 = vadd.f32 %v11018, %v11184
    %11186 = vmatmul.f32.gmra.mxu0 %v11027
    %v11187 = vpop.f32.mrf.mxu0
    %v11188 = vadd.f32 %v11018, %v11187
    %11189 = vmatmul.f32.gmra.mxu0 %v11030
    %v11190 = vpop.f32.mrf.mxu0
    %v11191 = vadd.f32 %v11018, %v11190
    %11192 = vmatmul.f32.gmra.mxu0 %v11033
    %v11193 = vpop.f32.mrf.mxu0
    %v11194 = vadd.f32 %v11018, %v11193
    %11195 = vmatmul.f32.gmra.mxu0 %v11036
    %v11196 = vpop.f32.mrf.mxu0
    %v11197 = vadd.f32 %v11018, %v11196
    %11198 = vmatmul.f32.gmra.mxu0 %v11039
    %v11199 = vpop.f32.mrf.mxu0
    %v11200 = vadd.f32 %v11018, %v11199
    %11201 = vmatmul.f32.gmra.mxu0 %v11042
    %v11202 = vpop.f32.mrf.mxu0
    %v11203 = vadd.f32 %v11018, %v11202
    %11204 = vmatmul.f32.gmra.mxu0 %v11045
    %v11205 = vpop.f32.mrf.mxu0
    %v11206 = vadd.f32 %v11018, %v11205
    %11207 = vmatmul.f32.gmra.mxu0 %v11048
    %v11208 = vpop.f32.mrf.mxu0
    %v11209 = vadd.f32 %v11018, %v11208
    %11210 = vmatmul.f32.gmra.mxu0 %v11051
    %v11211 = vpop.f32.mrf.mxu0
    %v11212 = vadd.f32 %v11018, %v11211
    %11213 = vmatmul.f32.gmra.mxu0 %v11054
    %v11214 = vpop.f32.mrf.mxu0
    %v11215 = vadd.f32 %v11018, %v11214
    %11216 = vmatmul.f32.gmra.mxu0 %v11057
    %v11217 = vpop.f32.mrf.mxu0
    %v11218 = vadd.f32 %v11018, %v11217
    %11219 = vmatmul.f32.gmra.mxu0 %v11060
    %v11220 = vpop.f32.mrf.mxu0
    %v11221 = vadd.f32 %v11018, %v11220
    %11222 = vmatmul.f32.gmra.mxu0 %v11063
    %v11223 = vpop.f32.mrf.mxu0
    %v11224 = vadd.f32 %v11018, %v11223
    %11225 = vmatmul.f32.gmra.mxu0 %v11066
    %v11226 = vpop.f32.mrf.mxu0
    %v11227 = vadd.f32 %v11018, %v11226
    %11228 = vmatmul.f32.gmra.mxu0 %v11069
    %v11229 = vpop.f32.mrf.mxu0
    %v11230 = vadd.f32 %v11018, %v11229
    %11231 = vmatmul.f32.gmra.mxu0 %v11072
    %v11232 = vpop.f32.mrf.mxu0
    %v11233 = vadd.f32 %v11018, %v11232
    %11234 = vmatmul.f32.gmra.mxu0 %v11075
    %v11235 = vpop.f32.mrf.mxu0
    %v11236 = vadd.f32 %v11018, %v11235
    %11237 = vmatmul.f32.gmra.mxu0 %v11078
    %v11238 = vpop.f32.mrf.mxu0
    %v11239 = vadd.f32 %v11018, %v11238
    %11240 = vmatmul.f32.gmra.mxu0 %v11081
    %v11241 = vpop.f32.mrf.mxu0
    %v11242 = vadd.f32 %v11018, %v11241
    %11243 = vmatmul.f32.gmra.mxu0 %v11084
    %v11244 = vpop.f32.mrf.mxu0
    %v11245 = vadd.f32 %v11018, %v11244
    %11246 = vmatmul.f32.gmra.mxu0 %v11087
    %v11247 = vpop.f32.mrf.mxu0
    %v11248 = vadd.f32 %v11018, %v11247
    %11249 = vmatmul.f32.gmra.mxu0 %v11090
    %v11250 = vpop.f32.mrf.mxu0
    %v11251 = vadd.f32 %v11018, %v11250
    %11252 = vmatmul.f32.gmra.mxu0 %v11093
    %v11253 = vpop.f32.mrf.mxu0
    %v11254 = vadd.f32 %v11018, %v11253
    %11255 = vmatmul.f32.gmra.mxu0 %v11096
    %v11256 = vpop.f32.mrf.mxu0
    %v11257 = vadd.f32 %v11018, %v11256
    %11258 = vmatmul.f32.gmra.mxu0 %v11099
    %v11259 = vpop.f32.mrf.mxu0
    %v11260 = vadd.f32 %v11018, %v11259
    %11261 = vmatmul.f32.gmra.mxu0 %v11102
    %v11262 = vpop.f32.mrf.mxu0
    %v11263 = vadd.f32 %v11018, %v11262
    %11264 = vmatmul.f32.gmra.mxu0 %v11105
    %v11265 = vpop.f32.mrf.mxu0
    %v11266 = vadd.f32 %v11018, %v11265
    %11267 = vmatmul.f32.gmra.mxu0 %v11108
    %v11268 = vpop.f32.mrf.mxu0
    %v11269 = vadd.f32 %v11018, %v11268
    %11270 = vmatmul.f32.gmra.mxu0 %v11111
    %v11271 = vpop.f32.mrf.mxu0
    %v11272 = vadd.f32 %v11018, %v11271
    %11273 = vmatmul.f32.gmra.mxu0 %v11114
    %v11274 = vpop.f32.mrf.mxu0
    %v11275 = vadd.f32 %v11018, %v11274
    %11276 = vmatmul.f32.gmra.mxu0 %v11117
    %v11277 = vpop.f32.mrf.mxu0
    %v11278 = vadd.f32 %v11018, %v11277
    %11279 = vmatmul.f32.gmra.mxu0 %v11120
    %v11280 = vpop.f32.mrf.mxu0
    %v11281 = vadd.f32 %v11018, %v11280
    %11282 = vmatmul.f32.gmra.mxu0 %v11123
    %v11283 = vpop.f32.mrf.mxu0
    %v11284 = vadd.f32 %v11018, %v11283
    %11285 = vmatmul.f32.gmra.mxu0 %v11126
    %v11286 = vpop.f32.mrf.mxu0
    %v11287 = vadd.f32 %v11018, %v11286
    %11288 = vmatmul.f32.gmra.mxu0 %v11129
    %v11289 = vpop.f32.mrf.mxu0
    %v11290 = vadd.f32 %v11018, %v11289
    %11291 = vmatmul.f32.gmra.mxu0 %v11132
    %v11292 = vpop.f32.mrf.mxu0
    %v11293 = vadd.f32 %v11018, %v11292
    %11294 = vmatmul.f32.gmra.mxu0 %v11135
    %v11295 = vpop.f32.mrf.mxu0
    %v11296 = vadd.f32 %v11018, %v11295
    %11297 = vmatmul.f32.gmra.mxu0 %v11138
    %v11298 = vpop.f32.mrf.mxu0
    %v11299 = vadd.f32 %v11018, %v11298
    %11300 = vmatmul.f32.gmra.mxu0 %v11141
    %v11301 = vpop.f32.mrf.mxu0
    %v11302 = vadd.f32 %v11018, %v11301
    %11303 = vmatmul.f32.gmra.mxu0 %v11144
    %v11304 = vpop.f32.mrf.mxu0
    %v11305 = vadd.f32 %v11018, %v11304
    %11306 = vmatmul.f32.gmra.mxu0 %v11147
    %v11307 = vpop.f32.mrf.mxu0
    %v11308 = vadd.f32 %v11018, %v11307
    %11309 = vmatmul.f32.gmra.mxu0 %v11150
    %v11310 = vpop.f32.mrf.mxu0
    %v11311 = vadd.f32 %v11018, %v11310
    %11312 = vmatmul.f32.gmra.mxu0 %v11153
    %v11313 = vpop.f32.mrf.mxu0
    %v11314 = vadd.f32 %v11018, %v11313
    %11315 = vmatmul.f32.gmra.mxu0 %v11156
    %v11316 = vpop.f32.mrf.mxu0
    %v11317 = vadd.f32 %v11018, %v11316
    %11318 = vmatmul.f32.gmra.mxu0 %v11159
    %v11319 = vpop.f32.mrf.mxu0
    %v11320 = vadd.f32 %v11018, %v11319
    %11321 = vmatmul.f32.gmra.mxu0 %v11162
    %v11322 = vpop.f32.mrf.mxu0
    %v11323 = vadd.f32 %v11018, %v11322
    %11324 = vdwg.mxu0
    %v11325 = vadd.f32 %v11182, %v9349
    %v11326 = vadd.f32 %v11185, %v9352
    %v11327 = vadd.f32 %v11188, %v9355
    %v11328 = vadd.f32 %v11191, %v9358
    %v11329 = vadd.f32 %v11194, %v9361
    %v11330 = vadd.f32 %v11197, %v9364
    %v11331 = vadd.f32 %v11200, %v9367
    %v11332 = vadd.f32 %v11203, %v9370
    %v11333 = vadd.f32 %v11206, %v9373
    %v11334 = vadd.f32 %v11209, %v9376
    %v11335 = vadd.f32 %v11212, %v9379
    %v11336 = vadd.f32 %v11215, %v9382
    %v11337 = vadd.f32 %v11218, %v9385
    %v11338 = vadd.f32 %v11221, %v9388
    %v11339 = vadd.f32 %v11224, %v9391
    %v11340 = vadd.f32 %v11227, %v9394
    %v11341 = vadd.f32 %v11230, %v9397
    %v11342 = vadd.f32 %v11233, %v9400
    %v11343 = vadd.f32 %v11236, %v9403
    %v11344 = vadd.f32 %v11239, %v9406
    %v11345 = vadd.f32 %v11242, %v9409
    %v11346 = vadd.f32 %v11245, %v9412
    %v11347 = vadd.f32 %v11248, %v9415
    %v11348 = vadd.f32 %v11251, %v9418
    %v11349 = vadd.f32 %v11254, %v9421
    %v11350 = vadd.f32 %v11257, %v9424
    %v11351 = vadd.f32 %v11260, %v9427
    %v11352 = vadd.f32 %v11263, %v9430
    %v11353 = vadd.f32 %v11266, %v9433
    %v11354 = vadd.f32 %v11269, %v9436
    %v11355 = vadd.f32 %v11272, %v9439
    %v11356 = vadd.f32 %v11275, %v9442
    %v11357 = vadd.f32 %v11278, %v9445
    %v11358 = vadd.f32 %v11281, %v9448
    %v11359 = vadd.f32 %v11284, %v9451
    %v11360 = vadd.f32 %v11287, %v9454
    %v11361 = vadd.f32 %v11290, %v9457
    %v11362 = vadd.f32 %v11293, %v9460
    %v11363 = vadd.f32 %v11296, %v9463
    %v11364 = vadd.f32 %v11299, %v9466
    %v11365 = vadd.f32 %v11302, %v9469
    %v11366 = vadd.f32 %v11305, %v9472
    %v11367 = vadd.f32 %v11308, %v9475
    %v11368 = vadd.f32 %v11311, %v9478
    %v11369 = vadd.f32 %v11314, %v9481
    %v11370 = vadd.f32 %v11317, %v9484
    %v11371 = vadd.f32 %v11320, %v9487
    %v11372 = vadd.f32 %v11323, %v9490
    %v11373 = vxor.u32 %v11182, 2147483648
    %v11374 = vxor.u32 %v11185, 2147483648
    %v11375 = vxor.u32 %v11188, 2147483648
    %v11376 = vxor.u32 %v11191, 2147483648
    %v11377 = vxor.u32 %v11194, 2147483648
    %v11378 = vxor.u32 %v11197, 2147483648
    %v11379 = vxor.u32 %v11200, 2147483648
    %v11380 = vxor.u32 %v11203, 2147483648
    %v11381 = vxor.u32 %v11206, 2147483648
    %v11382 = vxor.u32 %v11209, 2147483648
    %v11383 = vxor.u32 %v11212, 2147483648
    %v11384 = vxor.u32 %v11215, 2147483648
    %v11385 = vxor.u32 %v11218, 2147483648
    %v11386 = vxor.u32 %v11221, 2147483648
    %v11387 = vxor.u32 %v11224, 2147483648
    %v11388 = vxor.u32 %v11227, 2147483648
    %v11389 = vxor.u32 %v11230, 2147483648
    %v11390 = vxor.u32 %v11233, 2147483648
    %v11391 = vxor.u32 %v11236, 2147483648
    %v11392 = vxor.u32 %v11239, 2147483648
    %v11393 = vxor.u32 %v11242, 2147483648
    %v11394 = vxor.u32 %v11245, 2147483648
    %v11395 = vxor.u32 %v11248, 2147483648
    %v11396 = vxor.u32 %v11251, 2147483648
    %v11397 = vxor.u32 %v11254, 2147483648
    %v11398 = vxor.u32 %v11257, 2147483648
    %v11399 = vxor.u32 %v11260, 2147483648
    %v11400 = vxor.u32 %v11263, 2147483648
    %v11401 = vxor.u32 %v11266, 2147483648
    %v11402 = vxor.u32 %v11269, 2147483648
    %v11403 = vxor.u32 %v11272, 2147483648
    %v11404 = vxor.u32 %v11275, 2147483648
    %v11405 = vxor.u32 %v11278, 2147483648
    %v11406 = vxor.u32 %v11281, 2147483648
    %v11407 = vxor.u32 %v11284, 2147483648
    %v11408 = vxor.u32 %v11287, 2147483648
    %v11409 = vxor.u32 %v11290, 2147483648
    %v11410 = vxor.u32 %v11293, 2147483648
    %v11411 = vxor.u32 %v11296, 2147483648
    %v11412 = vxor.u32 %v11299, 2147483648
    %v11413 = vxor.u32 %v11302, 2147483648
    %v11414 = vxor.u32 %v11305, 2147483648
    %v11415 = vxor.u32 %v11308, 2147483648
    %v11416 = vxor.u32 %v11311, 2147483648
    %v11417 = vxor.u32 %v11314, 2147483648
    %v11418 = vxor.u32 %v11317, 2147483648
    %v11419 = vxor.u32 %v11320, 2147483648
    %v11420 = vxor.u32 %v11323, 2147483648
    %v11421 = vmul.f32 %v11373, 1.442695
    %v11422 = vpow.pop %v11421
    %v11423 = vmul.f32 %v11374, 1.442695
    %v11424 = vpow.pop %v11423
    %v11425 = vmul.f32 %v11375, 1.442695
    %v11426 = vpow.pop %v11425
    %v11427 = vmul.f32 %v11376, 1.442695
    %v11428 = vpow.pop %v11427
    %v11429 = vmul.f32 %v11377, 1.442695
    %v11430 = vpow.pop %v11429
    %v11431 = vmul.f32 %v11378, 1.442695
    %v11432 = vpow.pop %v11431
    %v11433 = vmul.f32 %v11379, 1.442695
    %v11434 = vpow.pop %v11433
    %v11435 = vmul.f32 %v11380, 1.442695
    %v11436 = vpow.pop %v11435
    %v11437 = vmul.f32 %v11381, 1.442695
    %v11438 = vpow.pop %v11437
    %v11439 = vmul.f32 %v11382, 1.442695
    %v11440 = vpow.pop %v11439
    %v11441 = vmul.f32 %v11383, 1.442695
    %v11442 = vpow.pop %v11441
    %v11443 = vmul.f32 %v11384, 1.442695
    %v11444 = vpow.pop %v11443
    %v11445 = vmul.f32 %v11385, 1.442695
    %v11446 = vpow.pop %v11445
    %v11447 = vmul.f32 %v11386, 1.442695
    %v11448 = vpow.pop %v11447
    %v11449 = vmul.f32 %v11387, 1.442695
    %v11450 = vpow.pop %v11449
    %v11451 = vmul.f32 %v11388, 1.442695
    %v11452 = vpow.pop %v11451
    %v11453 = vmul.f32 %v11389, 1.442695
    %v11454 = vpow.pop %v11453
    %v11455 = vmul.f32 %v11390, 1.442695
    %v11456 = vpow.pop %v11455
    %v11457 = vmul.f32 %v11391, 1.442695
    %v11458 = vpow.pop %v11457
    %v11459 = vmul.f32 %v11392, 1.442695
    %v11460 = vpow.pop %v11459
    %v11461 = vmul.f32 %v11393, 1.442695
    %v11462 = vpow.pop %v11461
    %v11463 = vmul.f32 %v11394, 1.442695
    %v11464 = vpow.pop %v11463
    %v11465 = vmul.f32 %v11395, 1.442695
    %v11466 = vpow.pop %v11465
    %v11467 = vmul.f32 %v11396, 1.442695
    %v11468 = vpow.pop %v11467
    %v11469 = vmul.f32 %v11397, 1.442695
    %v11470 = vpow.pop %v11469
    %v11471 = vmul.f32 %v11398, 1.442695
    %v11472 = vpow.pop %v11471
    %v11473 = vmul.f32 %v11399, 1.442695
    %v11474 = vpow.pop %v11473
    %v11475 = vmul.f32 %v11400, 1.442695
    %v11476 = vpow.pop %v11475
    %v11477 = vmul.f32 %v11401, 1.442695
    %v11478 = vpow.pop %v11477
    %v11479 = vmul.f32 %v11402, 1.442695
    %v11480 = vpow.pop %v11479
    %v11481 = vmul.f32 %v11403, 1.442695
    %v11482 = vpow.pop %v11481
    %v11483 = vmul.f32 %v11404, 1.442695
    %v11484 = vpow.pop %v11483
    %v11485 = vmul.f32 %v11405, 1.442695
    %v11486 = vpow.pop %v11485
    %v11487 = vmul.f32 %v11406, 1.442695
    %v11488 = vpow.pop %v11487
    %v11489 = vmul.f32 %v11407, 1.442695
    %v11490 = vpow.pop %v11489
    %v11491 = vmul.f32 %v11408, 1.442695
    %v11492 = vpow.pop %v11491
    %v11493 = vmul.f32 %v11409, 1.442695
    %v11494 = vpow.pop %v11493
    %v11495 = vmul.f32 %v11410, 1.442695
    %v11496 = vpow.pop %v11495
    %v11497 = vmul.f32 %v11411, 1.442695
    %v11498 = vpow.pop %v11497
    %v11499 = vmul.f32 %v11412, 1.442695
    %v11500 = vpow.pop %v11499
    %v11501 = vmul.f32 %v11413, 1.442695
    %v11502 = vpow.pop %v11501
    %v11503 = vmul.f32 %v11414, 1.442695
    %v11504 = vpow.pop %v11503
    %v11505 = vmul.f32 %v11415, 1.442695
    %v11506 = vpow.pop %v11505
    %v11507 = vmul.f32 %v11416, 1.442695
    %v11508 = vpow.pop %v11507
    %v11509 = vmul.f32 %v11417, 1.442695
    %v11510 = vpow.pop %v11509
    %v11511 = vmul.f32 %v11418, 1.442695
    %v11512 = vpow.pop %v11511
    %v11513 = vmul.f32 %v11419, 1.442695
    %v11514 = vpow.pop %v11513
    %v11515 = vmul.f32 %v11420, 1.442695
    %v11516 = vpow.pop %v11515
    %v11517 = vadd.f32 %v11422, 1.0
    %v11518 = vadd.f32 %v11424, 1.0
    %v11519 = vadd.f32 %v11426, 1.0
    %v11520 = vadd.f32 %v11428, 1.0
    %v11521 = vadd.f32 %v11430, 1.0
    %v11522 = vadd.f32 %v11432, 1.0
    %v11523 = vadd.f32 %v11434, 1.0
    %v11524 = vadd.f32 %v11436, 1.0
    %v11525 = vadd.f32 %v11438, 1.0
    %v11526 = vadd.f32 %v11440, 1.0
    %v11527 = vadd.f32 %v11442, 1.0
    %v11528 = vadd.f32 %v11444, 1.0
    %v11529 = vadd.f32 %v11446, 1.0
    %v11530 = vadd.f32 %v11448, 1.0
    %v11531 = vadd.f32 %v11450, 1.0
    %v11532 = vadd.f32 %v11452, 1.0
    %v11533 = vadd.f32 %v11454, 1.0
    %v11534 = vadd.f32 %v11456, 1.0
    %v11535 = vadd.f32 %v11458, 1.0
    %v11536 = vadd.f32 %v11460, 1.0
    %v11537 = vadd.f32 %v11462, 1.0
    %v11538 = vadd.f32 %v11464, 1.0
    %v11539 = vadd.f32 %v11466, 1.0
    %v11540 = vadd.f32 %v11468, 1.0
    %v11541 = vadd.f32 %v11470, 1.0
    %v11542 = vadd.f32 %v11472, 1.0
    %v11543 = vadd.f32 %v11474, 1.0
    %v11544 = vadd.f32 %v11476, 1.0
    %v11545 = vadd.f32 %v11478, 1.0
    %v11546 = vadd.f32 %v11480, 1.0
    %v11547 = vadd.f32 %v11482, 1.0
    %v11548 = vadd.f32 %v11484, 1.0
    %v11549 = vadd.f32 %v11486, 1.0
    %v11550 = vadd.f32 %v11488, 1.0
    %v11551 = vadd.f32 %v11490, 1.0
    %v11552 = vadd.f32 %v11492, 1.0
    %v11553 = vadd.f32 %v11494, 1.0
    %v11554 = vadd.f32 %v11496, 1.0
    %v11555 = vadd.f32 %v11498, 1.0
    %v11556 = vadd.f32 %v11500, 1.0
    %v11557 = vadd.f32 %v11502, 1.0
    %v11558 = vadd.f32 %v11504, 1.0
    %v11559 = vadd.f32 %v11506, 1.0
    %v11560 = vadd.f32 %v11508, 1.0
    %v11561 = vadd.f32 %v11510, 1.0
    %v11562 = vadd.f32 %v11512, 1.0
    %v11563 = vadd.f32 %v11514, 1.0
    %v11564 = vadd.f32 %v11516, 1.0
    %v11565 = vrcp.pop %v11517
    %v11566 = vmul.f32 %v11517, %v11565
    %v11567 = vsub.f32 1.0, %v11566
    %v11568 = vmul.f32 %v11565, %v11567
    %v11569 = vadd.f32 %v11565, %v11568
    %vm11570 = vweird.f32 %v11517
    %vm11571 = vweird.f32 %v11565
    %vm11572 = vmor %vm11570, %vm11571
    %v11573 = vsel %vm11572, %v11565, %v11569
    %v11574 = vand.u32 2147483647, %v11517
    %vm11575 = vcmp.eq.f32.partialorder %v11574, 8.507059e+37
    %v11576 = vand.u32 %v11517, 2147483648
    %v11577 = vor.u32 1.1754944e-38, %v11576
    %v11578 = vsel %vm11575, %v11577, %v11573
    %v11579 = vmul.f32 1.0, %v11578
    %v11580 = vrcp.pop %v11518
    %v11581 = vmul.f32 %v11518, %v11580
    %v11582 = vsub.f32 1.0, %v11581
    %v11583 = vmul.f32 %v11580, %v11582
    %v11584 = vadd.f32 %v11580, %v11583
    %vm11585 = vweird.f32 %v11518
    %vm11586 = vweird.f32 %v11580
    %vm11587 = vmor %vm11585, %vm11586
    %v11588 = vsel %vm11587, %v11580, %v11584
    %v11589 = vand.u32 2147483647, %v11518
    %vm11590 = vcmp.eq.f32.partialorder %v11589, 8.507059e+37
    %v11591 = vand.u32 %v11518, 2147483648
    %v11592 = vor.u32 1.1754944e-38, %v11591
    %v11593 = vsel %vm11590, %v11592, %v11588
    %v11594 = vmul.f32 1.0, %v11593
    %v11595 = vrcp.pop %v11519
    %v11596 = vmul.f32 %v11519, %v11595
    %v11597 = vsub.f32 1.0, %v11596
    %v11598 = vmul.f32 %v11595, %v11597
    %v11599 = vadd.f32 %v11595, %v11598
    %vm11600 = vweird.f32 %v11519
    %vm11601 = vweird.f32 %v11595
    %vm11602 = vmor %vm11600, %vm11601
    %v11603 = vsel %vm11602, %v11595, %v11599
    %v11604 = vand.u32 2147483647, %v11519
    %vm11605 = vcmp.eq.f32.partialorder %v11604, 8.507059e+37
    %v11606 = vand.u32 %v11519, 2147483648
    %v11607 = vor.u32 1.1754944e-38, %v11606
    %v11608 = vsel %vm11605, %v11607, %v11603
    %v11609 = vmul.f32 1.0, %v11608
    %v11610 = vrcp.pop %v11520
    %v11611 = vmul.f32 %v11520, %v11610
    %v11612 = vsub.f32 1.0, %v11611
    %v11613 = vmul.f32 %v11610, %v11612
    %v11614 = vadd.f32 %v11610, %v11613
    %vm11615 = vweird.f32 %v11520
    %vm11616 = vweird.f32 %v11610
    %vm11617 = vmor %vm11615, %vm11616
    %v11618 = vsel %vm11617, %v11610, %v11614
    %v11619 = vand.u32 2147483647, %v11520
    %vm11620 = vcmp.eq.f32.partialorder %v11619, 8.507059e+37
    %v11621 = vand.u32 %v11520, 2147483648
    %v11622 = vor.u32 1.1754944e-38, %v11621
    %v11623 = vsel %vm11620, %v11622, %v11618
    %v11624 = vmul.f32 1.0, %v11623
    %v11625 = vrcp.pop %v11521
    %v11626 = vmul.f32 %v11521, %v11625
    %v11627 = vsub.f32 1.0, %v11626
    %v11628 = vmul.f32 %v11625, %v11627
    %v11629 = vadd.f32 %v11625, %v11628
    %vm11630 = vweird.f32 %v11521
    %vm11631 = vweird.f32 %v11625
    %vm11632 = vmor %vm11630, %vm11631
    %v11633 = vsel %vm11632, %v11625, %v11629
    %v11634 = vand.u32 2147483647, %v11521
    %vm11635 = vcmp.eq.f32.partialorder %v11634, 8.507059e+37
    %v11636 = vand.u32 %v11521, 2147483648
    %v11637 = vor.u32 1.1754944e-38, %v11636
    %v11638 = vsel %vm11635, %v11637, %v11633
    %v11639 = vmul.f32 1.0, %v11638
    %v11640 = vrcp.pop %v11522
    %v11641 = vmul.f32 %v11522, %v11640
    %v11642 = vsub.f32 1.0, %v11641
    %v11643 = vmul.f32 %v11640, %v11642
    %v11644 = vadd.f32 %v11640, %v11643
    %vm11645 = vweird.f32 %v11522
    %vm11646 = vweird.f32 %v11640
    %vm11647 = vmor %vm11645, %vm11646
    %v11648 = vsel %vm11647, %v11640, %v11644
    %v11649 = vand.u32 2147483647, %v11522
    %vm11650 = vcmp.eq.f32.partialorder %v11649, 8.507059e+37
    %v11651 = vand.u32 %v11522, 2147483648
    %v11652 = vor.u32 1.1754944e-38, %v11651
    %v11653 = vsel %vm11650, %v11652, %v11648
    %v11654 = vmul.f32 1.0, %v11653
    %v11655 = vrcp.pop %v11523
    %v11656 = vmul.f32 %v11523, %v11655
    %v11657 = vsub.f32 1.0, %v11656
    %v11658 = vmul.f32 %v11655, %v11657
    %v11659 = vadd.f32 %v11655, %v11658
    %vm11660 = vweird.f32 %v11523
    %vm11661 = vweird.f32 %v11655
    %vm11662 = vmor %vm11660, %vm11661
    %v11663 = vsel %vm11662, %v11655, %v11659
    %v11664 = vand.u32 2147483647, %v11523
    %vm11665 = vcmp.eq.f32.partialorder %v11664, 8.507059e+37
    %v11666 = vand.u32 %v11523, 2147483648
    %v11667 = vor.u32 1.1754944e-38, %v11666
    %v11668 = vsel %vm11665, %v11667, %v11663
    %v11669 = vmul.f32 1.0, %v11668
    %v11670 = vrcp.pop %v11524
    %v11671 = vmul.f32 %v11524, %v11670
    %v11672 = vsub.f32 1.0, %v11671
    %v11673 = vmul.f32 %v11670, %v11672
    %v11674 = vadd.f32 %v11670, %v11673
    %vm11675 = vweird.f32 %v11524
    %vm11676 = vweird.f32 %v11670
    %vm11677 = vmor %vm11675, %vm11676
    %v11678 = vsel %vm11677, %v11670, %v11674
    %v11679 = vand.u32 2147483647, %v11524
    %vm11680 = vcmp.eq.f32.partialorder %v11679, 8.507059e+37
    %v11681 = vand.u32 %v11524, 2147483648
    %v11682 = vor.u32 1.1754944e-38, %v11681
    %v11683 = vsel %vm11680, %v11682, %v11678
    %v11684 = vmul.f32 1.0, %v11683
    %v11685 = vrcp.pop %v11525
    %v11686 = vmul.f32 %v11525, %v11685
    %v11687 = vsub.f32 1.0, %v11686
    %v11688 = vmul.f32 %v11685, %v11687
    %v11689 = vadd.f32 %v11685, %v11688
    %vm11690 = vweird.f32 %v11525
    %vm11691 = vweird.f32 %v11685
    %vm11692 = vmor %vm11690, %vm11691
    %v11693 = vsel %vm11692, %v11685, %v11689
    %v11694 = vand.u32 2147483647, %v11525
    %vm11695 = vcmp.eq.f32.partialorder %v11694, 8.507059e+37
    %v11696 = vand.u32 %v11525, 2147483648
    %v11697 = vor.u32 1.1754944e-38, %v11696
    %v11698 = vsel %vm11695, %v11697, %v11693
    %v11699 = vmul.f32 1.0, %v11698
    %v11700 = vrcp.pop %v11526
    %v11701 = vmul.f32 %v11526, %v11700
    %v11702 = vsub.f32 1.0, %v11701
    %v11703 = vmul.f32 %v11700, %v11702
    %v11704 = vadd.f32 %v11700, %v11703
    %vm11705 = vweird.f32 %v11526
    %vm11706 = vweird.f32 %v11700
    %vm11707 = vmor %vm11705, %vm11706
    %v11708 = vsel %vm11707, %v11700, %v11704
    %v11709 = vand.u32 2147483647, %v11526
    %vm11710 = vcmp.eq.f32.partialorder %v11709, 8.507059e+37
    %v11711 = vand.u32 %v11526, 2147483648
    %v11712 = vor.u32 1.1754944e-38, %v11711
    %v11713 = vsel %vm11710, %v11712, %v11708
    %v11714 = vmul.f32 1.0, %v11713
    %v11715 = vrcp.pop %v11527
    %v11716 = vmul.f32 %v11527, %v11715
    %v11717 = vsub.f32 1.0, %v11716
    %v11718 = vmul.f32 %v11715, %v11717
    %v11719 = vadd.f32 %v11715, %v11718
    %vm11720 = vweird.f32 %v11527
    %vm11721 = vweird.f32 %v11715
    %vm11722 = vmor %vm11720, %vm11721
    %v11723 = vsel %vm11722, %v11715, %v11719
    %v11724 = vand.u32 2147483647, %v11527
    %vm11725 = vcmp.eq.f32.partialorder %v11724, 8.507059e+37
    %v11726 = vand.u32 %v11527, 2147483648
    %v11727 = vor.u32 1.1754944e-38, %v11726
    %v11728 = vsel %vm11725, %v11727, %v11723
    %v11729 = vmul.f32 1.0, %v11728
    %v11730 = vrcp.pop %v11528
    %v11731 = vmul.f32 %v11528, %v11730
    %v11732 = vsub.f32 1.0, %v11731
    %v11733 = vmul.f32 %v11730, %v11732
    %v11734 = vadd.f32 %v11730, %v11733
    %vm11735 = vweird.f32 %v11528
    %vm11736 = vweird.f32 %v11730
    %vm11737 = vmor %vm11735, %vm11736
    %v11738 = vsel %vm11737, %v11730, %v11734
    %v11739 = vand.u32 2147483647, %v11528
    %vm11740 = vcmp.eq.f32.partialorder %v11739, 8.507059e+37
    %v11741 = vand.u32 %v11528, 2147483648
    %v11742 = vor.u32 1.1754944e-38, %v11741
    %v11743 = vsel %vm11740, %v11742, %v11738
    %v11744 = vmul.f32 1.0, %v11743
    %v11745 = vrcp.pop %v11529
    %v11746 = vmul.f32 %v11529, %v11745
    %v11747 = vsub.f32 1.0, %v11746
    %v11748 = vmul.f32 %v11745, %v11747
    %v11749 = vadd.f32 %v11745, %v11748
    %vm11750 = vweird.f32 %v11529
    %vm11751 = vweird.f32 %v11745
    %vm11752 = vmor %vm11750, %vm11751
    %v11753 = vsel %vm11752, %v11745, %v11749
    %v11754 = vand.u32 2147483647, %v11529
    %vm11755 = vcmp.eq.f32.partialorder %v11754, 8.507059e+37
    %v11756 = vand.u32 %v11529, 2147483648
    %v11757 = vor.u32 1.1754944e-38, %v11756
    %v11758 = vsel %vm11755, %v11757, %v11753
    %v11759 = vmul.f32 1.0, %v11758
    %v11760 = vrcp.pop %v11530
    %v11761 = vmul.f32 %v11530, %v11760
    %v11762 = vsub.f32 1.0, %v11761
    %v11763 = vmul.f32 %v11760, %v11762
    %v11764 = vadd.f32 %v11760, %v11763
    %vm11765 = vweird.f32 %v11530
    %vm11766 = vweird.f32 %v11760
    %vm11767 = vmor %vm11765, %vm11766
    %v11768 = vsel %vm11767, %v11760, %v11764
    %v11769 = vand.u32 2147483647, %v11530
    %vm11770 = vcmp.eq.f32.partialorder %v11769, 8.507059e+37
    %v11771 = vand.u32 %v11530, 2147483648
    %v11772 = vor.u32 1.1754944e-38, %v11771
    %v11773 = vsel %vm11770, %v11772, %v11768
    %v11774 = vmul.f32 1.0, %v11773
    %v11775 = vrcp.pop %v11531
    %v11776 = vmul.f32 %v11531, %v11775
    %v11777 = vsub.f32 1.0, %v11776
    %v11778 = vmul.f32 %v11775, %v11777
    %v11779 = vadd.f32 %v11775, %v11778
    %vm11780 = vweird.f32 %v11531
    %vm11781 = vweird.f32 %v11775
    %vm11782 = vmor %vm11780, %vm11781
    %v11783 = vsel %vm11782, %v11775, %v11779
    %v11784 = vand.u32 2147483647, %v11531
    %vm11785 = vcmp.eq.f32.partialorder %v11784, 8.507059e+37
    %v11786 = vand.u32 %v11531, 2147483648
    %v11787 = vor.u32 1.1754944e-38, %v11786
    %v11788 = vsel %vm11785, %v11787, %v11783
    %v11789 = vmul.f32 1.0, %v11788
    %v11790 = vrcp.pop %v11532
    %v11791 = vmul.f32 %v11532, %v11790
    %v11792 = vsub.f32 1.0, %v11791
    %v11793 = vmul.f32 %v11790, %v11792
    %v11794 = vadd.f32 %v11790, %v11793
    %vm11795 = vweird.f32 %v11532
    %vm11796 = vweird.f32 %v11790
    %vm11797 = vmor %vm11795, %vm11796
    %v11798 = vsel %vm11797, %v11790, %v11794
    %v11799 = vand.u32 2147483647, %v11532
    %vm11800 = vcmp.eq.f32.partialorder %v11799, 8.507059e+37
    %v11801 = vand.u32 %v11532, 2147483648
    %v11802 = vor.u32 1.1754944e-38, %v11801
    %v11803 = vsel %vm11800, %v11802, %v11798
    %v11804 = vmul.f32 1.0, %v11803
    %v11805 = vrcp.pop %v11533
    %v11806 = vmul.f32 %v11533, %v11805
    %v11807 = vsub.f32 1.0, %v11806
    %v11808 = vmul.f32 %v11805, %v11807
    %v11809 = vadd.f32 %v11805, %v11808
    %vm11810 = vweird.f32 %v11533
    %vm11811 = vweird.f32 %v11805
    %vm11812 = vmor %vm11810, %vm11811
    %v11813 = vsel %vm11812, %v11805, %v11809
    %v11814 = vand.u32 2147483647, %v11533
    %vm11815 = vcmp.eq.f32.partialorder %v11814, 8.507059e+37
    %v11816 = vand.u32 %v11533, 2147483648
    %v11817 = vor.u32 1.1754944e-38, %v11816
    %v11818 = vsel %vm11815, %v11817, %v11813
    %v11819 = vmul.f32 1.0, %v11818
    %v11820 = vrcp.pop %v11534
    %v11821 = vmul.f32 %v11534, %v11820
    %v11822 = vsub.f32 1.0, %v11821
    %v11823 = vmul.f32 %v11820, %v11822
    %v11824 = vadd.f32 %v11820, %v11823
    %vm11825 = vweird.f32 %v11534
    %vm11826 = vweird.f32 %v11820
    %vm11827 = vmor %vm11825, %vm11826
    %v11828 = vsel %vm11827, %v11820, %v11824
    %v11829 = vand.u32 2147483647, %v11534
    %vm11830 = vcmp.eq.f32.partialorder %v11829, 8.507059e+37
    %v11831 = vand.u32 %v11534, 2147483648
    %v11832 = vor.u32 1.1754944e-38, %v11831
    %v11833 = vsel %vm11830, %v11832, %v11828
    %v11834 = vmul.f32 1.0, %v11833
    %v11835 = vrcp.pop %v11535
    %v11836 = vmul.f32 %v11535, %v11835
    %v11837 = vsub.f32 1.0, %v11836
    %v11838 = vmul.f32 %v11835, %v11837
    %v11839 = vadd.f32 %v11835, %v11838
    %vm11840 = vweird.f32 %v11535
    %vm11841 = vweird.f32 %v11835
    %vm11842 = vmor %vm11840, %vm11841
    %v11843 = vsel %vm11842, %v11835, %v11839
    %v11844 = vand.u32 2147483647, %v11535
    %vm11845 = vcmp.eq.f32.partialorder %v11844, 8.507059e+37
    %v11846 = vand.u32 %v11535, 2147483648
    %v11847 = vor.u32 1.1754944e-38, %v11846
    %v11848 = vsel %vm11845, %v11847, %v11843
    %v11849 = vmul.f32 1.0, %v11848
    %v11850 = vrcp.pop %v11536
    %v11851 = vmul.f32 %v11536, %v11850
    %v11852 = vsub.f32 1.0, %v11851
    %v11853 = vmul.f32 %v11850, %v11852
    %v11854 = vadd.f32 %v11850, %v11853
    %vm11855 = vweird.f32 %v11536
    %vm11856 = vweird.f32 %v11850
    %vm11857 = vmor %vm11855, %vm11856
    %v11858 = vsel %vm11857, %v11850, %v11854
    %v11859 = vand.u32 2147483647, %v11536
    %vm11860 = vcmp.eq.f32.partialorder %v11859, 8.507059e+37
    %v11861 = vand.u32 %v11536, 2147483648
    %v11862 = vor.u32 1.1754944e-38, %v11861
    %v11863 = vsel %vm11860, %v11862, %v11858
    %v11864 = vmul.f32 1.0, %v11863
    %v11865 = vrcp.pop %v11537
    %v11866 = vmul.f32 %v11537, %v11865
    %v11867 = vsub.f32 1.0, %v11866
    %v11868 = vmul.f32 %v11865, %v11867
    %v11869 = vadd.f32 %v11865, %v11868
    %vm11870 = vweird.f32 %v11537
    %vm11871 = vweird.f32 %v11865
    %vm11872 = vmor %vm11870, %vm11871
    %v11873 = vsel %vm11872, %v11865, %v11869
    %v11874 = vand.u32 2147483647, %v11537
    %vm11875 = vcmp.eq.f32.partialorder %v11874, 8.507059e+37
    %v11876 = vand.u32 %v11537, 2147483648
    %v11877 = vor.u32 1.1754944e-38, %v11876
    %v11878 = vsel %vm11875, %v11877, %v11873
    %v11879 = vmul.f32 1.0, %v11878
    %v11880 = vrcp.pop %v11538
    %v11881 = vmul.f32 %v11538, %v11880
    %v11882 = vsub.f32 1.0, %v11881
    %v11883 = vmul.f32 %v11880, %v11882
    %v11884 = vadd.f32 %v11880, %v11883
    %vm11885 = vweird.f32 %v11538
    %vm11886 = vweird.f32 %v11880
    %vm11887 = vmor %vm11885, %vm11886
    %v11888 = vsel %vm11887, %v11880, %v11884
    %v11889 = vand.u32 2147483647, %v11538
    %vm11890 = vcmp.eq.f32.partialorder %v11889, 8.507059e+37
    %v11891 = vand.u32 %v11538, 2147483648
    %v11892 = vor.u32 1.1754944e-38, %v11891
    %v11893 = vsel %vm11890, %v11892, %v11888
    %v11894 = vmul.f32 1.0, %v11893
    %v11895 = vrcp.pop %v11539
    %v11896 = vmul.f32 %v11539, %v11895
    %v11897 = vsub.f32 1.0, %v11896
    %v11898 = vmul.f32 %v11895, %v11897
    %v11899 = vadd.f32 %v11895, %v11898
    %vm11900 = vweird.f32 %v11539
    %vm11901 = vweird.f32 %v11895
    %vm11902 = vmor %vm11900, %vm11901
    %v11903 = vsel %vm11902, %v11895, %v11899
    %v11904 = vand.u32 2147483647, %v11539
    %vm11905 = vcmp.eq.f32.partialorder %v11904, 8.507059e+37
    %v11906 = vand.u32 %v11539, 2147483648
    %v11907 = vor.u32 1.1754944e-38, %v11906
    %v11908 = vsel %vm11905, %v11907, %v11903
    %v11909 = vmul.f32 1.0, %v11908
    %v11910 = vrcp.pop %v11540
    %v11911 = vmul.f32 %v11540, %v11910
    %v11912 = vsub.f32 1.0, %v11911
    %v11913 = vmul.f32 %v11910, %v11912
    %v11914 = vadd.f32 %v11910, %v11913
    %vm11915 = vweird.f32 %v11540
    %vm11916 = vweird.f32 %v11910
    %vm11917 = vmor %vm11915, %vm11916
    %v11918 = vsel %vm11917, %v11910, %v11914
    %v11919 = vand.u32 2147483647, %v11540
    %vm11920 = vcmp.eq.f32.partialorder %v11919, 8.507059e+37
    %v11921 = vand.u32 %v11540, 2147483648
    %v11922 = vor.u32 1.1754944e-38, %v11921
    %v11923 = vsel %vm11920, %v11922, %v11918
    %v11924 = vmul.f32 1.0, %v11923
    %v11925 = vrcp.pop %v11541
    %v11926 = vmul.f32 %v11541, %v11925
    %v11927 = vsub.f32 1.0, %v11926
    %v11928 = vmul.f32 %v11925, %v11927
    %v11929 = vadd.f32 %v11925, %v11928
    %vm11930 = vweird.f32 %v11541
    %vm11931 = vweird.f32 %v11925
    %vm11932 = vmor %vm11930, %vm11931
    %v11933 = vsel %vm11932, %v11925, %v11929
    %v11934 = vand.u32 2147483647, %v11541
    %vm11935 = vcmp.eq.f32.partialorder %v11934, 8.507059e+37
    %v11936 = vand.u32 %v11541, 2147483648
    %v11937 = vor.u32 1.1754944e-38, %v11936
    %v11938 = vsel %vm11935, %v11937, %v11933
    %v11939 = vmul.f32 1.0, %v11938
    %v11940 = vrcp.pop %v11542
    %v11941 = vmul.f32 %v11542, %v11940
    %v11942 = vsub.f32 1.0, %v11941
    %v11943 = vmul.f32 %v11940, %v11942
    %v11944 = vadd.f32 %v11940, %v11943
    %vm11945 = vweird.f32 %v11542
    %vm11946 = vweird.f32 %v11940
    %vm11947 = vmor %vm11945, %vm11946
    %v11948 = vsel %vm11947, %v11940, %v11944
    %v11949 = vand.u32 2147483647, %v11542
    %vm11950 = vcmp.eq.f32.partialorder %v11949, 8.507059e+37
    %v11951 = vand.u32 %v11542, 2147483648
    %v11952 = vor.u32 1.1754944e-38, %v11951
    %v11953 = vsel %vm11950, %v11952, %v11948
    %v11954 = vmul.f32 1.0, %v11953
    %v11955 = vrcp.pop %v11543
    %v11956 = vmul.f32 %v11543, %v11955
    %v11957 = vsub.f32 1.0, %v11956
    %v11958 = vmul.f32 %v11955, %v11957
    %v11959 = vadd.f32 %v11955, %v11958
    %vm11960 = vweird.f32 %v11543
    %vm11961 = vweird.f32 %v11955
    %vm11962 = vmor %vm11960, %vm11961
    %v11963 = vsel %vm11962, %v11955, %v11959
    %v11964 = vand.u32 2147483647, %v11543
    %vm11965 = vcmp.eq.f32.partialorder %v11964, 8.507059e+37
    %v11966 = vand.u32 %v11543, 2147483648
    %v11967 = vor.u32 1.1754944e-38, %v11966
    %v11968 = vsel %vm11965, %v11967, %v11963
    %v11969 = vmul.f32 1.0, %v11968
    %v11970 = vrcp.pop %v11544
    %v11971 = vmul.f32 %v11544, %v11970
    %v11972 = vsub.f32 1.0, %v11971
    %v11973 = vmul.f32 %v11970, %v11972
    %v11974 = vadd.f32 %v11970, %v11973
    %vm11975 = vweird.f32 %v11544
    %vm11976 = vweird.f32 %v11970
    %vm11977 = vmor %vm11975, %vm11976
    %v11978 = vsel %vm11977, %v11970, %v11974
    %v11979 = vand.u32 2147483647, %v11544
    %vm11980 = vcmp.eq.f32.partialorder %v11979, 8.507059e+37
    %v11981 = vand.u32 %v11544, 2147483648
    %v11982 = vor.u32 1.1754944e-38, %v11981
    %v11983 = vsel %vm11980, %v11982, %v11978
    %v11984 = vmul.f32 1.0, %v11983
    %v11985 = vrcp.pop %v11545
    %v11986 = vmul.f32 %v11545, %v11985
    %v11987 = vsub.f32 1.0, %v11986
    %v11988 = vmul.f32 %v11985, %v11987
    %v11989 = vadd.f32 %v11985, %v11988
    %vm11990 = vweird.f32 %v11545
    %vm11991 = vweird.f32 %v11985
    %vm11992 = vmor %vm11990, %vm11991
    %v11993 = vsel %vm11992, %v11985, %v11989
    %v11994 = vand.u32 2147483647, %v11545
    %vm11995 = vcmp.eq.f32.partialorder %v11994, 8.507059e+37
    %v11996 = vand.u32 %v11545, 2147483648
    %v11997 = vor.u32 1.1754944e-38, %v11996
    %v11998 = vsel %vm11995, %v11997, %v11993
    %v11999 = vmul.f32 1.0, %v11998
    %v12000 = vrcp.pop %v11546
    %v12001 = vmul.f32 %v11546, %v12000
    %v12002 = vsub.f32 1.0, %v12001
    %v12003 = vmul.f32 %v12000, %v12002
    %v12004 = vadd.f32 %v12000, %v12003
    %vm12005 = vweird.f32 %v11546
    %vm12006 = vweird.f32 %v12000
    %vm12007 = vmor %vm12005, %vm12006
    %v12008 = vsel %vm12007, %v12000, %v12004
    %v12009 = vand.u32 2147483647, %v11546
    %vm12010 = vcmp.eq.f32.partialorder %v12009, 8.507059e+37
    %v12011 = vand.u32 %v11546, 2147483648
    %v12012 = vor.u32 1.1754944e-38, %v12011
    %v12013 = vsel %vm12010, %v12012, %v12008
    %v12014 = vmul.f32 1.0, %v12013
    %v12015 = vrcp.pop %v11547
    %v12016 = vmul.f32 %v11547, %v12015
    %v12017 = vsub.f32 1.0, %v12016
    %v12018 = vmul.f32 %v12015, %v12017
    %v12019 = vadd.f32 %v12015, %v12018
    %vm12020 = vweird.f32 %v11547
    %vm12021 = vweird.f32 %v12015
    %vm12022 = vmor %vm12020, %vm12021
    %v12023 = vsel %vm12022, %v12015, %v12019
    %v12024 = vand.u32 2147483647, %v11547
    %vm12025 = vcmp.eq.f32.partialorder %v12024, 8.507059e+37
    %v12026 = vand.u32 %v11547, 2147483648
    %v12027 = vor.u32 1.1754944e-38, %v12026
    %v12028 = vsel %vm12025, %v12027, %v12023
    %v12029 = vmul.f32 1.0, %v12028
    %v12030 = vrcp.pop %v11548
    %v12031 = vmul.f32 %v11548, %v12030
    %v12032 = vsub.f32 1.0, %v12031
    %v12033 = vmul.f32 %v12030, %v12032
    %v12034 = vadd.f32 %v12030, %v12033
    %vm12035 = vweird.f32 %v11548
    %vm12036 = vweird.f32 %v12030
    %vm12037 = vmor %vm12035, %vm12036
    %v12038 = vsel %vm12037, %v12030, %v12034
    %v12039 = vand.u32 2147483647, %v11548
    %vm12040 = vcmp.eq.f32.partialorder %v12039, 8.507059e+37
    %v12041 = vand.u32 %v11548, 2147483648
    %v12042 = vor.u32 1.1754944e-38, %v12041
    %v12043 = vsel %vm12040, %v12042, %v12038
    %v12044 = vmul.f32 1.0, %v12043
    %v12045 = vrcp.pop %v11549
    %v12046 = vmul.f32 %v11549, %v12045
    %v12047 = vsub.f32 1.0, %v12046
    %v12048 = vmul.f32 %v12045, %v12047
    %v12049 = vadd.f32 %v12045, %v12048
    %vm12050 = vweird.f32 %v11549
    %vm12051 = vweird.f32 %v12045
    %vm12052 = vmor %vm12050, %vm12051
    %v12053 = vsel %vm12052, %v12045, %v12049
    %v12054 = vand.u32 2147483647, %v11549
    %vm12055 = vcmp.eq.f32.partialorder %v12054, 8.507059e+37
    %v12056 = vand.u32 %v11549, 2147483648
    %v12057 = vor.u32 1.1754944e-38, %v12056
    %v12058 = vsel %vm12055, %v12057, %v12053
    %v12059 = vmul.f32 1.0, %v12058
    %v12060 = vrcp.pop %v11550
    %v12061 = vmul.f32 %v11550, %v12060
    %v12062 = vsub.f32 1.0, %v12061
    %v12063 = vmul.f32 %v12060, %v12062
    %v12064 = vadd.f32 %v12060, %v12063
    %vm12065 = vweird.f32 %v11550
    %vm12066 = vweird.f32 %v12060
    %vm12067 = vmor %vm12065, %vm12066
    %v12068 = vsel %vm12067, %v12060, %v12064
    %v12069 = vand.u32 2147483647, %v11550
    %vm12070 = vcmp.eq.f32.partialorder %v12069, 8.507059e+37
    %v12071 = vand.u32 %v11550, 2147483648
    %v12072 = vor.u32 1.1754944e-38, %v12071
    %v12073 = vsel %vm12070, %v12072, %v12068
    %v12074 = vmul.f32 1.0, %v12073
    %v12075 = vrcp.pop %v11551
    %v12076 = vmul.f32 %v11551, %v12075
    %v12077 = vsub.f32 1.0, %v12076
    %v12078 = vmul.f32 %v12075, %v12077
    %v12079 = vadd.f32 %v12075, %v12078
    %vm12080 = vweird.f32 %v11551
    %vm12081 = vweird.f32 %v12075
    %vm12082 = vmor %vm12080, %vm12081
    %v12083 = vsel %vm12082, %v12075, %v12079
    %v12084 = vand.u32 2147483647, %v11551
    %vm12085 = vcmp.eq.f32.partialorder %v12084, 8.507059e+37
    %v12086 = vand.u32 %v11551, 2147483648
    %v12087 = vor.u32 1.1754944e-38, %v12086
    %v12088 = vsel %vm12085, %v12087, %v12083
    %v12089 = vmul.f32 1.0, %v12088
    %v12090 = vrcp.pop %v11552
    %v12091 = vmul.f32 %v11552, %v12090
    %v12092 = vsub.f32 1.0, %v12091
    %v12093 = vmul.f32 %v12090, %v12092
    %v12094 = vadd.f32 %v12090, %v12093
    %vm12095 = vweird.f32 %v11552
    %vm12096 = vweird.f32 %v12090
    %vm12097 = vmor %vm12095, %vm12096
    %v12098 = vsel %vm12097, %v12090, %v12094
    %v12099 = vand.u32 2147483647, %v11552
    %vm12100 = vcmp.eq.f32.partialorder %v12099, 8.507059e+37
    %v12101 = vand.u32 %v11552, 2147483648
    %v12102 = vor.u32 1.1754944e-38, %v12101
    %v12103 = vsel %vm12100, %v12102, %v12098
    %v12104 = vmul.f32 1.0, %v12103
    %v12105 = vrcp.pop %v11553
    %v12106 = vmul.f32 %v11553, %v12105
    %v12107 = vsub.f32 1.0, %v12106
    %v12108 = vmul.f32 %v12105, %v12107
    %v12109 = vadd.f32 %v12105, %v12108
    %vm12110 = vweird.f32 %v11553
    %vm12111 = vweird.f32 %v12105
    %vm12112 = vmor %vm12110, %vm12111
    %v12113 = vsel %vm12112, %v12105, %v12109
    %v12114 = vand.u32 2147483647, %v11553
    %vm12115 = vcmp.eq.f32.partialorder %v12114, 8.507059e+37
    %v12116 = vand.u32 %v11553, 2147483648
    %v12117 = vor.u32 1.1754944e-38, %v12116
    %v12118 = vsel %vm12115, %v12117, %v12113
    %v12119 = vmul.f32 1.0, %v12118
    %v12120 = vrcp.pop %v11554
    %v12121 = vmul.f32 %v11554, %v12120
    %v12122 = vsub.f32 1.0, %v12121
    %v12123 = vmul.f32 %v12120, %v12122
    %v12124 = vadd.f32 %v12120, %v12123
    %vm12125 = vweird.f32 %v11554
    %vm12126 = vweird.f32 %v12120
    %vm12127 = vmor %vm12125, %vm12126
    %v12128 = vsel %vm12127, %v12120, %v12124
    %v12129 = vand.u32 2147483647, %v11554
    %vm12130 = vcmp.eq.f32.partialorder %v12129, 8.507059e+37
    %v12131 = vand.u32 %v11554, 2147483648
    %v12132 = vor.u32 1.1754944e-38, %v12131
    %v12133 = vsel %vm12130, %v12132, %v12128
    %v12134 = vmul.f32 1.0, %v12133
    %v12135 = vrcp.pop %v11555
    %v12136 = vmul.f32 %v11555, %v12135
    %v12137 = vsub.f32 1.0, %v12136
    %v12138 = vmul.f32 %v12135, %v12137
    %v12139 = vadd.f32 %v12135, %v12138
    %vm12140 = vweird.f32 %v11555
    %vm12141 = vweird.f32 %v12135
    %vm12142 = vmor %vm12140, %vm12141
    %v12143 = vsel %vm12142, %v12135, %v12139
    %v12144 = vand.u32 2147483647, %v11555
    %vm12145 = vcmp.eq.f32.partialorder %v12144, 8.507059e+37
    %v12146 = vand.u32 %v11555, 2147483648
    %v12147 = vor.u32 1.1754944e-38, %v12146
    %v12148 = vsel %vm12145, %v12147, %v12143
    %v12149 = vmul.f32 1.0, %v12148
    %v12150 = vrcp.pop %v11556
    %v12151 = vmul.f32 %v11556, %v12150
    %v12152 = vsub.f32 1.0, %v12151
    %v12153 = vmul.f32 %v12150, %v12152
    %v12154 = vadd.f32 %v12150, %v12153
    %vm12155 = vweird.f32 %v11556
    %vm12156 = vweird.f32 %v12150
    %vm12157 = vmor %vm12155, %vm12156
    %v12158 = vsel %vm12157, %v12150, %v12154
    %v12159 = vand.u32 2147483647, %v11556
    %vm12160 = vcmp.eq.f32.partialorder %v12159, 8.507059e+37
    %v12161 = vand.u32 %v11556, 2147483648
    %v12162 = vor.u32 1.1754944e-38, %v12161
    %v12163 = vsel %vm12160, %v12162, %v12158
    %v12164 = vmul.f32 1.0, %v12163
    %v12165 = vrcp.pop %v11557
    %v12166 = vmul.f32 %v11557, %v12165
    %v12167 = vsub.f32 1.0, %v12166
    %v12168 = vmul.f32 %v12165, %v12167
    %v12169 = vadd.f32 %v12165, %v12168
    %vm12170 = vweird.f32 %v11557
    %vm12171 = vweird.f32 %v12165
    %vm12172 = vmor %vm12170, %vm12171
    %v12173 = vsel %vm12172, %v12165, %v12169
    %v12174 = vand.u32 2147483647, %v11557
    %vm12175 = vcmp.eq.f32.partialorder %v12174, 8.507059e+37
    %v12176 = vand.u32 %v11557, 2147483648
    %v12177 = vor.u32 1.1754944e-38, %v12176
    %v12178 = vsel %vm12175, %v12177, %v12173
    %v12179 = vmul.f32 1.0, %v12178
    %v12180 = vrcp.pop %v11558
    %v12181 = vmul.f32 %v11558, %v12180
    %v12182 = vsub.f32 1.0, %v12181
    %v12183 = vmul.f32 %v12180, %v12182
    %v12184 = vadd.f32 %v12180, %v12183
    %vm12185 = vweird.f32 %v11558
    %vm12186 = vweird.f32 %v12180
    %vm12187 = vmor %vm12185, %vm12186
    %v12188 = vsel %vm12187, %v12180, %v12184
    %v12189 = vand.u32 2147483647, %v11558
    %vm12190 = vcmp.eq.f32.partialorder %v12189, 8.507059e+37
    %v12191 = vand.u32 %v11558, 2147483648
    %v12192 = vor.u32 1.1754944e-38, %v12191
    %v12193 = vsel %vm12190, %v12192, %v12188
    %v12194 = vmul.f32 1.0, %v12193
    %v12195 = vrcp.pop %v11559
    %v12196 = vmul.f32 %v11559, %v12195
    %v12197 = vsub.f32 1.0, %v12196
    %v12198 = vmul.f32 %v12195, %v12197
    %v12199 = vadd.f32 %v12195, %v12198
    %vm12200 = vweird.f32 %v11559
    %vm12201 = vweird.f32 %v12195
    %vm12202 = vmor %vm12200, %vm12201
    %v12203 = vsel %vm12202, %v12195, %v12199
    %v12204 = vand.u32 2147483647, %v11559
    %vm12205 = vcmp.eq.f32.partialorder %v12204, 8.507059e+37
    %v12206 = vand.u32 %v11559, 2147483648
    %v12207 = vor.u32 1.1754944e-38, %v12206
    %v12208 = vsel %vm12205, %v12207, %v12203
    %v12209 = vmul.f32 1.0, %v12208
    %v12210 = vrcp.pop %v11560
    %v12211 = vmul.f32 %v11560, %v12210
    %v12212 = vsub.f32 1.0, %v12211
    %v12213 = vmul.f32 %v12210, %v12212
    %v12214 = vadd.f32 %v12210, %v12213
    %vm12215 = vweird.f32 %v11560
    %vm12216 = vweird.f32 %v12210
    %vm12217 = vmor %vm12215, %vm12216
    %v12218 = vsel %vm12217, %v12210, %v12214
    %v12219 = vand.u32 2147483647, %v11560
    %vm12220 = vcmp.eq.f32.partialorder %v12219, 8.507059e+37
    %v12221 = vand.u32 %v11560, 2147483648
    %v12222 = vor.u32 1.1754944e-38, %v12221
    %v12223 = vsel %vm12220, %v12222, %v12218
    %v12224 = vmul.f32 1.0, %v12223
    %v12225 = vrcp.pop %v11561
    %v12226 = vmul.f32 %v11561, %v12225
    %v12227 = vsub.f32 1.0, %v12226
    %v12228 = vmul.f32 %v12225, %v12227
    %v12229 = vadd.f32 %v12225, %v12228
    %vm12230 = vweird.f32 %v11561
    %vm12231 = vweird.f32 %v12225
    %vm12232 = vmor %vm12230, %vm12231
    %v12233 = vsel %vm12232, %v12225, %v12229
    %v12234 = vand.u32 2147483647, %v11561
    %vm12235 = vcmp.eq.f32.partialorder %v12234, 8.507059e+37
    %v12236 = vand.u32 %v11561, 2147483648
    %v12237 = vor.u32 1.1754944e-38, %v12236
    %v12238 = vsel %vm12235, %v12237, %v12233
    %v12239 = vmul.f32 1.0, %v12238
    %v12240 = vrcp.pop %v11562
    %v12241 = vmul.f32 %v11562, %v12240
    %v12242 = vsub.f32 1.0, %v12241
    %v12243 = vmul.f32 %v12240, %v12242
    %v12244 = vadd.f32 %v12240, %v12243
    %vm12245 = vweird.f32 %v11562
    %vm12246 = vweird.f32 %v12240
    %vm12247 = vmor %vm12245, %vm12246
    %v12248 = vsel %vm12247, %v12240, %v12244
    %v12249 = vand.u32 2147483647, %v11562
    %vm12250 = vcmp.eq.f32.partialorder %v12249, 8.507059e+37
    %v12251 = vand.u32 %v11562, 2147483648
    %v12252 = vor.u32 1.1754944e-38, %v12251
    %v12253 = vsel %vm12250, %v12252, %v12248
    %v12254 = vmul.f32 1.0, %v12253
    %v12255 = vrcp.pop %v11563
    %v12256 = vmul.f32 %v11563, %v12255
    %v12257 = vsub.f32 1.0, %v12256
    %v12258 = vmul.f32 %v12255, %v12257
    %v12259 = vadd.f32 %v12255, %v12258
    %vm12260 = vweird.f32 %v11563
    %vm12261 = vweird.f32 %v12255
    %vm12262 = vmor %vm12260, %vm12261
    %v12263 = vsel %vm12262, %v12255, %v12259
    %v12264 = vand.u32 2147483647, %v11563
    %vm12265 = vcmp.eq.f32.partialorder %v12264, 8.507059e+37
    %v12266 = vand.u32 %v11563, 2147483648
    %v12267 = vor.u32 1.1754944e-38, %v12266
    %v12268 = vsel %vm12265, %v12267, %v12263
    %v12269 = vmul.f32 1.0, %v12268
    %v12270 = vrcp.pop %v11564
    %v12271 = vmul.f32 %v11564, %v12270
    %v12272 = vsub.f32 1.0, %v12271
    %v12273 = vmul.f32 %v12270, %v12272
    %v12274 = vadd.f32 %v12270, %v12273
    %vm12275 = vweird.f32 %v11564
    %vm12276 = vweird.f32 %v12270
    %vm12277 = vmor %vm12275, %vm12276
    %v12278 = vsel %vm12277, %v12270, %v12274
    %v12279 = vand.u32 2147483647, %v11564
    %vm12280 = vcmp.eq.f32.partialorder %v12279, 8.507059e+37
    %v12281 = vand.u32 %v11564, 2147483648
    %v12282 = vor.u32 1.1754944e-38, %v12281
    %v12283 = vsel %vm12280, %v12282, %v12278
    %v12284 = vmul.f32 1.0, %v12283
    %12333 = vrot.lane.b32.xlu0 %v11579, 96
    %v12334 = vpop.permute.xlu0 %12333
    %12335 = vrot.lane.b32.xlu0 %v11594, 96
    %v12336 = vpop.permute.xlu0 %12335
    %12337 = vrot.lane.b32.xlu0 %v11609, 96
    %v12338 = vpop.permute.xlu0 %12337
    %12339 = vrot.lane.b32.xlu0 %v11624, 96
    %v12340 = vpop.permute.xlu0 %12339
    %12341 = vrot.lane.b32.xlu0 %v11639, 96
    %v12342 = vpop.permute.xlu0 %12341
    %12343 = vrot.lane.b32.xlu0 %v11654, 96
    %v12344 = vpop.permute.xlu0 %12343
    %12345 = vrot.lane.b32.xlu0 %v11669, 96
    %v12346 = vpop.permute.xlu0 %12345
    %12347 = vrot.lane.b32.xlu0 %v11684, 96
    %v12348 = vpop.permute.xlu0 %12347
    %12349 = vrot.lane.b32.xlu0 %v11699, 96
    %v12350 = vpop.permute.xlu0 %12349
    %12351 = vrot.lane.b32.xlu0 %v11714, 96
    %v12352 = vpop.permute.xlu0 %12351
    %12353 = vrot.lane.b32.xlu0 %v11729, 96
    %v12354 = vpop.permute.xlu0 %12353
    %12355 = vrot.lane.b32.xlu0 %v11744, 96
    %v12356 = vpop.permute.xlu0 %12355
    %12357 = vrot.lane.b32.xlu0 %v11759, 96
    %v12358 = vpop.permute.xlu0 %12357
    %12359 = vrot.lane.b32.xlu0 %v11774, 96
    %v12360 = vpop.permute.xlu0 %12359
    %12361 = vrot.lane.b32.xlu0 %v11789, 96
    %v12362 = vpop.permute.xlu0 %12361
    %12363 = vrot.lane.b32.xlu0 %v11804, 96
    %v12364 = vpop.permute.xlu0 %12363
    %12365 = vrot.lane.b32.xlu0 %v11819, 96
    %v12366 = vpop.permute.xlu0 %12365
    %12367 = vrot.lane.b32.xlu0 %v11834, 96
    %v12368 = vpop.permute.xlu0 %12367
    %12369 = vrot.lane.b32.xlu0 %v11849, 96
    %v12370 = vpop.permute.xlu0 %12369
    %12371 = vrot.lane.b32.xlu0 %v11864, 96
    %v12372 = vpop.permute.xlu0 %12371
    %12373 = vrot.lane.b32.xlu0 %v11879, 96
    %v12374 = vpop.permute.xlu0 %12373
    %12375 = vrot.lane.b32.xlu0 %v11894, 96
    %v12376 = vpop.permute.xlu0 %12375
    %12377 = vrot.lane.b32.xlu0 %v11909, 96
    %v12378 = vpop.permute.xlu0 %12377
    %12379 = vrot.lane.b32.xlu0 %v11924, 96
    %v12380 = vpop.permute.xlu0 %12379
    %12381 = vrot.lane.b32.xlu0 %v11939, 96
    %v12382 = vpop.permute.xlu0 %12381
    %12383 = vrot.lane.b32.xlu0 %v11954, 96
    %v12384 = vpop.permute.xlu0 %12383
    %12385 = vrot.lane.b32.xlu0 %v11969, 96
    %v12386 = vpop.permute.xlu0 %12385
    %12387 = vrot.lane.b32.xlu0 %v11984, 96
    %v12388 = vpop.permute.xlu0 %12387
    %12389 = vrot.lane.b32.xlu0 %v11999, 96
    %v12390 = vpop.permute.xlu0 %12389
    %12391 = vrot.lane.b32.xlu0 %v12014, 96
    %v12392 = vpop.permute.xlu0 %12391
    %12393 = vrot.lane.b32.xlu0 %v12029, 96
    %v12394 = vpop.permute.xlu0 %12393
    %12395 = vrot.lane.b32.xlu0 %v12044, 96
    %v12396 = vpop.permute.xlu0 %12395
    %12397 = vrot.lane.b32.xlu0 %v12059, 96
    %v12398 = vpop.permute.xlu0 %12397
    %12399 = vrot.lane.b32.xlu0 %v12074, 96
    %v12400 = vpop.permute.xlu0 %12399
    %12401 = vrot.lane.b32.xlu0 %v12089, 96
    %v12402 = vpop.permute.xlu0 %12401
    %12403 = vrot.lane.b32.xlu0 %v12104, 96
    %v12404 = vpop.permute.xlu0 %12403
    %12405 = vrot.lane.b32.xlu0 %v12119, 96
    %v12406 = vpop.permute.xlu0 %12405
    %12407 = vrot.lane.b32.xlu0 %v12134, 96
    %v12408 = vpop.permute.xlu0 %12407
    %12409 = vrot.lane.b32.xlu0 %v12149, 96
    %v12410 = vpop.permute.xlu0 %12409
    %12411 = vrot.lane.b32.xlu0 %v12164, 96
    %v12412 = vpop.permute.xlu0 %12411
    %12413 = vrot.lane.b32.xlu0 %v12179, 96
    %v12414 = vpop.permute.xlu0 %12413
    %12415 = vrot.lane.b32.xlu0 %v12194, 96
    %v12416 = vpop.permute.xlu0 %12415
    %12417 = vrot.lane.b32.xlu0 %v12209, 96
    %v12418 = vpop.permute.xlu0 %12417
    %12419 = vrot.lane.b32.xlu0 %v12224, 96
    %v12420 = vpop.permute.xlu0 %12419
    %12421 = vrot.lane.b32.xlu0 %v12239, 96
    %v12422 = vpop.permute.xlu0 %12421
    %12423 = vrot.lane.b32.xlu0 %v12254, 96
    %v12424 = vpop.permute.xlu0 %12423
    %12425 = vrot.lane.b32.xlu0 %v12269, 96
    %v12426 = vpop.permute.xlu0 %12425
    %12427 = vrot.lane.b32.xlu0 %v12284, 96
    %v12428 = vpop.permute.xlu0 %12427
    %v12477 = vmul.f32 %v11325, %v12334
    %v12478 = vmul.f32 %v11326, %v12336
    %v12479 = vmul.f32 %v11327, %v12338
    %v12480 = vmul.f32 %v11328, %v12340
    %v12481 = vmul.f32 %v11329, %v12342
    %v12482 = vmul.f32 %v11330, %v12344
    %v12483 = vmul.f32 %v11331, %v12346
    %v12484 = vmul.f32 %v11332, %v12348
    %v12485 = vmul.f32 %v11333, %v12350
    %v12486 = vmul.f32 %v11334, %v12352
    %v12487 = vmul.f32 %v11335, %v12354
    %v12488 = vmul.f32 %v11336, %v12356
    %v12489 = vmul.f32 %v11337, %v12358
    %v12490 = vmul.f32 %v11338, %v12360
    %v12491 = vmul.f32 %v11339, %v12362
    %v12492 = vmul.f32 %v11340, %v12364
    %v12493 = vmul.f32 %v11341, %v12366
    %v12494 = vmul.f32 %v11342, %v12368
    %v12495 = vmul.f32 %v11343, %v12370
    %v12496 = vmul.f32 %v11344, %v12372
    %v12497 = vmul.f32 %v11345, %v12374
    %v12498 = vmul.f32 %v11346, %v12376
    %v12499 = vmul.f32 %v11347, %v12378
    %v12500 = vmul.f32 %v11348, %v12380
    %v12501 = vmul.f32 %v11349, %v12382
    %v12502 = vmul.f32 %v11350, %v12384
    %v12503 = vmul.f32 %v11351, %v12386
    %v12504 = vmul.f32 %v11352, %v12388
    %v12505 = vmul.f32 %v11353, %v12390
    %v12506 = vmul.f32 %v11354, %v12392
    %v12507 = vmul.f32 %v11355, %v12394
    %v12508 = vmul.f32 %v11356, %v12396
    %v12509 = vmul.f32 %v11357, %v12398
    %v12510 = vmul.f32 %v11358, %v12400
    %v12511 = vmul.f32 %v11359, %v12402
    %v12512 = vmul.f32 %v11360, %v12404
    %v12513 = vmul.f32 %v11361, %v12406
    %v12514 = vmul.f32 %v11362, %v12408
    %v12515 = vmul.f32 %v11363, %v12410
    %v12516 = vmul.f32 %v11364, %v12412
    %v12517 = vmul.f32 %v11365, %v12414
    %v12518 = vmul.f32 %v11366, %v12416
    %v12519 = vmul.f32 %v11367, %v12418
    %v12520 = vmul.f32 %v11368, %v12420
    %v12521 = vmul.f32 %v11369, %v12422
    %v12522 = vmul.f32 %v11370, %v12424
    %v12523 = vmul.f32 %v11371, %v12426
    %v12524 = vmul.f32 %v11372, %v12428
    %v12525 = vld [vmem:[%s18] sm:$0xff]
    %v12526 = vld [vmem:[%s18 + $0x8] sm:$0xff]
    %v12527 = vld [vmem:[%s18 + $0x10] sm:$0xff]
    %v12528 = vld [vmem:[%s18 + $0x18] sm:$0xff]
    %v12530 = vsel %vm2472, %v12477, 0
    %v12533 = vsel %vm2472, %v12478, 0
    %v12536 = vsel %vm2472, %v12479, 0
    %v12539 = vsel %vm2472, %v12480, 0
    %v12542 = vsel %vm2472, %v12481, 0
    %v12545 = vsel %vm2472, %v12482, 0
    %v12548 = vsel %vm2472, %v12483, 0
    %v12551 = vsel %vm2472, %v12484, 0
    %v12554 = vsel %vm2472, %v12485, 0
    %v12557 = vsel %vm2472, %v12486, 0
    %v12560 = vsel %vm2472, %v12487, 0
    %v12563 = vsel %vm2472, %v12488, 0
    %v12566 = vsel %vm2472, %v12489, 0
    %v12569 = vsel %vm2472, %v12490, 0
    %v12572 = vsel %vm2472, %v12491, 0
    %v12575 = vsel %vm2472, %v12492, 0
    %v12578 = vsel %vm2472, %v12493, 0
    %v12581 = vsel %vm2472, %v12494, 0
    %v12584 = vsel %vm2472, %v12495, 0
    %v12587 = vsel %vm2472, %v12496, 0
    %v12590 = vsel %vm2472, %v12497, 0
    %v12593 = vsel %vm2472, %v12498, 0
    %v12596 = vsel %vm2472, %v12499, 0
    %v12599 = vsel %vm2472, %v12500, 0
    %v12602 = vsel %vm2472, %v12501, 0
    %v12605 = vsel %vm2472, %v12502, 0
    %v12608 = vsel %vm2472, %v12503, 0
    %v12611 = vsel %vm2472, %v12504, 0
    %v12614 = vsel %vm2472, %v12505, 0
    %v12617 = vsel %vm2472, %v12506, 0
    %v12620 = vsel %vm2472, %v12507, 0
    %v12623 = vsel %vm2472, %v12508, 0
    %v12626 = vsel %vm2472, %v12509, 0
    %v12629 = vsel %vm2472, %v12510, 0
    %v12632 = vsel %vm2472, %v12511, 0
    %v12635 = vsel %vm2472, %v12512, 0
    %v12638 = vsel %vm2472, %v12513, 0
    %v12641 = vsel %vm2472, %v12514, 0
    %v12644 = vsel %vm2472, %v12515, 0
    %v12647 = vsel %vm2472, %v12516, 0
    %v12650 = vsel %vm2472, %v12517, 0
    %v12653 = vsel %vm2472, %v12518, 0
    %v12656 = vsel %vm2472, %v12519, 0
    %v12659 = vsel %vm2472, %v12520, 0
    %v12662 = vsel %vm2472, %v12521, 0
    %v12665 = vsel %vm2472, %v12522, 0
    %v12668 = vsel %vm2472, %v12523, 0
    %v12671 = vsel %vm2472, %v12524, 0
    %12673 = vmatpush.msra.mxu0 0.0
    %12674 = vmatpush.msra.mxu0 0.0
    %12675 = vmatpush.msra.mxu0 0.0
    %12676 = vmatpush.msra.mxu0 0.0
    %12677 = vmatpush.msra.mxu0 0.0
    %12678 = vmatpush.msra.mxu0 0.0
    %12679 = vmatpush.msra.mxu0 0.0
    %12680 = vmatpush.msra.mxu0 0.0
    %12681 = vmatpush.msra.mxu0 0.0
    %12682 = vmatpush.msra.mxu0 0.0
    %12683 = vmatpush.msra.mxu0 0.0
    %12684 = vmatpush.msra.mxu0 0.0
    %12685 = vmatpush.msra.mxu0 %v12528
    %12686 = vmatpush.msra.mxu0 %v12527
    %12687 = vmatpush.msra.mxu0 %v12526
    %12688 = vmatpush.msra.mxu0 %v12525
    %12689 = vmatmul.f32.gmra.mxu0 %v12530
    %v12690 = vpop.f32.mrf.mxu0
    %v12691 = vadd.f32 0.0, %v12690
    %12692 = vmatmul.f32.gmra.mxu0 %v12533
    %v12693 = vpop.f32.mrf.mxu0
    %v12694 = vadd.f32 0.0, %v12693
    %12695 = vmatmul.f32.gmra.mxu0 %v12536
    %v12696 = vpop.f32.mrf.mxu0
    %v12697 = vadd.f32 0.0, %v12696
    %12698 = vmatmul.f32.gmra.mxu0 %v12539
    %v12699 = vpop.f32.mrf.mxu0
    %v12700 = vadd.f32 0.0, %v12699
    %12701 = vmatmul.f32.gmra.mxu0 %v12542
    %v12702 = vpop.f32.mrf.mxu0
    %v12703 = vadd.f32 0.0, %v12702
    %12704 = vmatmul.f32.gmra.mxu0 %v12545
    %v12705 = vpop.f32.mrf.mxu0
    %v12706 = vadd.f32 0.0, %v12705
    %12707 = vmatmul.f32.gmra.mxu0 %v12548
    %v12708 = vpop.f32.mrf.mxu0
    %v12709 = vadd.f32 0.0, %v12708
    %12710 = vmatmul.f32.gmra.mxu0 %v12551
    %v12711 = vpop.f32.mrf.mxu0
    %v12712 = vadd.f32 0.0, %v12711
    %12713 = vmatmul.f32.gmra.mxu0 %v12554
    %v12714 = vpop.f32.mrf.mxu0
    %v12715 = vadd.f32 0.0, %v12714
    %12716 = vmatmul.f32.gmra.mxu0 %v12557
    %v12717 = vpop.f32.mrf.mxu0
    %v12718 = vadd.f32 0.0, %v12717
    %12719 = vmatmul.f32.gmra.mxu0 %v12560
    %v12720 = vpop.f32.mrf.mxu0
    %v12721 = vadd.f32 0.0, %v12720
    %12722 = vmatmul.f32.gmra.mxu0 %v12563
    %v12723 = vpop.f32.mrf.mxu0
    %v12724 = vadd.f32 0.0, %v12723
    %12725 = vmatmul.f32.gmra.mxu0 %v12566
    %v12726 = vpop.f32.mrf.mxu0
    %v12727 = vadd.f32 0.0, %v12726
    %12728 = vmatmul.f32.gmra.mxu0 %v12569
    %v12729 = vpop.f32.mrf.mxu0
    %v12730 = vadd.f32 0.0, %v12729
    %12731 = vmatmul.f32.gmra.mxu0 %v12572
    %v12732 = vpop.f32.mrf.mxu0
    %v12733 = vadd.f32 0.0, %v12732
    %12734 = vmatmul.f32.gmra.mxu0 %v12575
    %v12735 = vpop.f32.mrf.mxu0
    %v12736 = vadd.f32 0.0, %v12735
    %12737 = vmatmul.f32.gmra.mxu0 %v12578
    %v12738 = vpop.f32.mrf.mxu0
    %v12739 = vadd.f32 0.0, %v12738
    %12740 = vmatmul.f32.gmra.mxu0 %v12581
    %v12741 = vpop.f32.mrf.mxu0
    %v12742 = vadd.f32 0.0, %v12741
    %12743 = vmatmul.f32.gmra.mxu0 %v12584
    %v12744 = vpop.f32.mrf.mxu0
    %v12745 = vadd.f32 0.0, %v12744
    %12746 = vmatmul.f32.gmra.mxu0 %v12587
    %v12747 = vpop.f32.mrf.mxu0
    %v12748 = vadd.f32 0.0, %v12747
    %12749 = vmatmul.f32.gmra.mxu0 %v12590
    %v12750 = vpop.f32.mrf.mxu0
    %v12751 = vadd.f32 0.0, %v12750
    %12752 = vmatmul.f32.gmra.mxu0 %v12593
    %v12753 = vpop.f32.mrf.mxu0
    %v12754 = vadd.f32 0.0, %v12753
    %12755 = vmatmul.f32.gmra.mxu0 %v12596
    %v12756 = vpop.f32.mrf.mxu0
    %v12757 = vadd.f32 0.0, %v12756
    %12758 = vmatmul.f32.gmra.mxu0 %v12599
    %v12759 = vpop.f32.mrf.mxu0
    %v12760 = vadd.f32 0.0, %v12759
    %12761 = vmatmul.f32.gmra.mxu0 %v12602
    %v12762 = vpop.f32.mrf.mxu0
    %v12763 = vadd.f32 0.0, %v12762
    %12764 = vmatmul.f32.gmra.mxu0 %v12605
    %v12765 = vpop.f32.mrf.mxu0
    %v12766 = vadd.f32 0.0, %v12765
    %12767 = vmatmul.f32.gmra.mxu0 %v12608
    %v12768 = vpop.f32.mrf.mxu0
    %v12769 = vadd.f32 0.0, %v12768
    %12770 = vmatmul.f32.gmra.mxu0 %v12611
    %v12771 = vpop.f32.mrf.mxu0
    %v12772 = vadd.f32 0.0, %v12771
    %12773 = vmatmul.f32.gmra.mxu0 %v12614
    %v12774 = vpop.f32.mrf.mxu0
    %v12775 = vadd.f32 0.0, %v12774
    %12776 = vmatmul.f32.gmra.mxu0 %v12617
    %v12777 = vpop.f32.mrf.mxu0
    %v12778 = vadd.f32 0.0, %v12777
    %12779 = vmatmul.f32.gmra.mxu0 %v12620
    %v12780 = vpop.f32.mrf.mxu0
    %v12781 = vadd.f32 0.0, %v12780
    %12782 = vmatmul.f32.gmra.mxu0 %v12623
    %v12783 = vpop.f32.mrf.mxu0
    %v12784 = vadd.f32 0.0, %v12783
    %12785 = vmatmul.f32.gmra.mxu0 %v12626
    %v12786 = vpop.f32.mrf.mxu0
    %v12787 = vadd.f32 0.0, %v12786
    %12788 = vmatmul.f32.gmra.mxu0 %v12629
    %v12789 = vpop.f32.mrf.mxu0
    %v12790 = vadd.f32 0.0, %v12789
    %12791 = vmatmul.f32.gmra.mxu0 %v12632
    %v12792 = vpop.f32.mrf.mxu0
    %v12793 = vadd.f32 0.0, %v12792
    %12794 = vmatmul.f32.gmra.mxu0 %v12635
    %v12795 = vpop.f32.mrf.mxu0
    %v12796 = vadd.f32 0.0, %v12795
    %12797 = vmatmul.f32.gmra.mxu0 %v12638
    %v12798 = vpop.f32.mrf.mxu0
    %v12799 = vadd.f32 0.0, %v12798
    %12800 = vmatmul.f32.gmra.mxu0 %v12641
    %v12801 = vpop.f32.mrf.mxu0
    %v12802 = vadd.f32 0.0, %v12801
    %12803 = vmatmul.f32.gmra.mxu0 %v12644
    %v12804 = vpop.f32.mrf.mxu0
    %v12805 = vadd.f32 0.0, %v12804
    %12806 = vmatmul.f32.gmra.mxu0 %v12647
    %v12807 = vpop.f32.mrf.mxu0
    %v12808 = vadd.f32 0.0, %v12807
    %12809 = vmatmul.f32.gmra.mxu0 %v12650
    %v12810 = vpop.f32.mrf.mxu0
    %v12811 = vadd.f32 0.0, %v12810
    %12812 = vmatmul.f32.gmra.mxu0 %v12653
    %v12813 = vpop.f32.mrf.mxu0
    %v12814 = vadd.f32 0.0, %v12813
    %12815 = vmatmul.f32.gmra.mxu0 %v12656
    %v12816 = vpop.f32.mrf.mxu0
    %v12817 = vadd.f32 0.0, %v12816
    %12818 = vmatmul.f32.gmra.mxu0 %v12659
    %v12819 = vpop.f32.mrf.mxu0
    %v12820 = vadd.f32 0.0, %v12819
    %12821 = vmatmul.f32.gmra.mxu0 %v12662
    %v12822 = vpop.f32.mrf.mxu0
    %v12823 = vadd.f32 0.0, %v12822
    %12824 = vmatmul.f32.gmra.mxu0 %v12665
    %v12825 = vpop.f32.mrf.mxu0
    %v12826 = vadd.f32 0.0, %v12825
    %12827 = vmatmul.f32.gmra.mxu0 %v12668
    %v12828 = vpop.f32.mrf.mxu0
    %v12829 = vadd.f32 0.0, %v12828
    %12830 = vmatmul.f32.gmra.mxu0 %v12671
    %v12831 = vpop.f32.mrf.mxu0
    %v12832 = vadd.f32 0.0, %v12831
    %12833 = vdwg.mxu0
    %v12834 = vld [vmem:[%s19] sm:$0x1]
    %v12836 = vperm.slane %v12834, 0
    %12837 = vrot.lane.b32.xlu0 %v12836, 32
    %v12838 = vpop.permute.xlu0 %12837
    %v12840 = vadd.f32 %v12691, %v12838
    %v12841 = vadd.f32 %v12694, %v12838
    %v12842 = vadd.f32 %v12697, %v12838
    %v12843 = vadd.f32 %v12700, %v12838
    %v12844 = vadd.f32 %v12703, %v12838
    %v12845 = vadd.f32 %v12706, %v12838
    %v12846 = vadd.f32 %v12709, %v12838
    %v12847 = vadd.f32 %v12712, %v12838
    %v12848 = vadd.f32 %v12715, %v12838
    %v12849 = vadd.f32 %v12718, %v12838
    %v12850 = vadd.f32 %v12721, %v12838
    %v12851 = vadd.f32 %v12724, %v12838
    %v12852 = vadd.f32 %v12727, %v12838
    %v12853 = vadd.f32 %v12730, %v12838
    %v12854 = vadd.f32 %v12733, %v12838
    %v12855 = vadd.f32 %v12736, %v12838
    %v12856 = vadd.f32 %v12739, %v12838
    %v12857 = vadd.f32 %v12742, %v12838
    %v12858 = vadd.f32 %v12745, %v12838
    %v12859 = vadd.f32 %v12748, %v12838
    %v12860 = vadd.f32 %v12751, %v12838
    %v12861 = vadd.f32 %v12754, %v12838
    %v12862 = vadd.f32 %v12757, %v12838
    %v12863 = vadd.f32 %v12760, %v12838
    %v12864 = vadd.f32 %v12763, %v12838
    %v12865 = vadd.f32 %v12766, %v12838
    %v12866 = vadd.f32 %v12769, %v12838
    %v12867 = vadd.f32 %v12772, %v12838
    %v12868 = vadd.f32 %v12775, %v12838
    %v12869 = vadd.f32 %v12778, %v12838
    %v12870 = vadd.f32 %v12781, %v12838
    %v12871 = vadd.f32 %v12784, %v12838
    %v12872 = vadd.f32 %v12787, %v12838
    %v12873 = vadd.f32 %v12790, %v12838
    %v12874 = vadd.f32 %v12793, %v12838
    %v12875 = vadd.f32 %v12796, %v12838
    %v12876 = vadd.f32 %v12799, %v12838
    %v12877 = vadd.f32 %v12802, %v12838
    %v12878 = vadd.f32 %v12805, %v12838
    %v12879 = vadd.f32 %v12808, %v12838
    %v12880 = vadd.f32 %v12811, %v12838
    %v12881 = vadd.f32 %v12814, %v12838
    %v12882 = vadd.f32 %v12817, %v12838
    %v12883 = vadd.f32 %v12820, %v12838
    %v12884 = vadd.f32 %v12823, %v12838
    %v12885 = vadd.f32 %v12826, %v12838
    %v12886 = vadd.f32 %v12829, %v12838
    %v12887 = vadd.f32 %v12832, %v12838
    %12932 = vrot.lane.b32.xlu0 %v12691, 32
    %v12933 = vpop.permute.xlu0 %12932
    %12934 = vrot.lane.b32.xlu0 %v12694, 32
    %v12935 = vpop.permute.xlu0 %12934
    %12936 = vrot.lane.b32.xlu0 %v12697, 32
    %v12937 = vpop.permute.xlu0 %12936
    %12938 = vrot.lane.b32.xlu0 %v12700, 32
    %v12939 = vpop.permute.xlu0 %12938
    %12940 = vrot.lane.b32.xlu0 %v12703, 32
    %v12941 = vpop.permute.xlu0 %12940
    %12942 = vrot.lane.b32.xlu0 %v12706, 32
    %v12943 = vpop.permute.xlu0 %12942
    %12944 = vrot.lane.b32.xlu0 %v12709, 32
    %v12945 = vpop.permute.xlu0 %12944
    %12946 = vrot.lane.b32.xlu0 %v12712, 32
    %v12947 = vpop.permute.xlu0 %12946
    %12948 = vrot.lane.b32.xlu0 %v12715, 32
    %v12949 = vpop.permute.xlu0 %12948
    %12950 = vrot.lane.b32.xlu0 %v12718, 32
    %v12951 = vpop.permute.xlu0 %12950
    %12952 = vrot.lane.b32.xlu0 %v12721, 32
    %v12953 = vpop.permute.xlu0 %12952
    %12954 = vrot.lane.b32.xlu0 %v12724, 32
    %v12955 = vpop.permute.xlu0 %12954
    %12956 = vrot.lane.b32.xlu0 %v12727, 32
    %v12957 = vpop.permute.xlu0 %12956
    %12958 = vrot.lane.b32.xlu0 %v12730, 32
    %v12959 = vpop.permute.xlu0 %12958
    %12960 = vrot.lane.b32.xlu0 %v12733, 32
    %v12961 = vpop.permute.xlu0 %12960
    %12962 = vrot.lane.b32.xlu0 %v12736, 32
    %v12963 = vpop.permute.xlu0 %12962
    %12964 = vrot.lane.b32.xlu0 %v12739, 32
    %v12965 = vpop.permute.xlu0 %12964
    %12966 = vrot.lane.b32.xlu0 %v12742, 32
    %v12967 = vpop.permute.xlu0 %12966
    %12968 = vrot.lane.b32.xlu0 %v12745, 32
    %v12969 = vpop.permute.xlu0 %12968
    %12970 = vrot.lane.b32.xlu0 %v12748, 32
    %v12971 = vpop.permute.xlu0 %12970
    %12972 = vrot.lane.b32.xlu0 %v12751, 32
    %v12973 = vpop.permute.xlu0 %12972
    %12974 = vrot.lane.b32.xlu0 %v12754, 32
    %v12975 = vpop.permute.xlu0 %12974
    %12976 = vrot.lane.b32.xlu0 %v12757, 32
    %v12977 = vpop.permute.xlu0 %12976
    %12978 = vrot.lane.b32.xlu0 %v12760, 32
    %v12979 = vpop.permute.xlu0 %12978
    %12980 = vrot.lane.b32.xlu0 %v12763, 32
    %v12981 = vpop.permute.xlu0 %12980
    %12982 = vrot.lane.b32.xlu0 %v12766, 32
    %v12983 = vpop.permute.xlu0 %12982
    %12984 = vrot.lane.b32.xlu0 %v12769, 32
    %v12985 = vpop.permute.xlu0 %12984
    %12986 = vrot.lane.b32.xlu0 %v12772, 32
    %v12987 = vpop.permute.xlu0 %12986
    %12988 = vrot.lane.b32.xlu0 %v12775, 32
    %v12989 = vpop.permute.xlu0 %12988
    %12990 = vrot.lane.b32.xlu0 %v12778, 32
    %v12991 = vpop.permute.xlu0 %12990
    %12992 = vrot.lane.b32.xlu0 %v12781, 32
    %v12993 = vpop.permute.xlu0 %12992
    %12994 = vrot.lane.b32.xlu0 %v12784, 32
    %v12995 = vpop.permute.xlu0 %12994
    %12996 = vrot.lane.b32.xlu0 %v12787, 32
    %v12997 = vpop.permute.xlu0 %12996
    %12998 = vrot.lane.b32.xlu0 %v12790, 32
    %v12999 = vpop.permute.xlu0 %12998
    %13000 = vrot.lane.b32.xlu0 %v12793, 32
    %v13001 = vpop.permute.xlu0 %13000
    %13002 = vrot.lane.b32.xlu0 %v12796, 32
    %v13003 = vpop.permute.xlu0 %13002
    %13004 = vrot.lane.b32.xlu0 %v12799, 32
    %v13005 = vpop.permute.xlu0 %13004
    %13006 = vrot.lane.b32.xlu0 %v12802, 32
    %v13007 = vpop.permute.xlu0 %13006
    %13008 = vrot.lane.b32.xlu0 %v12805, 32
    %v13009 = vpop.permute.xlu0 %13008
    %13010 = vrot.lane.b32.xlu0 %v12808, 32
    %v13011 = vpop.permute.xlu0 %13010
    %13012 = vrot.lane.b32.xlu0 %v12811, 32
    %v13013 = vpop.permute.xlu0 %13012
    %13014 = vrot.lane.b32.xlu0 %v12814, 32
    %v13015 = vpop.permute.xlu0 %13014
    %13016 = vrot.lane.b32.xlu0 %v12817, 32
    %v13017 = vpop.permute.xlu0 %13016
    %13018 = vrot.lane.b32.xlu0 %v12820, 32
    %v13019 = vpop.permute.xlu0 %13018
    %v13064 = vadd.f32 %v12840, %v4501
    %v13065 = vadd.f32 %v12841, %v4501
    %v13066 = vadd.f32 %v12842, %v4501
    %v13067 = vadd.f32 %v12843, %v4501
    %v13068 = vadd.f32 %v12844, %v12933
    %v13069 = vadd.f32 %v12845, %v12935
    %v13070 = vadd.f32 %v12846, %v12937
    %v13071 = vadd.f32 %v12847, %v12939
    %v13072 = vadd.f32 %v12848, %v12941
    %v13073 = vadd.f32 %v12849, %v12943
    %v13074 = vadd.f32 %v12850, %v12945
    %v13075 = vadd.f32 %v12851, %v12947
    %v13076 = vadd.f32 %v12852, %v12949
    %v13077 = vadd.f32 %v12853, %v12951
    %v13078 = vadd.f32 %v12854, %v12953
    %v13079 = vadd.f32 %v12855, %v12955
    %v13080 = vadd.f32 %v12856, %v12957
    %v13081 = vadd.f32 %v12857, %v12959
    %v13082 = vadd.f32 %v12858, %v12961
    %v13083 = vadd.f32 %v12859, %v12963
    %v13084 = vadd.f32 %v12860, %v12965
    %v13085 = vadd.f32 %v12861, %v12967
    %v13086 = vadd.f32 %v12862, %v12969
    %v13087 = vadd.f32 %v12863, %v12971
    %v13088 = vadd.f32 %v12864, %v12973
    %v13089 = vadd.f32 %v12865, %v12975
    %v13090 = vadd.f32 %v12866, %v12977
    %v13091 = vadd.f32 %v12867, %v12979
    %v13092 = vadd.f32 %v12868, %v12981
    %v13093 = vadd.f32 %v12869, %v12983
    %v13094 = vadd.f32 %v12870, %v12985
    %v13095 = vadd.f32 %v12871, %v12987
    %v13096 = vadd.f32 %v12872, %v12989
    %v13097 = vadd.f32 %v12873, %v12991
    %v13098 = vadd.f32 %v12874, %v12993
    %v13099 = vadd.f32 %v12875, %v12995
    %v13100 = vadd.f32 %v12876, %v12997
    %v13101 = vadd.f32 %v12877, %v12999
    %v13102 = vadd.f32 %v12878, %v13001
    %v13103 = vadd.f32 %v12879, %v13003
    %v13104 = vadd.f32 %v12880, %v13005
    %v13105 = vadd.f32 %v12881, %v13007
    %v13106 = vadd.f32 %v12882, %v13009
    %v13107 = vadd.f32 %v12883, %v13011
    %v13108 = vadd.f32 %v12884, %v13013
    %v13109 = vadd.f32 %v12885, %v13015
    %v13110 = vadd.f32 %v12886, %v13017
    %v13111 = vadd.f32 %v12887, %v13019
    %13116 = vrot.lane.b32.xlu0 %v12703, 96
    %v13117 = vpop.permute.xlu0 %13116
    %13118 = vrot.lane.b32.xlu0 %v12706, 96
    %v13119 = vpop.permute.xlu0 %13118
    %13120 = vrot.lane.b32.xlu0 %v12709, 96
    %v13121 = vpop.permute.xlu0 %13120
    %13122 = vrot.lane.b32.xlu0 %v12712, 96
    %v13123 = vpop.permute.xlu0 %13122
    %13124 = vrot.lane.b32.xlu0 %v12715, 96
    %v13125 = vpop.permute.xlu0 %13124
    %13126 = vrot.lane.b32.xlu0 %v12718, 96
    %v13127 = vpop.permute.xlu0 %13126
    %13128 = vrot.lane.b32.xlu0 %v12721, 96
    %v13129 = vpop.permute.xlu0 %13128
    %13130 = vrot.lane.b32.xlu0 %v12724, 96
    %v13131 = vpop.permute.xlu0 %13130
    %13132 = vrot.lane.b32.xlu0 %v12727, 96
    %v13133 = vpop.permute.xlu0 %13132
    %13134 = vrot.lane.b32.xlu0 %v12730, 96
    %v13135 = vpop.permute.xlu0 %13134
    %13136 = vrot.lane.b32.xlu0 %v12733, 96
    %v13137 = vpop.permute.xlu0 %13136
    %13138 = vrot.lane.b32.xlu0 %v12736, 96
    %v13139 = vpop.permute.xlu0 %13138
    %13140 = vrot.lane.b32.xlu0 %v12739, 96
    %v13141 = vpop.permute.xlu0 %13140
    %13142 = vrot.lane.b32.xlu0 %v12742, 96
    %v13143 = vpop.permute.xlu0 %13142
    %13144 = vrot.lane.b32.xlu0 %v12745, 96
    %v13145 = vpop.permute.xlu0 %13144
    %13146 = vrot.lane.b32.xlu0 %v12748, 96
    %v13147 = vpop.permute.xlu0 %13146
    %13148 = vrot.lane.b32.xlu0 %v12751, 96
    %v13149 = vpop.permute.xlu0 %13148
    %13150 = vrot.lane.b32.xlu0 %v12754, 96
    %v13151 = vpop.permute.xlu0 %13150
    %13152 = vrot.lane.b32.xlu0 %v12757, 96
    %v13153 = vpop.permute.xlu0 %13152
    %13154 = vrot.lane.b32.xlu0 %v12760, 96
    %v13155 = vpop.permute.xlu0 %13154
    %13156 = vrot.lane.b32.xlu0 %v12763, 96
    %v13157 = vpop.permute.xlu0 %13156
    %13158 = vrot.lane.b32.xlu0 %v12766, 96
    %v13159 = vpop.permute.xlu0 %13158
    %13160 = vrot.lane.b32.xlu0 %v12769, 96
    %v13161 = vpop.permute.xlu0 %13160
    %13162 = vrot.lane.b32.xlu0 %v12772, 96
    %v13163 = vpop.permute.xlu0 %13162
    %13164 = vrot.lane.b32.xlu0 %v12775, 96
    %v13165 = vpop.permute.xlu0 %13164
    %13166 = vrot.lane.b32.xlu0 %v12778, 96
    %v13167 = vpop.permute.xlu0 %13166
    %13168 = vrot.lane.b32.xlu0 %v12781, 96
    %v13169 = vpop.permute.xlu0 %13168
    %13170 = vrot.lane.b32.xlu0 %v12784, 96
    %v13171 = vpop.permute.xlu0 %13170
    %13172 = vrot.lane.b32.xlu0 %v12787, 96
    %v13173 = vpop.permute.xlu0 %13172
    %13174 = vrot.lane.b32.xlu0 %v12790, 96
    %v13175 = vpop.permute.xlu0 %13174
    %13176 = vrot.lane.b32.xlu0 %v12793, 96
    %v13177 = vpop.permute.xlu0 %13176
    %13178 = vrot.lane.b32.xlu0 %v12796, 96
    %v13179 = vpop.permute.xlu0 %13178
    %13180 = vrot.lane.b32.xlu0 %v12799, 96
    %v13181 = vpop.permute.xlu0 %13180
    %13182 = vrot.lane.b32.xlu0 %v12802, 96
    %v13183 = vpop.permute.xlu0 %13182
    %13184 = vrot.lane.b32.xlu0 %v12805, 96
    %v13185 = vpop.permute.xlu0 %13184
    %13186 = vrot.lane.b32.xlu0 %v12808, 96
    %v13187 = vpop.permute.xlu0 %13186
    %13188 = vrot.lane.b32.xlu0 %v12811, 96
    %v13189 = vpop.permute.xlu0 %13188
    %13190 = vrot.lane.b32.xlu0 %v12814, 96
    %v13191 = vpop.permute.xlu0 %13190
    %13192 = vrot.lane.b32.xlu0 %v12817, 96
    %v13193 = vpop.permute.xlu0 %13192
    %13194 = vrot.lane.b32.xlu0 %v12820, 96
    %v13195 = vpop.permute.xlu0 %13194
    %13196 = vrot.lane.b32.xlu0 %v12823, 96
    %v13197 = vpop.permute.xlu0 %13196
    %13198 = vrot.lane.b32.xlu0 %v12826, 96
    %v13199 = vpop.permute.xlu0 %13198
    %13200 = vrot.lane.b32.xlu0 %v12829, 96
    %v13201 = vpop.permute.xlu0 %13200
    %13202 = vrot.lane.b32.xlu0 %v12832, 96
    %v13203 = vpop.permute.xlu0 %13202
    %v13248 = vadd.f32 %v13064, %v13117
    %v13249 = vadd.f32 %v13065, %v13119
    %v13250 = vadd.f32 %v13066, %v13121
    %v13251 = vadd.f32 %v13067, %v13123
    %v13252 = vadd.f32 %v13068, %v13125
    %v13253 = vadd.f32 %v13069, %v13127
    %v13254 = vadd.f32 %v13070, %v13129
    %v13255 = vadd.f32 %v13071, %v13131
    %v13256 = vadd.f32 %v13072, %v13133
    %v13257 = vadd.f32 %v13073, %v13135
    %v13258 = vadd.f32 %v13074, %v13137
    %v13259 = vadd.f32 %v13075, %v13139
    %v13260 = vadd.f32 %v13076, %v13141
    %v13261 = vadd.f32 %v13077, %v13143
    %v13262 = vadd.f32 %v13078, %v13145
    %v13263 = vadd.f32 %v13079, %v13147
    %v13264 = vadd.f32 %v13080, %v13149
    %v13265 = vadd.f32 %v13081, %v13151
    %v13266 = vadd.f32 %v13082, %v13153
    %v13267 = vadd.f32 %v13083, %v13155
    %v13268 = vadd.f32 %v13084, %v13157
    %v13269 = vadd.f32 %v13085, %v13159
    %v13270 = vadd.f32 %v13086, %v13161
    %v13271 = vadd.f32 %v13087, %v13163
    %v13272 = vadd.f32 %v13088, %v13165
    %v13273 = vadd.f32 %v13089, %v13167
    %v13274 = vadd.f32 %v13090, %v13169
    %v13275 = vadd.f32 %v13091, %v13171
    %v13276 = vadd.f32 %v13092, %v13173
    %v13277 = vadd.f32 %v13093, %v13175
    %v13278 = vadd.f32 %v13094, %v13177
    %v13279 = vadd.f32 %v13095, %v13179
    %v13280 = vadd.f32 %v13096, %v13181
    %v13281 = vadd.f32 %v13097, %v13183
    %v13282 = vadd.f32 %v13098, %v13185
    %v13283 = vadd.f32 %v13099, %v13187
    %v13284 = vadd.f32 %v13100, %v13189
    %v13285 = vadd.f32 %v13101, %v13191
    %v13286 = vadd.f32 %v13102, %v13193
    %v13287 = vadd.f32 %v13103, %v13195
    %v13288 = vadd.f32 %v13104, %v13197
    %v13289 = vadd.f32 %v13105, %v13199
    %v13290 = vadd.f32 %v13106, %v13201
    %v13291 = vadd.f32 %v13107, %v13203
    %v13292 = vadd.f32 %v13108, %v4776
    %v13293 = vadd.f32 %v13109, %v4776
    %v13294 = vadd.f32 %v13110, %v4776
    %v13295 = vadd.f32 %v13111, %v4776
    %vm13296 = vcmask 523520
    %v13297 = vsel %vm13296, %v13248, 0.0
    %v13298 = vsel %vm13296, %v13252, 0.0
    %v13299 = vadd.f32 %v13297, %v13298
    %v13300 = vsel %vm13296, %v13256, 0.0
    %v13301 = vadd.f32 %v13299, %v13300
    %v13302 = vsel %vm13296, %v13260, 0.0
    %v13303 = vadd.f32 %v13301, %v13302
    %v13304 = vsel %vm13296, %v13264, 0.0
    %v13305 = vadd.f32 %v13303, %v13304
    %v13306 = vsel %vm13296, %v13268, 0.0
    %v13307 = vadd.f32 %v13305, %v13306
    %v13308 = vsel %vm13296, %v13272, 0.0
    %v13309 = vadd.f32 %v13307, %v13308
    %v13310 = vsel %vm13296, %v13276, 0.0
    %v13311 = vadd.f32 %v13309, %v13310
    %v13312 = vsel %vm13296, %v13280, 0.0
    %v13313 = vadd.f32 %v13311, %v13312
    %v13314 = vsel %vm13296, %v13284, 0.0
    %v13315 = vadd.f32 %v13313, %v13314
    %v13316 = vsel %vm13296, %v13288, 0.0
    %v13317 = vadd.f32 %v13315, %v13316
    %v13318 = vsel %vm13296, %v13292, 0.0
    %v13319 = vadd.f32 %v13317, %v13318
    %v13320 = vsel %vm13296, %v13249, 0.0
    %v13321 = vsel %vm13296, %v13253, 0.0
    %v13322 = vadd.f32 %v13320, %v13321
    %v13323 = vsel %vm13296, %v13257, 0.0
    %v13324 = vadd.f32 %v13322, %v13323
    %v13325 = vsel %vm13296, %v13261, 0.0
    %v13326 = vadd.f32 %v13324, %v13325
    %v13327 = vsel %vm13296, %v13265, 0.0
    %v13328 = vadd.f32 %v13326, %v13327
    %v13329 = vsel %vm13296, %v13269, 0.0
    %v13330 = vadd.f32 %v13328, %v13329
    %v13331 = vsel %vm13296, %v13273, 0.0
    %v13332 = vadd.f32 %v13330, %v13331
    %v13333 = vsel %vm13296, %v13277, 0.0
    %v13334 = vadd.f32 %v13332, %v13333
    %v13335 = vsel %vm13296, %v13281, 0.0
    %v13336 = vadd.f32 %v13334, %v13335
    %v13337 = vsel %vm13296, %v13285, 0.0
    %v13338 = vadd.f32 %v13336, %v13337
    %v13339 = vsel %vm13296, %v13289, 0.0
    %v13340 = vadd.f32 %v13338, %v13339
    %v13341 = vsel %vm13296, %v13293, 0.0
    %v13342 = vadd.f32 %v13340, %v13341
    %v13343 = vsel %vm13296, %v13250, 0.0
    %v13344 = vsel %vm13296, %v13254, 0.0
    %v13345 = vadd.f32 %v13343, %v13344
    %v13346 = vsel %vm13296, %v13258, 0.0
    %v13347 = vadd.f32 %v13345, %v13346
    %v13348 = vsel %vm13296, %v13262, 0.0
    %v13349 = vadd.f32 %v13347, %v13348
    %v13350 = vsel %vm13296, %v13266, 0.0
    %v13351 = vadd.f32 %v13349, %v13350
    %v13352 = vsel %vm13296, %v13270, 0.0
    %v13353 = vadd.f32 %v13351, %v13352
    %v13354 = vsel %vm13296, %v13274, 0.0
    %v13355 = vadd.f32 %v13353, %v13354
    %v13356 = vsel %vm13296, %v13278, 0.0
    %v13357 = vadd.f32 %v13355, %v13356
    %v13358 = vsel %vm13296, %v13282, 0.0
    %v13359 = vadd.f32 %v13357, %v13358
    %v13360 = vsel %vm13296, %v13286, 0.0
    %v13361 = vadd.f32 %v13359, %v13360
    %v13362 = vsel %vm13296, %v13290, 0.0
    %v13363 = vadd.f32 %v13361, %v13362
    %v13364 = vsel %vm13296, %v13294, 0.0
    %v13365 = vadd.f32 %v13363, %v13364
    %v13366 = vsel %vm13296, %v13251, 0.0
    %v13367 = vsel %vm13296, %v13255, 0.0
    %v13368 = vadd.f32 %v13366, %v13367
    %v13369 = vsel %vm13296, %v13259, 0.0
    %v13370 = vadd.f32 %v13368, %v13369
    %v13371 = vsel %vm13296, %v13263, 0.0
    %v13372 = vadd.f32 %v13370, %v13371
    %v13373 = vsel %vm13296, %v13267, 0.0
    %v13374 = vadd.f32 %v13372, %v13373
    %v13375 = vsel %vm13296, %v13271, 0.0
    %v13376 = vadd.f32 %v13374, %v13375
    %v13377 = vsel %vm13296, %v13275, 0.0
    %v13378 = vadd.f32 %v13376, %v13377
    %v13379 = vsel %vm13296, %v13279, 0.0
    %v13380 = vadd.f32 %v13378, %v13379
    %v13381 = vsel %vm13296, %v13283, 0.0
    %v13382 = vadd.f32 %v13380, %v13381
    %v13383 = vsel %vm13296, %v13287, 0.0
    %v13384 = vadd.f32 %v13382, %v13383
    %v13385 = vsel %vm13296, %v13291, 0.0
    %v13386 = vadd.f32 %v13384, %v13385
    %v13387 = vsel %vm13296, %v13295, 0.0
    %v13388 = vadd.f32 %v13386, %v13387
    %v13389 = vrcp.pop 12.0
    %v13390 = vmul.f32 12.0, %v13389
    %v13391 = vsub.f32 1.0, %v13390
    %v13392 = vmul.f32 %v13389, %v13391
    %v13393 = vadd.f32 %v13389, %v13392
    %vm13394 = vweird.f32 %v13389
    %v13395 = vsel %vm13394, %v13389, %v13393
    %v13396 = vmul.f32 %v13319, %v13395
    %v13397 = vmul.f32 %v13342, %v13395
    %v13398 = vmul.f32 %v13365, %v13395
    %v13399 = vmul.f32 %v13388, %v13395
    %v13400 = vld [vmem:[%s20] sm:$0xff]
    %v13401 = vld [vmem:[%s20 + $0x8] sm:$0xff]
    %v13402 = vld [vmem:[%s20 + $0x10] sm:$0xff]
    %v13403 = vld [vmem:[%s20 + $0x18] sm:$0xff]
    %13408 = vrot.lane.b32.xlu0 %v13396, 96
    %v13409 = vpop.permute.xlu0 %13408
    %13410 = vrot.lane.b32.xlu0 %v13397, 96
    %v13411 = vpop.permute.xlu0 %13410
    %13412 = vrot.lane.b32.xlu0 %v13398, 96
    %v13413 = vpop.permute.xlu0 %13412
    %13414 = vrot.lane.b32.xlu0 %v13399, 96
    %v13415 = vpop.permute.xlu0 %13414
    %v13416 = vsel %vm2472, %v13409, 0
    %v13418 = vsel %vm2472, %v13411, 0
    %v13420 = vsel %vm2472, %v13413, 0
    %v13422 = vsel %vm2472, %v13415, 0
    %13424 = vmatpush.msra.mxu0 0.0
    %13425 = vmatpush.msra.mxu0 0.0
    %13426 = vmatpush.msra.mxu0 0.0
    %13427 = vmatpush.msra.mxu0 0.0
    %13428 = vmatpush.msra.mxu0 0.0
    %13429 = vmatpush.msra.mxu0 0.0
    %13430 = vmatpush.msra.mxu0 0.0
    %13431 = vmatpush.msra.mxu0 0.0
    %13432 = vmatpush.msra.mxu0 0.0
    %13433 = vmatpush.msra.mxu0 0.0
    %13434 = vmatpush.msra.mxu0 0.0
    %13435 = vmatpush.msra.mxu0 0.0
    %13436 = vmatpush.msra.mxu0 %v13403
    %13437 = vmatpush.msra.mxu0 %v13402
    %13438 = vmatpush.msra.mxu0 %v13401
    %13439 = vmatpush.msra.mxu0 %v13400
    %13440 = vmatmul.f32.gmra.mxu0 %v13416
    %v13441 = vpop.f32.mrf.mxu0
    %v13442 = vadd.f32 0.0, %v13441
    %13443 = vmatmul.f32.gmra.mxu0 %v13418
    %v13444 = vpop.f32.mrf.mxu0
    %v13445 = vadd.f32 0.0, %v13444
    %13446 = vmatmul.f32.gmra.mxu0 %v13420
    %v13447 = vpop.f32.mrf.mxu0
    %v13448 = vadd.f32 0.0, %v13447
    %13449 = vmatmul.f32.gmra.mxu0 %v13422
    %v13450 = vpop.f32.mrf.mxu0
    %v13451 = vadd.f32 0.0, %v13450
    %13452 = vdwg.mxu0
    %v13453 = vld [vmem:[%s23] sm:$0xff]
    %v13454 = vld [vmem:[%s23 + $0x8] sm:$0xff]
    %v13455 = vld [vmem:[%s21] sm:$0xff]
    %vm13456 = vcmask 64512
    %v13458 = vsel %vm13456, %v13453, 0
    %v13461 = vsel %vm13456, %v13454, 0
    %13463 = vmatpush.msra.mxu0 0.0
    %13464 = vmatpush.msra.mxu0 0.0
    %13465 = vmatpush.msra.mxu0 0.0
    %13466 = vmatpush.msra.mxu0 0.0
    %13467 = vmatpush.msra.mxu0 0.0
    %13468 = vmatpush.msra.mxu0 0.0
    %13469 = vmatpush.msra.mxu0 0.0
    %13470 = vmatpush.msra.mxu0 0.0
    %13471 = vmatpush.msra.mxu0 0.0
    %13472 = vmatpush.msra.mxu0 0.0
    %13473 = vmatpush.msra.mxu0 0.0
    %13474 = vmatpush.msra.mxu0 0.0
    %13475 = vmatpush.msra.mxu0 0.0
    %13476 = vmatpush.msra.mxu0 0.0
    %13477 = vmatpush.msra.mxu0 0.0
    %13478 = vmatpush.msra.mxu0 %v13455
    %13479 = vmatmul.f32.gmra.mxu0 %v13458
    %v13480 = vpop.f32.mrf.mxu0
    %v13481 = vadd.f32 0.0, %v13480
    %13482 = vmatmul.f32.gmra.mxu0 %v13461
    %v13483 = vpop.f32.mrf.mxu0
    %v13484 = vadd.f32 0.0, %v13483
    %13485 = vdwg.mxu0
    %v13487 = vsel %vm631, %v13442, 0
    %v13490 = vsel %vm631, %v13445, 0
    %v13493 = vsel %vm631, %v13448, 0
    %v13496 = vsel %vm631, %v13451, 0
    %v13499 = vsel %vm631, %v13481, 0
    %v13502 = vsel %vm631, %v13484, 0
    %13504 = vmatpush.xpose.msra.mxu0 0.0
    %13505 = vmatpush.xpose.msra.mxu0 0.0
    %13506 = vmatpush.xpose.msra.mxu0 0.0
    %13507 = vmatpush.xpose.msra.mxu0 0.0
    %13508 = vmatpush.xpose.msra.mxu0 0.0
    %13509 = vmatpush.xpose.msra.mxu0 0.0
    %13510 = vmatpush.xpose.msra.mxu0 0.0
    %13511 = vmatpush.xpose.msra.mxu0 0.0
    %13512 = vmatpush.xpose.msra.mxu0 0.0
    %13513 = vmatpush.xpose.msra.mxu0 0.0
    %13514 = vmatpush.xpose.msra.mxu0 0.0
    %13515 = vmatpush.xpose.msra.mxu0 0.0
    %13516 = vmatpush.xpose.msra.mxu0 0.0
    %13517 = vmatpush.xpose.msra.mxu0 0.0
    %13518 = vmatpush.xpose.msra.mxu0 %v13502
    %13519 = vmatpush.xpose.msra.mxu0 %v13499
    %13520 = vmatmul.f32.gmra.mxu0 %v13487
    %v13521 = vpop.f32.mrf.mxu0
    %v13522 = vadd.f32 0.0, %v13521
    %13523 = vmatmul.f32.gmra.mxu0 %v13490
    %v13524 = vpop.f32.mrf.mxu0
    %v13525 = vadd.f32 0.0, %v13524
    %13526 = vmatmul.f32.gmra.mxu0 %v13493
    %v13527 = vpop.f32.mrf.mxu0
    %v13528 = vadd.f32 0.0, %v13527
    %13529 = vmatmul.f32.gmra.mxu0 %v13496
    %v13530 = vpop.f32.mrf.mxu0
    %v13531 = vadd.f32 0.0, %v13530
    %13532 = vdwg.mxu0
    %v13533 = vmul.f32 %v13522, 0.25
    %v13534 = vmul.f32 %v13525, 0.25
    %v13535 = vmul.f32 %v13528, 0.25
    %v13536 = vmul.f32 %v13531, 0.25
    %v13537 = vsel %vm631, %v13533, -inf
    %13538 = vmax.xlane.f32.xlu0 %v13537
    %v13539 = vpop.xlane.xlu0 %13538
    %v13540 = vsel %vm631, %v13534, -inf
    %13541 = vmax.xlane.f32.xlu0 %v13540
    %v13542 = vpop.xlane.xlu0 %13541
    %v13543 = vsel %vm631, %v13535, -inf
    %13544 = vmax.xlane.f32.xlu0 %v13543
    %v13545 = vpop.xlane.xlu0 %13544
    %v13546 = vsel %vm631, %v13536, -inf
    %13547 = vmax.xlane.f32.xlu0 %v13546
    %v13548 = vpop.xlane.xlu0 %13547
    %v13549 = vsub.f32 %v13533, %v13539
    %v13550 = vsub.f32 %v13534, %v13542
    %v13551 = vsub.f32 %v13535, %v13545
    %v13552 = vsub.f32 %v13536, %v13548
    %v13553 = vmul.f32 %v13549, 1.442695
    %v13554 = vpow.pop %v13553
    %v13555 = vmul.f32 %v13550, 1.442695
    %v13556 = vpow.pop %v13555
    %v13557 = vmul.f32 %v13551, 1.442695
    %v13558 = vpow.pop %v13557
    %v13559 = vmul.f32 %v13552, 1.442695
    %v13560 = vpow.pop %v13559
    %v13561 = vsel %vm631, %v13554, 0.0
    %13562 = vadd.xlane.f32.xlu0 %v13561
    %v13563 = vpop.xlane.xlu0 %13562
    %v13564 = vsel %vm631, %v13556, 0.0
    %13565 = vadd.xlane.f32.xlu0 %v13564
    %v13566 = vpop.xlane.xlu0 %13565
    %v13567 = vsel %vm631, %v13558, 0.0
    %13568 = vadd.xlane.f32.xlu0 %v13567
    %v13569 = vpop.xlane.xlu0 %13568
    %v13570 = vsel %vm631, %v13560, 0.0
    %13571 = vadd.xlane.f32.xlu0 %v13570
    %v13572 = vpop.xlane.xlu0 %13571
    %v13573 = vrcp.pop %v13563
    %v13574 = vmul.f32 %v13563, %v13573
    %v13575 = vsub.f32 1.0, %v13574
    %v13576 = vmul.f32 %v13573, %v13575
    %v13577 = vadd.f32 %v13573, %v13576
    %vm13578 = vweird.f32 %v13563
    %vm13579 = vweird.f32 %v13573
    %vm13580 = vmor %vm13578, %vm13579
    %v13581 = vsel %vm13580, %v13573, %v13577
    %v13582 = vand.u32 2147483647, %v13563
    %vm13583 = vcmp.eq.f32.partialorder %v13582, 8.507059e+37
    %v13584 = vand.u32 %v13563, 2147483648
    %v13585 = vor.u32 1.1754944e-38, %v13584
    %v13586 = vsel %vm13583, %v13585, %v13581
    %v13587 = vmul.f32 %v13554, %v13586
    %v13588 = vrcp.pop %v13566
    %v13589 = vmul.f32 %v13566, %v13588
    %v13590 = vsub.f32 1.0, %v13589
    %v13591 = vmul.f32 %v13588, %v13590
    %v13592 = vadd.f32 %v13588, %v13591
    %vm13593 = vweird.f32 %v13566
    %vm13594 = vweird.f32 %v13588
    %vm13595 = vmor %vm13593, %vm13594
    %v13596 = vsel %vm13595, %v13588, %v13592
    %v13597 = vand.u32 2147483647, %v13566
    %vm13598 = vcmp.eq.f32.partialorder %v13597, 8.507059e+37
    %v13599 = vand.u32 %v13566, 2147483648
    %v13600 = vor.u32 1.1754944e-38, %v13599
    %v13601 = vsel %vm13598, %v13600, %v13596
    %v13602 = vmul.f32 %v13556, %v13601
    %v13603 = vrcp.pop %v13569
    %v13604 = vmul.f32 %v13569, %v13603
    %v13605 = vsub.f32 1.0, %v13604
    %v13606 = vmul.f32 %v13603, %v13605
    %v13607 = vadd.f32 %v13603, %v13606
    %vm13608 = vweird.f32 %v13569
    %vm13609 = vweird.f32 %v13603
    %vm13610 = vmor %vm13608, %vm13609
    %v13611 = vsel %vm13610, %v13603, %v13607
    %v13612 = vand.u32 2147483647, %v13569
    %vm13613 = vcmp.eq.f32.partialorder %v13612, 8.507059e+37
    %v13614 = vand.u32 %v13569, 2147483648
    %v13615 = vor.u32 1.1754944e-38, %v13614
    %v13616 = vsel %vm13613, %v13615, %v13611
    %v13617 = vmul.f32 %v13558, %v13616
    %v13618 = vrcp.pop %v13572
    %v13619 = vmul.f32 %v13572, %v13618
    %v13620 = vsub.f32 1.0, %v13619
    %v13621 = vmul.f32 %v13618, %v13620
    %v13622 = vadd.f32 %v13618, %v13621
    %vm13623 = vweird.f32 %v13572
    %vm13624 = vweird.f32 %v13618
    %vm13625 = vmor %vm13623, %vm13624
    %v13626 = vsel %vm13625, %v13618, %v13622
    %v13627 = vand.u32 2147483647, %v13572
    %vm13628 = vcmp.eq.f32.partialorder %v13627, 8.507059e+37
    %v13629 = vand.u32 %v13572, 2147483648
    %v13630 = vor.u32 1.1754944e-38, %v13629
    %v13631 = vsel %vm13628, %v13630, %v13626
    %v13632 = vmul.f32 %v13560, %v13631
    %v13633 = vld [vmem:[%s22] sm:$0xff]
    %v13634 = vld [vmem:[%s22 + $0x8] sm:$0xff]
    %v13636 = vsel %vm631, %v13587, 0
    %v13639 = vsel %vm631, %v13602, 0
    %v13642 = vsel %vm631, %v13617, 0
    %v13645 = vsel %vm631, %v13632, 0
    %13647 = vmatpush.msra.mxu0 0.0
    %13648 = vmatpush.msra.mxu0 0.0
    %13649 = vmatpush.msra.mxu0 0.0
    %13650 = vmatpush.msra.mxu0 0.0
    %13651 = vmatpush.msra.mxu0 0.0
    %13652 = vmatpush.msra.mxu0 0.0
    %13653 = vmatpush.msra.mxu0 0.0
    %13654 = vmatpush.msra.mxu0 0.0
    %13655 = vmatpush.msra.mxu0 0.0
    %13656 = vmatpush.msra.mxu0 0.0
    %13657 = vmatpush.msra.mxu0 0.0
    %13658 = vmatpush.msra.mxu0 0.0
    %13659 = vmatpush.msra.mxu0 0.0
    %13660 = vmatpush.msra.mxu0 0.0
    %13661 = vmatpush.msra.mxu0 %v13634
    %13662 = vmatpush.msra.mxu0 %v13633
    %13663 = vmatmul.f32.gmra.mxu0 %v13636
    %v13664 = vpop.f32.mrf.mxu0
    %v13665 = vadd.f32 0.0, %v13664
    %13666 = vmatmul.f32.gmra.mxu0 %v13639
    %v13667 = vpop.f32.mrf.mxu0
    %v13668 = vadd.f32 0.0, %v13667
    %13669 = vmatmul.f32.gmra.mxu0 %v13642
    %v13670 = vpop.f32.mrf.mxu0
    %v13671 = vadd.f32 0.0, %v13670
    %13672 = vmatmul.f32.gmra.mxu0 %v13645
    %v13673 = vpop.f32.mrf.mxu0
    %v13674 = vadd.f32 0.0, %v13673
    %13675 = vdwg.mxu0
    %v13676 = vtanh.pop %v13665
    %v13677 = vtanh.pop %v13668
    %v13678 = vtanh.pop %v13671
    %v13679 = vtanh.pop %v13674
    %13680 = vst.msk [vmem:[#allocation2] sm:$0xff] %vm631, %v13587
    %13681 = vst.msk [vmem:[#allocation2 + $0x8] sm:$0xff] %vm631, %v13602
    %13682 = vst.msk [vmem:[#allocation2 + $0x10] sm:$0xff] %vm631, %v13617
    %13683 = vst.msk [vmem:[#allocation2 + $0x18] sm:$0xff] %vm631, %v13632
    %vm13684 = vcmask 7168
    %13685 = vst.msk [vmem:[%s28] sm:$0xff] %vm13684, %v13676
    %13686 = vst.msk [vmem:[%s28 + $0x8] sm:$0xff] %vm13684, %v13677
    %13687 = vst.msk [vmem:[%s28 + $0x10] sm:$0xff] %vm13684, %v13678
    %13688 = vst.msk [vmem:[%s28 + $0x18] sm:$0xff] %vm13684, %v13679
    %v13689 = vadd.f32 %v13676, 1.0
    %v13690 = vadd.f32 %v13677, 1.0
    %v13691 = vadd.f32 %v13678, 1.0
    %v13692 = vadd.f32 %v13679, 1.0
    %13694 = vset.pattern.permute.xlu0 0
    %13695 = vperm.xlu0 %13694, %v13689
    %v13696 = vpop.permute.xlu0 %13695
    %13699 = vset.pattern.permute.xlu0 0
    %13700 = vperm.xlu0 %13699, %v13690
    %v13701 = vpop.permute.xlu0 %13700
    %13704 = vset.pattern.permute.xlu0 0
    %13705 = vperm.xlu0 %13704, %v13691
    %v13706 = vpop.permute.xlu0 %13705
    %13709 = vset.pattern.permute.xlu0 0
    %13710 = vperm.xlu0 %13709, %v13692
    %v13711 = vpop.permute.xlu0 %13710
    %v13713 = vmul.f32 %v13248, %v13696
    %v13714 = vmul.f32 %v13249, %v13701
    %v13715 = vmul.f32 %v13250, %v13706
    %v13716 = vmul.f32 %v13251, %v13711
    %v13717 = vmul.f32 %v13252, %v13696
    %v13718 = vmul.f32 %v13253, %v13701
    %v13719 = vmul.f32 %v13254, %v13706
    %v13720 = vmul.f32 %v13255, %v13711
    %v13721 = vmul.f32 %v13256, %v13696
    %v13722 = vmul.f32 %v13257, %v13701
    %v13723 = vmul.f32 %v13258, %v13706
    %v13724 = vmul.f32 %v13259, %v13711
    %v13725 = vmul.f32 %v13260, %v13696
    %v13726 = vmul.f32 %v13261, %v13701
    %v13727 = vmul.f32 %v13262, %v13706
    %v13728 = vmul.f32 %v13263, %v13711
    %v13729 = vmul.f32 %v13264, %v13696
    %v13730 = vmul.f32 %v13265, %v13701
    %v13731 = vmul.f32 %v13266, %v13706
    %v13732 = vmul.f32 %v13267, %v13711
    %v13733 = vmul.f32 %v13268, %v13696
    %v13734 = vmul.f32 %v13269, %v13701
    %v13735 = vmul.f32 %v13270, %v13706
    %v13736 = vmul.f32 %v13271, %v13711
    %v13737 = vmul.f32 %v13272, %v13696
    %v13738 = vmul.f32 %v13273, %v13701
    %v13739 = vmul.f32 %v13274, %v13706
    %v13740 = vmul.f32 %v13275, %v13711
    %v13741 = vmul.f32 %v13276, %v13696
    %v13742 = vmul.f32 %v13277, %v13701
    %v13743 = vmul.f32 %v13278, %v13706
    %v13744 = vmul.f32 %v13279, %v13711
    %v13745 = vmul.f32 %v13280, %v13696
    %v13746 = vmul.f32 %v13281, %v13701
    %v13747 = vmul.f32 %v13282, %v13706
    %v13748 = vmul.f32 %v13283, %v13711
    %v13749 = vmul.f32 %v13284, %v13696
    %v13750 = vmul.f32 %v13285, %v13701
    %v13751 = vmul.f32 %v13286, %v13706
    %v13752 = vmul.f32 %v13287, %v13711
    %v13753 = vmul.f32 %v13288, %v13696
    %v13754 = vmul.f32 %v13289, %v13701
    %v13755 = vmul.f32 %v13290, %v13706
    %v13756 = vmul.f32 %v13291, %v13711
    %v13757 = vmul.f32 %v13292, %v13696
    %v13758 = vmul.f32 %v13293, %v13701
    %v13759 = vmul.f32 %v13294, %v13706
    %v13760 = vmul.f32 %v13295, %v13711
    %13765 = vrot.lane.b32.xlu0 %v13713, 96
    %v13766 = vpop.permute.xlu0 %13765
    %13767 = vrot.lane.b32.xlu0 %v13714, 96
    %v13768 = vpop.permute.xlu0 %13767
    %13769 = vrot.lane.b32.xlu0 %v13715, 96
    %v13770 = vpop.permute.xlu0 %13769
    %13771 = vrot.lane.b32.xlu0 %v13716, 96
    %v13772 = vpop.permute.xlu0 %13771
    %13781 = vrot.lane.b32.xlu0 %v13721, 32
    %v13782 = vpop.permute.xlu0 %13781
    %13783 = vrot.lane.b32.xlu0 %v13722, 32
    %v13784 = vpop.permute.xlu0 %13783
    %13785 = vrot.lane.b32.xlu0 %v13723, 32
    %v13786 = vpop.permute.xlu0 %13785
    %13787 = vrot.lane.b32.xlu0 %v13724, 32
    %v13788 = vpop.permute.xlu0 %13787
    %13797 = vrot.lane.b32.xlu0 %v13725, 64
    %v13798 = vpop.permute.xlu0 %13797
    %13799 = vrot.lane.b32.xlu0 %v13726, 64
    %v13800 = vpop.permute.xlu0 %13799
    %13801 = vrot.lane.b32.xlu0 %v13727, 64
    %v13802 = vpop.permute.xlu0 %13801
    %13803 = vrot.lane.b32.xlu0 %v13728, 64
    %v13804 = vpop.permute.xlu0 %13803
    %13813 = vrot.lane.b32.xlu0 %v13729, 96
    %v13814 = vpop.permute.xlu0 %13813
    %13815 = vrot.lane.b32.xlu0 %v13730, 96
    %v13816 = vpop.permute.xlu0 %13815
    %13817 = vrot.lane.b32.xlu0 %v13731, 96
    %v13818 = vpop.permute.xlu0 %13817
    %13819 = vrot.lane.b32.xlu0 %v13732, 96
    %v13820 = vpop.permute.xlu0 %13819
    %13829 = vrot.lane.b32.xlu0 %v13737, 32
    %v13830 = vpop.permute.xlu0 %13829
    %13831 = vrot.lane.b32.xlu0 %v13738, 32
    %v13832 = vpop.permute.xlu0 %13831
    %13833 = vrot.lane.b32.xlu0 %v13739, 32
    %v13834 = vpop.permute.xlu0 %13833
    %13835 = vrot.lane.b32.xlu0 %v13740, 32
    %v13836 = vpop.permute.xlu0 %13835
    %13845 = vrot.lane.b32.xlu0 %v13741, 64
    %v13846 = vpop.permute.xlu0 %13845
    %13847 = vrot.lane.b32.xlu0 %v13742, 64
    %v13848 = vpop.permute.xlu0 %13847
    %13849 = vrot.lane.b32.xlu0 %v13743, 64
    %v13850 = vpop.permute.xlu0 %13849
    %13851 = vrot.lane.b32.xlu0 %v13744, 64
    %v13852 = vpop.permute.xlu0 %13851
    %13861 = vrot.lane.b32.xlu0 %v13745, 96
    %v13862 = vpop.permute.xlu0 %13861
    %13863 = vrot.lane.b32.xlu0 %v13746, 96
    %v13864 = vpop.permute.xlu0 %13863
    %13865 = vrot.lane.b32.xlu0 %v13747, 96
    %v13866 = vpop.permute.xlu0 %13865
    %13867 = vrot.lane.b32.xlu0 %v13748, 96
    %v13868 = vpop.permute.xlu0 %13867
    %13877 = vrot.lane.b32.xlu0 %v13753, 32
    %v13878 = vpop.permute.xlu0 %13877
    %13879 = vrot.lane.b32.xlu0 %v13754, 32
    %v13880 = vpop.permute.xlu0 %13879
    %13881 = vrot.lane.b32.xlu0 %v13755, 32
    %v13882 = vpop.permute.xlu0 %13881
    %13883 = vrot.lane.b32.xlu0 %v13756, 32
    %v13884 = vpop.permute.xlu0 %13883
    %13893 = vrot.lane.b32.xlu0 %v13757, 64
    %v13894 = vpop.permute.xlu0 %13893
    %13895 = vrot.lane.b32.xlu0 %v13758, 64
    %v13896 = vpop.permute.xlu0 %13895
    %13897 = vrot.lane.b32.xlu0 %v13759, 64
    %v13898 = vpop.permute.xlu0 %13897
    %13899 = vrot.lane.b32.xlu0 %v13760, 64
    %v13900 = vpop.permute.xlu0 %13899
    %v13905 = vsel %vm2472, %v13766, %v13717
    %v13906 = vsel %vm2472, %v13768, %v13718
    %v13907 = vsel %vm2472, %v13770, %v13719
    %v13908 = vsel %vm2472, %v13772, %v13720
    %v13909 = vsel %vm2521, %v13905, %v13782
    %v13910 = vsel %vm2521, %v13906, %v13784
    %v13911 = vsel %vm2521, %v13907, %v13786
    %v13912 = vsel %vm2521, %v13908, %v13788
    %v13913 = vsel %vm2586, %v13909, %v13798
    %v13914 = vsel %vm2586, %v13910, %v13800
    %v13915 = vsel %vm2586, %v13911, %v13802
    %v13916 = vsel %vm2586, %v13912, %v13804
    %v13917 = vsel %vm2472, %v13814, %v13733
    %v13918 = vsel %vm2472, %v13816, %v13734
    %v13919 = vsel %vm2472, %v13818, %v13735
    %v13920 = vsel %vm2472, %v13820, %v13736
    %v13921 = vsel %vm2521, %v13917, %v13830
    %v13922 = vsel %vm2521, %v13918, %v13832
    %v13923 = vsel %vm2521, %v13919, %v13834
    %v13924 = vsel %vm2521, %v13920, %v13836
    %v13925 = vsel %vm2586, %v13921, %v13846
    %v13926 = vsel %vm2586, %v13922, %v13848
    %v13927 = vsel %vm2586, %v13923, %v13850
    %v13928 = vsel %vm2586, %v13924, %v13852
    %v13929 = vsel %vm2472, %v13862, %v13749
    %v13930 = vsel %vm2472, %v13864, %v13750
    %v13931 = vsel %vm2472, %v13866, %v13751
    %v13932 = vsel %vm2472, %v13868, %v13752
    %v13933 = vsel %vm2521, %v13929, %v13878
    %v13934 = vsel %vm2521, %v13930, %v13880
    %v13935 = vsel %vm2521, %v13931, %v13882
    %v13936 = vsel %vm2521, %v13932, %v13884
    %v13937 = vsel %vm2586, %v13933, %v13894
    %v13938 = vsel %vm2586, %v13934, %v13896
    %v13939 = vsel %vm2586, %v13935, %v13898
    %v13940 = vsel %vm2586, %v13936, %v13900
    %v13941 = vld [vmem:[%s24] sm:$0xff]
    %v13942 = vld [vmem:[%s24 + $0x8] sm:$0xff]
    %v13943 = vld [vmem:[%s24 + $0x10] sm:$0xff]
    %v13944 = vld [vmem:[%s24 + $0x18] sm:$0xff]
    %v13945 = vld [vmem:[%s24 + $0x20] sm:$0xff]
    %v13946 = vld [vmem:[%s24 + $0x28] sm:$0xff]
    %v13947 = vld [vmem:[%s24 + $0x30] sm:$0xff]
    %v13948 = vld [vmem:[%s24 + $0x38] sm:$0xff]
    %v13949 = vld [vmem:[%s24 + $0x40] sm:$0xff]
    %v13950 = vld [vmem:[%s24 + $0x48] sm:$0xff]
    %v13951 = vld [vmem:[%s24 + $0x50] sm:$0xff]
    %v13952 = vld [vmem:[%s24 + $0x58] sm:$0xff]
    %v13953 = vld [vmem:[%s24 + $0x60] sm:$0xff]
    %v13954 = vld [vmem:[%s24 + $0x68] sm:$0xff]
    %v13955 = vld [vmem:[%s24 + $0x70] sm:$0xff]
    %v13956 = vld [vmem:[%s24 + $0x78] sm:$0xff]
    %v13957 = vld [vmem:[%s24 + $0x80] sm:$0xff]
    %v13958 = vld [vmem:[%s24 + $0x88] sm:$0xff]
    %v13959 = vld [vmem:[%s24 + $0x90] sm:$0xff]
    %v13960 = vld [vmem:[%s24 + $0x98] sm:$0xff]
    %v13961 = vld [vmem:[%s24 + $0xa0] sm:$0xff]
    %v13962 = vld [vmem:[%s24 + $0xa8] sm:$0xff]
    %v13963 = vld [vmem:[%s24 + $0xb0] sm:$0xff]
    %v13964 = vld [vmem:[%s24 + $0xb8] sm:$0xff]
    %v13965 = vld [vmem:[%s24 + $0xc0] sm:$0xff]
    %v13966 = vld [vmem:[%s24 + $0xc8] sm:$0xff]
    %v13967 = vld [vmem:[%s24 + $0xd0] sm:$0xff]
    %v13968 = vld [vmem:[%s24 + $0xd8] sm:$0xff]
    %v13969 = vld [vmem:[%s24 + $0xe0] sm:$0xff]
    %v13970 = vld [vmem:[%s24 + $0xe8] sm:$0xff]
    %v13971 = vld [vmem:[%s24 + $0xf0] sm:$0xff]
    %v13972 = vld [vmem:[%s24 + $0xf8] sm:$0xff]
    %v13973 = vld [vmem:[%s24 + $0x100] sm:$0xff]
    %v13974 = vld [vmem:[%s24 + $0x108] sm:$0xff]
    %v13975 = vld [vmem:[%s24 + $0x110] sm:$0xff]
    %v13976 = vld [vmem:[%s24 + $0x118] sm:$0xff]
    %v13977 = vld [vmem:[%s24 + $0x120] sm:$0xff]
    %v13978 = vld [vmem:[%s24 + $0x128] sm:$0xff]
    %v13979 = vld [vmem:[%s24 + $0x130] sm:$0xff]
    %v13980 = vld [vmem:[%s24 + $0x138] sm:$0xff]
    %v13981 = vld [vmem:[%s24 + $0x140] sm:$0xff]
    %v13982 = vld [vmem:[%s24 + $0x148] sm:$0xff]
    %v13983 = vld [vmem:[%s24 + $0x150] sm:$0xff]
    %v13984 = vld [vmem:[%s24 + $0x158] sm:$0xff]
    %v13985 = vld [vmem:[%s24 + $0x160] sm:$0xff]
    %v13986 = vld [vmem:[%s24 + $0x168] sm:$0xff]
    %v13987 = vld [vmem:[%s24 + $0x170] sm:$0xff]
    %v13988 = vld [vmem:[%s24 + $0x178] sm:$0xff]
    %v13989 = vld [vmem:[%s25] sm:$0x1]
    %v13991 = vperm.slane %v13989, 0
    %13993 = vmatpush.msra.mxu0 %v13956
    %13994 = vmatpush.msra.mxu0 %v13955
    %13995 = vmatpush.msra.mxu0 %v13954
    %13996 = vmatpush.msra.mxu0 %v13953
    %13997 = vmatpush.msra.mxu0 %v13952
    %13998 = vmatpush.msra.mxu0 %v13951
    %13999 = vmatpush.msra.mxu0 %v13950
    %14000 = vmatpush.msra.mxu0 %v13949
    %14001 = vmatpush.msra.mxu0 %v13948
    %14002 = vmatpush.msra.mxu0 %v13947
    %14003 = vmatpush.msra.mxu0 %v13946
    %14004 = vmatpush.msra.mxu0 %v13945
    %14005 = vmatpush.msra.mxu0 %v13944
    %14006 = vmatpush.msra.mxu0 %v13943
    %14007 = vmatpush.msra.mxu0 %v13942
    %14008 = vmatpush.msra.mxu0 %v13941
    %14009 = vmatmul.f32.gmra.mxu0 %v13913
    %v14010 = vpop.f32.mrf.mxu0
    %v14011 = vadd.f32 %v13991, %v14010
    %14012 = vmatmul.f32.gmra.mxu0 %v13914
    %v14013 = vpop.f32.mrf.mxu0
    %v14014 = vadd.f32 %v13991, %v14013
    %14015 = vmatmul.f32.gmra.mxu0 %v13915
    %v14016 = vpop.f32.mrf.mxu0
    %v14017 = vadd.f32 %v13991, %v14016
    %14018 = vmatmul.f32.gmra.mxu0 %v13916
    %v14019 = vpop.f32.mrf.mxu0
    %v14020 = vadd.f32 %v13991, %v14019
    %14021 = vdwg.mxu0
    %14022 = vmatpush.msra.mxu0 %v13972
    %14023 = vmatpush.msra.mxu0 %v13971
    %14024 = vmatpush.msra.mxu0 %v13970
    %14025 = vmatpush.msra.mxu0 %v13969
    %14026 = vmatpush.msra.mxu0 %v13968
    %14027 = vmatpush.msra.mxu0 %v13967
    %14028 = vmatpush.msra.mxu0 %v13966
    %14029 = vmatpush.msra.mxu0 %v13965
    %14030 = vmatpush.msra.mxu0 %v13964
    %14031 = vmatpush.msra.mxu0 %v13963
    %14032 = vmatpush.msra.mxu0 %v13962
    %14033 = vmatpush.msra.mxu0 %v13961
    %14034 = vmatpush.msra.mxu0 %v13960
    %14035 = vmatpush.msra.mxu0 %v13959
    %14036 = vmatpush.msra.mxu0 %v13958
    %14037 = vmatpush.msra.mxu0 %v13957
    %14038 = vmatmul.f32.gmra.mxu0 %v13925
    %v14039 = vpop.f32.mrf.mxu0
    %v14040 = vadd.f32 %v14011, %v14039
    %14041 = vmatmul.f32.gmra.mxu0 %v13926
    %v14042 = vpop.f32.mrf.mxu0
    %v14043 = vadd.f32 %v14014, %v14042
    %14044 = vmatmul.f32.gmra.mxu0 %v13927
    %v14045 = vpop.f32.mrf.mxu0
    %v14046 = vadd.f32 %v14017, %v14045
    %14047 = vmatmul.f32.gmra.mxu0 %v13928
    %v14048 = vpop.f32.mrf.mxu0
    %v14049 = vadd.f32 %v14020, %v14048
    %14050 = vdwg.mxu0
    %14051 = vmatpush.msra.mxu0 %v13988
    %14052 = vmatpush.msra.mxu0 %v13987
    %14053 = vmatpush.msra.mxu0 %v13986
    %14054 = vmatpush.msra.mxu0 %v13985
    %14055 = vmatpush.msra.mxu0 %v13984
    %14056 = vmatpush.msra.mxu0 %v13983
    %14057 = vmatpush.msra.mxu0 %v13982
    %14058 = vmatpush.msra.mxu0 %v13981
    %14059 = vmatpush.msra.mxu0 %v13980
    %14060 = vmatpush.msra.mxu0 %v13979
    %14061 = vmatpush.msra.mxu0 %v13978
    %14062 = vmatpush.msra.mxu0 %v13977
    %14063 = vmatpush.msra.mxu0 %v13976
    %14064 = vmatpush.msra.mxu0 %v13975
    %14065 = vmatpush.msra.mxu0 %v13974
    %14066 = vmatpush.msra.mxu0 %v13973
    %14067 = vmatmul.f32.gmra.mxu0 %v13937
    %v14068 = vpop.f32.mrf.mxu0
    %v14069 = vadd.f32 %v14040, %v14068
    %14070 = vmatmul.f32.gmra.mxu0 %v13938
    %v14071 = vpop.f32.mrf.mxu0
    %v14072 = vadd.f32 %v14043, %v14071
    %14073 = vmatmul.f32.gmra.mxu0 %v13939
    %v14074 = vpop.f32.mrf.mxu0
    %v14075 = vadd.f32 %v14046, %v14074
    %14076 = vmatmul.f32.gmra.mxu0 %v13940
    %v14077 = vpop.f32.mrf.mxu0
    %v14078 = vadd.f32 %v14049, %v14077
    %14079 = vdwg.mxu0
    %vm14080 = vcmask 97280
    %14081 = vst.msk [vmem:[%s26] sm:$0xff] %vm14080, %v14069
    %14082 = vst.msk [vmem:[%s26 + $0x8] sm:$0xff] %vm14080, %v14072
    %14083 = vst.msk [vmem:[%s26 + $0x10] sm:$0xff] %vm14080, %v14075
    %14084 = vst.msk [vmem:[%s26 + $0x18] sm:$0xff] %vm14080, %v14078
    // Predicated region
    $region106: #{pstgcn_forward.1} parent=1 // pred_check
      _
    $region107: #{pstgcn_forward.1} parent=1 // pred_check_branch
      %14086 = sbr.rel (0) target = $region109
    $region108: #{pstgcn_forward.1} parent=1 // pred_region
      _
    $region109: #{pstgcn_forward.1} parent=1 // pred_fallthru
      _
    // Predicated region
    $region110: #{pstgcn_forward.1} parent=1 // pred_check
      _
    $region111: #{pstgcn_forward.1} parent=1 // pred_check_branch
      %14088 = sbr.rel (0) target = $region113
    $region112: #{pstgcn_forward.1} parent=1 // pred_region
      %14090 = vsyncadd [#allocation3], 0
      %s14091 = sshll.u32 [#allocation2], 4
      %s14092 = int_to_ptr.vmem [resolvable:$true] %s14091
      %s14093 = sshll.u32 %s27, 4
      %s14094 = int_to_ptr.hbm [resolvable:$true] %s14093
      %14099 = dma.vmem_to_hbm [thread:$0]  %s14092, 512, %s14094, [#allocation3], 128, 128, 8
    $region113: #{pstgcn_forward.1} parent=1 // pred_fallthru
      _
    // Predicated region
    $region114: #{pstgcn_forward.1} parent=1 // pred_check
      _
    $region115: #{pstgcn_forward.1} parent=1 // pred_check_branch
      %14101 = sbr.rel (0) target = $region117
    $region116: #{pstgcn_forward.1} parent=1 // pred_region
      _
    $region117: #{pstgcn_forward.1} parent=1 // pred_fallthru
      _
    // Predicated region
    $region118: #{pstgcn_forward.1} parent=1 // pred_check
      _
    $region119: #{pstgcn_forward.1} parent=1 // pred_check_branch
      %14103 = sbr.rel (0) target = $region121
    $region120: #{pstgcn_forward.1} parent=1 // pred_region
      _
    $region121: #{pstgcn_forward.1} parent=1 // pred_fallthru
      _
    // Predicated region
    $region122: #{pstgcn_forward.1} parent=1 // pred_check
      _
    $region123: #{pstgcn_forward.1} parent=1 // pred_check_branch
      %14105 = sbr.rel (0) target = $region125
    $region124: #{pstgcn_forward.1} parent=1 // pred_region
      %14107 = dma.done [#allocation3], 512
    $region125: #{pstgcn_forward.1} parent=1 // pred_fallthru
      _
    // Predicated region
    $region126: #{pstgcn_forward.1} parent=1 // pred_check
      _
    $region127: #{pstgcn_forward.1} parent=1 // pred_check_branch
      %14109 = sbr.rel (0) target = $region129
    $region128: #{pstgcn_forward.1} parent=1 // pred_region
      _
    $region129: #{pstgcn_forward.1} parent=1 // pred_fallthru
      _
    %14110 = vsyncpa [#allocation3], 1

</llo_original>
